<compile_context>
chip_gen: v6e
topology: v6e:2x2x1
jax: 0.10.0
libtpu: 0.0.40
codegen_flags: <defaults>
</compile_context>

<pallas_src>
import jax
import jax.numpy as jnp
import numpy as np
from jax.experimental import pallas as pl
from jax.experimental.pallas import tpu as pltpu

K = 9                  # conv taps
PAD = (K - 1) // 2     # zero padding on each side of the conv axis
assert PAD == 4


def _pick_gblk(g):
    """Batch-pair blocks folded into the matmul M dim per grid step.

    Bigger blocks amortize the per-step weight stream; we still keep >= 2
    grid steps whenever possible so v7x's two TensorCores both get work.
    """
    for cand in (8, 4, 2):
        if g % cand == 0 and g // cand >= 2:
            return cand
    return 1


def _sweep_kernel(x_ref, w_f_ref, b_f_ref, w_b_ref, b_b_ref, o_ref):
    """Forward + backward recurrence along axis 1 of one (Gb, N, L, CP) block."""
    Gb, N, L, CP = o_ref.shape

    # Hoisted loop-invariants.
    zhalo = jnp.zeros((Gb, PAD, CP), jnp.float32)
    bias_f = jnp.broadcast_to(b_f_ref[...].reshape(1, 1, CP), (Gb, L, CP))
    bias_b = jnp.broadcast_to(b_b_ref[...].reshape(1, 1, CP), (Gb, L, CP))

    def conv_relu(prev, w_ref, bias):
        # prev: (Gb, L, CP) f32.  Build the im2col LHS in registers: zero halo
        # + 9 sublane-shifted views concatenated along lanes -> (Gb, L, K*CP).
        prev_pad = jnp.concatenate([zhalo, prev, zhalo], axis=1)
        lhs = jnp.concatenate([prev_pad[:, k:k + L, :] for k in range(K)],
                              axis=-1)
        # Single fused matmul: 1152-deep contraction, f32 accumulation.
        out = jax.lax.dot_general(
            lhs.astype(jnp.bfloat16), w_ref[...],
            dimension_numbers=(((2,), (0,)), ((), ())),
            preferred_element_type=jnp.float32)            # (Gb, L, CP)
        return jnp.maximum(out + bias, 0.0)                # bias + ReLU (f32)

    # Bounded unroll for long recurrences (vreg pressure); full for short ones.
    unroll = True if N <= 16 else 4

    # Row 0 passes through unchanged.
    row0 = x_ref[:, pl.ds(0, 1), :, :].reshape(Gb, L, CP)
    o_ref[:, pl.ds(0, 1), :, :] = row0.reshape(Gb, 1, L, CP)

    # forward recurrence:  state[i] += relu(conv_f(state[i-1])),  i = 1..N-1
    def fwd_body(i, prev):
        new = (x_ref[:, pl.ds(i, 1), :, :].reshape(Gb, L, CP)
               + conv_relu(prev, w_f_ref, bias_f))
        o_ref[:, pl.ds(i, 1), :, :] = new.reshape(Gb, 1, L, CP)
        return new                      # carry the just-updated row

    last = jax.lax.fori_loop(1, N, fwd_body, row0, unroll=unroll)

    # backward recurrence: state[i] += relu(conv_b(state[i+1])),  i = N-2..0
    def bwd_body(j, prev):
        i = N - 2 - j
        new = (o_ref[:, pl.ds(i, 1), :, :].reshape(Gb, L, CP)
               + conv_relu(prev, w_b_ref, bias_b))
        o_ref[:, pl.ds(i, 1), :, :] = new.reshape(Gb, 1, L, CP)
        return new

    jax.lax.fori_loop(0, N - 1, bwd_body, last, unroll=unroll)


def _sweep(state, w_f, b_f, w_b, b_b):
    """state: (G, N, L, CP) f32. Recurrence over axis 1, conv along axis 2."""
    G, N, L, CP = state.shape
    Gb = _pick_gblk(G)

    state_spec = pl.BlockSpec((Gb, N, L, CP), lambda g: (g, 0, 0, 0))
    w_spec = pl.BlockSpec((K * CP, CP), lambda g: (0, 0))
    b_spec = pl.BlockSpec((1, CP), lambda g: (0, 0))

    flops = 4 * (N - 1) * G * L * CP * (K * CP)            # fwd + bwd, 2*MACs
    bytes_accessed = (2 * G * N * L * CP * 4               # state in + out
                      + 2 * K * CP * CP * 2 + 2 * CP * 4)  # weights + biases

    return pl.pallas_call(
        _sweep_kernel,
        out_shape=jax.ShapeDtypeStruct((G, N, L, CP), jnp.float32),
        grid=(G // Gb,),
        in_specs=[state_spec, w_spec, b_spec, w_spec, b_spec],
        out_specs=state_spec,
        input_output_aliases={0: 0},        # in-place at the HBM level
        compiler_params=pltpu.CompilerParams(
            dimension_semantics=("parallel",),   # batch-pair blocks -> both TCs
            vmem_limit_bytes=48 * 1024 * 1024),  # safe on v7x (64 MiB physical)
        cost_estimate=pl.CostEstimate(
            flops=flops, transcendentals=0, bytes_accessed=bytes_accessed),
    )(state, w_f, b_f, w_b, b_b)


def _to_kio(w_conv):
    """torch conv weight (O, I, kh, kw) with one 9-tap spatial axis -> (K, I, O)."""
    o, i = w_conv.shape[0], w_conv.shape[1]
    return jnp.transpose(w_conv.reshape(o, i, K), (2, 1, 0))


def _pack_weight(w_conv, c):
    """-> (K*2C, 2C) bf16 im2col weight, block-diagonal over the batch-pair
    lane packing: out = lhs_im2col @ W with lhs[l, k*2C+i] = prev[l+k-4, i]."""
    wk = _to_kio(w_conv)                             # (K, C, C)  [k, i, o]
    z = jnp.zeros_like(wk)
    wpk = jnp.concatenate(
        [jnp.concatenate([wk, z], axis=2),
         jnp.concatenate([z, wk], axis=2)], axis=1)  # (K, 2C, 2C), block-diag
    return wpk.reshape(K * 2 * c, 2 * c).astype(jnp.bfloat16)


def _pack_bias(b):
    return jnp.concatenate([b, b]).reshape(1, -1).astype(jnp.float32)


@jax.jit
def scnn_forward(x_nchw, params):
    B, C, H, W = x_nchw.shape
    x = x_nchw.astype(jnp.float32)

    # Pad batch to even so pairs of batch elements lane-pack into 2C = 128.
    Bp = B + (B % 2)
    if Bp != B:
        x = jnp.concatenate([x, jnp.zeros((1, C, H, W), jnp.float32)], axis=0)
    G = Bp // 2

    # NCHW -> lane-packed channels-last state (G, H, W, 2C).
    xs = jnp.transpose(x.reshape(G, 2, C, H, W), (0, 3, 4, 1, 2))
    xs = xs.reshape(G, H, W, 2 * C)

    w_ud, b_ud = _pack_weight(params['w_ud'], C), _pack_bias(params['b_ud'])
    w_du, b_du = _pack_weight(params['w_du'], C), _pack_bias(params['b_du'])
    w_lr, b_lr = _pack_weight(params['w_lr'], C), _pack_bias(params['b_lr'])
    w_rl, b_rl = _pack_weight(params['w_rl'], C), _pack_bias(params['b_rl'])

    # Vertical message passing: recurrence over H, (1,9) conv along W.
    xs = _sweep(xs, w_ud, b_ud, w_du, b_du)

    # Horizontal message passing: recurrence over W, (9,1) conv along H.
    # TODO(synk): fold this transpose into the kernel (see header).
    xs = jnp.transpose(xs, (0, 2, 1, 3))                   # (G, W, H, 2C)
    xs = _sweep(xs, w_lr, b_lr, w_rl, b_rl)

    # Unpack (G, W, H, 2C) straight back to NCHW (single fused transpose).
    out = jnp.transpose(xs.reshape(G, W, H, 2, C), (0, 3, 4, 2, 1))
    return out.reshape(Bp, C, H, W)[:B]


# ----------------------------- pure-JAX reference -----------------------------
def _conv_nchw(x, w, b, pad):
    out = jax.lax.conv_general_dilated(
        x, w, window_strides=(1, 1), padding=pad,
        dimension_numbers=('NCHW', 'OIHW', 'NCHW'))
    return out + b.reshape(1, -1, 1, 1)


def scnn_reference(x, p):
    B, C, H, W = x.shape
    for i in range(1, H):
        upd = jax.nn.relu(_conv_nchw(x[:, :, i - 1:i, :], p['w_ud'], p['b_ud'],
                                     ((0, 0), (4, 4))))
        x = x.at[:, :, i:i + 1, :].add(upd)
    for i in range(H - 2, -1, -1):
        upd = jax.nn.relu(_conv_nchw(x[:, :, i + 1:i + 2, :], p['w_du'], p['b_du'],
                                     ((0, 0), (4, 4))))
        x = x.at[:, :, i:i + 1, :].add(upd)
    for i in range(1, W):
        upd = jax.nn.relu(_conv_nchw(x[:, :, :, i - 1:i], p['w_lr'], p['b_lr'],
                                     ((4, 4), (0, 0))))
        x = x.at[:, :, :, i:i + 1].add(upd)
    for i in range(W - 2, -1, -1):
        upd = jax.nn.relu(_conv_nchw(x[:, :, :, i + 1:i + 2], p['w_rl'], p['b_rl'],
                                     ((4, 4), (0, 0))))
        x = x.at[:, :, :, i:i + 1].add(upd)
    return x


if __name__ == "__main__":
    key = jax.random.PRNGKey(0)
    ks = jax.random.split(key, 9)

    B, C, H, W = 2, 64, 8, 8          # C=64 is fixed by the module definition
    x = jax.random.normal(ks[0], (B, C, H, W), jnp.float32)

    scale = 0.02
    params = {
        'w_ud': scale * jax.random.normal(ks[1], (C, C, 1, K), jnp.float32),
        'b_ud': scale * jax.random.normal(ks[2], (C,), jnp.float32),
        'w_du': scale * jax.random.normal(ks[3], (C, C, 1, K), jnp.float32),
        'b_du': scale * jax.random.normal(ks[4], (C,), jnp.float32),
        'w_lr': scale * jax.random.normal(ks[5], (C, C, K, 1), jnp.float32),
        'b_lr': scale * jax.random.normal(ks[6], (C,), jnp.float32),
        'w_rl': scale * jax.random.normal(ks[7], (C, C, K, 1), jnp.float32),
        'b_rl': scale * jax.random.normal(ks[8], (C,), jnp.float32),
    }

    out = jax.block_until_ready(scnn_forward(x, params))
    ref = jax.block_until_ready(scnn_reference(x, params))
    # Tolerance slightly looser than pure-f32: MXU operands are bf16 (per perf
    # review); accumulation, carried state, bias and ReLU remain f32.
    np.testing.assert_allclose(np.asarray(out), np.asarray(ref),
                               rtol=3e-2, atol=3e-2)
    print("KERNEL_OK")
</pallas_src>

<mosaic_0001>
module attributes {stable_mosaic.version = 11 : i64} {
  func.func @_sweep_kernel(%arg0: i32, %arg1: memref<1x8x8x128xf32, #tpu.memory_space<vmem>>, %arg2: memref<1152x128xbf16, #tpu.memory_space<vmem>>, %arg3: memref<1x128xf32, #tpu.memory_space<vmem>>, %arg4: memref<1152x128xbf16, #tpu.memory_space<vmem>>, %arg5: memref<1x128xf32, #tpu.memory_space<vmem>>, %arg6: memref<1x8x8x128xf32, #tpu.memory_space<vmem>>) attributes {dimension_semantics = [#tpu.dimension_semantics<parallel>], iteration_bounds = array<i64: 1>, scalar_prefetch = 0 : i64, scratch_operands = 0 : i64, tpu.core_type = #tpu.core_type<tc>, window_params = [{transform_indices = @transform_0, window_bounds = array<i64: 1, 8, 8, 128>}, {pipeline_mode = #tpu.pipeline_mode<synchronous>, transform_indices = @transform_1, window_bounds = array<i64: 1152, 128>}, {pipeline_mode = #tpu.pipeline_mode<synchronous>, transform_indices = @transform_2, window_bounds = array<i64: 1, 128>}, {pipeline_mode = #tpu.pipeline_mode<synchronous>, transform_indices = @transform_3, window_bounds = array<i64: 1152, 128>}, {pipeline_mode = #tpu.pipeline_mode<synchronous>, transform_indices = @transform_4, window_bounds = array<i64: 1, 128>}, {transform_indices = @transform_5, window_bounds = array<i64: 1, 8, 8, 128>}]} {
    %cst = arith.constant 0.000000e+00 : f32
    %0 = vector.broadcast %cst : f32 to vector<1x4x128xf32>
    %c0 = arith.constant 0 : index
    %c0_0 = arith.constant 0 : index
    %1 = vector.load %arg3[%c0, %c0_0] : memref<1x128xf32, #tpu.memory_space<vmem>>, vector<1x128xf32>
    %2 = vector.shape_cast %1 : vector<1x128xf32> to vector<1x1x128xf32>
    %3 = vector.shape_cast %2 : vector<1x1x128xf32> to vector<1x1x128xf32>
    %4 = vector.broadcast %3 : vector<1x1x128xf32> to vector<1x8x128xf32>
    %c0_1 = arith.constant 0 : index
    %c0_2 = arith.constant 0 : index
    %5 = vector.load %arg5[%c0_1, %c0_2] : memref<1x128xf32, #tpu.memory_space<vmem>>, vector<1x128xf32>
    %6 = vector.shape_cast %5 : vector<1x128xf32> to vector<1x1x128xf32>
    %7 = vector.shape_cast %6 : vector<1x1x128xf32> to vector<1x1x128xf32>
    %8 = vector.broadcast %7 : vector<1x1x128xf32> to vector<1x8x128xf32>
    %c0_3 = arith.constant 0 : index
    %c0_4 = arith.constant 0 : index
    %c0_5 = arith.constant 0 : index
    %c0_6 = arith.constant 0 : index
    %9 = vector.load %arg1[%c0_3, %c0_4, %c0_5, %c0_6] : memref<1x8x8x128xf32, #tpu.memory_space<vmem>>, vector<1x1x8x128xf32>
    %10 = vector.shape_cast %9 : vector<1x1x8x128xf32> to vector<1x8x128xf32>
    %11 = vector.shape_cast %10 : vector<1x8x128xf32> to vector<1x1x8x128xf32>
    %c0_7 = arith.constant 0 : index
    %c0_8 = arith.constant 0 : index
    %c0_9 = arith.constant 0 : index
    %c0_10 = arith.constant 0 : index
    %12 = vector.load %arg6[%c0_7, %c0_8, %c0_9, %c0_10] : memref<1x8x8x128xf32, #tpu.memory_space<vmem>>, vector<1x1x8x128xf32>
    tpu.vector_store %arg6[%c0_7, %c0_8, %c0_9, %c0_10], %11 {strides = array<i32>} : memref<1x8x8x128xf32, #tpu.memory_space<vmem>>, vector<1x1x8x128xf32>,
    %c1_i32 = arith.constant 1 : i32
    %c0_11 = arith.constant 0 : index
    %13 = arith.index_cast %c1_i32 : i32 to index
    %c0_12 = arith.constant 0 : index
    %c0_13 = arith.constant 0 : index
    %14 = vector.load %arg1[%c0_11, %13, %c0_12, %c0_13] : memref<1x8x8x128xf32, #tpu.memory_space<vmem>>, vector<1x1x8x128xf32>
    %15 = vector.shape_cast %14 : vector<1x1x8x128xf32> to vector<1x8x128xf32>
    %16 = tpu.concatenate %0, %10, %0 in 1 : vector<1x4x128xf32>, vector<1x8x128xf32>, vector<1x4x128xf32> -> vector<1x16x128xf32>
    %17 = vector.extract_strided_slice %16 {offsets = [0, 0, 0], sizes = [1, 8, 128], strides = [1, 1, 1]} : vector<1x16x128xf32> to vector<1x8x128xf32>
    %18 = vector.extract_strided_slice %16 {offsets = [0, 1, 0], sizes = [1, 8, 128], strides = [1, 1, 1]} : vector<1x16x128xf32> to vector<1x8x128xf32>
    %19 = vector.extract_strided_slice %16 {offsets = [0, 2, 0], sizes = [1, 8, 128], strides = [1, 1, 1]} : vector<1x16x128xf32> to vector<1x8x128xf32>
    %20 = vector.extract_strided_slice %16 {offsets = [0, 3, 0], sizes = [1, 8, 128], strides = [1, 1, 1]} : vector<1x16x128xf32> to vector<1x8x128xf32>
    %21 = vector.extract_strided_slice %16 {offsets = [0, 4, 0], sizes = [1, 8, 128], strides = [1, 1, 1]} : vector<1x16x128xf32> to vector<1x8x128xf32>
    %22 = vector.extract_strided_slice %16 {offsets = [0, 5, 0], sizes = [1, 8, 128], strides = [1, 1, 1]} : vector<1x16x128xf32> to vector<1x8x128xf32>
    %23 = vector.extract_strided_slice %16 {offsets = [0, 6, 0], sizes = [1, 8, 128], strides = [1, 1, 1]} : vector<1x16x128xf32> to vector<1x8x128xf32>
    %24 = vector.extract_strided_slice %16 {offsets = [0, 7, 0], sizes = [1, 8, 128], strides = [1, 1, 1]} : vector<1x16x128xf32> to vector<1x8x128xf32>
    %25 = vector.extract_strided_slice %16 {offsets = [0, 8, 0], sizes = [1, 8, 128], strides = [1, 1, 1]} : vector<1x16x128xf32> to vector<1x8x128xf32>
    %26 = tpu.concatenate %17, %18, %19, %20, %21, %22, %23, %24, %25 in 2 : vector<1x8x128xf32>, vector<1x8x128xf32>, vector<1x8x128xf32>, vector<1x8x128xf32>, vector<1x8x128xf32>, vector<1x8x128xf32>, vector<1x8x128xf32>, vector<1x8x128xf32>, vector<1x8x128xf32> -> vector<1x8x1152xf32>
    %27 = arith.truncf %26 : vector<1x8x1152xf32> to vector<1x8x1152xbf16>
    %c0_14 = arith.constant 0 : index
    %c0_15 = arith.constant 0 : index
    %28 = vector.load %arg2[%c0_14, %c0_15] : memref<1152x128xbf16, #tpu.memory_space<vmem>>, vector<1152x128xbf16>
    %cst_16 = arith.constant dense<0.000000e+00> : vector<1x8x128xf32>
    %29 = tpu.matmul %27, %28, %cst_16 {dimension_numbers = #tpu.dot_dimension_numbers<[2], [0], [0, 1], [1], [0, 0, 0, 1, 1, 1], [], []>} : vector<1x8x1152xbf16>, vector<1152x128xbf16>, vector<1x8x128xf32> -> vector<1x8x128xf32>
    %30 = arith.addf %29, %4 : vector<1x8x128xf32>
    %cst_17 = arith.constant 0.000000e+00 : f32
    %31 = vector.broadcast %cst_17 : f32 to vector<1x8x128xf32>
    %32 = arith.maximumf %30, %31 : vector<1x8x128xf32>
    %33 = arith.addf %15, %32 : vector<1x8x128xf32>
    %34 = vector.shape_cast %33 : vector<1x8x128xf32> to vector<1x1x8x128xf32>
    %c0_18 = arith.constant 0 : index
    %35 = arith.index_cast %c1_i32 : i32 to index
    %c0_19 = arith.constant 0 : index
    %c0_20 = arith.constant 0 : index
    %36 = vector.load %arg6[%c0_18, %35, %c0_19, %c0_20] : memref<1x8x8x128xf32, #tpu.memory_space<vmem>>, vector<1x1x8x128xf32>
    tpu.vector_store %arg6[%c0_18, %35, %c0_19, %c0_20], %34 {strides = array<i32>} : memref<1x8x8x128xf32, #tpu.memory_space<vmem>>, vector<1x1x8x128xf32>,
    %c2_i32 = arith.constant 2 : i32
    %c0_21 = arith.constant 0 : index
    %37 = arith.index_cast %c2_i32 : i32 to index
    %c0_22 = arith.constant 0 : index
    %c0_23 = arith.constant 0 : index
    %38 = vector.load %arg1[%c0_21, %37, %c0_22, %c0_23] : memref<1x8x8x128xf32, #tpu.memory_space<vmem>>, vector<1x1x8x128xf32>
    %39 = vector.shape_cast %38 : vector<1x1x8x128xf32> to vector<1x8x128xf32>
    %40 = tpu.concatenate %0, %33, %0 in 1 : vector<1x4x128xf32>, vector<1x8x128xf32>, vector<1x4x128xf32> -> vector<1x16x128xf32>
    %41 = vector.extract_strided_slice %40 {offsets = [0, 0, 0], sizes = [1, 8, 128], strides = [1, 1, 1]} : vector<1x16x128xf32> to vector<1x8x128xf32>
    %42 = vector.extract_strided_slice %40 {offsets = [0, 1, 0], sizes = [1, 8, 128], strides = [1, 1, 1]} : vector<1x16x128xf32> to vector<1x8x128xf32>
    %43 = vector.extract_strided_slice %40 {offsets = [0, 2, 0], sizes = [1, 8, 128], strides = [1, 1, 1]} : vector<1x16x128xf32> to vector<1x8x128xf32>
    %44 = vector.extract_strided_slice %40 {offsets = [0, 3, 0], sizes = [1, 8, 128], strides = [1, 1, 1]} : vector<1x16x128xf32> to vector<1x8x128xf32>
    %45 = vector.extract_strided_slice %40 {offsets = [0, 4, 0], sizes = [1, 8, 128], strides = [1, 1, 1]} : vector<1x16x128xf32> to vector<1x8x128xf32>
    %46 = vector.extract_strided_slice %40 {offsets = [0, 5, 0], sizes = [1, 8, 128], strides = [1, 1, 1]} : vector<1x16x128xf32> to vector<1x8x128xf32>
    %47 = vector.extract_strided_slice %40 {offsets = [0, 6, 0], sizes = [1, 8, 128], strides = [1, 1, 1]} : vector<1x16x128xf32> to vector<1x8x128xf32>
    %48 = vector.extract_strided_slice %40 {offsets = [0, 7, 0], sizes = [1, 8, 128], strides = [1, 1, 1]} : vector<1x16x128xf32> to vector<1x8x128xf32>
    %49 = vector.extract_strided_slice %40 {offsets = [0, 8, 0], sizes = [1, 8, 128], strides = [1, 1, 1]} : vector<1x16x128xf32> to vector<1x8x128xf32>
    %50 = tpu.concatenate %41, %42, %43, %44, %45, %46, %47, %48, %49 in 2 : vector<1x8x128xf32>, vector<1x8x128xf32>, vector<1x8x128xf32>, vector<1x8x128xf32>, vector<1x8x128xf32>, vector<1x8x128xf32>, vector<1x8x128xf32>, vector<1x8x128xf32>, vector<1x8x128xf32> -> vector<1x8x1152xf32>
    %51 = arith.truncf %50 : vector<1x8x1152xf32> to vector<1x8x1152xbf16>
    %c0_24 = arith.constant 0 : index
    %c0_25 = arith.constant 0 : index
    %52 = vector.load %arg2[%c0_24, %c0_25] : memref<1152x128xbf16, #tpu.memory_space<vmem>>, vector<1152x128xbf16>
    %cst_26 = arith.constant dense<0.000000e+00> : vector<1x8x128xf32>
    %53 = tpu.matmul %51, %52, %cst_26 {dimension_numbers = #tpu.dot_dimension_numbers<[2], [0], [0, 1], [1], [0, 0, 0, 1, 1, 1], [], []>} : vector<1x8x1152xbf16>, vector<1152x128xbf16>, vector<1x8x128xf32> -> vector<1x8x128xf32>
    %54 = arith.addf %53, %4 : vector<1x8x128xf32>
    %cst_27 = arith.constant 0.000000e+00 : f32
    %55 = vector.broadcast %cst_27 : f32 to vector<1x8x128xf32>
    %56 = arith.maximumf %54, %55 : vector<1x8x128xf32>
    %57 = arith.addf %39, %56 : vector<1x8x128xf32>
    %58 = vector.shape_cast %57 : vector<1x8x128xf32> to vector<1x1x8x128xf32>
    %c0_28 = arith.constant 0 : index
    %59 = arith.index_cast %c2_i32 : i32 to index
    %c0_29 = arith.constant 0 : index
    %c0_30 = arith.constant 0 : index
    %60 = vector.load %arg6[%c0_28, %59, %c0_29, %c0_30] : memref<1x8x8x128xf32, #tpu.memory_space<vmem>>, vector<1x1x8x128xf32>
    tpu.vector_store %arg6[%c0_28, %59, %c0_29, %c0_30], %58 {strides = array<i32>} : memref<1x8x8x128xf32, #tpu.memory_space<vmem>>, vector<1x1x8x128xf32>,
    %c3_i32 = arith.constant 3 : i32
    %c0_31 = arith.constant 0 : index
    %61 = arith.index_cast %c3_i32 : i32 to index
    %c0_32 = arith.constant 0 : index
    %c0_33 = arith.constant 0 : index
    %62 = vector.load %arg1[%c0_31, %61, %c0_32, %c0_33] : memref<1x8x8x128xf32, #tpu.memory_space<vmem>>, vector<1x1x8x128xf32>
    %63 = vector.shape_cast %62 : vector<1x1x8x128xf32> to vector<1x8x128xf32>
    %64 = tpu.concatenate %0, %57, %0 in 1 : vector<1x4x128xf32>, vector<1x8x128xf32>, vector<1x4x128xf32> -> vector<1x16x128xf32>
    %65 = vector.extract_strided_slice %64 {offsets = [0, 0, 0], sizes = [1, 8, 128], strides = [1, 1, 1]} : vector<1x16x128xf32> to vector<1x8x128xf32>
    %66 = vector.extract_strided_slice %64 {offsets = [0, 1, 0], sizes = [1, 8, 128], strides = [1, 1, 1]} : vector<1x16x128xf32> to vector<1x8x128xf32>
    %67 = vector.extract_strided_slice %64 {offsets = [0, 2, 0], sizes = [1, 8, 128], strides = [1, 1, 1]} : vector<1x16x128xf32> to vector<1x8x128xf32>
    %68 = vector.extract_strided_slice %64 {offsets = [0, 3, 0], sizes = [1, 8, 128], strides = [1, 1, 1]} : vector<1x16x128xf32> to vector<1x8x128xf32>
    %69 = vector.extract_strided_slice %64 {offsets = [0, 4, 0], sizes = [1, 8, 128], strides = [1, 1, 1]} : vector<1x16x128xf32> to vector<1x8x128xf32>
    %70 = vector.extract_strided_slice %64 {offsets = [0, 5, 0], sizes = [1, 8, 128], strides = [1, 1, 1]} : vector<1x16x128xf32> to vector<1x8x128xf32>
    %71 = vector.extract_strided_slice %64 {offsets = [0, 6, 0], sizes = [1, 8, 128], strides = [1, 1, 1]} : vector<1x16x128xf32> to vector<1x8x128xf32>
    %72 = vector.extract_strided_slice %64 {offsets = [0, 7, 0], sizes = [1, 8, 128], strides = [1, 1, 1]} : vector<1x16x128xf32> to vector<1x8x128xf32>
    %73 = vector.extract_strided_slice %64 {offsets = [0, 8, 0], sizes = [1, 8, 128], strides = [1, 1, 1]} : vector<1x16x128xf32> to vector<1x8x128xf32>
    %74 = tpu.concatenate %65, %66, %67, %68, %69, %70, %71, %72, %73 in 2 : vector<1x8x128xf32>, vector<1x8x128xf32>, vector<1x8x128xf32>, vector<1x8x128xf32>, vector<1x8x128xf32>, vector<1x8x128xf32>, vector<1x8x128xf32>, vector<1x8x128xf32>, vector<1x8x128xf32> -> vector<1x8x1152xf32>
    %75 = arith.truncf %74 : vector<1x8x1152xf32> to vector<1x8x1152xbf16>
    %c0_34 = arith.constant 0 : index
    %c0_35 = arith.constant 0 : index
    %76 = vector.load %arg2[%c0_34, %c0_35] : memref<1152x128xbf16, #tpu.memory_space<vmem>>, vector<1152x128xbf16>
    %cst_36 = arith.constant dense<0.000000e+00> : vector<1x8x128xf32>
    %77 = tpu.matmul %75, %76, %cst_36 {dimension_numbers = #tpu.dot_dimension_numbers<[2], [0], [0, 1], [1], [0, 0, 0, 1, 1, 1], [], []>} : vector<1x8x1152xbf16>, vector<1152x128xbf16>, vector<1x8x128xf32> -> vector<1x8x128xf32>
    %78 = arith.addf %77, %4 : vector<1x8x128xf32>
    %cst_37 = arith.constant 0.000000e+00 : f32
    %79 = vector.broadcast %cst_37 : f32 to vector<1x8x128xf32>
    %80 = arith.maximumf %78, %79 : vector<1x8x128xf32>
    %81 = arith.addf %63, %80 : vector<1x8x128xf32>
    %82 = vector.shape_cast %81 : vector<1x8x128xf32> to vector<1x1x8x128xf32>
    %c0_38 = arith.constant 0 : index
    %83 = arith.index_cast %c3_i32 : i32 to index
    %c0_39 = arith.constant 0 : index
    %c0_40 = arith.constant 0 : index
    %84 = vector.load %arg6[%c0_38, %83, %c0_39, %c0_40] : memref<1x8x8x128xf32, #tpu.memory_space<vmem>>, vector<1x1x8x128xf32>
    tpu.vector_store %arg6[%c0_38, %83, %c0_39, %c0_40], %82 {strides = array<i32>} : memref<1x8x8x128xf32, #tpu.memory_space<vmem>>, vector<1x1x8x128xf32>,
    %c4_i32 = arith.constant 4 : i32
    %c0_41 = arith.constant 0 : index
    %85 = arith.index_cast %c4_i32 : i32 to index
    %c0_42 = arith.constant 0 : index
    %c0_43 = arith.constant 0 : index
    %86 = vector.load %arg1[%c0_41, %85, %c0_42, %c0_43] : memref<1x8x8x128xf32, #tpu.memory_space<vmem>>, vector<1x1x8x128xf32>
    %87 = vector.shape_cast %86 : vector<1x1x8x128xf32> to vector<1x8x128xf32>
    %88 = tpu.concatenate %0, %81, %0 in 1 : vector<1x4x128xf32>, vector<1x8x128xf32>, vector<1x4x128xf32> -> vector<1x16x128xf32>
    %89 = vector.extract_strided_slice %88 {offsets = [0, 0, 0], sizes = [1, 8, 128], strides = [1, 1, 1]} : vector<1x16x128xf32> to vector<1x8x128xf32>
    %90 = vector.extract_strided_slice %88 {offsets = [0, 1, 0], sizes = [1, 8, 128], strides = [1, 1, 1]} : vector<1x16x128xf32> to vector<1x8x128xf32>
    %91 = vector.extract_strided_slice %88 {offsets = [0, 2, 0], sizes = [1, 8, 128], strides = [1, 1, 1]} : vector<1x16x128xf32> to vector<1x8x128xf32>
    %92 = vector.extract_strided_slice %88 {offsets = [0, 3, 0], sizes = [1, 8, 128], strides = [1, 1, 1]} : vector<1x16x128xf32> to vector<1x8x128xf32>
    %93 = vector.extract_strided_slice %88 {offsets = [0, 4, 0], sizes = [1, 8, 128], strides = [1, 1, 1]} : vector<1x16x128xf32> to vector<1x8x128xf32>
    %94 = vector.extract_strided_slice %88 {offsets = [0, 5, 0], sizes = [1, 8, 128], strides = [1, 1, 1]} : vector<1x16x128xf32> to vector<1x8x128xf32>
    %95 = vector.extract_strided_slice %88 {offsets = [0, 6, 0], sizes = [1, 8, 128], strides = [1, 1, 1]} : vector<1x16x128xf32> to vector<1x8x128xf32>
    %96 = vector.extract_strided_slice %88 {offsets = [0, 7, 0], sizes = [1, 8, 128], strides = [1, 1, 1]} : vector<1x16x128xf32> to vector<1x8x128xf32>
    %97 = vector.extract_strided_slice %88 {offsets = [0, 8, 0], sizes = [1, 8, 128], strides = [1, 1, 1]} : vector<1x16x128xf32> to vector<1x8x128xf32>
    %98 = tpu.concatenate %89, %90, %91, %92, %93, %94, %95, %96, %97 in 2 : vector<1x8x128xf32>, vector<1x8x128xf32>, vector<1x8x128xf32>, vector<1x8x128xf32>, vector<1x8x128xf32>, vector<1x8x128xf32>, vector<1x8x128xf32>, vector<1x8x128xf32>, vector<1x8x128xf32> -> vector<1x8x1152xf32>
    %99 = arith.truncf %98 : vector<1x8x1152xf32> to vector<1x8x1152xbf16>
    %c0_44 = arith.constant 0 : index
    %c0_45 = arith.constant 0 : index
    %100 = vector.load %arg2[%c0_44, %c0_45] : memref<1152x128xbf16, #tpu.memory_space<vmem>>, vector<1152x128xbf16>
    %cst_46 = arith.constant dense<0.000000e+00> : vector<1x8x128xf32>
    %101 = tpu.matmul %99, %100, %cst_46 {dimension_numbers = #tpu.dot_dimension_numbers<[2], [0], [0, 1], [1], [0, 0, 0, 1, 1, 1], [], []>} : vector<1x8x1152xbf16>, vector<1152x128xbf16>, vector<1x8x128xf32> -> vector<1x8x128xf32>
    %102 = arith.addf %101, %4 : vector<1x8x128xf32>
    %cst_47 = arith.constant 0.000000e+00 : f32
    %103 = vector.broadcast %cst_47 : f32 to vector<1x8x128xf32>
    %104 = arith.maximumf %102, %103 : vector<1x8x128xf32>
    %105 = arith.addf %87, %104 : vector<1x8x128xf32>
    %106 = vector.shape_cast %105 : vector<1x8x128xf32> to vector<1x1x8x128xf32>
    %c0_48 = arith.constant 0 : index
    %107 = arith.index_cast %c4_i32 : i32 to index
    %c0_49 = arith.constant 0 : index
    %c0_50 = arith.constant 0 : index
    %108 = vector.load %arg6[%c0_48, %107, %c0_49, %c0_50] : memref<1x8x8x128xf32, #tpu.memory_space<vmem>>, vector<1x1x8x128xf32>
    tpu.vector_store %arg6[%c0_48, %107, %c0_49, %c0_50], %106 {strides = array<i32>} : memref<1x8x8x128xf32, #tpu.memory_space<vmem>>, vector<1x1x8x128xf32>,
    %c5_i32 = arith.constant 5 : i32
    %c0_51 = arith.constant 0 : index
    %109 = arith.index_cast %c5_i32 : i32 to index
    %c0_52 = arith.constant 0 : index
    %c0_53 = arith.constant 0 : index
    %110 = vector.load %arg1[%c0_51, %109, %c0_52, %c0_53] : memref<1x8x8x128xf32, #tpu.memory_space<vmem>>, vector<1x1x8x128xf32>
    %111 = vector.shape_cast %110 : vector<1x1x8x128xf32> to vector<1x8x128xf32>
    %112 = tpu.concatenate %0, %105, %0 in 1 : vector<1x4x128xf32>, vector<1x8x128xf32>, vector<1x4x128xf32> -> vector<1x16x128xf32>
    %113 = vector.extract_strided_slice %112 {offsets = [0, 0, 0], sizes = [1, 8, 128], strides = [1, 1, 1]} : vector<1x16x128xf32> to vector<1x8x128xf32>
    %114 = vector.extract_strided_slice %112 {offsets = [0, 1, 0], sizes = [1, 8, 128], strides = [1, 1, 1]} : vector<1x16x128xf32> to vector<1x8x128xf32>
    %115 = vector.extract_strided_slice %112 {offsets = [0, 2, 0], sizes = [1, 8, 128], strides = [1, 1, 1]} : vector<1x16x128xf32> to vector<1x8x128xf32>
    %116 = vector.extract_strided_slice %112 {offsets = [0, 3, 0], sizes = [1, 8, 128], strides = [1, 1, 1]} : vector<1x16x128xf32> to vector<1x8x128xf32>
    %117 = vector.extract_strided_slice %112 {offsets = [0, 4, 0], sizes = [1, 8, 128], strides = [1, 1, 1]} : vector<1x16x128xf32> to vector<1x8x128xf32>
    %118 = vector.extract_strided_slice %112 {offsets = [0, 5, 0], sizes = [1, 8, 128], strides = [1, 1, 1]} : vector<1x16x128xf32> to vector<1x8x128xf32>
    %119 = vector.extract_strided_slice %112 {offsets = [0, 6, 0], sizes = [1, 8, 128], strides = [1, 1, 1]} : vector<1x16x128xf32> to vector<1x8x128xf32>
    %120 = vector.extract_strided_slice %112 {offsets = [0, 7, 0], sizes = [1, 8, 128], strides = [1, 1, 1]} : vector<1x16x128xf32> to vector<1x8x128xf32>
    %121 = vector.extract_strided_slice %112 {offsets = [0, 8, 0], sizes = [1, 8, 128], strides = [1, 1, 1]} : vector<1x16x128xf32> to vector<1x8x128xf32>
    %122 = tpu.concatenate %113, %114, %115, %116, %117, %118, %119, %120, %121 in 2 : vector<1x8x128xf32>, vector<1x8x128xf32>, vector<1x8x128xf32>, vector<1x8x128xf32>, vector<1x8x128xf32>, vector<1x8x128xf32>, vector<1x8x128xf32>, vector<1x8x128xf32>, vector<1x8x128xf32> -> vector<1x8x1152xf32>
    %123 = arith.truncf %122 : vector<1x8x1152xf32> to vector<1x8x1152xbf16>
    %c0_54 = arith.constant 0 : index
    %c0_55 = arith.constant 0 : index
    %124 = vector.load %arg2[%c0_54, %c0_55] : memref<1152x128xbf16, #tpu.memory_space<vmem>>, vector<1152x128xbf16>
    %cst_56 = arith.constant dense<0.000000e+00> : vector<1x8x128xf32>
    %125 = tpu.matmul %123, %124, %cst_56 {dimension_numbers = #tpu.dot_dimension_numbers<[2], [0], [0, 1], [1], [0, 0, 0, 1, 1, 1], [], []>} : vector<1x8x1152xbf16>, vector<1152x128xbf16>, vector<1x8x128xf32> -> vector<1x8x128xf32>
    %126 = arith.addf %125, %4 : vector<1x8x128xf32>
    %cst_57 = arith.constant 0.000000e+00 : f32
    %127 = vector.broadcast %cst_57 : f32 to vector<1x8x128xf32>
    %128 = arith.maximumf %126, %127 : vector<1x8x128xf32>
    %129 = arith.addf %111, %128 : vector<1x8x128xf32>
    %130 = vector.shape_cast %129 : vector<1x8x128xf32> to vector<1x1x8x128xf32>
    %c0_58 = arith.constant 0 : index
    %131 = arith.index_cast %c5_i32 : i32 to index
    %c0_59 = arith.constant 0 : index
    %c0_60 = arith.constant 0 : index
    %132 = vector.load %arg6[%c0_58, %131, %c0_59, %c0_60] : memref<1x8x8x128xf32, #tpu.memory_space<vmem>>, vector<1x1x8x128xf32>
    tpu.vector_store %arg6[%c0_58, %131, %c0_59, %c0_60], %130 {strides = array<i32>} : memref<1x8x8x128xf32, #tpu.memory_space<vmem>>, vector<1x1x8x128xf32>,
    %c6_i32 = arith.constant 6 : i32
    %c0_61 = arith.constant 0 : index
    %133 = arith.index_cast %c6_i32 : i32 to index
    %c0_62 = arith.constant 0 : index
    %c0_63 = arith.constant 0 : index
    %134 = vector.load %arg1[%c0_61, %133, %c0_62, %c0_63] : memref<1x8x8x128xf32, #tpu.memory_space<vmem>>, vector<1x1x8x128xf32>
    %135 = vector.shape_cast %134 : vector<1x1x8x128xf32> to vector<1x8x128xf32>
    %136 = tpu.concatenate %0, %129, %0 in 1 : vector<1x4x128xf32>, vector<1x8x128xf32>, vector<1x4x128xf32> -> vector<1x16x128xf32>
    %137 = vector.extract_strided_slice %136 {offsets = [0, 0, 0], sizes = [1, 8, 128], strides = [1, 1, 1]} : vector<1x16x128xf32> to vector<1x8x128xf32>
    %138 = vector.extract_strided_slice %136 {offsets = [0, 1, 0], sizes = [1, 8, 128], strides = [1, 1, 1]} : vector<1x16x128xf32> to vector<1x8x128xf32>
    %139 = vector.extract_strided_slice %136 {offsets = [0, 2, 0], sizes = [1, 8, 128], strides = [1, 1, 1]} : vector<1x16x128xf32> to vector<1x8x128xf32>
    %140 = vector.extract_strided_slice %136 {offsets = [0, 3, 0], sizes = [1, 8, 128], strides = [1, 1, 1]} : vector<1x16x128xf32> to vector<1x8x128xf32>
    %141 = vector.extract_strided_slice %136 {offsets = [0, 4, 0], sizes = [1, 8, 128], strides = [1, 1, 1]} : vector<1x16x128xf32> to vector<1x8x128xf32>
    %142 = vector.extract_strided_slice %136 {offsets = [0, 5, 0], sizes = [1, 8, 128], strides = [1, 1, 1]} : vector<1x16x128xf32> to vector<1x8x128xf32>
    %143 = vector.extract_strided_slice %136 {offsets = [0, 6, 0], sizes = [1, 8, 128], strides = [1, 1, 1]} : vector<1x16x128xf32> to vector<1x8x128xf32>
    %144 = vector.extract_strided_slice %136 {offsets = [0, 7, 0], sizes = [1, 8, 128], strides = [1, 1, 1]} : vector<1x16x128xf32> to vector<1x8x128xf32>
    %145 = vector.extract_strided_slice %136 {offsets = [0, 8, 0], sizes = [1, 8, 128], strides = [1, 1, 1]} : vector<1x16x128xf32> to vector<1x8x128xf32>
    %146 = tpu.concatenate %137, %138, %139, %140, %141, %142, %143, %144, %145 in 2 : vector<1x8x128xf32>, vector<1x8x128xf32>, vector<1x8x128xf32>, vector<1x8x128xf32>, vector<1x8x128xf32>, vector<1x8x128xf32>, vector<1x8x128xf32>, vector<1x8x128xf32>, vector<1x8x128xf32> -> vector<1x8x1152xf32>
    %147 = arith.truncf %146 : vector<1x8x1152xf32> to vector<1x8x1152xbf16>
    %c0_64 = arith.constant 0 : index
    %c0_65 = arith.constant 0 : index
    %148 = vector.load %arg2[%c0_64, %c0_65] : memref<1152x128xbf16, #tpu.memory_space<vmem>>, vector<1152x128xbf16>
    %cst_66 = arith.constant dense<0.000000e+00> : vector<1x8x128xf32>
    %149 = tpu.matmul %147, %148, %cst_66 {dimension_numbers = #tpu.dot_dimension_numbers<[2], [0], [0, 1], [1], [0, 0, 0, 1, 1, 1], [], []>} : vector<1x8x1152xbf16>, vector<1152x128xbf16>, vector<1x8x128xf32> -> vector<1x8x128xf32>
    %150 = arith.addf %149, %4 : vector<1x8x128xf32>
    %cst_67 = arith.constant 0.000000e+00 : f32
    %151 = vector.broadcast %cst_67 : f32 to vector<1x8x128xf32>
    %152 = arith.maximumf %150, %151 : vector<1x8x128xf32>
    %153 = arith.addf %135, %152 : vector<1x8x128xf32>
    %154 = vector.shape_cast %153 : vector<1x8x128xf32> to vector<1x1x8x128xf32>
    %c0_68 = arith.constant 0 : index
    %155 = arith.index_cast %c6_i32 : i32 to index
    %c0_69 = arith.constant 0 : index
    %c0_70 = arith.constant 0 : index
    %156 = vector.load %arg6[%c0_68, %155, %c0_69, %c0_70] : memref<1x8x8x128xf32, #tpu.memory_space<vmem>>, vector<1x1x8x128xf32>
    tpu.vector_store %arg6[%c0_68, %155, %c0_69, %c0_70], %154 {strides = array<i32>} : memref<1x8x8x128xf32, #tpu.memory_space<vmem>>, vector<1x1x8x128xf32>,
    %c7_i32 = arith.constant 7 : i32
    %c0_71 = arith.constant 0 : index
    %157 = arith.index_cast %c7_i32 : i32 to index
    %c0_72 = arith.constant 0 : index
    %c0_73 = arith.constant 0 : index
    %158 = vector.load %arg1[%c0_71, %157, %c0_72, %c0_73] : memref<1x8x8x128xf32, #tpu.memory_space<vmem>>, vector<1x1x8x128xf32>
    %159 = vector.shape_cast %158 : vector<1x1x8x128xf32> to vector<1x8x128xf32>
    %160 = tpu.concatenate %0, %153, %0 in 1 : vector<1x4x128xf32>, vector<1x8x128xf32>, vector<1x4x128xf32> -> vector<1x16x128xf32>
    %161 = vector.extract_strided_slice %160 {offsets = [0, 0, 0], sizes = [1, 8, 128], strides = [1, 1, 1]} : vector<1x16x128xf32> to vector<1x8x128xf32>
    %162 = vector.extract_strided_slice %160 {offsets = [0, 1, 0], sizes = [1, 8, 128], strides = [1, 1, 1]} : vector<1x16x128xf32> to vector<1x8x128xf32>
    %163 = vector.extract_strided_slice %160 {offsets = [0, 2, 0], sizes = [1, 8, 128], strides = [1, 1, 1]} : vector<1x16x128xf32> to vector<1x8x128xf32>
    %164 = vector.extract_strided_slice %160 {offsets = [0, 3, 0], sizes = [1, 8, 128], strides = [1, 1, 1]} : vector<1x16x128xf32> to vector<1x8x128xf32>
    %165 = vector.extract_strided_slice %160 {offsets = [0, 4, 0], sizes = [1, 8, 128], strides = [1, 1, 1]} : vector<1x16x128xf32> to vector<1x8x128xf32>
    %166 = vector.extract_strided_slice %160 {offsets = [0, 5, 0], sizes = [1, 8, 128], strides = [1, 1, 1]} : vector<1x16x128xf32> to vector<1x8x128xf32>
    %167 = vector.extract_strided_slice %160 {offsets = [0, 6, 0], sizes = [1, 8, 128], strides = [1, 1, 1]} : vector<1x16x128xf32> to vector<1x8x128xf32>
    %168 = vector.extract_strided_slice %160 {offsets = [0, 7, 0], sizes = [1, 8, 128], strides = [1, 1, 1]} : vector<1x16x128xf32> to vector<1x8x128xf32>
    %169 = vector.extract_strided_slice %160 {offsets = [0, 8, 0], sizes = [1, 8, 128], strides = [1, 1, 1]} : vector<1x16x128xf32> to vector<1x8x128xf32>
    %170 = tpu.concatenate %161, %162, %163, %164, %165, %166, %167, %168, %169 in 2 : vector<1x8x128xf32>, vector<1x8x128xf32>, vector<1x8x128xf32>, vector<1x8x128xf32>, vector<1x8x128xf32>, vector<1x8x128xf32>, vector<1x8x128xf32>, vector<1x8x128xf32>, vector<1x8x128xf32> -> vector<1x8x1152xf32>
    %171 = arith.truncf %170 : vector<1x8x1152xf32> to vector<1x8x1152xbf16>
    %c0_74 = arith.constant 0 : index
    %c0_75 = arith.constant 0 : index
    %172 = vector.load %arg2[%c0_74, %c0_75] : memref<1152x128xbf16, #tpu.memory_space<vmem>>, vector<1152x128xbf16>
    %cst_76 = arith.constant dense<0.000000e+00> : vector<1x8x128xf32>
    %173 = tpu.matmul %171, %172, %cst_76 {dimension_numbers = #tpu.dot_dimension_numbers<[2], [0], [0, 1], [1], [0, 0, 0, 1, 1, 1], [], []>} : vector<1x8x1152xbf16>, vector<1152x128xbf16>, vector<1x8x128xf32> -> vector<1x8x128xf32>
    %174 = arith.addf %173, %4 : vector<1x8x128xf32>
    %cst_77 = arith.constant 0.000000e+00 : f32
    %175 = vector.broadcast %cst_77 : f32 to vector<1x8x128xf32>
    %176 = arith.maximumf %174, %175 : vector<1x8x128xf32>
    %177 = arith.addf %159, %176 : vector<1x8x128xf32>
    %178 = vector.shape_cast %177 : vector<1x8x128xf32> to vector<1x1x8x128xf32>
    %c0_78 = arith.constant 0 : index
    %179 = arith.index_cast %c7_i32 : i32 to index
    %c0_79 = arith.constant 0 : index
    %c0_80 = arith.constant 0 : index
    %180 = vector.load %arg6[%c0_78, %179, %c0_79, %c0_80] : memref<1x8x8x128xf32, #tpu.memory_space<vmem>>, vector<1x1x8x128xf32>
    tpu.vector_store %arg6[%c0_78, %179, %c0_79, %c0_80], %178 {strides = array<i32>} : memref<1x8x8x128xf32, #tpu.memory_space<vmem>>, vector<1x1x8x128xf32>,
    %c7_i32_81 = arith.constant 7 : i32
    %c0_i32 = arith.constant 0 : i32
    %c6_i32_82 = arith.constant 6 : i32
    %181 = arith.subi %c6_i32_82, %c0_i32 : i32
    %c0_83 = arith.constant 0 : index
    %182 = arith.index_cast %181 : i32 to index
    %c0_84 = arith.constant 0 : index
    %c0_85 = arith.constant 0 : index
    %183 = vector.load %arg6[%c0_83, %182, %c0_84, %c0_85] : memref<1x8x8x128xf32, #tpu.memory_space<vmem>>, vector<1x1x8x128xf32>
    %184 = vector.shape_cast %183 : vector<1x1x8x128xf32> to vector<1x8x128xf32>
    %185 = tpu.concatenate %0, %177, %0 in 1 : vector<1x4x128xf32>, vector<1x8x128xf32>, vector<1x4x128xf32> -> vector<1x16x128xf32>
    %186 = vector.extract_strided_slice %185 {offsets = [0, 0, 0], sizes = [1, 8, 128], strides = [1, 1, 1]} : vector<1x16x128xf32> to vector<1x8x128xf32>
    %187 = vector.extract_strided_slice %185 {offsets = [0, 1, 0], sizes = [1, 8, 128], strides = [1, 1, 1]} : vector<1x16x128xf32> to vector<1x8x128xf32>
    %188 = vector.extract_strided_slice %185 {offsets = [0, 2, 0], sizes = [1, 8, 128], strides = [1, 1, 1]} : vector<1x16x128xf32> to vector<1x8x128xf32>
    %189 = vector.extract_strided_slice %185 {offsets = [0, 3, 0], sizes = [1, 8, 128], strides = [1, 1, 1]} : vector<1x16x128xf32> to vector<1x8x128xf32>
    %190 = vector.extract_strided_slice %185 {offsets = [0, 4, 0], sizes = [1, 8, 128], strides = [1, 1, 1]} : vector<1x16x128xf32> to vector<1x8x128xf32>
    %191 = vector.extract_strided_slice %185 {offsets = [0, 5, 0], sizes = [1, 8, 128], strides = [1, 1, 1]} : vector<1x16x128xf32> to vector<1x8x128xf32>
    %192 = vector.extract_strided_slice %185 {offsets = [0, 6, 0], sizes = [1, 8, 128], strides = [1, 1, 1]} : vector<1x16x128xf32> to vector<1x8x128xf32>
    %193 = vector.extract_strided_slice %185 {offsets = [0, 7, 0], sizes = [1, 8, 128], strides = [1, 1, 1]} : vector<1x16x128xf32> to vector<1x8x128xf32>
    %194 = vector.extract_strided_slice %185 {offsets = [0, 8, 0], sizes = [1, 8, 128], strides = [1, 1, 1]} : vector<1x16x128xf32> to vector<1x8x128xf32>
    %195 = tpu.concatenate %186, %187, %188, %189, %190, %191, %192, %193, %194 in 2 : vector<1x8x128xf32>, vector<1x8x128xf32>, vector<1x8x128xf32>, vector<1x8x128xf32>, vector<1x8x128xf32>, vector<1x8x128xf32>, vector<1x8x128xf32>, vector<1x8x128xf32>, vector<1x8x128xf32> -> vector<1x8x1152xf32>
    %196 = arith.truncf %195 : vector<1x8x1152xf32> to vector<1x8x1152xbf16>
    %c0_86 = arith.constant 0 : index
    %c0_87 = arith.constant 0 : index
    %197 = vector.load %arg4[%c0_86, %c0_87] : memref<1152x128xbf16, #tpu.memory_space<vmem>>, vector<1152x128xbf16>
    %cst_88 = arith.constant dense<0.000000e+00> : vector<1x8x128xf32>
    %198 = tpu.matmul %196, %197, %cst_88 {dimension_numbers = #tpu.dot_dimension_numbers<[2], [0], [0, 1], [1], [0, 0, 0, 1, 1, 1], [], []>} : vector<1x8x1152xbf16>, vector<1152x128xbf16>, vector<1x8x128xf32> -> vector<1x8x128xf32>
    %199 = arith.addf %198, %8 : vector<1x8x128xf32>
    %cst_89 = arith.constant 0.000000e+00 : f32
    %200 = vector.broadcast %cst_89 : f32 to vector<1x8x128xf32>
    %201 = arith.maximumf %199, %200 : vector<1x8x128xf32>
    %202 = arith.addf %184, %201 : vector<1x8x128xf32>
    %203 = vector.shape_cast %202 : vector<1x8x128xf32> to vector<1x1x8x128xf32>
    %c0_90 = arith.constant 0 : index
    %204 = arith.index_cast %181 : i32 to index
    %c0_91 = arith.constant 0 : index
    %c0_92 = arith.constant 0 : index
    %205 = vector.load %arg6[%c0_90, %204, %c0_91, %c0_92] : memref<1x8x8x128xf32, #tpu.memory_space<vmem>>, vector<1x1x8x128xf32>
    tpu.vector_store %arg6[%c0_90, %204, %c0_91, %c0_92], %203 {strides = array<i32>} : memref<1x8x8x128xf32, #tpu.memory_space<vmem>>, vector<1x1x8x128xf32>,
    %c1_i32_93 = arith.constant 1 : i32
    %c6_i32_94 = arith.constant 6 : i32
    %206 = arith.subi %c6_i32_94, %c1_i32_93 : i32
    %c0_95 = arith.constant 0 : index
    %207 = arith.index_cast %206 : i32 to index
    %c0_96 = arith.constant 0 : index
    %c0_97 = arith.constant 0 : index
    %208 = vector.load %arg6[%c0_95, %207, %c0_96, %c0_97] : memref<1x8x8x128xf32, #tpu.memory_space<vmem>>, vector<1x1x8x128xf32>
    %209 = vector.shape_cast %208 : vector<1x1x8x128xf32> to vector<1x8x128xf32>
    %210 = tpu.concatenate %0, %202, %0 in 1 : vector<1x4x128xf32>, vector<1x8x128xf32>, vector<1x4x128xf32> -> vector<1x16x128xf32>
    %211 = vector.extract_strided_slice %210 {offsets = [0, 0, 0], sizes = [1, 8, 128], strides = [1, 1, 1]} : vector<1x16x128xf32> to vector<1x8x128xf32>
    %212 = vector.extract_strided_slice %210 {offsets = [0, 1, 0], sizes = [1, 8, 128], strides = [1, 1, 1]} : vector<1x16x128xf32> to vector<1x8x128xf32>
    %213 = vector.extract_strided_slice %210 {offsets = [0, 2, 0], sizes = [1, 8, 128], strides = [1, 1, 1]} : vector<1x16x128xf32> to vector<1x8x128xf32>
    %214 = vector.extract_strided_slice %210 {offsets = [0, 3, 0], sizes = [1, 8, 128], strides = [1, 1, 1]} : vector<1x16x128xf32> to vector<1x8x128xf32>
    %215 = vector.extract_strided_slice %210 {offsets = [0, 4, 0], sizes = [1, 8, 128], strides = [1, 1, 1]} : vector<1x16x128xf32> to vector<1x8x128xf32>
    %216 = vector.extract_strided_slice %210 {offsets = [0, 5, 0], sizes = [1, 8, 128], strides = [1, 1, 1]} : vector<1x16x128xf32> to vector<1x8x128xf32>
    %217 = vector.extract_strided_slice %210 {offsets = [0, 6, 0], sizes = [1, 8, 128], strides = [1, 1, 1]} : vector<1x16x128xf32> to vector<1x8x128xf32>
    %218 = vector.extract_strided_slice %210 {offsets = [0, 7, 0], sizes = [1, 8, 128], strides = [1, 1, 1]} : vector<1x16x128xf32> to vector<1x8x128xf32>
    %219 = vector.extract_strided_slice %210 {offsets = [0, 8, 0], sizes = [1, 8, 128], strides = [1, 1, 1]} : vector<1x16x128xf32> to vector<1x8x128xf32>
    %220 = tpu.concatenate %211, %212, %213, %214, %215, %216, %217, %218, %219 in 2 : vector<1x8x128xf32>, vector<1x8x128xf32>, vector<1x8x128xf32>, vector<1x8x128xf32>, vector<1x8x128xf32>, vector<1x8x128xf32>, vector<1x8x128xf32>, vector<1x8x128xf32>, vector<1x8x128xf32> -> vector<1x8x1152xf32>
    %221 = arith.truncf %220 : vector<1x8x1152xf32> to vector<1x8x1152xbf16>
    %c0_98 = arith.constant 0 : index
    %c0_99 = arith.constant 0 : index
    %222 = vector.load %arg4[%c0_98, %c0_99] : memref<1152x128xbf16, #tpu.memory_space<vmem>>, vector<1152x128xbf16>
    %cst_100 = arith.constant dense<0.000000e+00> : vector<1x8x128xf32>
    %223 = tpu.matmul %221, %222, %cst_100 {dimension_numbers = #tpu.dot_dimension_numbers<[2], [0], [0, 1], [1], [0, 0, 0, 1, 1, 1], [], []>} : vector<1x8x1152xbf16>, vector<1152x128xbf16>, vector<1x8x128xf32> -> vector<1x8x128xf32>
    %224 = arith.addf %223, %8 : vector<1x8x128xf32>
    %cst_101 = arith.constant 0.000000e+00 : f32
    %225 = vector.broadcast %cst_101 : f32 to vector<1x8x128xf32>
    %226 = arith.maximumf %224, %225 : vector<1x8x128xf32>
    %227 = arith.addf %209, %226 : vector<1x8x128xf32>
    %228 = vector.shape_cast %227 : vector<1x8x128xf32> to vector<1x1x8x128xf32>
    %c0_102 = arith.constant 0 : index
    %229 = arith.index_cast %206 : i32 to index
    %c0_103 = arith.constant 0 : index
    %c0_104 = arith.constant 0 : index
    %230 = vector.load %arg6[%c0_102, %229, %c0_103, %c0_104] : memref<1x8x8x128xf32, #tpu.memory_space<vmem>>, vector<1x1x8x128xf32>
    tpu.vector_store %arg6[%c0_102, %229, %c0_103, %c0_104], %228 {strides = array<i32>} : memref<1x8x8x128xf32, #tpu.memory_space<vmem>>, vector<1x1x8x128xf32>,
    %c2_i32_105 = arith.constant 2 : i32
    %c6_i32_106 = arith.constant 6 : i32
    %231 = arith.subi %c6_i32_106, %c2_i32_105 : i32
    %c0_107 = arith.constant 0 : index
    %232 = arith.index_cast %231 : i32 to index
    %c0_108 = arith.constant 0 : index
    %c0_109 = arith.constant 0 : index
    %233 = vector.load %arg6[%c0_107, %232, %c0_108, %c0_109] : memref<1x8x8x128xf32, #tpu.memory_space<vmem>>, vector<1x1x8x128xf32>
    %234 = vector.shape_cast %233 : vector<1x1x8x128xf32> to vector<1x8x128xf32>
    %235 = tpu.concatenate %0, %227, %0 in 1 : vector<1x4x128xf32>, vector<1x8x128xf32>, vector<1x4x128xf32> -> vector<1x16x128xf32>
    %236 = vector.extract_strided_slice %235 {offsets = [0, 0, 0], sizes = [1, 8, 128], strides = [1, 1, 1]} : vector<1x16x128xf32> to vector<1x8x128xf32>
    %237 = vector.extract_strided_slice %235 {offsets = [0, 1, 0], sizes = [1, 8, 128], strides = [1, 1, 1]} : vector<1x16x128xf32> to vector<1x8x128xf32>
    %238 = vector.extract_strided_slice %235 {offsets = [0, 2, 0], sizes = [1, 8, 128], strides = [1, 1, 1]} : vector<1x16x128xf32> to vector<1x8x128xf32>
    %239 = vector.extract_strided_slice %235 {offsets = [0, 3, 0], sizes = [1, 8, 128], strides = [1, 1, 1]} : vector<1x16x128xf32> to vector<1x8x128xf32>
    %240 = vector.extract_strided_slice %235 {offsets = [0, 4, 0], sizes = [1, 8, 128], strides = [1, 1, 1]} : vector<1x16x128xf32> to vector<1x8x128xf32>
    %241 = vector.extract_strided_slice %235 {offsets = [0, 5, 0], sizes = [1, 8, 128], strides = [1, 1, 1]} : vector<1x16x128xf32> to vector<1x8x128xf32>
    %242 = vector.extract_strided_slice %235 {offsets = [0, 6, 0], sizes = [1, 8, 128], strides = [1, 1, 1]} : vector<1x16x128xf32> to vector<1x8x128xf32>
    %243 = vector.extract_strided_slice %235 {offsets = [0, 7, 0], sizes = [1, 8, 128], strides = [1, 1, 1]} : vector<1x16x128xf32> to vector<1x8x128xf32>
    %244 = vector.extract_strided_slice %235 {offsets = [0, 8, 0], sizes = [1, 8, 128], strides = [1, 1, 1]} : vector<1x16x128xf32> to vector<1x8x128xf32>
    %245 = tpu.concatenate %236, %237, %238, %239, %240, %241, %242, %243, %244 in 2 : vector<1x8x128xf32>, vector<1x8x128xf32>, vector<1x8x128xf32>, vector<1x8x128xf32>, vector<1x8x128xf32>, vector<1x8x128xf32>, vector<1x8x128xf32>, vector<1x8x128xf32>, vector<1x8x128xf32> -> vector<1x8x1152xf32>
    %246 = arith.truncf %245 : vector<1x8x1152xf32> to vector<1x8x1152xbf16>
    %c0_110 = arith.constant 0 : index
    %c0_111 = arith.constant 0 : index
    %247 = vector.load %arg4[%c0_110, %c0_111] : memref<1152x128xbf16, #tpu.memory_space<vmem>>, vector<1152x128xbf16>
    %cst_112 = arith.constant dense<0.000000e+00> : vector<1x8x128xf32>
    %248 = tpu.matmul %246, %247, %cst_112 {dimension_numbers = #tpu.dot_dimension_numbers<[2], [0], [0, 1], [1], [0, 0, 0, 1, 1, 1], [], []>} : vector<1x8x1152xbf16>, vector<1152x128xbf16>, vector<1x8x128xf32> -> vector<1x8x128xf32>
    %249 = arith.addf %248, %8 : vector<1x8x128xf32>
    %cst_113 = arith.constant 0.000000e+00 : f32
    %250 = vector.broadcast %cst_113 : f32 to vector<1x8x128xf32>
    %251 = arith.maximumf %249, %250 : vector<1x8x128xf32>
    %252 = arith.addf %234, %251 : vector<1x8x128xf32>
    %253 = vector.shape_cast %252 : vector<1x8x128xf32> to vector<1x1x8x128xf32>
    %c0_114 = arith.constant 0 : index
    %254 = arith.index_cast %231 : i32 to index
    %c0_115 = arith.constant 0 : index
    %c0_116 = arith.constant 0 : index
    %255 = vector.load %arg6[%c0_114, %254, %c0_115, %c0_116] : memref<1x8x8x128xf32, #tpu.memory_space<vmem>>, vector<1x1x8x128xf32>
    tpu.vector_store %arg6[%c0_114, %254, %c0_115, %c0_116], %253 {strides = array<i32>} : memref<1x8x8x128xf32, #tpu.memory_space<vmem>>, vector<1x1x8x128xf32>,
    %c3_i32_117 = arith.constant 3 : i32
    %c6_i32_118 = arith.constant 6 : i32
    %256 = arith.subi %c6_i32_118, %c3_i32_117 : i32
    %c0_119 = arith.constant 0 : index
    %257 = arith.index_cast %256 : i32 to index
    %c0_120 = arith.constant 0 : index
    %c0_121 = arith.constant 0 : index
    %258 = vector.load %arg6[%c0_119, %257, %c0_120, %c0_121] : memref<1x8x8x128xf32, #tpu.memory_space<vmem>>, vector<1x1x8x128xf32>
    %259 = vector.shape_cast %258 : vector<1x1x8x128xf32> to vector<1x8x128xf32>
    %260 = tpu.concatenate %0, %252, %0 in 1 : vector<1x4x128xf32>, vector<1x8x128xf32>, vector<1x4x128xf32> -> vector<1x16x128xf32>
    %261 = vector.extract_strided_slice %260 {offsets = [0, 0, 0], sizes = [1, 8, 128], strides = [1, 1, 1]} : vector<1x16x128xf32> to vector<1x8x128xf32>
    %262 = vector.extract_strided_slice %260 {offsets = [0, 1, 0], sizes = [1, 8, 128], strides = [1, 1, 1]} : vector<1x16x128xf32> to vector<1x8x128xf32>
    %263 = vector.extract_strided_slice %260 {offsets = [0, 2, 0], sizes = [1, 8, 128], strides = [1, 1, 1]} : vector<1x16x128xf32> to vector<1x8x128xf32>
    %264 = vector.extract_strided_slice %260 {offsets = [0, 3, 0], sizes = [1, 8, 128], strides = [1, 1, 1]} : vector<1x16x128xf32> to vector<1x8x128xf32>
    %265 = vector.extract_strided_slice %260 {offsets = [0, 4, 0], sizes = [1, 8, 128], strides = [1, 1, 1]} : vector<1x16x128xf32> to vector<1x8x128xf32>
    %266 = vector.extract_strided_slice %260 {offsets = [0, 5, 0], sizes = [1, 8, 128], strides = [1, 1, 1]} : vector<1x16x128xf32> to vector<1x8x128xf32>
    %267 = vector.extract_strided_slice %260 {offsets = [0, 6, 0], sizes = [1, 8, 128], strides = [1, 1, 1]} : vector<1x16x128xf32> to vector<1x8x128xf32>
    %268 = vector.extract_strided_slice %260 {offsets = [0, 7, 0], sizes = [1, 8, 128], strides = [1, 1, 1]} : vector<1x16x128xf32> to vector<1x8x128xf32>
    %269 = vector.extract_strided_slice %260 {offsets = [0, 8, 0], sizes = [1, 8, 128], strides = [1, 1, 1]} : vector<1x16x128xf32> to vector<1x8x128xf32>
    %270 = tpu.concatenate %261, %262, %263, %264, %265, %266, %267, %268, %269 in 2 : vector<1x8x128xf32>, vector<1x8x128xf32>, vector<1x8x128xf32>, vector<1x8x128xf32>, vector<1x8x128xf32>, vector<1x8x128xf32>, vector<1x8x128xf32>, vector<1x8x128xf32>, vector<1x8x128xf32> -> vector<1x8x1152xf32>
    %271 = arith.truncf %270 : vector<1x8x1152xf32> to vector<1x8x1152xbf16>
    %c0_122 = arith.constant 0 : index
    %c0_123 = arith.constant 0 : index
    %272 = vector.load %arg4[%c0_122, %c0_123] : memref<1152x128xbf16, #tpu.memory_space<vmem>>, vector<1152x128xbf16>
    %cst_124 = arith.constant dense<0.000000e+00> : vector<1x8x128xf32>
    %273 = tpu.matmul %271, %272, %cst_124 {dimension_numbers = #tpu.dot_dimension_numbers<[2], [0], [0, 1], [1], [0, 0, 0, 1, 1, 1], [], []>} : vector<1x8x1152xbf16>, vector<1152x128xbf16>, vector<1x8x128xf32> -> vector<1x8x128xf32>
    %274 = arith.addf %273, %8 : vector<1x8x128xf32>
    %cst_125 = arith.constant 0.000000e+00 : f32
    %275 = vector.broadcast %cst_125 : f32 to vector<1x8x128xf32>
    %276 = arith.maximumf %274, %275 : vector<1x8x128xf32>
    %277 = arith.addf %259, %276 : vector<1x8x128xf32>
    %278 = vector.shape_cast %277 : vector<1x8x128xf32> to vector<1x1x8x128xf32>
    %c0_126 = arith.constant 0 : index
    %279 = arith.index_cast %256 : i32 to index
    %c0_127 = arith.constant 0 : index
    %c0_128 = arith.constant 0 : index
    %280 = vector.load %arg6[%c0_126, %279, %c0_127, %c0_128] : memref<1x8x8x128xf32, #tpu.memory_space<vmem>>, vector<1x1x8x128xf32>
    tpu.vector_store %arg6[%c0_126, %279, %c0_127, %c0_128], %278 {strides = array<i32>} : memref<1x8x8x128xf32, #tpu.memory_space<vmem>>, vector<1x1x8x128xf32>,
    %c4_i32_129 = arith.constant 4 : i32
    %c6_i32_130 = arith.constant 6 : i32
    %281 = arith.subi %c6_i32_130, %c4_i32_129 : i32
    %c0_131 = arith.constant 0 : index
    %282 = arith.index_cast %281 : i32 to index
    %c0_132 = arith.constant 0 : index
    %c0_133 = arith.constant 0 : index
    %283 = vector.load %arg6[%c0_131, %282, %c0_132, %c0_133] : memref<1x8x8x128xf32, #tpu.memory_space<vmem>>, vector<1x1x8x128xf32>
    %284 = vector.shape_cast %283 : vector<1x1x8x128xf32> to vector<1x8x128xf32>
    %285 = tpu.concatenate %0, %277, %0 in 1 : vector<1x4x128xf32>, vector<1x8x128xf32>, vector<1x4x128xf32> -> vector<1x16x128xf32>
    %286 = vector.extract_strided_slice %285 {offsets = [0, 0, 0], sizes = [1, 8, 128], strides = [1, 1, 1]} : vector<1x16x128xf32> to vector<1x8x128xf32>
    %287 = vector.extract_strided_slice %285 {offsets = [0, 1, 0], sizes = [1, 8, 128], strides = [1, 1, 1]} : vector<1x16x128xf32> to vector<1x8x128xf32>
    %288 = vector.extract_strided_slice %285 {offsets = [0, 2, 0], sizes = [1, 8, 128], strides = [1, 1, 1]} : vector<1x16x128xf32> to vector<1x8x128xf32>
    %289 = vector.extract_strided_slice %285 {offsets = [0, 3, 0], sizes = [1, 8, 128], strides = [1, 1, 1]} : vector<1x16x128xf32> to vector<1x8x128xf32>
    %290 = vector.extract_strided_slice %285 {offsets = [0, 4, 0], sizes = [1, 8, 128], strides = [1, 1, 1]} : vector<1x16x128xf32> to vector<1x8x128xf32>
    %291 = vector.extract_strided_slice %285 {offsets = [0, 5, 0], sizes = [1, 8, 128], strides = [1, 1, 1]} : vector<1x16x128xf32> to vector<1x8x128xf32>
    %292 = vector.extract_strided_slice %285 {offsets = [0, 6, 0], sizes = [1, 8, 128], strides = [1, 1, 1]} : vector<1x16x128xf32> to vector<1x8x128xf32>
    %293 = vector.extract_strided_slice %285 {offsets = [0, 7, 0], sizes = [1, 8, 128], strides = [1, 1, 1]} : vector<1x16x128xf32> to vector<1x8x128xf32>
    %294 = vector.extract_strided_slice %285 {offsets = [0, 8, 0], sizes = [1, 8, 128], strides = [1, 1, 1]} : vector<1x16x128xf32> to vector<1x8x128xf32>
    %295 = tpu.concatenate %286, %287, %288, %289, %290, %291, %292, %293, %294 in 2 : vector<1x8x128xf32>, vector<1x8x128xf32>, vector<1x8x128xf32>, vector<1x8x128xf32>, vector<1x8x128xf32>, vector<1x8x128xf32>, vector<1x8x128xf32>, vector<1x8x128xf32>, vector<1x8x128xf32> -> vector<1x8x1152xf32>
    %296 = arith.truncf %295 : vector<1x8x1152xf32> to vector<1x8x1152xbf16>
    %c0_134 = arith.constant 0 : index
    %c0_135 = arith.constant 0 : index
    %297 = vector.load %arg4[%c0_134, %c0_135] : memref<1152x128xbf16, #tpu.memory_space<vmem>>, vector<1152x128xbf16>
    %cst_136 = arith.constant dense<0.000000e+00> : vector<1x8x128xf32>
    %298 = tpu.matmul %296, %297, %cst_136 {dimension_numbers = #tpu.dot_dimension_numbers<[2], [0], [0, 1], [1], [0, 0, 0, 1, 1, 1], [], []>} : vector<1x8x1152xbf16>, vector<1152x128xbf16>, vector<1x8x128xf32> -> vector<1x8x128xf32>
    %299 = arith.addf %298, %8 : vector<1x8x128xf32>
    %cst_137 = arith.constant 0.000000e+00 : f32
    %300 = vector.broadcast %cst_137 : f32 to vector<1x8x128xf32>
    %301 = arith.maximumf %299, %300 : vector<1x8x128xf32>
    %302 = arith.addf %284, %301 : vector<1x8x128xf32>
    %303 = vector.shape_cast %302 : vector<1x8x128xf32> to vector<1x1x8x128xf32>
    %c0_138 = arith.constant 0 : index
    %304 = arith.index_cast %281 : i32 to index
    %c0_139 = arith.constant 0 : index
    %c0_140 = arith.constant 0 : index
    %305 = vector.load %arg6[%c0_138, %304, %c0_139, %c0_140] : memref<1x8x8x128xf32, #tpu.memory_space<vmem>>, vector<1x1x8x128xf32>
    tpu.vector_store %arg6[%c0_138, %304, %c0_139, %c0_140], %303 {strides = array<i32>} : memref<1x8x8x128xf32, #tpu.memory_space<vmem>>, vector<1x1x8x128xf32>,
    %c5_i32_141 = arith.constant 5 : i32
    %c6_i32_142 = arith.constant 6 : i32
    %306 = arith.subi %c6_i32_142, %c5_i32_141 : i32
    %c0_143 = arith.constant 0 : index
    %307 = arith.index_cast %306 : i32 to index
    %c0_144 = arith.constant 0 : index
    %c0_145 = arith.constant 0 : index
    %308 = vector.load %arg6[%c0_143, %307, %c0_144, %c0_145] : memref<1x8x8x128xf32, #tpu.memory_space<vmem>>, vector<1x1x8x128xf32>
    %309 = vector.shape_cast %308 : vector<1x1x8x128xf32> to vector<1x8x128xf32>
    %310 = tpu.concatenate %0, %302, %0 in 1 : vector<1x4x128xf32>, vector<1x8x128xf32>, vector<1x4x128xf32> -> vector<1x16x128xf32>
    %311 = vector.extract_strided_slice %310 {offsets = [0, 0, 0], sizes = [1, 8, 128], strides = [1, 1, 1]} : vector<1x16x128xf32> to vector<1x8x128xf32>
    %312 = vector.extract_strided_slice %310 {offsets = [0, 1, 0], sizes = [1, 8, 128], strides = [1, 1, 1]} : vector<1x16x128xf32> to vector<1x8x128xf32>
    %313 = vector.extract_strided_slice %310 {offsets = [0, 2, 0], sizes = [1, 8, 128], strides = [1, 1, 1]} : vector<1x16x128xf32> to vector<1x8x128xf32>
    %314 = vector.extract_strided_slice %310 {offsets = [0, 3, 0], sizes = [1, 8, 128], strides = [1, 1, 1]} : vector<1x16x128xf32> to vector<1x8x128xf32>
    %315 = vector.extract_strided_slice %310 {offsets = [0, 4, 0], sizes = [1, 8, 128], strides = [1, 1, 1]} : vector<1x16x128xf32> to vector<1x8x128xf32>
    %316 = vector.extract_strided_slice %310 {offsets = [0, 5, 0], sizes = [1, 8, 128], strides = [1, 1, 1]} : vector<1x16x128xf32> to vector<1x8x128xf32>
    %317 = vector.extract_strided_slice %310 {offsets = [0, 6, 0], sizes = [1, 8, 128], strides = [1, 1, 1]} : vector<1x16x128xf32> to vector<1x8x128xf32>
    %318 = vector.extract_strided_slice %310 {offsets = [0, 7, 0], sizes = [1, 8, 128], strides = [1, 1, 1]} : vector<1x16x128xf32> to vector<1x8x128xf32>
    %319 = vector.extract_strided_slice %310 {offsets = [0, 8, 0], sizes = [1, 8, 128], strides = [1, 1, 1]} : vector<1x16x128xf32> to vector<1x8x128xf32>
    %320 = tpu.concatenate %311, %312, %313, %314, %315, %316, %317, %318, %319 in 2 : vector<1x8x128xf32>, vector<1x8x128xf32>, vector<1x8x128xf32>, vector<1x8x128xf32>, vector<1x8x128xf32>, vector<1x8x128xf32>, vector<1x8x128xf32>, vector<1x8x128xf32>, vector<1x8x128xf32> -> vector<1x8x1152xf32>
    %321 = arith.truncf %320 : vector<1x8x1152xf32> to vector<1x8x1152xbf16>
    %c0_146 = arith.constant 0 : index
    %c0_147 = arith.constant 0 : index
    %322 = vector.load %arg4[%c0_146, %c0_147] : memref<1152x128xbf16, #tpu.memory_space<vmem>>, vector<1152x128xbf16>
    %cst_148 = arith.constant dense<0.000000e+00> : vector<1x8x128xf32>
    %323 = tpu.matmul %321, %322, %cst_148 {dimension_numbers = #tpu.dot_dimension_numbers<[2], [0], [0, 1], [1], [0, 0, 0, 1, 1, 1], [], []>} : vector<1x8x1152xbf16>, vector<1152x128xbf16>, vector<1x8x128xf32> -> vector<1x8x128xf32>
    %324 = arith.addf %323, %8 : vector<1x8x128xf32>
    %cst_149 = arith.constant 0.000000e+00 : f32
    %325 = vector.broadcast %cst_149 : f32 to vector<1x8x128xf32>
    %326 = arith.maximumf %324, %325 : vector<1x8x128xf32>
    %327 = arith.addf %309, %326 : vector<1x8x128xf32>
    %328 = vector.shape_cast %327 : vector<1x8x128xf32> to vector<1x1x8x128xf32>
    %c0_150 = arith.constant 0 : index
    %329 = arith.index_cast %306 : i32 to index
    %c0_151 = arith.constant 0 : index
    %c0_152 = arith.constant 0 : index
    %330 = vector.load %arg6[%c0_150, %329, %c0_151, %c0_152] : memref<1x8x8x128xf32, #tpu.memory_space<vmem>>, vector<1x1x8x128xf32>
    tpu.vector_store %arg6[%c0_150, %329, %c0_151, %c0_152], %328 {strides = array<i32>} : memref<1x8x8x128xf32, #tpu.memory_space<vmem>>, vector<1x1x8x128xf32>,
    %c6_i32_153 = arith.constant 6 : i32
    %c6_i32_154 = arith.constant 6 : i32
    %331 = arith.subi %c6_i32_154, %c6_i32_153 : i32
    %c0_155 = arith.constant 0 : index
    %332 = arith.index_cast %331 : i32 to index
    %c0_156 = arith.constant 0 : index
    %c0_157 = arith.constant 0 : index
    %333 = vector.load %arg6[%c0_155, %332, %c0_156, %c0_157] : memref<1x8x8x128xf32, #tpu.memory_space<vmem>>, vector<1x1x8x128xf32>
    %334 = vector.shape_cast %333 : vector<1x1x8x128xf32> to vector<1x8x128xf32>
    %335 = tpu.concatenate %0, %327, %0 in 1 : vector<1x4x128xf32>, vector<1x8x128xf32>, vector<1x4x128xf32> -> vector<1x16x128xf32>
    %336 = vector.extract_strided_slice %335 {offsets = [0, 0, 0], sizes = [1, 8, 128], strides = [1, 1, 1]} : vector<1x16x128xf32> to vector<1x8x128xf32>
    %337 = vector.extract_strided_slice %335 {offsets = [0, 1, 0], sizes = [1, 8, 128], strides = [1, 1, 1]} : vector<1x16x128xf32> to vector<1x8x128xf32>
    %338 = vector.extract_strided_slice %335 {offsets = [0, 2, 0], sizes = [1, 8, 128], strides = [1, 1, 1]} : vector<1x16x128xf32> to vector<1x8x128xf32>
    %339 = vector.extract_strided_slice %335 {offsets = [0, 3, 0], sizes = [1, 8, 128], strides = [1, 1, 1]} : vector<1x16x128xf32> to vector<1x8x128xf32>
    %340 = vector.extract_strided_slice %335 {offsets = [0, 4, 0], sizes = [1, 8, 128], strides = [1, 1, 1]} : vector<1x16x128xf32> to vector<1x8x128xf32>
    %341 = vector.extract_strided_slice %335 {offsets = [0, 5, 0], sizes = [1, 8, 128], strides = [1, 1, 1]} : vector<1x16x128xf32> to vector<1x8x128xf32>
    %342 = vector.extract_strided_slice %335 {offsets = [0, 6, 0], sizes = [1, 8, 128], strides = [1, 1, 1]} : vector<1x16x128xf32> to vector<1x8x128xf32>
    %343 = vector.extract_strided_slice %335 {offsets = [0, 7, 0], sizes = [1, 8, 128], strides = [1, 1, 1]} : vector<1x16x128xf32> to vector<1x8x128xf32>
    %344 = vector.extract_strided_slice %335 {offsets = [0, 8, 0], sizes = [1, 8, 128], strides = [1, 1, 1]} : vector<1x16x128xf32> to vector<1x8x128xf32>
    %345 = tpu.concatenate %336, %337, %338, %339, %340, %341, %342, %343, %344 in 2 : vector<1x8x128xf32>, vector<1x8x128xf32>, vector<1x8x128xf32>, vector<1x8x128xf32>, vector<1x8x128xf32>, vector<1x8x128xf32>, vector<1x8x128xf32>, vector<1x8x128xf32>, vector<1x8x128xf32> -> vector<1x8x1152xf32>
    %346 = arith.truncf %345 : vector<1x8x1152xf32> to vector<1x8x1152xbf16>
    %c0_158 = arith.constant 0 : index
    %c0_159 = arith.constant 0 : index
    %347 = vector.load %arg4[%c0_158, %c0_159] : memref<1152x128xbf16, #tpu.memory_space<vmem>>, vector<1152x128xbf16>
    %cst_160 = arith.constant dense<0.000000e+00> : vector<1x8x128xf32>
    %348 = tpu.matmul %346, %347, %cst_160 {dimension_numbers = #tpu.dot_dimension_numbers<[2], [0], [0, 1], [1], [0, 0, 0, 1, 1, 1], [], []>} : vector<1x8x1152xbf16>, vector<1152x128xbf16>, vector<1x8x128xf32> -> vector<1x8x128xf32>
    %349 = arith.addf %348, %8 : vector<1x8x128xf32>
    %cst_161 = arith.constant 0.000000e+00 : f32
    %350 = vector.broadcast %cst_161 : f32 to vector<1x8x128xf32>
    %351 = arith.maximumf %349, %350 : vector<1x8x128xf32>
    %352 = arith.addf %334, %351 : vector<1x8x128xf32>
    %353 = vector.shape_cast %352 : vector<1x8x128xf32> to vector<1x1x8x128xf32>
    %c0_162 = arith.constant 0 : index
    %354 = arith.index_cast %331 : i32 to index
    %c0_163 = arith.constant 0 : index
    %c0_164 = arith.constant 0 : index
    %355 = vector.load %arg6[%c0_162, %354, %c0_163, %c0_164] : memref<1x8x8x128xf32, #tpu.memory_space<vmem>>, vector<1x1x8x128xf32>
    tpu.vector_store %arg6[%c0_162, %354, %c0_163, %c0_164], %353 {strides = array<i32>} : memref<1x8x8x128xf32, #tpu.memory_space<vmem>>, vector<1x1x8x128xf32>,
    %c7_i32_165 = arith.constant 7 : i32
    return
  }
  func.func @transform_0(%arg0: i32) -> (i32, i32, i32, i32) {
    %c0_i32 = arith.constant 0 : i32
    %c0_i32_0 = arith.constant 0 : i32
    %c0_i32_1 = arith.constant 0 : i32
    %c0_i32_2 = arith.constant 0 : i32
    return %arg0, %c0_i32, %c0_i32_0, %c0_i32_1 : i32, i32, i32, i32
  }
  func.func @transform_1(%arg0: i32) -> (i32, i32) {
    %c0_i32 = arith.constant 0 : i32
    %c0_i32_0 = arith.constant 0 : i32
    %c0_i32_1 = arith.constant 0 : i32
    return %c0_i32, %c0_i32_0 : i32, i32
  }
  func.func @transform_2(%arg0: i32) -> (i32, i32) {
    %c0_i32 = arith.constant 0 : i32
    %c0_i32_0 = arith.constant 0 : i32
    %c0_i32_1 = arith.constant 0 : i32
    return %c0_i32, %c0_i32_0 : i32, i32
  }
  func.func @transform_3(%arg0: i32) -> (i32, i32) {
    %c0_i32 = arith.constant 0 : i32
    %c0_i32_0 = arith.constant 0 : i32
    %c0_i32_1 = arith.constant 0 : i32
    return %c0_i32, %c0_i32_0 : i32, i32
  }
  func.func @transform_4(%arg0: i32) -> (i32, i32) {
    %c0_i32 = arith.constant 0 : i32
    %c0_i32_0 = arith.constant 0 : i32
    %c0_i32_1 = arith.constant 0 : i32
    return %c0_i32, %c0_i32_0 : i32, i32
  }
  func.func @transform_5(%arg0: i32) -> (i32, i32, i32, i32) {
    %c0_i32 = arith.constant 0 : i32
    %c0_i32_0 = arith.constant 0 : i32
    %c0_i32_1 = arith.constant 0 : i32
    %c0_i32_2 = arith.constant 0 : i32
    return %arg0, %c0_i32, %c0_i32_0, %c0_i32_1 : i32, i32, i32, i32
  }
}

</mosaic_0001>

<llo_original>
// kernel: scnn_forward.2
$region0: #{scnn_forward.2}
  #allocation0 [shape = 'u32[]', space=smem, size = 0x4, offset = 0x4, fixed_abs, tag = 'smem constant byte address 0x4 - core index']
  #allocation1 [shape = 'u32[144,128]{1,0:T(1,128)}', space=vmem, size = 0x12000, scoped, tag = 'internal scratch']
  %s0 = inlined_call_operand.vmem [shape: f32[1,8,8,128], index: 0, kind: input, shape index: {}, may-alias: {0,5}]
  %s1 = inlined_call_operand.vmem [shape: bf16[1152,128], index: 1, kind: input, shape index: {}]
  %s2 = inlined_call_operand.vmem [shape: f32[1,128], index: 2, kind: input, shape index: {}]
  %s3 = inlined_call_operand.vmem [shape: bf16[1152,128], index: 3, kind: input, shape index: {}]
  %s4 = inlined_call_operand.vmem [shape: f32[1,128], index: 4, kind: input, shape index: {}]
  %s5 = inlined_call_operand.vmem [shape: f32[1,8,8,128], index: 5, kind: output, shape index: {}, may-alias: {0,5}]
  %s6 = sld [smem:[#allocation0]]
  $region30: #{scnn_forward.2} parent=0
    _
  %s8 = ssub.s32 1, %s6
  %s9 = scalar_select 0, %s8, %s6
  // Predicated region
  $region2: #{scnn_forward.2} parent=0 // pred_check
    _
  $region3: #{scnn_forward.2} parent=0 // pred_check_branch
    %11 = sbr.rel (0) target = $region5
  $region4: #{scnn_forward.2} parent=0 // pred_region
    _
  $region5: #{scnn_forward.2} parent=0 // pred_fallthru
    _
  // Predicated region
  $region6: #{scnn_forward.2} parent=0 // pred_check
    _
  $region7: #{scnn_forward.2} parent=0 // pred_check_branch
    %13 = sbr.rel (0) target = $region9
  $region8: #{scnn_forward.2} parent=0 // pred_region
    _
  $region9: #{scnn_forward.2} parent=0 // pred_fallthru
    _
  // Predicated region
  $region10: #{scnn_forward.2} parent=0 // pred_check
    _
  $region11: #{scnn_forward.2} parent=0 // pred_check_branch
    %15 = sbr.rel (0) target = $region13
  $region12: #{scnn_forward.2} parent=0 // pred_region
    _
  $region13: #{scnn_forward.2} parent=0 // pred_fallthru
    _
  // Predicated region
  $region14: #{scnn_forward.2} parent=0 // pred_check
    _
  $region15: #{scnn_forward.2} parent=0 // pred_check_branch
    %17 = sbr.rel (0) target = $region17
  $region16: #{scnn_forward.2} parent=0 // pred_region
    _
  $region17: #{scnn_forward.2} parent=0 // pred_fallthru
    _
  // Predicated region
  $region18: #{scnn_forward.2} parent=0 // pred_check
    _
  $region19: #{scnn_forward.2} parent=0 // pred_check_branch
    %19 = sbr.rel (0) target = $region21
  $region20: #{scnn_forward.2} parent=0 // pred_region
    _
  $region21: #{scnn_forward.2} parent=0 // pred_fallthru
    _
  %v21 = vld [vmem:[%s2] sm:$0x1]
  %v23 = vlaneseq
  %v24 = vshrl.u32 %v23, 7
  %v25 = vsub.s32 0, %v24
  %v26 = vrot.slane %v21, %v25
  %v28 = vld [vmem:[%s4] sm:$0x1]
  %v30 = vlaneseq
  %v31 = vshrl.u32 %v30, 7
  %v32 = vsub.s32 0, %v31
  %v33 = vrot.slane %v28, %v32
  %v35 = vld [vmem:[%s0] sm:$0xff]
  %36 = vst [vmem:[%s5] sm:$0xff] %v35
  %s37 = scalar_lea.vmem %s0, 8
  %v38 = vld [vmem:[%s37] sm:$0xff]
  %v40 = vrot.slane %v35, 4
  %vm42 = vcmask 1043456
  %v43 = vsel %vm42, 0.0, %v40
  %v44 = vsel %vm42, %v40, 0.0
  %vm47 = vcmask 1046528
  %v48 = vrot.slane %v43, 1
  %v49 = vrot.slane %v44, 1
  %v50 = vsel %vm47, %v48, %v49
  %vm52 = vcmask 1045504
  %v53 = vrot.slane %v43, 2
  %v54 = vrot.slane %v44, 2
  %v55 = vsel %vm52, %v53, %v54
  %vm57 = vcmask 1044480
  %v58 = vrot.slane %v43, 3
  %v59 = vrot.slane %v44, 3
  %v60 = vsel %vm57, %v58, %v59
  %v62 = vrot.slane %v43, 4
  %v63 = vrot.slane %v44, 4
  %v64 = vsel %vm42, %v62, %v63
  %vm66 = vcmask 1042432
  %v67 = vrot.slane %v43, 5
  %v68 = vrot.slane %v44, 5
  %v69 = vsel %vm66, %v67, %v68
  %vm71 = vcmask 1041408
  %v72 = vrot.slane %v43, 6
  %v73 = vrot.slane %v44, 6
  %v74 = vsel %vm71, %v72, %v73
  %vm76 = vcmask 1040384
  %v77 = vrot.slane %v43, 7
  %v78 = vrot.slane %v44, 7
  %v79 = vsel %vm76, %v77, %v78
  %v81 = vpack.c.bf16 %v43, %v43
  %v82 = vpack.c.bf16 %v50, %v50
  %v83 = vpack.c.bf16 %v55, %v55
  %v84 = vpack.c.bf16 %v60, %v60
  %v85 = vpack.c.bf16 %v64, %v64
  %v86 = vpack.c.bf16 %v69, %v69
  %v87 = vpack.c.bf16 %v74, %v74
  %v88 = vpack.c.bf16 %v79, %v79
  %v89 = vpack.c.bf16 %v44, %v44
  %v90 = vld [vmem:[%s1] sm:$0xf]
  %v91 = vld [vmem:[%s1 + $0x4] sm:$0xf]
  %v92 = vld [vmem:[%s1 + $0x8] sm:$0xf]
  %v93 = vld [vmem:[%s1 + $0xc] sm:$0xf]
  %v94 = vld [vmem:[%s1 + $0x10] sm:$0xf]
  %v95 = vld [vmem:[%s1 + $0x14] sm:$0xf]
  %v96 = vld [vmem:[%s1 + $0x18] sm:$0xf]
  %v97 = vld [vmem:[%s1 + $0x1c] sm:$0xf]
  %v98 = vld [vmem:[%s1 + $0x20] sm:$0xf]
  %v99 = vld [vmem:[%s1 + $0x24] sm:$0xf]
  %v100 = vld [vmem:[%s1 + $0x28] sm:$0xf]
  %v101 = vld [vmem:[%s1 + $0x2c] sm:$0xf]
  %v102 = vld [vmem:[%s1 + $0x30] sm:$0xf]
  %v103 = vld [vmem:[%s1 + $0x34] sm:$0xf]
  %v104 = vld [vmem:[%s1 + $0x38] sm:$0xf]
  %v105 = vld [vmem:[%s1 + $0x3c] sm:$0xf]
  %v106 = vld [vmem:[%s1 + $0x40] sm:$0xf]
  %v107 = vld [vmem:[%s1 + $0x44] sm:$0xf]
  %v108 = vld [vmem:[%s1 + $0x48] sm:$0xf]
  %v109 = vld [vmem:[%s1 + $0x4c] sm:$0xf]
  %v110 = vld [vmem:[%s1 + $0x50] sm:$0xf]
  %v111 = vld [vmem:[%s1 + $0x54] sm:$0xf]
  %v112 = vld [vmem:[%s1 + $0x58] sm:$0xf]
  %v113 = vld [vmem:[%s1 + $0x5c] sm:$0xf]
  %v114 = vld [vmem:[%s1 + $0x60] sm:$0xf]
  %v115 = vld [vmem:[%s1 + $0x64] sm:$0xf]
  %v116 = vld [vmem:[%s1 + $0x68] sm:$0xf]
  %v117 = vld [vmem:[%s1 + $0x6c] sm:$0xf]
  %v118 = vld [vmem:[%s1 + $0x70] sm:$0xf]
  %v119 = vld [vmem:[%s1 + $0x74] sm:$0xf]
  %v120 = vld [vmem:[%s1 + $0x78] sm:$0xf]
  %v121 = vld [vmem:[%s1 + $0x7c] sm:$0xf]
  %v122 = vld [vmem:[%s1 + $0x80] sm:$0xf]
  %v123 = vld [vmem:[%s1 + $0x84] sm:$0xf]
  %v124 = vld [vmem:[%s1 + $0x88] sm:$0xf]
  %v125 = vld [vmem:[%s1 + $0x8c] sm:$0xf]
  %v126 = vld [vmem:[%s1 + $0x90] sm:$0xf]
  %v127 = vld [vmem:[%s1 + $0x94] sm:$0xf]
  %v128 = vld [vmem:[%s1 + $0x98] sm:$0xf]
  %v129 = vld [vmem:[%s1 + $0x9c] sm:$0xf]
  %v130 = vld [vmem:[%s1 + $0xa0] sm:$0xf]
  %v131 = vld [vmem:[%s1 + $0xa4] sm:$0xf]
  %v132 = vld [vmem:[%s1 + $0xa8] sm:$0xf]
  %v133 = vld [vmem:[%s1 + $0xac] sm:$0xf]
  %v134 = vld [vmem:[%s1 + $0xb0] sm:$0xf]
  %v135 = vld [vmem:[%s1 + $0xb4] sm:$0xf]
  %v136 = vld [vmem:[%s1 + $0xb8] sm:$0xf]
  %v137 = vld [vmem:[%s1 + $0xbc] sm:$0xf]
  %v138 = vld [vmem:[%s1 + $0xc0] sm:$0xf]
  %v139 = vld [vmem:[%s1 + $0xc4] sm:$0xf]
  %v140 = vld [vmem:[%s1 + $0xc8] sm:$0xf]
  %v141 = vld [vmem:[%s1 + $0xcc] sm:$0xf]
  %v142 = vld [vmem:[%s1 + $0xd0] sm:$0xf]
  %v143 = vld [vmem:[%s1 + $0xd4] sm:$0xf]
  %v144 = vld [vmem:[%s1 + $0xd8] sm:$0xf]
  %v145 = vld [vmem:[%s1 + $0xdc] sm:$0xf]
  %v146 = vld [vmem:[%s1 + $0xe0] sm:$0xf]
  %v147 = vld [vmem:[%s1 + $0xe4] sm:$0xf]
  %v148 = vld [vmem:[%s1 + $0xe8] sm:$0xf]
  %v149 = vld [vmem:[%s1 + $0xec] sm:$0xf]
  %v150 = vld [vmem:[%s1 + $0xf0] sm:$0xf]
  %v151 = vld [vmem:[%s1 + $0xf4] sm:$0xf]
  %v152 = vld [vmem:[%s1 + $0xf8] sm:$0xf]
  %v153 = vld [vmem:[%s1 + $0xfc] sm:$0xf]
  %v154 = vld [vmem:[%s1 + $0x100] sm:$0xf]
  %v155 = vld [vmem:[%s1 + $0x104] sm:$0xf]
  %v156 = vld [vmem:[%s1 + $0x108] sm:$0xf]
  %v157 = vld [vmem:[%s1 + $0x10c] sm:$0xf]
  %v158 = vld [vmem:[%s1 + $0x110] sm:$0xf]
  %v159 = vld [vmem:[%s1 + $0x114] sm:$0xf]
  %v160 = vld [vmem:[%s1 + $0x118] sm:$0xf]
  %v161 = vld [vmem:[%s1 + $0x11c] sm:$0xf]
  %v162 = vld [vmem:[%s1 + $0x120] sm:$0xf]
  %v163 = vld [vmem:[%s1 + $0x124] sm:$0xf]
  %v164 = vld [vmem:[%s1 + $0x128] sm:$0xf]
  %v165 = vld [vmem:[%s1 + $0x12c] sm:$0xf]
  %v166 = vld [vmem:[%s1 + $0x130] sm:$0xf]
  %v167 = vld [vmem:[%s1 + $0x134] sm:$0xf]
  %v168 = vld [vmem:[%s1 + $0x138] sm:$0xf]
  %v169 = vld [vmem:[%s1 + $0x13c] sm:$0xf]
  %v170 = vld [vmem:[%s1 + $0x140] sm:$0xf]
  %v171 = vld [vmem:[%s1 + $0x144] sm:$0xf]
  %v172 = vld [vmem:[%s1 + $0x148] sm:$0xf]
  %v173 = vld [vmem:[%s1 + $0x14c] sm:$0xf]
  %v174 = vld [vmem:[%s1 + $0x150] sm:$0xf]
  %v175 = vld [vmem:[%s1 + $0x154] sm:$0xf]
  %v176 = vld [vmem:[%s1 + $0x158] sm:$0xf]
  %v177 = vld [vmem:[%s1 + $0x15c] sm:$0xf]
  %v178 = vld [vmem:[%s1 + $0x160] sm:$0xf]
  %v179 = vld [vmem:[%s1 + $0x164] sm:$0xf]
  %v180 = vld [vmem:[%s1 + $0x168] sm:$0xf]
  %v181 = vld [vmem:[%s1 + $0x16c] sm:$0xf]
  %v182 = vld [vmem:[%s1 + $0x170] sm:$0xf]
  %v183 = vld [vmem:[%s1 + $0x174] sm:$0xf]
  %v184 = vld [vmem:[%s1 + $0x178] sm:$0xf]
  %v185 = vld [vmem:[%s1 + $0x17c] sm:$0xf]
  %v186 = vld [vmem:[%s1 + $0x180] sm:$0xf]
  %v187 = vld [vmem:[%s1 + $0x184] sm:$0xf]
  %v188 = vld [vmem:[%s1 + $0x188] sm:$0xf]
  %v189 = vld [vmem:[%s1 + $0x18c] sm:$0xf]
  %v190 = vld [vmem:[%s1 + $0x190] sm:$0xf]
  %v191 = vld [vmem:[%s1 + $0x194] sm:$0xf]
  %v192 = vld [vmem:[%s1 + $0x198] sm:$0xf]
  %v193 = vld [vmem:[%s1 + $0x19c] sm:$0xf]
  %v194 = vld [vmem:[%s1 + $0x1a0] sm:$0xf]
  %v195 = vld [vmem:[%s1 + $0x1a4] sm:$0xf]
  %v196 = vld [vmem:[%s1 + $0x1a8] sm:$0xf]
  %v197 = vld [vmem:[%s1 + $0x1ac] sm:$0xf]
  %v198 = vld [vmem:[%s1 + $0x1b0] sm:$0xf]
  %v199 = vld [vmem:[%s1 + $0x1b4] sm:$0xf]
  %v200 = vld [vmem:[%s1 + $0x1b8] sm:$0xf]
  %v201 = vld [vmem:[%s1 + $0x1bc] sm:$0xf]
  %v202 = vld [vmem:[%s1 + $0x1c0] sm:$0xf]
  %v203 = vld [vmem:[%s1 + $0x1c4] sm:$0xf]
  %v204 = vld [vmem:[%s1 + $0x1c8] sm:$0xf]
  %v205 = vld [vmem:[%s1 + $0x1cc] sm:$0xf]
  %v206 = vld [vmem:[%s1 + $0x1d0] sm:$0xf]
  %v207 = vld [vmem:[%s1 + $0x1d4] sm:$0xf]
  %v208 = vld [vmem:[%s1 + $0x1d8] sm:$0xf]
  %v209 = vld [vmem:[%s1 + $0x1dc] sm:$0xf]
  %v210 = vld [vmem:[%s1 + $0x1e0] sm:$0xf]
  %v211 = vld [vmem:[%s1 + $0x1e4] sm:$0xf]
  %v212 = vld [vmem:[%s1 + $0x1e8] sm:$0xf]
  %v213 = vld [vmem:[%s1 + $0x1ec] sm:$0xf]
  %v214 = vld [vmem:[%s1 + $0x1f0] sm:$0xf]
  %v215 = vld [vmem:[%s1 + $0x1f4] sm:$0xf]
  %v216 = vld [vmem:[%s1 + $0x1f8] sm:$0xf]
  %v217 = vld [vmem:[%s1 + $0x1fc] sm:$0xf]
  %v218 = vld [vmem:[%s1 + $0x200] sm:$0xf]
  %v219 = vld [vmem:[%s1 + $0x204] sm:$0xf]
  %v220 = vld [vmem:[%s1 + $0x208] sm:$0xf]
  %v221 = vld [vmem:[%s1 + $0x20c] sm:$0xf]
  %v222 = vld [vmem:[%s1 + $0x210] sm:$0xf]
  %v223 = vld [vmem:[%s1 + $0x214] sm:$0xf]
  %v224 = vld [vmem:[%s1 + $0x218] sm:$0xf]
  %v225 = vld [vmem:[%s1 + $0x21c] sm:$0xf]
  %v226 = vld [vmem:[%s1 + $0x220] sm:$0xf]
  %v227 = vld [vmem:[%s1 + $0x224] sm:$0xf]
  %v228 = vld [vmem:[%s1 + $0x228] sm:$0xf]
  %v229 = vld [vmem:[%s1 + $0x22c] sm:$0xf]
  %v230 = vld [vmem:[%s1 + $0x230] sm:$0xf]
  %v231 = vld [vmem:[%s1 + $0x234] sm:$0xf]
  %v232 = vld [vmem:[%s1 + $0x238] sm:$0xf]
  %v233 = vld [vmem:[%s1 + $0x23c] sm:$0xf]
  %v378 = vunpack.c.l.b16 %v90
  %v379 = vunpack.c.l.b16 %v91
  %v380 = vunpack.c.l.b16 %v92
  %v381 = vunpack.c.l.b16 %v93
  %v382 = vunpack.c.l.b16 %v94
  %v383 = vunpack.c.l.b16 %v95
  %v384 = vunpack.c.l.b16 %v96
  %v385 = vunpack.c.l.b16 %v97
  %v386 = vunpack.c.l.b16 %v98
  %v387 = vunpack.c.l.b16 %v99
  %v388 = vunpack.c.l.b16 %v100
  %v389 = vunpack.c.l.b16 %v101
  %v390 = vunpack.c.l.b16 %v102
  %v391 = vunpack.c.l.b16 %v103
  %v392 = vunpack.c.l.b16 %v104
  %v393 = vunpack.c.l.b16 %v105
  %v394 = vunpack.c.l.b16 %v106
  %v395 = vunpack.c.l.b16 %v107
  %v396 = vunpack.c.l.b16 %v108
  %v397 = vunpack.c.l.b16 %v109
  %v398 = vunpack.c.l.b16 %v110
  %v399 = vunpack.c.l.b16 %v111
  %v400 = vunpack.c.l.b16 %v112
  %v401 = vunpack.c.l.b16 %v113
  %v402 = vunpack.c.l.b16 %v114
  %v403 = vunpack.c.l.b16 %v115
  %v404 = vunpack.c.l.b16 %v116
  %v405 = vunpack.c.l.b16 %v117
  %v406 = vunpack.c.l.b16 %v118
  %v407 = vunpack.c.l.b16 %v119
  %v408 = vunpack.c.l.b16 %v120
  %v409 = vunpack.c.l.b16 %v121
  %v410 = vunpack.c.l.b16 %v122
  %v411 = vunpack.c.l.b16 %v123
  %v412 = vunpack.c.l.b16 %v124
  %v413 = vunpack.c.l.b16 %v125
  %v414 = vunpack.c.l.b16 %v126
  %v415 = vunpack.c.l.b16 %v127
  %v416 = vunpack.c.l.b16 %v128
  %v417 = vunpack.c.l.b16 %v129
  %v418 = vunpack.c.l.b16 %v130
  %v419 = vunpack.c.l.b16 %v131
  %v420 = vunpack.c.l.b16 %v132
  %v421 = vunpack.c.l.b16 %v133
  %v422 = vunpack.c.l.b16 %v134
  %v423 = vunpack.c.l.b16 %v135
  %v424 = vunpack.c.l.b16 %v136
  %v425 = vunpack.c.l.b16 %v137
  %v426 = vunpack.c.l.b16 %v138
  %v427 = vunpack.c.l.b16 %v139
  %v428 = vunpack.c.l.b16 %v140
  %v429 = vunpack.c.l.b16 %v141
  %v430 = vunpack.c.l.b16 %v142
  %v431 = vunpack.c.l.b16 %v143
  %v432 = vunpack.c.l.b16 %v144
  %v433 = vunpack.c.l.b16 %v145
  %v434 = vunpack.c.l.b16 %v146
  %v435 = vunpack.c.l.b16 %v147
  %v436 = vunpack.c.l.b16 %v148
  %v437 = vunpack.c.l.b16 %v149
  %v438 = vunpack.c.l.b16 %v150
  %v439 = vunpack.c.l.b16 %v151
  %v440 = vunpack.c.l.b16 %v152
  %v441 = vunpack.c.l.b16 %v153
  %v442 = vunpack.c.l.b16 %v154
  %v443 = vunpack.c.l.b16 %v155
  %v444 = vunpack.c.l.b16 %v156
  %v445 = vunpack.c.l.b16 %v157
  %v446 = vunpack.c.l.b16 %v158
  %v447 = vunpack.c.l.b16 %v159
  %v448 = vunpack.c.l.b16 %v160
  %v449 = vunpack.c.l.b16 %v161
  %v450 = vunpack.c.l.b16 %v162
  %v451 = vunpack.c.l.b16 %v163
  %v452 = vunpack.c.l.b16 %v164
  %v453 = vunpack.c.l.b16 %v165
  %v454 = vunpack.c.l.b16 %v166
  %v455 = vunpack.c.l.b16 %v167
  %v456 = vunpack.c.l.b16 %v168
  %v457 = vunpack.c.l.b16 %v169
  %v458 = vunpack.c.l.b16 %v170
  %v459 = vunpack.c.l.b16 %v171
  %v460 = vunpack.c.l.b16 %v172
  %v461 = vunpack.c.l.b16 %v173
  %v462 = vunpack.c.l.b16 %v174
  %v463 = vunpack.c.l.b16 %v175
  %v464 = vunpack.c.l.b16 %v176
  %v465 = vunpack.c.l.b16 %v177
  %v466 = vunpack.c.l.b16 %v178
  %v467 = vunpack.c.l.b16 %v179
  %v468 = vunpack.c.l.b16 %v180
  %v469 = vunpack.c.l.b16 %v181
  %v470 = vunpack.c.l.b16 %v182
  %v471 = vunpack.c.l.b16 %v183
  %v472 = vunpack.c.l.b16 %v184
  %v473 = vunpack.c.l.b16 %v185
  %v474 = vunpack.c.l.b16 %v186
  %v475 = vunpack.c.l.b16 %v187
  %v476 = vunpack.c.l.b16 %v188
  %v477 = vunpack.c.l.b16 %v189
  %v478 = vunpack.c.l.b16 %v190
  %v479 = vunpack.c.l.b16 %v191
  %v480 = vunpack.c.l.b16 %v192
  %v481 = vunpack.c.l.b16 %v193
  %v482 = vunpack.c.l.b16 %v194
  %v483 = vunpack.c.l.b16 %v195
  %v484 = vunpack.c.l.b16 %v196
  %v485 = vunpack.c.l.b16 %v197
  %v486 = vunpack.c.l.b16 %v198
  %v487 = vunpack.c.l.b16 %v199
  %v488 = vunpack.c.l.b16 %v200
  %v489 = vunpack.c.l.b16 %v201
  %v490 = vunpack.c.l.b16 %v202
  %v491 = vunpack.c.l.b16 %v203
  %v492 = vunpack.c.l.b16 %v204
  %v493 = vunpack.c.l.b16 %v205
  %v494 = vunpack.c.l.b16 %v206
  %v495 = vunpack.c.l.b16 %v207
  %v496 = vunpack.c.l.b16 %v208
  %v497 = vunpack.c.l.b16 %v209
  %v498 = vunpack.c.l.b16 %v210
  %v499 = vunpack.c.l.b16 %v211
  %v500 = vunpack.c.l.b16 %v212
  %v501 = vunpack.c.l.b16 %v213
  %v502 = vunpack.c.l.b16 %v214
  %v503 = vunpack.c.l.b16 %v215
  %v504 = vunpack.c.l.b16 %v216
  %v505 = vunpack.c.l.b16 %v217
  %v506 = vunpack.c.l.b16 %v218
  %v507 = vunpack.c.l.b16 %v219
  %v508 = vunpack.c.l.b16 %v220
  %v509 = vunpack.c.l.b16 %v221
  %v510 = vunpack.c.l.b16 %v222
  %v511 = vunpack.c.l.b16 %v223
  %v512 = vunpack.c.l.b16 %v224
  %v513 = vunpack.c.l.b16 %v225
  %v514 = vunpack.c.l.b16 %v226
  %v515 = vunpack.c.l.b16 %v227
  %v516 = vunpack.c.l.b16 %v228
  %v517 = vunpack.c.l.b16 %v229
  %v518 = vunpack.c.l.b16 %v230
  %v519 = vunpack.c.l.b16 %v231
  %v520 = vunpack.c.l.b16 %v232
  %v521 = vunpack.c.l.b16 %v233
  %v522 = vpack.c.b16 %v379, %v378
  %v523 = vpack.c.b16 %v381, %v380
  %v524 = vpack.c.b16 %v383, %v382
  %v525 = vpack.c.b16 %v385, %v384
  %v526 = vpack.c.b16 %v387, %v386
  %v527 = vpack.c.b16 %v389, %v388
  %v528 = vpack.c.b16 %v391, %v390
  %v529 = vpack.c.b16 %v393, %v392
  %v530 = vpack.c.b16 %v395, %v394
  %v531 = vpack.c.b16 %v397, %v396
  %v532 = vpack.c.b16 %v399, %v398
  %v533 = vpack.c.b16 %v401, %v400
  %v534 = vpack.c.b16 %v403, %v402
  %v535 = vpack.c.b16 %v405, %v404
  %v536 = vpack.c.b16 %v407, %v406
  %v537 = vpack.c.b16 %v409, %v408
  %v538 = vpack.c.b16 %v411, %v410
  %v539 = vpack.c.b16 %v413, %v412
  %v540 = vpack.c.b16 %v415, %v414
  %v541 = vpack.c.b16 %v417, %v416
  %v542 = vpack.c.b16 %v419, %v418
  %v543 = vpack.c.b16 %v421, %v420
  %v544 = vpack.c.b16 %v423, %v422
  %v545 = vpack.c.b16 %v425, %v424
  %v546 = vpack.c.b16 %v427, %v426
  %v547 = vpack.c.b16 %v429, %v428
  %v548 = vpack.c.b16 %v431, %v430
  %v549 = vpack.c.b16 %v433, %v432
  %v550 = vpack.c.b16 %v435, %v434
  %v551 = vpack.c.b16 %v437, %v436
  %v552 = vpack.c.b16 %v439, %v438
  %v553 = vpack.c.b16 %v441, %v440
  %v554 = vpack.c.b16 %v443, %v442
  %v555 = vpack.c.b16 %v445, %v444
  %v556 = vpack.c.b16 %v447, %v446
  %v557 = vpack.c.b16 %v449, %v448
  %v558 = vpack.c.b16 %v451, %v450
  %v559 = vpack.c.b16 %v453, %v452
  %v560 = vpack.c.b16 %v455, %v454
  %v561 = vpack.c.b16 %v457, %v456
  %v562 = vpack.c.b16 %v459, %v458
  %v563 = vpack.c.b16 %v461, %v460
  %v564 = vpack.c.b16 %v463, %v462
  %v565 = vpack.c.b16 %v465, %v464
  %v566 = vpack.c.b16 %v467, %v466
  %v567 = vpack.c.b16 %v469, %v468
  %v568 = vpack.c.b16 %v471, %v470
  %v569 = vpack.c.b16 %v473, %v472
  %v570 = vpack.c.b16 %v475, %v474
  %v571 = vpack.c.b16 %v477, %v476
  %v572 = vpack.c.b16 %v479, %v478
  %v573 = vpack.c.b16 %v481, %v480
  %v574 = vpack.c.b16 %v483, %v482
  %v575 = vpack.c.b16 %v485, %v484
  %v576 = vpack.c.b16 %v487, %v486
  %v577 = vpack.c.b16 %v489, %v488
  %v578 = vpack.c.b16 %v491, %v490
  %v579 = vpack.c.b16 %v493, %v492
  %v580 = vpack.c.b16 %v495, %v494
  %v581 = vpack.c.b16 %v497, %v496
  %v582 = vpack.c.b16 %v499, %v498
  %v583 = vpack.c.b16 %v501, %v500
  %v584 = vpack.c.b16 %v503, %v502
  %v585 = vpack.c.b16 %v505, %v504
  %v586 = vpack.c.b16 %v507, %v506
  %v587 = vpack.c.b16 %v509, %v508
  %v588 = vpack.c.b16 %v511, %v510
  %v589 = vpack.c.b16 %v513, %v512
  %v590 = vpack.c.b16 %v515, %v514
  %v591 = vpack.c.b16 %v517, %v516
  %v592 = vpack.c.b16 %v519, %v518
  %v593 = vpack.c.b16 %v521, %v520
  %666 = vmatprep.subr.bf16.mxu0 0
  %667 = vmatpush1.bf16.msra.mxu0 %v529
  %668 = vmatprep.subr.bf16.mxu0 0
  %669 = vmatpush1.bf16.msra.mxu0 %v528
  %670 = vmatprep.subr.bf16.mxu0 0
  %671 = vmatpush1.bf16.msra.mxu0 %v527
  %672 = vmatprep.subr.bf16.mxu0 0
  %673 = vmatpush1.bf16.msra.mxu0 %v526
  %674 = vmatprep.subr.bf16.mxu0 0
  %675 = vmatpush1.bf16.msra.mxu0 %v525
  %676 = vmatprep.subr.bf16.mxu0 0
  %677 = vmatpush1.bf16.msra.mxu0 %v524
  %678 = vmatprep.subr.bf16.mxu0 0
  %679 = vmatpush1.bf16.msra.mxu0 %v523
  %680 = vmatprep.subr.bf16.mxu0 0
  %681 = vmatpush1.bf16.msra.mxu0 %v522
  %682 = vmatprep.subr.bf16.mxu0 0
  %683 = vmatpush2.bf16.msra.mxu0 %v537
  %684 = vmatprep.subr.bf16.mxu0 0
  %685 = vmatpush2.bf16.msra.mxu0 %v536
  %686 = vmatprep.subr.bf16.mxu0 0
  %687 = vmatpush2.bf16.msra.mxu0 %v535
  %688 = vmatprep.subr.bf16.mxu0 0
  %689 = vmatpush2.bf16.msra.mxu0 %v534
  %690 = vmatprep.subr.bf16.mxu0 0
  %691 = vmatpush2.bf16.msra.mxu0 %v533
  %692 = vmatprep.subr.bf16.mxu0 0
  %693 = vmatpush2.bf16.msra.mxu0 %v532
  %694 = vmatprep.subr.bf16.mxu0 0
  %695 = vmatpush2.bf16.msra.mxu0 %v531
  %696 = vmatprep.subr.bf16.mxu0 0
  %697 = vmatpush2.bf16.msra.mxu0 %v530
  %698 = vmatprep.mubr.bf16.mxu0 %v82
  %699 = vmatmul.mubr.bf16.gmra.mxu0 %v81
  %v700 = vpop.f32.mrf.mxu0
  %v701 = vadd.f32 %v26, %v700
  %v702 = vpop.f32.mrf.mxu0
  %v703 = vpop.f32.mrf.mxu0
  %v704 = vpop.f32.mrf.mxu0
  %705 = vdwg.mxu0
  %706 = vmatprep.subr.bf16.mxu0 0
  %707 = vmatpush1.bf16.msra.mxu0 %v545
  %708 = vmatprep.subr.bf16.mxu0 0
  %709 = vmatpush1.bf16.msra.mxu0 %v544
  %710 = vmatprep.subr.bf16.mxu0 0
  %711 = vmatpush1.bf16.msra.mxu0 %v543
  %712 = vmatprep.subr.bf16.mxu0 0
  %713 = vmatpush1.bf16.msra.mxu0 %v542
  %714 = vmatprep.subr.bf16.mxu0 0
  %715 = vmatpush1.bf16.msra.mxu0 %v541
  %716 = vmatprep.subr.bf16.mxu0 0
  %717 = vmatpush1.bf16.msra.mxu0 %v540
  %718 = vmatprep.subr.bf16.mxu0 0
  %719 = vmatpush1.bf16.msra.mxu0 %v539
  %720 = vmatprep.subr.bf16.mxu0 0
  %721 = vmatpush1.bf16.msra.mxu0 %v538
  %722 = vmatprep.subr.bf16.mxu0 0
  %723 = vmatpush2.bf16.msra.mxu0 %v553
  %724 = vmatprep.subr.bf16.mxu0 0
  %725 = vmatpush2.bf16.msra.mxu0 %v552
  %726 = vmatprep.subr.bf16.mxu0 0
  %727 = vmatpush2.bf16.msra.mxu0 %v551
  %728 = vmatprep.subr.bf16.mxu0 0
  %729 = vmatpush2.bf16.msra.mxu0 %v550
  %730 = vmatprep.subr.bf16.mxu0 0
  %731 = vmatpush2.bf16.msra.mxu0 %v549
  %732 = vmatprep.subr.bf16.mxu0 0
  %733 = vmatpush2.bf16.msra.mxu0 %v548
  %734 = vmatprep.subr.bf16.mxu0 0
  %735 = vmatpush2.bf16.msra.mxu0 %v547
  %736 = vmatprep.subr.bf16.mxu0 0
  %737 = vmatpush2.bf16.msra.mxu0 %v546
  %738 = vmatprep.mubr.bf16.mxu0 %v84
  %739 = vmatmul.mubr.bf16.gmra.mxu0 %v83
  %v740 = vpop.f32.mrf.mxu0
  %v741 = vadd.f32 %v701, %v740
  %v742 = vpop.f32.mrf.mxu0
  %v743 = vpop.f32.mrf.mxu0
  %v744 = vpop.f32.mrf.mxu0
  %745 = vdwg.mxu0
  %746 = vmatprep.subr.bf16.mxu0 0
  %747 = vmatpush1.bf16.msra.mxu0 %v561
  %748 = vmatprep.subr.bf16.mxu0 0
  %749 = vmatpush1.bf16.msra.mxu0 %v560
  %750 = vmatprep.subr.bf16.mxu0 0
  %751 = vmatpush1.bf16.msra.mxu0 %v559
  %752 = vmatprep.subr.bf16.mxu0 0
  %753 = vmatpush1.bf16.msra.mxu0 %v558
  %754 = vmatprep.subr.bf16.mxu0 0
  %755 = vmatpush1.bf16.msra.mxu0 %v557
  %756 = vmatprep.subr.bf16.mxu0 0
  %757 = vmatpush1.bf16.msra.mxu0 %v556
  %758 = vmatprep.subr.bf16.mxu0 0
  %759 = vmatpush1.bf16.msra.mxu0 %v555
  %760 = vmatprep.subr.bf16.mxu0 0
  %761 = vmatpush1.bf16.msra.mxu0 %v554
  %762 = vmatprep.subr.bf16.mxu0 0
  %763 = vmatpush2.bf16.msra.mxu0 %v569
  %764 = vmatprep.subr.bf16.mxu0 0
  %765 = vmatpush2.bf16.msra.mxu0 %v568
  %766 = vmatprep.subr.bf16.mxu0 0
  %767 = vmatpush2.bf16.msra.mxu0 %v567
  %768 = vmatprep.subr.bf16.mxu0 0
  %769 = vmatpush2.bf16.msra.mxu0 %v566
  %770 = vmatprep.subr.bf16.mxu0 0
  %771 = vmatpush2.bf16.msra.mxu0 %v565
  %772 = vmatprep.subr.bf16.mxu0 0
  %773 = vmatpush2.bf16.msra.mxu0 %v564
  %774 = vmatprep.subr.bf16.mxu0 0
  %775 = vmatpush2.bf16.msra.mxu0 %v563
  %776 = vmatprep.subr.bf16.mxu0 0
  %777 = vmatpush2.bf16.msra.mxu0 %v562
  %778 = vmatprep.mubr.bf16.mxu0 %v86
  %779 = vmatmul.mubr.bf16.gmra.mxu0 %v85
  %v780 = vpop.f32.mrf.mxu0
  %v781 = vadd.f32 %v741, %v780
  %v782 = vpop.f32.mrf.mxu0
  %v783 = vpop.f32.mrf.mxu0
  %v784 = vpop.f32.mrf.mxu0
  %785 = vdwg.mxu0
  %786 = vmatprep.subr.bf16.mxu0 0
  %787 = vmatpush1.bf16.msra.mxu0 %v577
  %788 = vmatprep.subr.bf16.mxu0 0
  %789 = vmatpush1.bf16.msra.mxu0 %v576
  %790 = vmatprep.subr.bf16.mxu0 0
  %791 = vmatpush1.bf16.msra.mxu0 %v575
  %792 = vmatprep.subr.bf16.mxu0 0
  %793 = vmatpush1.bf16.msra.mxu0 %v574
  %794 = vmatprep.subr.bf16.mxu0 0
  %795 = vmatpush1.bf16.msra.mxu0 %v573
  %796 = vmatprep.subr.bf16.mxu0 0
  %797 = vmatpush1.bf16.msra.mxu0 %v572
  %798 = vmatprep.subr.bf16.mxu0 0
  %799 = vmatpush1.bf16.msra.mxu0 %v571
  %800 = vmatprep.subr.bf16.mxu0 0
  %801 = vmatpush1.bf16.msra.mxu0 %v570
  %802 = vmatprep.subr.bf16.mxu0 0
  %803 = vmatpush2.bf16.msra.mxu0 %v585
  %804 = vmatprep.subr.bf16.mxu0 0
  %805 = vmatpush2.bf16.msra.mxu0 %v584
  %806 = vmatprep.subr.bf16.mxu0 0
  %807 = vmatpush2.bf16.msra.mxu0 %v583
  %808 = vmatprep.subr.bf16.mxu0 0
  %809 = vmatpush2.bf16.msra.mxu0 %v582
  %810 = vmatprep.subr.bf16.mxu0 0
  %811 = vmatpush2.bf16.msra.mxu0 %v581
  %812 = vmatprep.subr.bf16.mxu0 0
  %813 = vmatpush2.bf16.msra.mxu0 %v580
  %814 = vmatprep.subr.bf16.mxu0 0
  %815 = vmatpush2.bf16.msra.mxu0 %v579
  %816 = vmatprep.subr.bf16.mxu0 0
  %817 = vmatpush2.bf16.msra.mxu0 %v578
  %818 = vmatprep.mubr.bf16.mxu0 %v88
  %819 = vmatmul.mubr.bf16.gmra.mxu0 %v87
  %v820 = vpop.f32.mrf.mxu0
  %v821 = vadd.f32 %v781, %v820
  %v822 = vpop.f32.mrf.mxu0
  %v823 = vpop.f32.mrf.mxu0
  %v824 = vpop.f32.mrf.mxu0
  %825 = vdwg.mxu0
  %826 = vmatprep.subr.bf16.mxu0 0
  %827 = vmatpush1.bf16.msra.mxu0 %v593
  %828 = vmatprep.subr.bf16.mxu0 0
  %829 = vmatpush1.bf16.msra.mxu0 %v592
  %830 = vmatprep.subr.bf16.mxu0 0
  %831 = vmatpush1.bf16.msra.mxu0 %v591
  %832 = vmatprep.subr.bf16.mxu0 0
  %833 = vmatpush1.bf16.msra.mxu0 %v590
  %834 = vmatprep.subr.bf16.mxu0 0
  %835 = vmatpush1.bf16.msra.mxu0 %v589
  %836 = vmatprep.subr.bf16.mxu0 0
  %837 = vmatpush1.bf16.msra.mxu0 %v588
  %838 = vmatprep.subr.bf16.mxu0 0
  %839 = vmatpush1.bf16.msra.mxu0 %v587
  %840 = vmatprep.subr.bf16.mxu0 0
  %841 = vmatpush1.bf16.msra.mxu0 %v586
  %842 = vmatprep.subr.bf16.mxu0 0
  %843 = vmatpush2.bf16.msra.mxu0 0
  %844 = vmatprep.subr.bf16.mxu0 0
  %845 = vmatpush2.bf16.msra.mxu0 0
  %846 = vmatprep.subr.bf16.mxu0 0
  %847 = vmatpush2.bf16.msra.mxu0 0
  %848 = vmatprep.subr.bf16.mxu0 0
  %849 = vmatpush2.bf16.msra.mxu0 0
  %850 = vmatprep.subr.bf16.mxu0 0
  %851 = vmatpush2.bf16.msra.mxu0 0
  %852 = vmatprep.subr.bf16.mxu0 0
  %853 = vmatpush2.bf16.msra.mxu0 0
  %854 = vmatprep.subr.bf16.mxu0 0
  %855 = vmatpush2.bf16.msra.mxu0 0
  %856 = vmatprep.subr.bf16.mxu0 0
  %857 = vmatpush2.bf16.msra.mxu0 0
  %858 = vmatprep.mubr.bf16.mxu0 0
  %859 = vmatmul.mubr.bf16.gmra.mxu0 %v89
  %v860 = vpop.f32.mrf.mxu0
  %v861 = vadd.f32 %v821, %v860
  %v862 = vpop.f32.mrf.mxu0
  %v863 = vpop.f32.mrf.mxu0
  %v864 = vpop.f32.mrf.mxu0
  %865 = vdwg.mxu0
  %v866 = vmax.f32 %v861, 0.0
  %v867 = vadd.f32 %v38, %v866
  %s868 = scalar_lea.vmem %s5, 8
  %869 = vst [vmem:[%s868] sm:$0xff] %v867
  %s870 = scalar_lea.vmem %s0, 16
  %v871 = vld [vmem:[%s870] sm:$0xff]
  %v873 = vrot.slane %v867, 4
  %v875 = vsel %vm42, 0.0, %v873
  %v876 = vsel %vm42, %v873, 0.0
  %v879 = vrot.slane %v875, 1
  %v880 = vrot.slane %v876, 1
  %v881 = vsel %vm47, %v879, %v880
  %v883 = vrot.slane %v875, 2
  %v884 = vrot.slane %v876, 2
  %v885 = vsel %vm52, %v883, %v884
  %v887 = vrot.slane %v875, 3
  %v888 = vrot.slane %v876, 3
  %v889 = vsel %vm57, %v887, %v888
  %v891 = vrot.slane %v875, 4
  %v892 = vrot.slane %v876, 4
  %v893 = vsel %vm42, %v891, %v892
  %v895 = vrot.slane %v875, 5
  %v896 = vrot.slane %v876, 5
  %v897 = vsel %vm66, %v895, %v896
  %v899 = vrot.slane %v875, 6
  %v900 = vrot.slane %v876, 6
  %v901 = vsel %vm71, %v899, %v900
  %v903 = vrot.slane %v875, 7
  %v904 = vrot.slane %v876, 7
  %v905 = vsel %vm76, %v903, %v904
  %v907 = vpack.c.bf16 %v875, %v875
  %v908 = vpack.c.bf16 %v881, %v881
  %v909 = vpack.c.bf16 %v885, %v885
  %v910 = vpack.c.bf16 %v889, %v889
  %v911 = vpack.c.bf16 %v893, %v893
  %v912 = vpack.c.bf16 %v897, %v897
  %v913 = vpack.c.bf16 %v901, %v901
  %v914 = vpack.c.bf16 %v905, %v905
  %v915 = vpack.c.bf16 %v876, %v876
  %v916 = vld [vmem:[%s1] sm:$0xf]
  %v917 = vld [vmem:[%s1 + $0x4] sm:$0xf]
  %v918 = vld [vmem:[%s1 + $0x8] sm:$0xf]
  %v919 = vld [vmem:[%s1 + $0xc] sm:$0xf]
  %v920 = vld [vmem:[%s1 + $0x10] sm:$0xf]
  %v921 = vld [vmem:[%s1 + $0x14] sm:$0xf]
  %v922 = vld [vmem:[%s1 + $0x18] sm:$0xf]
  %v923 = vld [vmem:[%s1 + $0x1c] sm:$0xf]
  %v924 = vld [vmem:[%s1 + $0x20] sm:$0xf]
  %v925 = vld [vmem:[%s1 + $0x24] sm:$0xf]
  %v926 = vld [vmem:[%s1 + $0x28] sm:$0xf]
  %v927 = vld [vmem:[%s1 + $0x2c] sm:$0xf]
  %v928 = vld [vmem:[%s1 + $0x30] sm:$0xf]
  %v929 = vld [vmem:[%s1 + $0x34] sm:$0xf]
  %v930 = vld [vmem:[%s1 + $0x38] sm:$0xf]
  %v931 = vld [vmem:[%s1 + $0x3c] sm:$0xf]
  %v932 = vld [vmem:[%s1 + $0x40] sm:$0xf]
  %v933 = vld [vmem:[%s1 + $0x44] sm:$0xf]
  %v934 = vld [vmem:[%s1 + $0x48] sm:$0xf]
  %v935 = vld [vmem:[%s1 + $0x4c] sm:$0xf]
  %v936 = vld [vmem:[%s1 + $0x50] sm:$0xf]
  %v937 = vld [vmem:[%s1 + $0x54] sm:$0xf]
  %v938 = vld [vmem:[%s1 + $0x58] sm:$0xf]
  %v939 = vld [vmem:[%s1 + $0x5c] sm:$0xf]
  %v940 = vld [vmem:[%s1 + $0x60] sm:$0xf]
  %v941 = vld [vmem:[%s1 + $0x64] sm:$0xf]
  %v942 = vld [vmem:[%s1 + $0x68] sm:$0xf]
  %v943 = vld [vmem:[%s1 + $0x6c] sm:$0xf]
  %v944 = vld [vmem:[%s1 + $0x70] sm:$0xf]
  %v945 = vld [vmem:[%s1 + $0x74] sm:$0xf]
  %v946 = vld [vmem:[%s1 + $0x78] sm:$0xf]
  %v947 = vld [vmem:[%s1 + $0x7c] sm:$0xf]
  %v948 = vld [vmem:[%s1 + $0x80] sm:$0xf]
  %v949 = vld [vmem:[%s1 + $0x84] sm:$0xf]
  %v950 = vld [vmem:[%s1 + $0x88] sm:$0xf]
  %v951 = vld [vmem:[%s1 + $0x8c] sm:$0xf]
  %v952 = vld [vmem:[%s1 + $0x90] sm:$0xf]
  %v953 = vld [vmem:[%s1 + $0x94] sm:$0xf]
  %v954 = vld [vmem:[%s1 + $0x98] sm:$0xf]
  %v955 = vld [vmem:[%s1 + $0x9c] sm:$0xf]
  %v956 = vld [vmem:[%s1 + $0xa0] sm:$0xf]
  %v957 = vld [vmem:[%s1 + $0xa4] sm:$0xf]
  %v958 = vld [vmem:[%s1 + $0xa8] sm:$0xf]
  %v959 = vld [vmem:[%s1 + $0xac] sm:$0xf]
  %v960 = vld [vmem:[%s1 + $0xb0] sm:$0xf]
  %v961 = vld [vmem:[%s1 + $0xb4] sm:$0xf]
  %v962 = vld [vmem:[%s1 + $0xb8] sm:$0xf]
  %v963 = vld [vmem:[%s1 + $0xbc] sm:$0xf]
  %v964 = vld [vmem:[%s1 + $0xc0] sm:$0xf]
  %v965 = vld [vmem:[%s1 + $0xc4] sm:$0xf]
  %v966 = vld [vmem:[%s1 + $0xc8] sm:$0xf]
  %v967 = vld [vmem:[%s1 + $0xcc] sm:$0xf]
  %v968 = vld [vmem:[%s1 + $0xd0] sm:$0xf]
  %v969 = vld [vmem:[%s1 + $0xd4] sm:$0xf]
  %v970 = vld [vmem:[%s1 + $0xd8] sm:$0xf]
  %v971 = vld [vmem:[%s1 + $0xdc] sm:$0xf]
  %v972 = vld [vmem:[%s1 + $0xe0] sm:$0xf]
  %v973 = vld [vmem:[%s1 + $0xe4] sm:$0xf]
  %v974 = vld [vmem:[%s1 + $0xe8] sm:$0xf]
  %v975 = vld [vmem:[%s1 + $0xec] sm:$0xf]
  %v976 = vld [vmem:[%s1 + $0xf0] sm:$0xf]
  %v977 = vld [vmem:[%s1 + $0xf4] sm:$0xf]
  %v978 = vld [vmem:[%s1 + $0xf8] sm:$0xf]
  %v979 = vld [vmem:[%s1 + $0xfc] sm:$0xf]
  %v980 = vld [vmem:[%s1 + $0x100] sm:$0xf]
  %v981 = vld [vmem:[%s1 + $0x104] sm:$0xf]
  %v982 = vld [vmem:[%s1 + $0x108] sm:$0xf]
  %v983 = vld [vmem:[%s1 + $0x10c] sm:$0xf]
  %v984 = vld [vmem:[%s1 + $0x110] sm:$0xf]
  %v985 = vld [vmem:[%s1 + $0x114] sm:$0xf]
  %v986 = vld [vmem:[%s1 + $0x118] sm:$0xf]
  %v987 = vld [vmem:[%s1 + $0x11c] sm:$0xf]
  %v988 = vld [vmem:[%s1 + $0x120] sm:$0xf]
  %v989 = vld [vmem:[%s1 + $0x124] sm:$0xf]
  %v990 = vld [vmem:[%s1 + $0x128] sm:$0xf]
  %v991 = vld [vmem:[%s1 + $0x12c] sm:$0xf]
  %v992 = vld [vmem:[%s1 + $0x130] sm:$0xf]
  %v993 = vld [vmem:[%s1 + $0x134] sm:$0xf]
  %v994 = vld [vmem:[%s1 + $0x138] sm:$0xf]
  %v995 = vld [vmem:[%s1 + $0x13c] sm:$0xf]
  %v996 = vld [vmem:[%s1 + $0x140] sm:$0xf]
  %v997 = vld [vmem:[%s1 + $0x144] sm:$0xf]
  %v998 = vld [vmem:[%s1 + $0x148] sm:$0xf]
  %v999 = vld [vmem:[%s1 + $0x14c] sm:$0xf]
  %v1000 = vld [vmem:[%s1 + $0x150] sm:$0xf]
  %v1001 = vld [vmem:[%s1 + $0x154] sm:$0xf]
  %v1002 = vld [vmem:[%s1 + $0x158] sm:$0xf]
  %v1003 = vld [vmem:[%s1 + $0x15c] sm:$0xf]
  %v1004 = vld [vmem:[%s1 + $0x160] sm:$0xf]
  %v1005 = vld [vmem:[%s1 + $0x164] sm:$0xf]
  %v1006 = vld [vmem:[%s1 + $0x168] sm:$0xf]
  %v1007 = vld [vmem:[%s1 + $0x16c] sm:$0xf]
  %v1008 = vld [vmem:[%s1 + $0x170] sm:$0xf]
  %v1009 = vld [vmem:[%s1 + $0x174] sm:$0xf]
  %v1010 = vld [vmem:[%s1 + $0x178] sm:$0xf]
  %v1011 = vld [vmem:[%s1 + $0x17c] sm:$0xf]
  %v1012 = vld [vmem:[%s1 + $0x180] sm:$0xf]
  %v1013 = vld [vmem:[%s1 + $0x184] sm:$0xf]
  %v1014 = vld [vmem:[%s1 + $0x188] sm:$0xf]
  %v1015 = vld [vmem:[%s1 + $0x18c] sm:$0xf]
  %v1016 = vld [vmem:[%s1 + $0x190] sm:$0xf]
  %v1017 = vld [vmem:[%s1 + $0x194] sm:$0xf]
  %v1018 = vld [vmem:[%s1 + $0x198] sm:$0xf]
  %v1019 = vld [vmem:[%s1 + $0x19c] sm:$0xf]
  %v1020 = vld [vmem:[%s1 + $0x1a0] sm:$0xf]
  %v1021 = vld [vmem:[%s1 + $0x1a4] sm:$0xf]
  %v1022 = vld [vmem:[%s1 + $0x1a8] sm:$0xf]
  %v1023 = vld [vmem:[%s1 + $0x1ac] sm:$0xf]
  %v1024 = vld [vmem:[%s1 + $0x1b0] sm:$0xf]
  %v1025 = vld [vmem:[%s1 + $0x1b4] sm:$0xf]
  %v1026 = vld [vmem:[%s1 + $0x1b8] sm:$0xf]
  %v1027 = vld [vmem:[%s1 + $0x1bc] sm:$0xf]
  %v1028 = vld [vmem:[%s1 + $0x1c0] sm:$0xf]
  %v1029 = vld [vmem:[%s1 + $0x1c4] sm:$0xf]
  %v1030 = vld [vmem:[%s1 + $0x1c8] sm:$0xf]
  %v1031 = vld [vmem:[%s1 + $0x1cc] sm:$0xf]
  %v1032 = vld [vmem:[%s1 + $0x1d0] sm:$0xf]
  %v1033 = vld [vmem:[%s1 + $0x1d4] sm:$0xf]
  %v1034 = vld [vmem:[%s1 + $0x1d8] sm:$0xf]
  %v1035 = vld [vmem:[%s1 + $0x1dc] sm:$0xf]
  %v1036 = vld [vmem:[%s1 + $0x1e0] sm:$0xf]
  %v1037 = vld [vmem:[%s1 + $0x1e4] sm:$0xf]
  %v1038 = vld [vmem:[%s1 + $0x1e8] sm:$0xf]
  %v1039 = vld [vmem:[%s1 + $0x1ec] sm:$0xf]
  %v1040 = vld [vmem:[%s1 + $0x1f0] sm:$0xf]
  %v1041 = vld [vmem:[%s1 + $0x1f4] sm:$0xf]
  %v1042 = vld [vmem:[%s1 + $0x1f8] sm:$0xf]
  %v1043 = vld [vmem:[%s1 + $0x1fc] sm:$0xf]
  %v1044 = vld [vmem:[%s1 + $0x200] sm:$0xf]
  %v1045 = vld [vmem:[%s1 + $0x204] sm:$0xf]
  %v1046 = vld [vmem:[%s1 + $0x208] sm:$0xf]
  %v1047 = vld [vmem:[%s1 + $0x20c] sm:$0xf]
  %v1048 = vld [vmem:[%s1 + $0x210] sm:$0xf]
  %v1049 = vld [vmem:[%s1 + $0x214] sm:$0xf]
  %v1050 = vld [vmem:[%s1 + $0x218] sm:$0xf]
  %v1051 = vld [vmem:[%s1 + $0x21c] sm:$0xf]
  %v1052 = vld [vmem:[%s1 + $0x220] sm:$0xf]
  %v1053 = vld [vmem:[%s1 + $0x224] sm:$0xf]
  %v1054 = vld [vmem:[%s1 + $0x228] sm:$0xf]
  %v1055 = vld [vmem:[%s1 + $0x22c] sm:$0xf]
  %v1056 = vld [vmem:[%s1 + $0x230] sm:$0xf]
  %v1057 = vld [vmem:[%s1 + $0x234] sm:$0xf]
  %v1058 = vld [vmem:[%s1 + $0x238] sm:$0xf]
  %v1059 = vld [vmem:[%s1 + $0x23c] sm:$0xf]
  %v1204 = vunpack.c.l.b16 %v916
  %v1205 = vunpack.c.l.b16 %v917
  %v1206 = vunpack.c.l.b16 %v918
  %v1207 = vunpack.c.l.b16 %v919
  %v1208 = vunpack.c.l.b16 %v920
  %v1209 = vunpack.c.l.b16 %v921
  %v1210 = vunpack.c.l.b16 %v922
  %v1211 = vunpack.c.l.b16 %v923
  %v1212 = vunpack.c.l.b16 %v924
  %v1213 = vunpack.c.l.b16 %v925
  %v1214 = vunpack.c.l.b16 %v926
  %v1215 = vunpack.c.l.b16 %v927
  %v1216 = vunpack.c.l.b16 %v928
  %v1217 = vunpack.c.l.b16 %v929
  %v1218 = vunpack.c.l.b16 %v930
  %v1219 = vunpack.c.l.b16 %v931
  %v1220 = vunpack.c.l.b16 %v932
  %v1221 = vunpack.c.l.b16 %v933
  %v1222 = vunpack.c.l.b16 %v934
  %v1223 = vunpack.c.l.b16 %v935
  %v1224 = vunpack.c.l.b16 %v936
  %v1225 = vunpack.c.l.b16 %v937
  %v1226 = vunpack.c.l.b16 %v938
  %v1227 = vunpack.c.l.b16 %v939
  %v1228 = vunpack.c.l.b16 %v940
  %v1229 = vunpack.c.l.b16 %v941
  %v1230 = vunpack.c.l.b16 %v942
  %v1231 = vunpack.c.l.b16 %v943
  %v1232 = vunpack.c.l.b16 %v944
  %v1233 = vunpack.c.l.b16 %v945
  %v1234 = vunpack.c.l.b16 %v946
  %v1235 = vunpack.c.l.b16 %v947
  %v1236 = vunpack.c.l.b16 %v948
  %v1237 = vunpack.c.l.b16 %v949
  %v1238 = vunpack.c.l.b16 %v950
  %v1239 = vunpack.c.l.b16 %v951
  %v1240 = vunpack.c.l.b16 %v952
  %v1241 = vunpack.c.l.b16 %v953
  %v1242 = vunpack.c.l.b16 %v954
  %v1243 = vunpack.c.l.b16 %v955
  %v1244 = vunpack.c.l.b16 %v956
  %v1245 = vunpack.c.l.b16 %v957
  %v1246 = vunpack.c.l.b16 %v958
  %v1247 = vunpack.c.l.b16 %v959
  %v1248 = vunpack.c.l.b16 %v960
  %v1249 = vunpack.c.l.b16 %v961
  %v1250 = vunpack.c.l.b16 %v962
  %v1251 = vunpack.c.l.b16 %v963
  %v1252 = vunpack.c.l.b16 %v964
  %v1253 = vunpack.c.l.b16 %v965
  %v1254 = vunpack.c.l.b16 %v966
  %v1255 = vunpack.c.l.b16 %v967
  %v1256 = vunpack.c.l.b16 %v968
  %v1257 = vunpack.c.l.b16 %v969
  %v1258 = vunpack.c.l.b16 %v970
  %v1259 = vunpack.c.l.b16 %v971
  %v1260 = vunpack.c.l.b16 %v972
  %v1261 = vunpack.c.l.b16 %v973
  %v1262 = vunpack.c.l.b16 %v974
  %v1263 = vunpack.c.l.b16 %v975
  %v1264 = vunpack.c.l.b16 %v976
  %v1265 = vunpack.c.l.b16 %v977
  %v1266 = vunpack.c.l.b16 %v978
  %v1267 = vunpack.c.l.b16 %v979
  %v1268 = vunpack.c.l.b16 %v980
  %v1269 = vunpack.c.l.b16 %v981
  %v1270 = vunpack.c.l.b16 %v982
  %v1271 = vunpack.c.l.b16 %v983
  %v1272 = vunpack.c.l.b16 %v984
  %v1273 = vunpack.c.l.b16 %v985
  %v1274 = vunpack.c.l.b16 %v986
  %v1275 = vunpack.c.l.b16 %v987
  %v1276 = vunpack.c.l.b16 %v988
  %v1277 = vunpack.c.l.b16 %v989
  %v1278 = vunpack.c.l.b16 %v990
  %v1279 = vunpack.c.l.b16 %v991
  %v1280 = vunpack.c.l.b16 %v992
  %v1281 = vunpack.c.l.b16 %v993
  %v1282 = vunpack.c.l.b16 %v994
  %v1283 = vunpack.c.l.b16 %v995
  %v1284 = vunpack.c.l.b16 %v996
  %v1285 = vunpack.c.l.b16 %v997
  %v1286 = vunpack.c.l.b16 %v998
  %v1287 = vunpack.c.l.b16 %v999
  %v1288 = vunpack.c.l.b16 %v1000
  %v1289 = vunpack.c.l.b16 %v1001
  %v1290 = vunpack.c.l.b16 %v1002
  %v1291 = vunpack.c.l.b16 %v1003
  %v1292 = vunpack.c.l.b16 %v1004
  %v1293 = vunpack.c.l.b16 %v1005
  %v1294 = vunpack.c.l.b16 %v1006
  %v1295 = vunpack.c.l.b16 %v1007
  %v1296 = vunpack.c.l.b16 %v1008
  %v1297 = vunpack.c.l.b16 %v1009
  %v1298 = vunpack.c.l.b16 %v1010
  %v1299 = vunpack.c.l.b16 %v1011
  %v1300 = vunpack.c.l.b16 %v1012
  %v1301 = vunpack.c.l.b16 %v1013
  %v1302 = vunpack.c.l.b16 %v1014
  %v1303 = vunpack.c.l.b16 %v1015
  %v1304 = vunpack.c.l.b16 %v1016
  %v1305 = vunpack.c.l.b16 %v1017
  %v1306 = vunpack.c.l.b16 %v1018
  %v1307 = vunpack.c.l.b16 %v1019
  %v1308 = vunpack.c.l.b16 %v1020
  %v1309 = vunpack.c.l.b16 %v1021
  %v1310 = vunpack.c.l.b16 %v1022
  %v1311 = vunpack.c.l.b16 %v1023
  %v1312 = vunpack.c.l.b16 %v1024
  %v1313 = vunpack.c.l.b16 %v1025
  %v1314 = vunpack.c.l.b16 %v1026
  %v1315 = vunpack.c.l.b16 %v1027
  %v1316 = vunpack.c.l.b16 %v1028
  %v1317 = vunpack.c.l.b16 %v1029
  %v1318 = vunpack.c.l.b16 %v1030
  %v1319 = vunpack.c.l.b16 %v1031
  %v1320 = vunpack.c.l.b16 %v1032
  %v1321 = vunpack.c.l.b16 %v1033
  %v1322 = vunpack.c.l.b16 %v1034
  %v1323 = vunpack.c.l.b16 %v1035
  %v1324 = vunpack.c.l.b16 %v1036
  %v1325 = vunpack.c.l.b16 %v1037
  %v1326 = vunpack.c.l.b16 %v1038
  %v1327 = vunpack.c.l.b16 %v1039
  %v1328 = vunpack.c.l.b16 %v1040
  %v1329 = vunpack.c.l.b16 %v1041
  %v1330 = vunpack.c.l.b16 %v1042
  %v1331 = vunpack.c.l.b16 %v1043
  %v1332 = vunpack.c.l.b16 %v1044
  %v1333 = vunpack.c.l.b16 %v1045
  %v1334 = vunpack.c.l.b16 %v1046
  %v1335 = vunpack.c.l.b16 %v1047
  %v1336 = vunpack.c.l.b16 %v1048
  %v1337 = vunpack.c.l.b16 %v1049
  %v1338 = vunpack.c.l.b16 %v1050
  %v1339 = vunpack.c.l.b16 %v1051
  %v1340 = vunpack.c.l.b16 %v1052
  %v1341 = vunpack.c.l.b16 %v1053
  %v1342 = vunpack.c.l.b16 %v1054
  %v1343 = vunpack.c.l.b16 %v1055
  %v1344 = vunpack.c.l.b16 %v1056
  %v1345 = vunpack.c.l.b16 %v1057
  %v1346 = vunpack.c.l.b16 %v1058
  %v1347 = vunpack.c.l.b16 %v1059
  %v1348 = vpack.c.b16 %v1205, %v1204
  %v1349 = vpack.c.b16 %v1207, %v1206
  %v1350 = vpack.c.b16 %v1209, %v1208
  %v1351 = vpack.c.b16 %v1211, %v1210
  %v1352 = vpack.c.b16 %v1213, %v1212
  %v1353 = vpack.c.b16 %v1215, %v1214
  %v1354 = vpack.c.b16 %v1217, %v1216
  %v1355 = vpack.c.b16 %v1219, %v1218
  %v1356 = vpack.c.b16 %v1221, %v1220
  %v1357 = vpack.c.b16 %v1223, %v1222
  %v1358 = vpack.c.b16 %v1225, %v1224
  %v1359 = vpack.c.b16 %v1227, %v1226
  %v1360 = vpack.c.b16 %v1229, %v1228
  %v1361 = vpack.c.b16 %v1231, %v1230
  %v1362 = vpack.c.b16 %v1233, %v1232
  %v1363 = vpack.c.b16 %v1235, %v1234
  %v1364 = vpack.c.b16 %v1237, %v1236
  %v1365 = vpack.c.b16 %v1239, %v1238
  %v1366 = vpack.c.b16 %v1241, %v1240
  %v1367 = vpack.c.b16 %v1243, %v1242
  %v1368 = vpack.c.b16 %v1245, %v1244
  %v1369 = vpack.c.b16 %v1247, %v1246
  %v1370 = vpack.c.b16 %v1249, %v1248
  %v1371 = vpack.c.b16 %v1251, %v1250
  %v1372 = vpack.c.b16 %v1253, %v1252
  %v1373 = vpack.c.b16 %v1255, %v1254
  %v1374 = vpack.c.b16 %v1257, %v1256
  %v1375 = vpack.c.b16 %v1259, %v1258
  %v1376 = vpack.c.b16 %v1261, %v1260
  %v1377 = vpack.c.b16 %v1263, %v1262
  %v1378 = vpack.c.b16 %v1265, %v1264
  %v1379 = vpack.c.b16 %v1267, %v1266
  %v1380 = vpack.c.b16 %v1269, %v1268
  %v1381 = vpack.c.b16 %v1271, %v1270
  %v1382 = vpack.c.b16 %v1273, %v1272
  %v1383 = vpack.c.b16 %v1275, %v1274
  %v1384 = vpack.c.b16 %v1277, %v1276
  %v1385 = vpack.c.b16 %v1279, %v1278
  %v1386 = vpack.c.b16 %v1281, %v1280
  %v1387 = vpack.c.b16 %v1283, %v1282
  %v1388 = vpack.c.b16 %v1285, %v1284
  %v1389 = vpack.c.b16 %v1287, %v1286
  %v1390 = vpack.c.b16 %v1289, %v1288
  %v1391 = vpack.c.b16 %v1291, %v1290
  %v1392 = vpack.c.b16 %v1293, %v1292
  %v1393 = vpack.c.b16 %v1295, %v1294
  %v1394 = vpack.c.b16 %v1297, %v1296
  %v1395 = vpack.c.b16 %v1299, %v1298
  %v1396 = vpack.c.b16 %v1301, %v1300
  %v1397 = vpack.c.b16 %v1303, %v1302
  %v1398 = vpack.c.b16 %v1305, %v1304
  %v1399 = vpack.c.b16 %v1307, %v1306
  %v1400 = vpack.c.b16 %v1309, %v1308
  %v1401 = vpack.c.b16 %v1311, %v1310
  %v1402 = vpack.c.b16 %v1313, %v1312
  %v1403 = vpack.c.b16 %v1315, %v1314
  %v1404 = vpack.c.b16 %v1317, %v1316
  %v1405 = vpack.c.b16 %v1319, %v1318
  %v1406 = vpack.c.b16 %v1321, %v1320
  %v1407 = vpack.c.b16 %v1323, %v1322
  %v1408 = vpack.c.b16 %v1325, %v1324
  %v1409 = vpack.c.b16 %v1327, %v1326
  %v1410 = vpack.c.b16 %v1329, %v1328
  %v1411 = vpack.c.b16 %v1331, %v1330
  %v1412 = vpack.c.b16 %v1333, %v1332
  %v1413 = vpack.c.b16 %v1335, %v1334
  %v1414 = vpack.c.b16 %v1337, %v1336
  %v1415 = vpack.c.b16 %v1339, %v1338
  %v1416 = vpack.c.b16 %v1341, %v1340
  %v1417 = vpack.c.b16 %v1343, %v1342
  %v1418 = vpack.c.b16 %v1345, %v1344
  %v1419 = vpack.c.b16 %v1347, %v1346
  %1492 = vmatprep.subr.bf16.mxu0 0
  %1493 = vmatpush1.bf16.msra.mxu0 %v1355
  %1494 = vmatprep.subr.bf16.mxu0 0
  %1495 = vmatpush1.bf16.msra.mxu0 %v1354
  %1496 = vmatprep.subr.bf16.mxu0 0
  %1497 = vmatpush1.bf16.msra.mxu0 %v1353
  %1498 = vmatprep.subr.bf16.mxu0 0
  %1499 = vmatpush1.bf16.msra.mxu0 %v1352
  %1500 = vmatprep.subr.bf16.mxu0 0
  %1501 = vmatpush1.bf16.msra.mxu0 %v1351
  %1502 = vmatprep.subr.bf16.mxu0 0
  %1503 = vmatpush1.bf16.msra.mxu0 %v1350
  %1504 = vmatprep.subr.bf16.mxu0 0
  %1505 = vmatpush1.bf16.msra.mxu0 %v1349
  %1506 = vmatprep.subr.bf16.mxu0 0
  %1507 = vmatpush1.bf16.msra.mxu0 %v1348
  %1508 = vmatprep.subr.bf16.mxu0 0
  %1509 = vmatpush2.bf16.msra.mxu0 %v1363
  %1510 = vmatprep.subr.bf16.mxu0 0
  %1511 = vmatpush2.bf16.msra.mxu0 %v1362
  %1512 = vmatprep.subr.bf16.mxu0 0
  %1513 = vmatpush2.bf16.msra.mxu0 %v1361
  %1514 = vmatprep.subr.bf16.mxu0 0
  %1515 = vmatpush2.bf16.msra.mxu0 %v1360
  %1516 = vmatprep.subr.bf16.mxu0 0
  %1517 = vmatpush2.bf16.msra.mxu0 %v1359
  %1518 = vmatprep.subr.bf16.mxu0 0
  %1519 = vmatpush2.bf16.msra.mxu0 %v1358
  %1520 = vmatprep.subr.bf16.mxu0 0
  %1521 = vmatpush2.bf16.msra.mxu0 %v1357
  %1522 = vmatprep.subr.bf16.mxu0 0
  %1523 = vmatpush2.bf16.msra.mxu0 %v1356
  %1524 = vmatprep.mubr.bf16.mxu0 %v908
  %1525 = vmatmul.mubr.bf16.gmra.mxu0 %v907
  %v1526 = vpop.f32.mrf.mxu0
  %v1527 = vadd.f32 %v26, %v1526
  %v1528 = vpop.f32.mrf.mxu0
  %v1529 = vpop.f32.mrf.mxu0
  %v1530 = vpop.f32.mrf.mxu0
  %1531 = vdwg.mxu0
  %1532 = vmatprep.subr.bf16.mxu0 0
  %1533 = vmatpush1.bf16.msra.mxu0 %v1371
  %1534 = vmatprep.subr.bf16.mxu0 0
  %1535 = vmatpush1.bf16.msra.mxu0 %v1370
  %1536 = vmatprep.subr.bf16.mxu0 0
  %1537 = vmatpush1.bf16.msra.mxu0 %v1369
  %1538 = vmatprep.subr.bf16.mxu0 0
  %1539 = vmatpush1.bf16.msra.mxu0 %v1368
  %1540 = vmatprep.subr.bf16.mxu0 0
  %1541 = vmatpush1.bf16.msra.mxu0 %v1367
  %1542 = vmatprep.subr.bf16.mxu0 0
  %1543 = vmatpush1.bf16.msra.mxu0 %v1366
  %1544 = vmatprep.subr.bf16.mxu0 0
  %1545 = vmatpush1.bf16.msra.mxu0 %v1365
  %1546 = vmatprep.subr.bf16.mxu0 0
  %1547 = vmatpush1.bf16.msra.mxu0 %v1364
  %1548 = vmatprep.subr.bf16.mxu0 0
  %1549 = vmatpush2.bf16.msra.mxu0 %v1379
  %1550 = vmatprep.subr.bf16.mxu0 0
  %1551 = vmatpush2.bf16.msra.mxu0 %v1378
  %1552 = vmatprep.subr.bf16.mxu0 0
  %1553 = vmatpush2.bf16.msra.mxu0 %v1377
  %1554 = vmatprep.subr.bf16.mxu0 0
  %1555 = vmatpush2.bf16.msra.mxu0 %v1376
  %1556 = vmatprep.subr.bf16.mxu0 0
  %1557 = vmatpush2.bf16.msra.mxu0 %v1375
  %1558 = vmatprep.subr.bf16.mxu0 0
  %1559 = vmatpush2.bf16.msra.mxu0 %v1374
  %1560 = vmatprep.subr.bf16.mxu0 0
  %1561 = vmatpush2.bf16.msra.mxu0 %v1373
  %1562 = vmatprep.subr.bf16.mxu0 0
  %1563 = vmatpush2.bf16.msra.mxu0 %v1372
  %1564 = vmatprep.mubr.bf16.mxu0 %v910
  %1565 = vmatmul.mubr.bf16.gmra.mxu0 %v909
  %v1566 = vpop.f32.mrf.mxu0
  %v1567 = vadd.f32 %v1527, %v1566
  %v1568 = vpop.f32.mrf.mxu0
  %v1569 = vpop.f32.mrf.mxu0
  %v1570 = vpop.f32.mrf.mxu0
  %1571 = vdwg.mxu0
  %1572 = vmatprep.subr.bf16.mxu0 0
  %1573 = vmatpush1.bf16.msra.mxu0 %v1387
  %1574 = vmatprep.subr.bf16.mxu0 0
  %1575 = vmatpush1.bf16.msra.mxu0 %v1386
  %1576 = vmatprep.subr.bf16.mxu0 0
  %1577 = vmatpush1.bf16.msra.mxu0 %v1385
  %1578 = vmatprep.subr.bf16.mxu0 0
  %1579 = vmatpush1.bf16.msra.mxu0 %v1384
  %1580 = vmatprep.subr.bf16.mxu0 0
  %1581 = vmatpush1.bf16.msra.mxu0 %v1383
  %1582 = vmatprep.subr.bf16.mxu0 0
  %1583 = vmatpush1.bf16.msra.mxu0 %v1382
  %1584 = vmatprep.subr.bf16.mxu0 0
  %1585 = vmatpush1.bf16.msra.mxu0 %v1381
  %1586 = vmatprep.subr.bf16.mxu0 0
  %1587 = vmatpush1.bf16.msra.mxu0 %v1380
  %1588 = vmatprep.subr.bf16.mxu0 0
  %1589 = vmatpush2.bf16.msra.mxu0 %v1395
  %1590 = vmatprep.subr.bf16.mxu0 0
  %1591 = vmatpush2.bf16.msra.mxu0 %v1394
  %1592 = vmatprep.subr.bf16.mxu0 0
  %1593 = vmatpush2.bf16.msra.mxu0 %v1393
  %1594 = vmatprep.subr.bf16.mxu0 0
  %1595 = vmatpush2.bf16.msra.mxu0 %v1392
  %1596 = vmatprep.subr.bf16.mxu0 0
  %1597 = vmatpush2.bf16.msra.mxu0 %v1391
  %1598 = vmatprep.subr.bf16.mxu0 0
  %1599 = vmatpush2.bf16.msra.mxu0 %v1390
  %1600 = vmatprep.subr.bf16.mxu0 0
  %1601 = vmatpush2.bf16.msra.mxu0 %v1389
  %1602 = vmatprep.subr.bf16.mxu0 0
  %1603 = vmatpush2.bf16.msra.mxu0 %v1388
  %1604 = vmatprep.mubr.bf16.mxu0 %v912
  %1605 = vmatmul.mubr.bf16.gmra.mxu0 %v911
  %v1606 = vpop.f32.mrf.mxu0
  %v1607 = vadd.f32 %v1567, %v1606
  %v1608 = vpop.f32.mrf.mxu0
  %v1609 = vpop.f32.mrf.mxu0
  %v1610 = vpop.f32.mrf.mxu0
  %1611 = vdwg.mxu0
  %1612 = vmatprep.subr.bf16.mxu0 0
  %1613 = vmatpush1.bf16.msra.mxu0 %v1403
  %1614 = vmatprep.subr.bf16.mxu0 0
  %1615 = vmatpush1.bf16.msra.mxu0 %v1402
  %1616 = vmatprep.subr.bf16.mxu0 0
  %1617 = vmatpush1.bf16.msra.mxu0 %v1401
  %1618 = vmatprep.subr.bf16.mxu0 0
  %1619 = vmatpush1.bf16.msra.mxu0 %v1400
  %1620 = vmatprep.subr.bf16.mxu0 0
  %1621 = vmatpush1.bf16.msra.mxu0 %v1399
  %1622 = vmatprep.subr.bf16.mxu0 0
  %1623 = vmatpush1.bf16.msra.mxu0 %v1398
  %1624 = vmatprep.subr.bf16.mxu0 0
  %1625 = vmatpush1.bf16.msra.mxu0 %v1397
  %1626 = vmatprep.subr.bf16.mxu0 0
  %1627 = vmatpush1.bf16.msra.mxu0 %v1396
  %1628 = vmatprep.subr.bf16.mxu0 0
  %1629 = vmatpush2.bf16.msra.mxu0 %v1411
  %1630 = vmatprep.subr.bf16.mxu0 0
  %1631 = vmatpush2.bf16.msra.mxu0 %v1410
  %1632 = vmatprep.subr.bf16.mxu0 0
  %1633 = vmatpush2.bf16.msra.mxu0 %v1409
  %1634 = vmatprep.subr.bf16.mxu0 0
  %1635 = vmatpush2.bf16.msra.mxu0 %v1408
  %1636 = vmatprep.subr.bf16.mxu0 0
  %1637 = vmatpush2.bf16.msra.mxu0 %v1407
  %1638 = vmatprep.subr.bf16.mxu0 0
  %1639 = vmatpush2.bf16.msra.mxu0 %v1406
  %1640 = vmatprep.subr.bf16.mxu0 0
  %1641 = vmatpush2.bf16.msra.mxu0 %v1405
  %1642 = vmatprep.subr.bf16.mxu0 0
  %1643 = vmatpush2.bf16.msra.mxu0 %v1404
  %1644 = vmatprep.mubr.bf16.mxu0 %v914
  %1645 = vmatmul.mubr.bf16.gmra.mxu0 %v913
  %v1646 = vpop.f32.mrf.mxu0
  %v1647 = vadd.f32 %v1607, %v1646
  %v1648 = vpop.f32.mrf.mxu0
  %v1649 = vpop.f32.mrf.mxu0
  %v1650 = vpop.f32.mrf.mxu0
  %1651 = vdwg.mxu0
  %1652 = vmatprep.subr.bf16.mxu0 0
  %1653 = vmatpush1.bf16.msra.mxu0 %v1419
  %1654 = vmatprep.subr.bf16.mxu0 0
  %1655 = vmatpush1.bf16.msra.mxu0 %v1418
  %1656 = vmatprep.subr.bf16.mxu0 0
  %1657 = vmatpush1.bf16.msra.mxu0 %v1417
  %1658 = vmatprep.subr.bf16.mxu0 0
  %1659 = vmatpush1.bf16.msra.mxu0 %v1416
  %1660 = vmatprep.subr.bf16.mxu0 0
  %1661 = vmatpush1.bf16.msra.mxu0 %v1415
  %1662 = vmatprep.subr.bf16.mxu0 0
  %1663 = vmatpush1.bf16.msra.mxu0 %v1414
  %1664 = vmatprep.subr.bf16.mxu0 0
  %1665 = vmatpush1.bf16.msra.mxu0 %v1413
  %1666 = vmatprep.subr.bf16.mxu0 0
  %1667 = vmatpush1.bf16.msra.mxu0 %v1412
  %1668 = vmatprep.subr.bf16.mxu0 0
  %1669 = vmatpush2.bf16.msra.mxu0 0
  %1670 = vmatprep.subr.bf16.mxu0 0
  %1671 = vmatpush2.bf16.msra.mxu0 0
  %1672 = vmatprep.subr.bf16.mxu0 0
  %1673 = vmatpush2.bf16.msra.mxu0 0
  %1674 = vmatprep.subr.bf16.mxu0 0
  %1675 = vmatpush2.bf16.msra.mxu0 0
  %1676 = vmatprep.subr.bf16.mxu0 0
  %1677 = vmatpush2.bf16.msra.mxu0 0
  %1678 = vmatprep.subr.bf16.mxu0 0
  %1679 = vmatpush2.bf16.msra.mxu0 0
  %1680 = vmatprep.subr.bf16.mxu0 0
  %1681 = vmatpush2.bf16.msra.mxu0 0
  %1682 = vmatprep.subr.bf16.mxu0 0
  %1683 = vmatpush2.bf16.msra.mxu0 0
  %1684 = vmatprep.mubr.bf16.mxu0 0
  %1685 = vmatmul.mubr.bf16.gmra.mxu0 %v915
  %v1686 = vpop.f32.mrf.mxu0
  %v1687 = vadd.f32 %v1647, %v1686
  %v1688 = vpop.f32.mrf.mxu0
  %v1689 = vpop.f32.mrf.mxu0
  %v1690 = vpop.f32.mrf.mxu0
  %1691 = vdwg.mxu0
  %v1692 = vmax.f32 %v1687, 0.0
  %v1693 = vadd.f32 %v871, %v1692
  %s1694 = scalar_lea.vmem %s5, 16
  %1695 = vst [vmem:[%s1694] sm:$0xff] %v1693
  %s1696 = scalar_lea.vmem %s0, 24
  %v1697 = vld [vmem:[%s1696] sm:$0xff]
  %v1699 = vrot.slane %v1693, 4
  %v1701 = vsel %vm42, 0.0, %v1699
  %v1702 = vsel %vm42, %v1699, 0.0
  %v1705 = vrot.slane %v1701, 1
  %v1706 = vrot.slane %v1702, 1
  %v1707 = vsel %vm47, %v1705, %v1706
  %v1709 = vrot.slane %v1701, 2
  %v1710 = vrot.slane %v1702, 2
  %v1711 = vsel %vm52, %v1709, %v1710
  %v1713 = vrot.slane %v1701, 3
  %v1714 = vrot.slane %v1702, 3
  %v1715 = vsel %vm57, %v1713, %v1714
  %v1717 = vrot.slane %v1701, 4
  %v1718 = vrot.slane %v1702, 4
  %v1719 = vsel %vm42, %v1717, %v1718
  %v1721 = vrot.slane %v1701, 5
  %v1722 = vrot.slane %v1702, 5
  %v1723 = vsel %vm66, %v1721, %v1722
  %v1725 = vrot.slane %v1701, 6
  %v1726 = vrot.slane %v1702, 6
  %v1727 = vsel %vm71, %v1725, %v1726
  %v1729 = vrot.slane %v1701, 7
  %v1730 = vrot.slane %v1702, 7
  %v1731 = vsel %vm76, %v1729, %v1730
  %v1733 = vpack.c.bf16 %v1701, %v1701
  %v1734 = vpack.c.bf16 %v1707, %v1707
  %v1735 = vpack.c.bf16 %v1711, %v1711
  %v1736 = vpack.c.bf16 %v1715, %v1715
  %v1737 = vpack.c.bf16 %v1719, %v1719
  %v1738 = vpack.c.bf16 %v1723, %v1723
  %v1739 = vpack.c.bf16 %v1727, %v1727
  %v1740 = vpack.c.bf16 %v1731, %v1731
  %v1741 = vpack.c.bf16 %v1702, %v1702
  %v1742 = vld [vmem:[%s1] sm:$0xf]
  %v1743 = vld [vmem:[%s1 + $0x4] sm:$0xf]
  %v1744 = vld [vmem:[%s1 + $0x8] sm:$0xf]
  %v1745 = vld [vmem:[%s1 + $0xc] sm:$0xf]
  %v1746 = vld [vmem:[%s1 + $0x10] sm:$0xf]
  %v1747 = vld [vmem:[%s1 + $0x14] sm:$0xf]
  %v1748 = vld [vmem:[%s1 + $0x18] sm:$0xf]
  %v1749 = vld [vmem:[%s1 + $0x1c] sm:$0xf]
  %v1750 = vld [vmem:[%s1 + $0x20] sm:$0xf]
  %v1751 = vld [vmem:[%s1 + $0x24] sm:$0xf]
  %v1752 = vld [vmem:[%s1 + $0x28] sm:$0xf]
  %v1753 = vld [vmem:[%s1 + $0x2c] sm:$0xf]
  %v1754 = vld [vmem:[%s1 + $0x30] sm:$0xf]
  %v1755 = vld [vmem:[%s1 + $0x34] sm:$0xf]
  %v1756 = vld [vmem:[%s1 + $0x38] sm:$0xf]
  %v1757 = vld [vmem:[%s1 + $0x3c] sm:$0xf]
  %v1758 = vld [vmem:[%s1 + $0x40] sm:$0xf]
  %v1759 = vld [vmem:[%s1 + $0x44] sm:$0xf]
  %v1760 = vld [vmem:[%s1 + $0x48] sm:$0xf]
  %v1761 = vld [vmem:[%s1 + $0x4c] sm:$0xf]
  %v1762 = vld [vmem:[%s1 + $0x50] sm:$0xf]
  %v1763 = vld [vmem:[%s1 + $0x54] sm:$0xf]
  %v1764 = vld [vmem:[%s1 + $0x58] sm:$0xf]
  %v1765 = vld [vmem:[%s1 + $0x5c] sm:$0xf]
  %v1766 = vld [vmem:[%s1 + $0x60] sm:$0xf]
  %v1767 = vld [vmem:[%s1 + $0x64] sm:$0xf]
  %v1768 = vld [vmem:[%s1 + $0x68] sm:$0xf]
  %v1769 = vld [vmem:[%s1 + $0x6c] sm:$0xf]
  %v1770 = vld [vmem:[%s1 + $0x70] sm:$0xf]
  %v1771 = vld [vmem:[%s1 + $0x74] sm:$0xf]
  %v1772 = vld [vmem:[%s1 + $0x78] sm:$0xf]
  %v1773 = vld [vmem:[%s1 + $0x7c] sm:$0xf]
  %v1774 = vld [vmem:[%s1 + $0x80] sm:$0xf]
  %v1775 = vld [vmem:[%s1 + $0x84] sm:$0xf]
  %v1776 = vld [vmem:[%s1 + $0x88] sm:$0xf]
  %v1777 = vld [vmem:[%s1 + $0x8c] sm:$0xf]
  %v1778 = vld [vmem:[%s1 + $0x90] sm:$0xf]
  %v1779 = vld [vmem:[%s1 + $0x94] sm:$0xf]
  %v1780 = vld [vmem:[%s1 + $0x98] sm:$0xf]
  %v1781 = vld [vmem:[%s1 + $0x9c] sm:$0xf]
  %v1782 = vld [vmem:[%s1 + $0xa0] sm:$0xf]
  %v1783 = vld [vmem:[%s1 + $0xa4] sm:$0xf]
  %v1784 = vld [vmem:[%s1 + $0xa8] sm:$0xf]
  %v1785 = vld [vmem:[%s1 + $0xac] sm:$0xf]
  %v1786 = vld [vmem:[%s1 + $0xb0] sm:$0xf]
  %v1787 = vld [vmem:[%s1 + $0xb4] sm:$0xf]
  %v1788 = vld [vmem:[%s1 + $0xb8] sm:$0xf]
  %v1789 = vld [vmem:[%s1 + $0xbc] sm:$0xf]
  %v1790 = vld [vmem:[%s1 + $0xc0] sm:$0xf]
  %v1791 = vld [vmem:[%s1 + $0xc4] sm:$0xf]
  %v1792 = vld [vmem:[%s1 + $0xc8] sm:$0xf]
  %v1793 = vld [vmem:[%s1 + $0xcc] sm:$0xf]
  %v1794 = vld [vmem:[%s1 + $0xd0] sm:$0xf]
  %v1795 = vld [vmem:[%s1 + $0xd4] sm:$0xf]
  %v1796 = vld [vmem:[%s1 + $0xd8] sm:$0xf]
  %v1797 = vld [vmem:[%s1 + $0xdc] sm:$0xf]
  %v1798 = vld [vmem:[%s1 + $0xe0] sm:$0xf]
  %v1799 = vld [vmem:[%s1 + $0xe4] sm:$0xf]
  %v1800 = vld [vmem:[%s1 + $0xe8] sm:$0xf]
  %v1801 = vld [vmem:[%s1 + $0xec] sm:$0xf]
  %v1802 = vld [vmem:[%s1 + $0xf0] sm:$0xf]
  %v1803 = vld [vmem:[%s1 + $0xf4] sm:$0xf]
  %v1804 = vld [vmem:[%s1 + $0xf8] sm:$0xf]
  %v1805 = vld [vmem:[%s1 + $0xfc] sm:$0xf]
  %v1806 = vld [vmem:[%s1 + $0x100] sm:$0xf]
  %v1807 = vld [vmem:[%s1 + $0x104] sm:$0xf]
  %v1808 = vld [vmem:[%s1 + $0x108] sm:$0xf]
  %v1809 = vld [vmem:[%s1 + $0x10c] sm:$0xf]
  %v1810 = vld [vmem:[%s1 + $0x110] sm:$0xf]
  %v1811 = vld [vmem:[%s1 + $0x114] sm:$0xf]
  %v1812 = vld [vmem:[%s1 + $0x118] sm:$0xf]
  %v1813 = vld [vmem:[%s1 + $0x11c] sm:$0xf]
  %v1814 = vld [vmem:[%s1 + $0x120] sm:$0xf]
  %v1815 = vld [vmem:[%s1 + $0x124] sm:$0xf]
  %v1816 = vld [vmem:[%s1 + $0x128] sm:$0xf]
  %v1817 = vld [vmem:[%s1 + $0x12c] sm:$0xf]
  %v1818 = vld [vmem:[%s1 + $0x130] sm:$0xf]
  %v1819 = vld [vmem:[%s1 + $0x134] sm:$0xf]
  %v1820 = vld [vmem:[%s1 + $0x138] sm:$0xf]
  %v1821 = vld [vmem:[%s1 + $0x13c] sm:$0xf]
  %v1822 = vld [vmem:[%s1 + $0x140] sm:$0xf]
  %v1823 = vld [vmem:[%s1 + $0x144] sm:$0xf]
  %v1824 = vld [vmem:[%s1 + $0x148] sm:$0xf]
  %v1825 = vld [vmem:[%s1 + $0x14c] sm:$0xf]
  %v1826 = vld [vmem:[%s1 + $0x150] sm:$0xf]
  %v1827 = vld [vmem:[%s1 + $0x154] sm:$0xf]
  %v1828 = vld [vmem:[%s1 + $0x158] sm:$0xf]
  %v1829 = vld [vmem:[%s1 + $0x15c] sm:$0xf]
  %v1830 = vld [vmem:[%s1 + $0x160] sm:$0xf]
  %v1831 = vld [vmem:[%s1 + $0x164] sm:$0xf]
  %v1832 = vld [vmem:[%s1 + $0x168] sm:$0xf]
  %v1833 = vld [vmem:[%s1 + $0x16c] sm:$0xf]
  %v1834 = vld [vmem:[%s1 + $0x170] sm:$0xf]
  %v1835 = vld [vmem:[%s1 + $0x174] sm:$0xf]
  %v1836 = vld [vmem:[%s1 + $0x178] sm:$0xf]
  %v1837 = vld [vmem:[%s1 + $0x17c] sm:$0xf]
  %v1838 = vld [vmem:[%s1 + $0x180] sm:$0xf]
  %v1839 = vld [vmem:[%s1 + $0x184] sm:$0xf]
  %v1840 = vld [vmem:[%s1 + $0x188] sm:$0xf]
  %v1841 = vld [vmem:[%s1 + $0x18c] sm:$0xf]
  %v1842 = vld [vmem:[%s1 + $0x190] sm:$0xf]
  %v1843 = vld [vmem:[%s1 + $0x194] sm:$0xf]
  %v1844 = vld [vmem:[%s1 + $0x198] sm:$0xf]
  %v1845 = vld [vmem:[%s1 + $0x19c] sm:$0xf]
  %v1846 = vld [vmem:[%s1 + $0x1a0] sm:$0xf]
  %v1847 = vld [vmem:[%s1 + $0x1a4] sm:$0xf]
  %v1848 = vld [vmem:[%s1 + $0x1a8] sm:$0xf]
  %v1849 = vld [vmem:[%s1 + $0x1ac] sm:$0xf]
  %v1850 = vld [vmem:[%s1 + $0x1b0] sm:$0xf]
  %v1851 = vld [vmem:[%s1 + $0x1b4] sm:$0xf]
  %v1852 = vld [vmem:[%s1 + $0x1b8] sm:$0xf]
  %v1853 = vld [vmem:[%s1 + $0x1bc] sm:$0xf]
  %v1854 = vld [vmem:[%s1 + $0x1c0] sm:$0xf]
  %v1855 = vld [vmem:[%s1 + $0x1c4] sm:$0xf]
  %v1856 = vld [vmem:[%s1 + $0x1c8] sm:$0xf]
  %v1857 = vld [vmem:[%s1 + $0x1cc] sm:$0xf]
  %v1858 = vld [vmem:[%s1 + $0x1d0] sm:$0xf]
  %v1859 = vld [vmem:[%s1 + $0x1d4] sm:$0xf]
  %v1860 = vld [vmem:[%s1 + $0x1d8] sm:$0xf]
  %v1861 = vld [vmem:[%s1 + $0x1dc] sm:$0xf]
  %v1862 = vld [vmem:[%s1 + $0x1e0] sm:$0xf]
  %v1863 = vld [vmem:[%s1 + $0x1e4] sm:$0xf]
  %v1864 = vld [vmem:[%s1 + $0x1e8] sm:$0xf]
  %v1865 = vld [vmem:[%s1 + $0x1ec] sm:$0xf]
  %v1866 = vld [vmem:[%s1 + $0x1f0] sm:$0xf]
  %v1867 = vld [vmem:[%s1 + $0x1f4] sm:$0xf]
  %v1868 = vld [vmem:[%s1 + $0x1f8] sm:$0xf]
  %v1869 = vld [vmem:[%s1 + $0x1fc] sm:$0xf]
  %v1870 = vld [vmem:[%s1 + $0x200] sm:$0xf]
  %v1871 = vld [vmem:[%s1 + $0x204] sm:$0xf]
  %v1872 = vld [vmem:[%s1 + $0x208] sm:$0xf]
  %v1873 = vld [vmem:[%s1 + $0x20c] sm:$0xf]
  %v1874 = vld [vmem:[%s1 + $0x210] sm:$0xf]
  %v1875 = vld [vmem:[%s1 + $0x214] sm:$0xf]
  %v1876 = vld [vmem:[%s1 + $0x218] sm:$0xf]
  %v1877 = vld [vmem:[%s1 + $0x21c] sm:$0xf]
  %v1878 = vld [vmem:[%s1 + $0x220] sm:$0xf]
  %v1879 = vld [vmem:[%s1 + $0x224] sm:$0xf]
  %v1880 = vld [vmem:[%s1 + $0x228] sm:$0xf]
  %v1881 = vld [vmem:[%s1 + $0x22c] sm:$0xf]
  %v1882 = vld [vmem:[%s1 + $0x230] sm:$0xf]
  %v1883 = vld [vmem:[%s1 + $0x234] sm:$0xf]
  %v1884 = vld [vmem:[%s1 + $0x238] sm:$0xf]
  %v1885 = vld [vmem:[%s1 + $0x23c] sm:$0xf]
  %v2030 = vunpack.c.l.b16 %v1742
  %v2031 = vunpack.c.l.b16 %v1743
  %v2032 = vunpack.c.l.b16 %v1744
  %v2033 = vunpack.c.l.b16 %v1745
  %v2034 = vunpack.c.l.b16 %v1746
  %v2035 = vunpack.c.l.b16 %v1747
  %v2036 = vunpack.c.l.b16 %v1748
  %v2037 = vunpack.c.l.b16 %v1749
  %v2038 = vunpack.c.l.b16 %v1750
  %v2039 = vunpack.c.l.b16 %v1751
  %v2040 = vunpack.c.l.b16 %v1752
  %v2041 = vunpack.c.l.b16 %v1753
  %v2042 = vunpack.c.l.b16 %v1754
  %v2043 = vunpack.c.l.b16 %v1755
  %v2044 = vunpack.c.l.b16 %v1756
  %v2045 = vunpack.c.l.b16 %v1757
  %v2046 = vunpack.c.l.b16 %v1758
  %v2047 = vunpack.c.l.b16 %v1759
  %v2048 = vunpack.c.l.b16 %v1760
  %v2049 = vunpack.c.l.b16 %v1761
  %v2050 = vunpack.c.l.b16 %v1762
  %v2051 = vunpack.c.l.b16 %v1763
  %v2052 = vunpack.c.l.b16 %v1764
  %v2053 = vunpack.c.l.b16 %v1765
  %v2054 = vunpack.c.l.b16 %v1766
  %v2055 = vunpack.c.l.b16 %v1767
  %v2056 = vunpack.c.l.b16 %v1768
  %v2057 = vunpack.c.l.b16 %v1769
  %v2058 = vunpack.c.l.b16 %v1770
  %v2059 = vunpack.c.l.b16 %v1771
  %v2060 = vunpack.c.l.b16 %v1772
  %v2061 = vunpack.c.l.b16 %v1773
  %v2062 = vunpack.c.l.b16 %v1774
  %v2063 = vunpack.c.l.b16 %v1775
  %v2064 = vunpack.c.l.b16 %v1776
  %v2065 = vunpack.c.l.b16 %v1777
  %v2066 = vunpack.c.l.b16 %v1778
  %v2067 = vunpack.c.l.b16 %v1779
  %v2068 = vunpack.c.l.b16 %v1780
  %v2069 = vunpack.c.l.b16 %v1781
  %v2070 = vunpack.c.l.b16 %v1782
  %v2071 = vunpack.c.l.b16 %v1783
  %v2072 = vunpack.c.l.b16 %v1784
  %v2073 = vunpack.c.l.b16 %v1785
  %v2074 = vunpack.c.l.b16 %v1786
  %v2075 = vunpack.c.l.b16 %v1787
  %v2076 = vunpack.c.l.b16 %v1788
  %v2077 = vunpack.c.l.b16 %v1789
  %v2078 = vunpack.c.l.b16 %v1790
  %v2079 = vunpack.c.l.b16 %v1791
  %v2080 = vunpack.c.l.b16 %v1792
  %v2081 = vunpack.c.l.b16 %v1793
  %v2082 = vunpack.c.l.b16 %v1794
  %v2083 = vunpack.c.l.b16 %v1795
  %v2084 = vunpack.c.l.b16 %v1796
  %v2085 = vunpack.c.l.b16 %v1797
  %v2086 = vunpack.c.l.b16 %v1798
  %v2087 = vunpack.c.l.b16 %v1799
  %v2088 = vunpack.c.l.b16 %v1800
  %v2089 = vunpack.c.l.b16 %v1801
  %v2090 = vunpack.c.l.b16 %v1802
  %v2091 = vunpack.c.l.b16 %v1803
  %v2092 = vunpack.c.l.b16 %v1804
  %v2093 = vunpack.c.l.b16 %v1805
  %v2094 = vunpack.c.l.b16 %v1806
  %v2095 = vunpack.c.l.b16 %v1807
  %v2096 = vunpack.c.l.b16 %v1808
  %v2097 = vunpack.c.l.b16 %v1809
  %v2098 = vunpack.c.l.b16 %v1810
  %v2099 = vunpack.c.l.b16 %v1811
  %v2100 = vunpack.c.l.b16 %v1812
  %v2101 = vunpack.c.l.b16 %v1813
  %v2102 = vunpack.c.l.b16 %v1814
  %v2103 = vunpack.c.l.b16 %v1815
  %v2104 = vunpack.c.l.b16 %v1816
  %v2105 = vunpack.c.l.b16 %v1817
  %v2106 = vunpack.c.l.b16 %v1818
  %v2107 = vunpack.c.l.b16 %v1819
  %v2108 = vunpack.c.l.b16 %v1820
  %v2109 = vunpack.c.l.b16 %v1821
  %v2110 = vunpack.c.l.b16 %v1822
  %v2111 = vunpack.c.l.b16 %v1823
  %v2112 = vunpack.c.l.b16 %v1824
  %v2113 = vunpack.c.l.b16 %v1825
  %v2114 = vunpack.c.l.b16 %v1826
  %v2115 = vunpack.c.l.b16 %v1827
  %v2116 = vunpack.c.l.b16 %v1828
  %v2117 = vunpack.c.l.b16 %v1829
  %v2118 = vunpack.c.l.b16 %v1830
  %v2119 = vunpack.c.l.b16 %v1831
  %v2120 = vunpack.c.l.b16 %v1832
  %v2121 = vunpack.c.l.b16 %v1833
  %v2122 = vunpack.c.l.b16 %v1834
  %v2123 = vunpack.c.l.b16 %v1835
  %v2124 = vunpack.c.l.b16 %v1836
  %v2125 = vunpack.c.l.b16 %v1837
  %v2126 = vunpack.c.l.b16 %v1838
  %v2127 = vunpack.c.l.b16 %v1839
  %v2128 = vunpack.c.l.b16 %v1840
  %v2129 = vunpack.c.l.b16 %v1841
  %v2130 = vunpack.c.l.b16 %v1842
  %v2131 = vunpack.c.l.b16 %v1843
  %v2132 = vunpack.c.l.b16 %v1844
  %v2133 = vunpack.c.l.b16 %v1845
  %v2134 = vunpack.c.l.b16 %v1846
  %v2135 = vunpack.c.l.b16 %v1847
  %v2136 = vunpack.c.l.b16 %v1848
  %v2137 = vunpack.c.l.b16 %v1849
  %v2138 = vunpack.c.l.b16 %v1850
  %v2139 = vunpack.c.l.b16 %v1851
  %v2140 = vunpack.c.l.b16 %v1852
  %v2141 = vunpack.c.l.b16 %v1853
  %v2142 = vunpack.c.l.b16 %v1854
  %v2143 = vunpack.c.l.b16 %v1855
  %v2144 = vunpack.c.l.b16 %v1856
  %v2145 = vunpack.c.l.b16 %v1857
  %v2146 = vunpack.c.l.b16 %v1858
  %v2147 = vunpack.c.l.b16 %v1859
  %v2148 = vunpack.c.l.b16 %v1860
  %v2149 = vunpack.c.l.b16 %v1861
  %v2150 = vunpack.c.l.b16 %v1862
  %v2151 = vunpack.c.l.b16 %v1863
  %v2152 = vunpack.c.l.b16 %v1864
  %v2153 = vunpack.c.l.b16 %v1865
  %v2154 = vunpack.c.l.b16 %v1866
  %v2155 = vunpack.c.l.b16 %v1867
  %v2156 = vunpack.c.l.b16 %v1868
  %v2157 = vunpack.c.l.b16 %v1869
  %v2158 = vunpack.c.l.b16 %v1870
  %v2159 = vunpack.c.l.b16 %v1871
  %v2160 = vunpack.c.l.b16 %v1872
  %v2161 = vunpack.c.l.b16 %v1873
  %v2162 = vunpack.c.l.b16 %v1874
  %v2163 = vunpack.c.l.b16 %v1875
  %v2164 = vunpack.c.l.b16 %v1876
  %v2165 = vunpack.c.l.b16 %v1877
  %v2166 = vunpack.c.l.b16 %v1878
  %v2167 = vunpack.c.l.b16 %v1879
  %v2168 = vunpack.c.l.b16 %v1880
  %v2169 = vunpack.c.l.b16 %v1881
  %v2170 = vunpack.c.l.b16 %v1882
  %v2171 = vunpack.c.l.b16 %v1883
  %v2172 = vunpack.c.l.b16 %v1884
  %v2173 = vunpack.c.l.b16 %v1885
  %v2174 = vpack.c.b16 %v2031, %v2030
  %v2175 = vpack.c.b16 %v2033, %v2032
  %v2176 = vpack.c.b16 %v2035, %v2034
  %v2177 = vpack.c.b16 %v2037, %v2036
  %v2178 = vpack.c.b16 %v2039, %v2038
  %v2179 = vpack.c.b16 %v2041, %v2040
  %v2180 = vpack.c.b16 %v2043, %v2042
  %v2181 = vpack.c.b16 %v2045, %v2044
  %v2182 = vpack.c.b16 %v2047, %v2046
  %v2183 = vpack.c.b16 %v2049, %v2048
  %v2184 = vpack.c.b16 %v2051, %v2050
  %v2185 = vpack.c.b16 %v2053, %v2052
  %v2186 = vpack.c.b16 %v2055, %v2054
  %v2187 = vpack.c.b16 %v2057, %v2056
  %v2188 = vpack.c.b16 %v2059, %v2058
  %v2189 = vpack.c.b16 %v2061, %v2060
  %v2190 = vpack.c.b16 %v2063, %v2062
  %v2191 = vpack.c.b16 %v2065, %v2064
  %v2192 = vpack.c.b16 %v2067, %v2066
  %v2193 = vpack.c.b16 %v2069, %v2068
  %v2194 = vpack.c.b16 %v2071, %v2070
  %v2195 = vpack.c.b16 %v2073, %v2072
  %v2196 = vpack.c.b16 %v2075, %v2074
  %v2197 = vpack.c.b16 %v2077, %v2076
  %v2198 = vpack.c.b16 %v2079, %v2078
  %v2199 = vpack.c.b16 %v2081, %v2080
  %v2200 = vpack.c.b16 %v2083, %v2082
  %v2201 = vpack.c.b16 %v2085, %v2084
  %v2202 = vpack.c.b16 %v2087, %v2086
  %v2203 = vpack.c.b16 %v2089, %v2088
  %v2204 = vpack.c.b16 %v2091, %v2090
  %v2205 = vpack.c.b16 %v2093, %v2092
  %v2206 = vpack.c.b16 %v2095, %v2094
  %v2207 = vpack.c.b16 %v2097, %v2096
  %v2208 = vpack.c.b16 %v2099, %v2098
  %v2209 = vpack.c.b16 %v2101, %v2100
  %v2210 = vpack.c.b16 %v2103, %v2102
  %v2211 = vpack.c.b16 %v2105, %v2104
  %v2212 = vpack.c.b16 %v2107, %v2106
  %v2213 = vpack.c.b16 %v2109, %v2108
  %v2214 = vpack.c.b16 %v2111, %v2110
  %v2215 = vpack.c.b16 %v2113, %v2112
  %v2216 = vpack.c.b16 %v2115, %v2114
  %v2217 = vpack.c.b16 %v2117, %v2116
  %v2218 = vpack.c.b16 %v2119, %v2118
  %v2219 = vpack.c.b16 %v2121, %v2120
  %v2220 = vpack.c.b16 %v2123, %v2122
  %v2221 = vpack.c.b16 %v2125, %v2124
  %v2222 = vpack.c.b16 %v2127, %v2126
  %v2223 = vpack.c.b16 %v2129, %v2128
  %v2224 = vpack.c.b16 %v2131, %v2130
  %v2225 = vpack.c.b16 %v2133, %v2132
  %v2226 = vpack.c.b16 %v2135, %v2134
  %v2227 = vpack.c.b16 %v2137, %v2136
  %v2228 = vpack.c.b16 %v2139, %v2138
  %v2229 = vpack.c.b16 %v2141, %v2140
  %v2230 = vpack.c.b16 %v2143, %v2142
  %v2231 = vpack.c.b16 %v2145, %v2144
  %v2232 = vpack.c.b16 %v2147, %v2146
  %v2233 = vpack.c.b16 %v2149, %v2148
  %v2234 = vpack.c.b16 %v2151, %v2150
  %v2235 = vpack.c.b16 %v2153, %v2152
  %v2236 = vpack.c.b16 %v2155, %v2154
  %v2237 = vpack.c.b16 %v2157, %v2156
  %v2238 = vpack.c.b16 %v2159, %v2158
  %v2239 = vpack.c.b16 %v2161, %v2160
  %v2240 = vpack.c.b16 %v2163, %v2162
  %v2241 = vpack.c.b16 %v2165, %v2164
  %v2242 = vpack.c.b16 %v2167, %v2166
  %v2243 = vpack.c.b16 %v2169, %v2168
  %v2244 = vpack.c.b16 %v2171, %v2170
  %v2245 = vpack.c.b16 %v2173, %v2172
  %2318 = vmatprep.subr.bf16.mxu0 0
  %2319 = vmatpush1.bf16.msra.mxu0 %v2181
  %2320 = vmatprep.subr.bf16.mxu0 0
  %2321 = vmatpush1.bf16.msra.mxu0 %v2180
  %2322 = vmatprep.subr.bf16.mxu0 0
  %2323 = vmatpush1.bf16.msra.mxu0 %v2179
  %2324 = vmatprep.subr.bf16.mxu0 0
  %2325 = vmatpush1.bf16.msra.mxu0 %v2178
  %2326 = vmatprep.subr.bf16.mxu0 0
  %2327 = vmatpush1.bf16.msra.mxu0 %v2177
  %2328 = vmatprep.subr.bf16.mxu0 0
  %2329 = vmatpush1.bf16.msra.mxu0 %v2176
  %2330 = vmatprep.subr.bf16.mxu0 0
  %2331 = vmatpush1.bf16.msra.mxu0 %v2175
  %2332 = vmatprep.subr.bf16.mxu0 0
  %2333 = vmatpush1.bf16.msra.mxu0 %v2174
  %2334 = vmatprep.subr.bf16.mxu0 0
  %2335 = vmatpush2.bf16.msra.mxu0 %v2189
  %2336 = vmatprep.subr.bf16.mxu0 0
  %2337 = vmatpush2.bf16.msra.mxu0 %v2188
  %2338 = vmatprep.subr.bf16.mxu0 0
  %2339 = vmatpush2.bf16.msra.mxu0 %v2187
  %2340 = vmatprep.subr.bf16.mxu0 0
  %2341 = vmatpush2.bf16.msra.mxu0 %v2186
  %2342 = vmatprep.subr.bf16.mxu0 0
  %2343 = vmatpush2.bf16.msra.mxu0 %v2185
  %2344 = vmatprep.subr.bf16.mxu0 0
  %2345 = vmatpush2.bf16.msra.mxu0 %v2184
  %2346 = vmatprep.subr.bf16.mxu0 0
  %2347 = vmatpush2.bf16.msra.mxu0 %v2183
  %2348 = vmatprep.subr.bf16.mxu0 0
  %2349 = vmatpush2.bf16.msra.mxu0 %v2182
  %2350 = vmatprep.mubr.bf16.mxu0 %v1734
  %2351 = vmatmul.mubr.bf16.gmra.mxu0 %v1733
  %v2352 = vpop.f32.mrf.mxu0
  %v2353 = vadd.f32 %v26, %v2352
  %v2354 = vpop.f32.mrf.mxu0
  %v2355 = vpop.f32.mrf.mxu0
  %v2356 = vpop.f32.mrf.mxu0
  %2357 = vdwg.mxu0
  %2358 = vmatprep.subr.bf16.mxu0 0
  %2359 = vmatpush1.bf16.msra.mxu0 %v2197
  %2360 = vmatprep.subr.bf16.mxu0 0
  %2361 = vmatpush1.bf16.msra.mxu0 %v2196
  %2362 = vmatprep.subr.bf16.mxu0 0
  %2363 = vmatpush1.bf16.msra.mxu0 %v2195
  %2364 = vmatprep.subr.bf16.mxu0 0
  %2365 = vmatpush1.bf16.msra.mxu0 %v2194
  %2366 = vmatprep.subr.bf16.mxu0 0
  %2367 = vmatpush1.bf16.msra.mxu0 %v2193
  %2368 = vmatprep.subr.bf16.mxu0 0
  %2369 = vmatpush1.bf16.msra.mxu0 %v2192
  %2370 = vmatprep.subr.bf16.mxu0 0
  %2371 = vmatpush1.bf16.msra.mxu0 %v2191
  %2372 = vmatprep.subr.bf16.mxu0 0
  %2373 = vmatpush1.bf16.msra.mxu0 %v2190
  %2374 = vmatprep.subr.bf16.mxu0 0
  %2375 = vmatpush2.bf16.msra.mxu0 %v2205
  %2376 = vmatprep.subr.bf16.mxu0 0
  %2377 = vmatpush2.bf16.msra.mxu0 %v2204
  %2378 = vmatprep.subr.bf16.mxu0 0
  %2379 = vmatpush2.bf16.msra.mxu0 %v2203
  %2380 = vmatprep.subr.bf16.mxu0 0
  %2381 = vmatpush2.bf16.msra.mxu0 %v2202
  %2382 = vmatprep.subr.bf16.mxu0 0
  %2383 = vmatpush2.bf16.msra.mxu0 %v2201
  %2384 = vmatprep.subr.bf16.mxu0 0
  %2385 = vmatpush2.bf16.msra.mxu0 %v2200
  %2386 = vmatprep.subr.bf16.mxu0 0
  %2387 = vmatpush2.bf16.msra.mxu0 %v2199
  %2388 = vmatprep.subr.bf16.mxu0 0
  %2389 = vmatpush2.bf16.msra.mxu0 %v2198
  %2390 = vmatprep.mubr.bf16.mxu0 %v1736
  %2391 = vmatmul.mubr.bf16.gmra.mxu0 %v1735
  %v2392 = vpop.f32.mrf.mxu0
  %v2393 = vadd.f32 %v2353, %v2392
  %v2394 = vpop.f32.mrf.mxu0
  %v2395 = vpop.f32.mrf.mxu0
  %v2396 = vpop.f32.mrf.mxu0
  %2397 = vdwg.mxu0
  %2398 = vmatprep.subr.bf16.mxu0 0
  %2399 = vmatpush1.bf16.msra.mxu0 %v2213
  %2400 = vmatprep.subr.bf16.mxu0 0
  %2401 = vmatpush1.bf16.msra.mxu0 %v2212
  %2402 = vmatprep.subr.bf16.mxu0 0
  %2403 = vmatpush1.bf16.msra.mxu0 %v2211
  %2404 = vmatprep.subr.bf16.mxu0 0
  %2405 = vmatpush1.bf16.msra.mxu0 %v2210
  %2406 = vmatprep.subr.bf16.mxu0 0
  %2407 = vmatpush1.bf16.msra.mxu0 %v2209
  %2408 = vmatprep.subr.bf16.mxu0 0
  %2409 = vmatpush1.bf16.msra.mxu0 %v2208
  %2410 = vmatprep.subr.bf16.mxu0 0
  %2411 = vmatpush1.bf16.msra.mxu0 %v2207
  %2412 = vmatprep.subr.bf16.mxu0 0
  %2413 = vmatpush1.bf16.msra.mxu0 %v2206
  %2414 = vmatprep.subr.bf16.mxu0 0
  %2415 = vmatpush2.bf16.msra.mxu0 %v2221
  %2416 = vmatprep.subr.bf16.mxu0 0
  %2417 = vmatpush2.bf16.msra.mxu0 %v2220
  %2418 = vmatprep.subr.bf16.mxu0 0
  %2419 = vmatpush2.bf16.msra.mxu0 %v2219
  %2420 = vmatprep.subr.bf16.mxu0 0
  %2421 = vmatpush2.bf16.msra.mxu0 %v2218
  %2422 = vmatprep.subr.bf16.mxu0 0
  %2423 = vmatpush2.bf16.msra.mxu0 %v2217
  %2424 = vmatprep.subr.bf16.mxu0 0
  %2425 = vmatpush2.bf16.msra.mxu0 %v2216
  %2426 = vmatprep.subr.bf16.mxu0 0
  %2427 = vmatpush2.bf16.msra.mxu0 %v2215
  %2428 = vmatprep.subr.bf16.mxu0 0
  %2429 = vmatpush2.bf16.msra.mxu0 %v2214
  %2430 = vmatprep.mubr.bf16.mxu0 %v1738
  %2431 = vmatmul.mubr.bf16.gmra.mxu0 %v1737
  %v2432 = vpop.f32.mrf.mxu0
  %v2433 = vadd.f32 %v2393, %v2432
  %v2434 = vpop.f32.mrf.mxu0
  %v2435 = vpop.f32.mrf.mxu0
  %v2436 = vpop.f32.mrf.mxu0
  %2437 = vdwg.mxu0
  %2438 = vmatprep.subr.bf16.mxu0 0
  %2439 = vmatpush1.bf16.msra.mxu0 %v2229
  %2440 = vmatprep.subr.bf16.mxu0 0
  %2441 = vmatpush1.bf16.msra.mxu0 %v2228
  %2442 = vmatprep.subr.bf16.mxu0 0
  %2443 = vmatpush1.bf16.msra.mxu0 %v2227
  %2444 = vmatprep.subr.bf16.mxu0 0
  %2445 = vmatpush1.bf16.msra.mxu0 %v2226
  %2446 = vmatprep.subr.bf16.mxu0 0
  %2447 = vmatpush1.bf16.msra.mxu0 %v2225
  %2448 = vmatprep.subr.bf16.mxu0 0
  %2449 = vmatpush1.bf16.msra.mxu0 %v2224
  %2450 = vmatprep.subr.bf16.mxu0 0
  %2451 = vmatpush1.bf16.msra.mxu0 %v2223
  %2452 = vmatprep.subr.bf16.mxu0 0
  %2453 = vmatpush1.bf16.msra.mxu0 %v2222
  %2454 = vmatprep.subr.bf16.mxu0 0
  %2455 = vmatpush2.bf16.msra.mxu0 %v2237
  %2456 = vmatprep.subr.bf16.mxu0 0
  %2457 = vmatpush2.bf16.msra.mxu0 %v2236
  %2458 = vmatprep.subr.bf16.mxu0 0
  %2459 = vmatpush2.bf16.msra.mxu0 %v2235
  %2460 = vmatprep.subr.bf16.mxu0 0
  %2461 = vmatpush2.bf16.msra.mxu0 %v2234
  %2462 = vmatprep.subr.bf16.mxu0 0
  %2463 = vmatpush2.bf16.msra.mxu0 %v2233
  %2464 = vmatprep.subr.bf16.mxu0 0
  %2465 = vmatpush2.bf16.msra.mxu0 %v2232
  %2466 = vmatprep.subr.bf16.mxu0 0
  %2467 = vmatpush2.bf16.msra.mxu0 %v2231
  %2468 = vmatprep.subr.bf16.mxu0 0
  %2469 = vmatpush2.bf16.msra.mxu0 %v2230
  %2470 = vmatprep.mubr.bf16.mxu0 %v1740
  %2471 = vmatmul.mubr.bf16.gmra.mxu0 %v1739
  %v2472 = vpop.f32.mrf.mxu0
  %v2473 = vadd.f32 %v2433, %v2472
  %v2474 = vpop.f32.mrf.mxu0
  %v2475 = vpop.f32.mrf.mxu0
  %v2476 = vpop.f32.mrf.mxu0
  %2477 = vdwg.mxu0
  %2478 = vmatprep.subr.bf16.mxu0 0
  %2479 = vmatpush1.bf16.msra.mxu0 %v2245
  %2480 = vmatprep.subr.bf16.mxu0 0
  %2481 = vmatpush1.bf16.msra.mxu0 %v2244
  %2482 = vmatprep.subr.bf16.mxu0 0
  %2483 = vmatpush1.bf16.msra.mxu0 %v2243
  %2484 = vmatprep.subr.bf16.mxu0 0
  %2485 = vmatpush1.bf16.msra.mxu0 %v2242
  %2486 = vmatprep.subr.bf16.mxu0 0
  %2487 = vmatpush1.bf16.msra.mxu0 %v2241
  %2488 = vmatprep.subr.bf16.mxu0 0
  %2489 = vmatpush1.bf16.msra.mxu0 %v2240
  %2490 = vmatprep.subr.bf16.mxu0 0
  %2491 = vmatpush1.bf16.msra.mxu0 %v2239
  %2492 = vmatprep.subr.bf16.mxu0 0
  %2493 = vmatpush1.bf16.msra.mxu0 %v2238
  %2494 = vmatprep.subr.bf16.mxu0 0
  %2495 = vmatpush2.bf16.msra.mxu0 0
  %2496 = vmatprep.subr.bf16.mxu0 0
  %2497 = vmatpush2.bf16.msra.mxu0 0
  %2498 = vmatprep.subr.bf16.mxu0 0
  %2499 = vmatpush2.bf16.msra.mxu0 0
  %2500 = vmatprep.subr.bf16.mxu0 0
  %2501 = vmatpush2.bf16.msra.mxu0 0
  %2502 = vmatprep.subr.bf16.mxu0 0
  %2503 = vmatpush2.bf16.msra.mxu0 0
  %2504 = vmatprep.subr.bf16.mxu0 0
  %2505 = vmatpush2.bf16.msra.mxu0 0
  %2506 = vmatprep.subr.bf16.mxu0 0
  %2507 = vmatpush2.bf16.msra.mxu0 0
  %2508 = vmatprep.subr.bf16.mxu0 0
  %2509 = vmatpush2.bf16.msra.mxu0 0
  %2510 = vmatprep.mubr.bf16.mxu0 0
  %2511 = vmatmul.mubr.bf16.gmra.mxu0 %v1741
  %v2512 = vpop.f32.mrf.mxu0
  %v2513 = vadd.f32 %v2473, %v2512
  %v2514 = vpop.f32.mrf.mxu0
  %v2515 = vpop.f32.mrf.mxu0
  %v2516 = vpop.f32.mrf.mxu0
  %2517 = vdwg.mxu0
  %v2518 = vmax.f32 %v2513, 0.0
  %v2519 = vadd.f32 %v1697, %v2518
  %s2520 = scalar_lea.vmem %s5, 24
  %2521 = vst [vmem:[%s2520] sm:$0xff] %v2519
  %s2522 = scalar_lea.vmem %s0, 32
  %v2523 = vld [vmem:[%s2522] sm:$0xff]
  %v2525 = vrot.slane %v2519, 4
  %v2527 = vsel %vm42, 0.0, %v2525
  %v2528 = vsel %vm42, %v2525, 0.0
  %v2531 = vrot.slane %v2527, 1
  %v2532 = vrot.slane %v2528, 1
  %v2533 = vsel %vm47, %v2531, %v2532
  %v2535 = vrot.slane %v2527, 2
  %v2536 = vrot.slane %v2528, 2
  %v2537 = vsel %vm52, %v2535, %v2536
  %v2539 = vrot.slane %v2527, 3
  %v2540 = vrot.slane %v2528, 3
  %v2541 = vsel %vm57, %v2539, %v2540
  %v2543 = vrot.slane %v2527, 4
  %v2544 = vrot.slane %v2528, 4
  %v2545 = vsel %vm42, %v2543, %v2544
  %v2547 = vrot.slane %v2527, 5
  %v2548 = vrot.slane %v2528, 5
  %v2549 = vsel %vm66, %v2547, %v2548
  %v2551 = vrot.slane %v2527, 6
  %v2552 = vrot.slane %v2528, 6
  %v2553 = vsel %vm71, %v2551, %v2552
  %v2555 = vrot.slane %v2527, 7
  %v2556 = vrot.slane %v2528, 7
  %v2557 = vsel %vm76, %v2555, %v2556
  %v2559 = vpack.c.bf16 %v2527, %v2527
  %v2560 = vpack.c.bf16 %v2533, %v2533
  %v2561 = vpack.c.bf16 %v2537, %v2537
  %v2562 = vpack.c.bf16 %v2541, %v2541
  %v2563 = vpack.c.bf16 %v2545, %v2545
  %v2564 = vpack.c.bf16 %v2549, %v2549
  %v2565 = vpack.c.bf16 %v2553, %v2553
  %v2566 = vpack.c.bf16 %v2557, %v2557
  %v2567 = vpack.c.bf16 %v2528, %v2528
  %v2568 = vld [vmem:[%s1] sm:$0xf]
  %v2569 = vld [vmem:[%s1 + $0x4] sm:$0xf]
  %v2570 = vld [vmem:[%s1 + $0x8] sm:$0xf]
  %v2571 = vld [vmem:[%s1 + $0xc] sm:$0xf]
  %v2572 = vld [vmem:[%s1 + $0x10] sm:$0xf]
  %v2573 = vld [vmem:[%s1 + $0x14] sm:$0xf]
  %v2574 = vld [vmem:[%s1 + $0x18] sm:$0xf]
  %v2575 = vld [vmem:[%s1 + $0x1c] sm:$0xf]
  %v2576 = vld [vmem:[%s1 + $0x20] sm:$0xf]
  %v2577 = vld [vmem:[%s1 + $0x24] sm:$0xf]
  %v2578 = vld [vmem:[%s1 + $0x28] sm:$0xf]
  %v2579 = vld [vmem:[%s1 + $0x2c] sm:$0xf]
  %v2580 = vld [vmem:[%s1 + $0x30] sm:$0xf]
  %v2581 = vld [vmem:[%s1 + $0x34] sm:$0xf]
  %v2582 = vld [vmem:[%s1 + $0x38] sm:$0xf]
  %v2583 = vld [vmem:[%s1 + $0x3c] sm:$0xf]
  %v2584 = vld [vmem:[%s1 + $0x40] sm:$0xf]
  %v2585 = vld [vmem:[%s1 + $0x44] sm:$0xf]
  %v2586 = vld [vmem:[%s1 + $0x48] sm:$0xf]
  %v2587 = vld [vmem:[%s1 + $0x4c] sm:$0xf]
  %v2588 = vld [vmem:[%s1 + $0x50] sm:$0xf]
  %v2589 = vld [vmem:[%s1 + $0x54] sm:$0xf]
  %v2590 = vld [vmem:[%s1 + $0x58] sm:$0xf]
  %v2591 = vld [vmem:[%s1 + $0x5c] sm:$0xf]
  %v2592 = vld [vmem:[%s1 + $0x60] sm:$0xf]
  %v2593 = vld [vmem:[%s1 + $0x64] sm:$0xf]
  %v2594 = vld [vmem:[%s1 + $0x68] sm:$0xf]
  %v2595 = vld [vmem:[%s1 + $0x6c] sm:$0xf]
  %v2596 = vld [vmem:[%s1 + $0x70] sm:$0xf]
  %v2597 = vld [vmem:[%s1 + $0x74] sm:$0xf]
  %v2598 = vld [vmem:[%s1 + $0x78] sm:$0xf]
  %v2599 = vld [vmem:[%s1 + $0x7c] sm:$0xf]
  %v2600 = vld [vmem:[%s1 + $0x80] sm:$0xf]
  %v2601 = vld [vmem:[%s1 + $0x84] sm:$0xf]
  %v2602 = vld [vmem:[%s1 + $0x88] sm:$0xf]
  %v2603 = vld [vmem:[%s1 + $0x8c] sm:$0xf]
  %v2604 = vld [vmem:[%s1 + $0x90] sm:$0xf]
  %v2605 = vld [vmem:[%s1 + $0x94] sm:$0xf]
  %v2606 = vld [vmem:[%s1 + $0x98] sm:$0xf]
  %v2607 = vld [vmem:[%s1 + $0x9c] sm:$0xf]
  %v2608 = vld [vmem:[%s1 + $0xa0] sm:$0xf]
  %v2609 = vld [vmem:[%s1 + $0xa4] sm:$0xf]
  %v2610 = vld [vmem:[%s1 + $0xa8] sm:$0xf]
  %v2611 = vld [vmem:[%s1 + $0xac] sm:$0xf]
  %v2612 = vld [vmem:[%s1 + $0xb0] sm:$0xf]
  %v2613 = vld [vmem:[%s1 + $0xb4] sm:$0xf]
  %v2614 = vld [vmem:[%s1 + $0xb8] sm:$0xf]
  %v2615 = vld [vmem:[%s1 + $0xbc] sm:$0xf]
  %v2616 = vld [vmem:[%s1 + $0xc0] sm:$0xf]
  %v2617 = vld [vmem:[%s1 + $0xc4] sm:$0xf]
  %v2618 = vld [vmem:[%s1 + $0xc8] sm:$0xf]
  %v2619 = vld [vmem:[%s1 + $0xcc] sm:$0xf]
  %v2620 = vld [vmem:[%s1 + $0xd0] sm:$0xf]
  %v2621 = vld [vmem:[%s1 + $0xd4] sm:$0xf]
  %v2622 = vld [vmem:[%s1 + $0xd8] sm:$0xf]
  %v2623 = vld [vmem:[%s1 + $0xdc] sm:$0xf]
  %v2624 = vld [vmem:[%s1 + $0xe0] sm:$0xf]
  %v2625 = vld [vmem:[%s1 + $0xe4] sm:$0xf]
  %v2626 = vld [vmem:[%s1 + $0xe8] sm:$0xf]
  %v2627 = vld [vmem:[%s1 + $0xec] sm:$0xf]
  %v2628 = vld [vmem:[%s1 + $0xf0] sm:$0xf]
  %v2629 = vld [vmem:[%s1 + $0xf4] sm:$0xf]
  %v2630 = vld [vmem:[%s1 + $0xf8] sm:$0xf]
  %v2631 = vld [vmem:[%s1 + $0xfc] sm:$0xf]
  %v2632 = vld [vmem:[%s1 + $0x100] sm:$0xf]
  %v2633 = vld [vmem:[%s1 + $0x104] sm:$0xf]
  %v2634 = vld [vmem:[%s1 + $0x108] sm:$0xf]
  %v2635 = vld [vmem:[%s1 + $0x10c] sm:$0xf]
  %v2636 = vld [vmem:[%s1 + $0x110] sm:$0xf]
  %v2637 = vld [vmem:[%s1 + $0x114] sm:$0xf]
  %v2638 = vld [vmem:[%s1 + $0x118] sm:$0xf]
  %v2639 = vld [vmem:[%s1 + $0x11c] sm:$0xf]
  %v2640 = vld [vmem:[%s1 + $0x120] sm:$0xf]
  %v2641 = vld [vmem:[%s1 + $0x124] sm:$0xf]
  %v2642 = vld [vmem:[%s1 + $0x128] sm:$0xf]
  %v2643 = vld [vmem:[%s1 + $0x12c] sm:$0xf]
  %v2644 = vld [vmem:[%s1 + $0x130] sm:$0xf]
  %v2645 = vld [vmem:[%s1 + $0x134] sm:$0xf]
  %v2646 = vld [vmem:[%s1 + $0x138] sm:$0xf]
  %v2647 = vld [vmem:[%s1 + $0x13c] sm:$0xf]
  %v2648 = vld [vmem:[%s1 + $0x140] sm:$0xf]
  %v2649 = vld [vmem:[%s1 + $0x144] sm:$0xf]
  %v2650 = vld [vmem:[%s1 + $0x148] sm:$0xf]
  %v2651 = vld [vmem:[%s1 + $0x14c] sm:$0xf]
  %v2652 = vld [vmem:[%s1 + $0x150] sm:$0xf]
  %v2653 = vld [vmem:[%s1 + $0x154] sm:$0xf]
  %v2654 = vld [vmem:[%s1 + $0x158] sm:$0xf]
  %v2655 = vld [vmem:[%s1 + $0x15c] sm:$0xf]
  %v2656 = vld [vmem:[%s1 + $0x160] sm:$0xf]
  %v2657 = vld [vmem:[%s1 + $0x164] sm:$0xf]
  %v2658 = vld [vmem:[%s1 + $0x168] sm:$0xf]
  %v2659 = vld [vmem:[%s1 + $0x16c] sm:$0xf]
  %v2660 = vld [vmem:[%s1 + $0x170] sm:$0xf]
  %v2661 = vld [vmem:[%s1 + $0x174] sm:$0xf]
  %v2662 = vld [vmem:[%s1 + $0x178] sm:$0xf]
  %v2663 = vld [vmem:[%s1 + $0x17c] sm:$0xf]
  %v2664 = vld [vmem:[%s1 + $0x180] sm:$0xf]
  %v2665 = vld [vmem:[%s1 + $0x184] sm:$0xf]
  %v2666 = vld [vmem:[%s1 + $0x188] sm:$0xf]
  %v2667 = vld [vmem:[%s1 + $0x18c] sm:$0xf]
  %v2668 = vld [vmem:[%s1 + $0x190] sm:$0xf]
  %v2669 = vld [vmem:[%s1 + $0x194] sm:$0xf]
  %v2670 = vld [vmem:[%s1 + $0x198] sm:$0xf]
  %v2671 = vld [vmem:[%s1 + $0x19c] sm:$0xf]
  %v2672 = vld [vmem:[%s1 + $0x1a0] sm:$0xf]
  %v2673 = vld [vmem:[%s1 + $0x1a4] sm:$0xf]
  %v2674 = vld [vmem:[%s1 + $0x1a8] sm:$0xf]
  %v2675 = vld [vmem:[%s1 + $0x1ac] sm:$0xf]
  %v2676 = vld [vmem:[%s1 + $0x1b0] sm:$0xf]
  %v2677 = vld [vmem:[%s1 + $0x1b4] sm:$0xf]
  %v2678 = vld [vmem:[%s1 + $0x1b8] sm:$0xf]
  %v2679 = vld [vmem:[%s1 + $0x1bc] sm:$0xf]
  %v2680 = vld [vmem:[%s1 + $0x1c0] sm:$0xf]
  %v2681 = vld [vmem:[%s1 + $0x1c4] sm:$0xf]
  %v2682 = vld [vmem:[%s1 + $0x1c8] sm:$0xf]
  %v2683 = vld [vmem:[%s1 + $0x1cc] sm:$0xf]
  %v2684 = vld [vmem:[%s1 + $0x1d0] sm:$0xf]
  %v2685 = vld [vmem:[%s1 + $0x1d4] sm:$0xf]
  %v2686 = vld [vmem:[%s1 + $0x1d8] sm:$0xf]
  %v2687 = vld [vmem:[%s1 + $0x1dc] sm:$0xf]
  %v2688 = vld [vmem:[%s1 + $0x1e0] sm:$0xf]
  %v2689 = vld [vmem:[%s1 + $0x1e4] sm:$0xf]
  %v2690 = vld [vmem:[%s1 + $0x1e8] sm:$0xf]
  %v2691 = vld [vmem:[%s1 + $0x1ec] sm:$0xf]
  %v2692 = vld [vmem:[%s1 + $0x1f0] sm:$0xf]
  %v2693 = vld [vmem:[%s1 + $0x1f4] sm:$0xf]
  %v2694 = vld [vmem:[%s1 + $0x1f8] sm:$0xf]
  %v2695 = vld [vmem:[%s1 + $0x1fc] sm:$0xf]
  %v2696 = vld [vmem:[%s1 + $0x200] sm:$0xf]
  %v2697 = vld [vmem:[%s1 + $0x204] sm:$0xf]
  %v2698 = vld [vmem:[%s1 + $0x208] sm:$0xf]
  %v2699 = vld [vmem:[%s1 + $0x20c] sm:$0xf]
  %v2700 = vld [vmem:[%s1 + $0x210] sm:$0xf]
  %v2701 = vld [vmem:[%s1 + $0x214] sm:$0xf]
  %v2702 = vld [vmem:[%s1 + $0x218] sm:$0xf]
  %v2703 = vld [vmem:[%s1 + $0x21c] sm:$0xf]
  %v2704 = vld [vmem:[%s1 + $0x220] sm:$0xf]
  %v2705 = vld [vmem:[%s1 + $0x224] sm:$0xf]
  %v2706 = vld [vmem:[%s1 + $0x228] sm:$0xf]
  %v2707 = vld [vmem:[%s1 + $0x22c] sm:$0xf]
  %v2708 = vld [vmem:[%s1 + $0x230] sm:$0xf]
  %v2709 = vld [vmem:[%s1 + $0x234] sm:$0xf]
  %v2710 = vld [vmem:[%s1 + $0x238] sm:$0xf]
  %v2711 = vld [vmem:[%s1 + $0x23c] sm:$0xf]
  %v2856 = vunpack.c.l.b16 %v2568
  %v2857 = vunpack.c.l.b16 %v2569
  %v2858 = vunpack.c.l.b16 %v2570
  %v2859 = vunpack.c.l.b16 %v2571
  %v2860 = vunpack.c.l.b16 %v2572
  %v2861 = vunpack.c.l.b16 %v2573
  %v2862 = vunpack.c.l.b16 %v2574
  %v2863 = vunpack.c.l.b16 %v2575
  %v2864 = vunpack.c.l.b16 %v2576
  %v2865 = vunpack.c.l.b16 %v2577
  %v2866 = vunpack.c.l.b16 %v2578
  %v2867 = vunpack.c.l.b16 %v2579
  %v2868 = vunpack.c.l.b16 %v2580
  %v2869 = vunpack.c.l.b16 %v2581
  %v2870 = vunpack.c.l.b16 %v2582
  %v2871 = vunpack.c.l.b16 %v2583
  %v2872 = vunpack.c.l.b16 %v2584
  %v2873 = vunpack.c.l.b16 %v2585
  %v2874 = vunpack.c.l.b16 %v2586
  %v2875 = vunpack.c.l.b16 %v2587
  %v2876 = vunpack.c.l.b16 %v2588
  %v2877 = vunpack.c.l.b16 %v2589
  %v2878 = vunpack.c.l.b16 %v2590
  %v2879 = vunpack.c.l.b16 %v2591
  %v2880 = vunpack.c.l.b16 %v2592
  %v2881 = vunpack.c.l.b16 %v2593
  %v2882 = vunpack.c.l.b16 %v2594
  %v2883 = vunpack.c.l.b16 %v2595
  %v2884 = vunpack.c.l.b16 %v2596
  %v2885 = vunpack.c.l.b16 %v2597
  %v2886 = vunpack.c.l.b16 %v2598
  %v2887 = vunpack.c.l.b16 %v2599
  %v2888 = vunpack.c.l.b16 %v2600
  %v2889 = vunpack.c.l.b16 %v2601
  %v2890 = vunpack.c.l.b16 %v2602
  %v2891 = vunpack.c.l.b16 %v2603
  %v2892 = vunpack.c.l.b16 %v2604
  %v2893 = vunpack.c.l.b16 %v2605
  %v2894 = vunpack.c.l.b16 %v2606
  %v2895 = vunpack.c.l.b16 %v2607
  %v2896 = vunpack.c.l.b16 %v2608
  %v2897 = vunpack.c.l.b16 %v2609
  %v2898 = vunpack.c.l.b16 %v2610
  %v2899 = vunpack.c.l.b16 %v2611
  %v2900 = vunpack.c.l.b16 %v2612
  %v2901 = vunpack.c.l.b16 %v2613
  %v2902 = vunpack.c.l.b16 %v2614
  %v2903 = vunpack.c.l.b16 %v2615
  %v2904 = vunpack.c.l.b16 %v2616
  %v2905 = vunpack.c.l.b16 %v2617
  %v2906 = vunpack.c.l.b16 %v2618
  %v2907 = vunpack.c.l.b16 %v2619
  %v2908 = vunpack.c.l.b16 %v2620
  %v2909 = vunpack.c.l.b16 %v2621
  %v2910 = vunpack.c.l.b16 %v2622
  %v2911 = vunpack.c.l.b16 %v2623
  %v2912 = vunpack.c.l.b16 %v2624
  %v2913 = vunpack.c.l.b16 %v2625
  %v2914 = vunpack.c.l.b16 %v2626
  %v2915 = vunpack.c.l.b16 %v2627
  %v2916 = vunpack.c.l.b16 %v2628
  %v2917 = vunpack.c.l.b16 %v2629
  %v2918 = vunpack.c.l.b16 %v2630
  %v2919 = vunpack.c.l.b16 %v2631
  %v2920 = vunpack.c.l.b16 %v2632
  %v2921 = vunpack.c.l.b16 %v2633
  %v2922 = vunpack.c.l.b16 %v2634
  %v2923 = vunpack.c.l.b16 %v2635
  %v2924 = vunpack.c.l.b16 %v2636
  %v2925 = vunpack.c.l.b16 %v2637
  %v2926 = vunpack.c.l.b16 %v2638
  %v2927 = vunpack.c.l.b16 %v2639
  %v2928 = vunpack.c.l.b16 %v2640
  %v2929 = vunpack.c.l.b16 %v2641
  %v2930 = vunpack.c.l.b16 %v2642
  %v2931 = vunpack.c.l.b16 %v2643
  %v2932 = vunpack.c.l.b16 %v2644
  %v2933 = vunpack.c.l.b16 %v2645
  %v2934 = vunpack.c.l.b16 %v2646
  %v2935 = vunpack.c.l.b16 %v2647
  %v2936 = vunpack.c.l.b16 %v2648
  %v2937 = vunpack.c.l.b16 %v2649
  %v2938 = vunpack.c.l.b16 %v2650
  %v2939 = vunpack.c.l.b16 %v2651
  %v2940 = vunpack.c.l.b16 %v2652
  %v2941 = vunpack.c.l.b16 %v2653
  %v2942 = vunpack.c.l.b16 %v2654
  %v2943 = vunpack.c.l.b16 %v2655
  %v2944 = vunpack.c.l.b16 %v2656
  %v2945 = vunpack.c.l.b16 %v2657
  %v2946 = vunpack.c.l.b16 %v2658
  %v2947 = vunpack.c.l.b16 %v2659
  %v2948 = vunpack.c.l.b16 %v2660
  %v2949 = vunpack.c.l.b16 %v2661
  %v2950 = vunpack.c.l.b16 %v2662
  %v2951 = vunpack.c.l.b16 %v2663
  %v2952 = vunpack.c.l.b16 %v2664
  %v2953 = vunpack.c.l.b16 %v2665
  %v2954 = vunpack.c.l.b16 %v2666
  %v2955 = vunpack.c.l.b16 %v2667
  %v2956 = vunpack.c.l.b16 %v2668
  %v2957 = vunpack.c.l.b16 %v2669
  %v2958 = vunpack.c.l.b16 %v2670
  %v2959 = vunpack.c.l.b16 %v2671
  %v2960 = vunpack.c.l.b16 %v2672
  %v2961 = vunpack.c.l.b16 %v2673
  %v2962 = vunpack.c.l.b16 %v2674
  %v2963 = vunpack.c.l.b16 %v2675
  %v2964 = vunpack.c.l.b16 %v2676
  %v2965 = vunpack.c.l.b16 %v2677
  %v2966 = vunpack.c.l.b16 %v2678
  %v2967 = vunpack.c.l.b16 %v2679
  %v2968 = vunpack.c.l.b16 %v2680
  %v2969 = vunpack.c.l.b16 %v2681
  %v2970 = vunpack.c.l.b16 %v2682
  %v2971 = vunpack.c.l.b16 %v2683
  %v2972 = vunpack.c.l.b16 %v2684
  %v2973 = vunpack.c.l.b16 %v2685
  %v2974 = vunpack.c.l.b16 %v2686
  %v2975 = vunpack.c.l.b16 %v2687
  %v2976 = vunpack.c.l.b16 %v2688
  %v2977 = vunpack.c.l.b16 %v2689
  %v2978 = vunpack.c.l.b16 %v2690
  %v2979 = vunpack.c.l.b16 %v2691
  %v2980 = vunpack.c.l.b16 %v2692
  %v2981 = vunpack.c.l.b16 %v2693
  %v2982 = vunpack.c.l.b16 %v2694
  %v2983 = vunpack.c.l.b16 %v2695
  %v2984 = vunpack.c.l.b16 %v2696
  %v2985 = vunpack.c.l.b16 %v2697
  %v2986 = vunpack.c.l.b16 %v2698
  %v2987 = vunpack.c.l.b16 %v2699
  %v2988 = vunpack.c.l.b16 %v2700
  %v2989 = vunpack.c.l.b16 %v2701
  %v2990 = vunpack.c.l.b16 %v2702
  %v2991 = vunpack.c.l.b16 %v2703
  %v2992 = vunpack.c.l.b16 %v2704
  %v2993 = vunpack.c.l.b16 %v2705
  %v2994 = vunpack.c.l.b16 %v2706
  %v2995 = vunpack.c.l.b16 %v2707
  %v2996 = vunpack.c.l.b16 %v2708
  %v2997 = vunpack.c.l.b16 %v2709
  %v2998 = vunpack.c.l.b16 %v2710
  %v2999 = vunpack.c.l.b16 %v2711
  %v3000 = vpack.c.b16 %v2857, %v2856
  %v3001 = vpack.c.b16 %v2859, %v2858
  %v3002 = vpack.c.b16 %v2861, %v2860
  %v3003 = vpack.c.b16 %v2863, %v2862
  %v3004 = vpack.c.b16 %v2865, %v2864
  %v3005 = vpack.c.b16 %v2867, %v2866
  %v3006 = vpack.c.b16 %v2869, %v2868
  %v3007 = vpack.c.b16 %v2871, %v2870
  %v3008 = vpack.c.b16 %v2873, %v2872
  %v3009 = vpack.c.b16 %v2875, %v2874
  %v3010 = vpack.c.b16 %v2877, %v2876
  %v3011 = vpack.c.b16 %v2879, %v2878
  %v3012 = vpack.c.b16 %v2881, %v2880
  %v3013 = vpack.c.b16 %v2883, %v2882
  %v3014 = vpack.c.b16 %v2885, %v2884
  %v3015 = vpack.c.b16 %v2887, %v2886
  %v3016 = vpack.c.b16 %v2889, %v2888
  %v3017 = vpack.c.b16 %v2891, %v2890
  %v3018 = vpack.c.b16 %v2893, %v2892
  %v3019 = vpack.c.b16 %v2895, %v2894
  %v3020 = vpack.c.b16 %v2897, %v2896
  %v3021 = vpack.c.b16 %v2899, %v2898
  %v3022 = vpack.c.b16 %v2901, %v2900
  %v3023 = vpack.c.b16 %v2903, %v2902
  %v3024 = vpack.c.b16 %v2905, %v2904
  %v3025 = vpack.c.b16 %v2907, %v2906
  %v3026 = vpack.c.b16 %v2909, %v2908
  %v3027 = vpack.c.b16 %v2911, %v2910
  %v3028 = vpack.c.b16 %v2913, %v2912
  %v3029 = vpack.c.b16 %v2915, %v2914
  %v3030 = vpack.c.b16 %v2917, %v2916
  %v3031 = vpack.c.b16 %v2919, %v2918
  %v3032 = vpack.c.b16 %v2921, %v2920
  %v3033 = vpack.c.b16 %v2923, %v2922
  %v3034 = vpack.c.b16 %v2925, %v2924
  %v3035 = vpack.c.b16 %v2927, %v2926
  %v3036 = vpack.c.b16 %v2929, %v2928
  %v3037 = vpack.c.b16 %v2931, %v2930
  %v3038 = vpack.c.b16 %v2933, %v2932
  %v3039 = vpack.c.b16 %v2935, %v2934
  %v3040 = vpack.c.b16 %v2937, %v2936
  %v3041 = vpack.c.b16 %v2939, %v2938
  %v3042 = vpack.c.b16 %v2941, %v2940
  %v3043 = vpack.c.b16 %v2943, %v2942
  %v3044 = vpack.c.b16 %v2945, %v2944
  %v3045 = vpack.c.b16 %v2947, %v2946
  %v3046 = vpack.c.b16 %v2949, %v2948
  %v3047 = vpack.c.b16 %v2951, %v2950
  %v3048 = vpack.c.b16 %v2953, %v2952
  %v3049 = vpack.c.b16 %v2955, %v2954
  %v3050 = vpack.c.b16 %v2957, %v2956
  %v3051 = vpack.c.b16 %v2959, %v2958
  %v3052 = vpack.c.b16 %v2961, %v2960
  %v3053 = vpack.c.b16 %v2963, %v2962
  %v3054 = vpack.c.b16 %v2965, %v2964
  %v3055 = vpack.c.b16 %v2967, %v2966
  %v3056 = vpack.c.b16 %v2969, %v2968
  %v3057 = vpack.c.b16 %v2971, %v2970
  %v3058 = vpack.c.b16 %v2973, %v2972
  %v3059 = vpack.c.b16 %v2975, %v2974
  %v3060 = vpack.c.b16 %v2977, %v2976
  %v3061 = vpack.c.b16 %v2979, %v2978
  %v3062 = vpack.c.b16 %v2981, %v2980
  %v3063 = vpack.c.b16 %v2983, %v2982
  %v3064 = vpack.c.b16 %v2985, %v2984
  %v3065 = vpack.c.b16 %v2987, %v2986
  %v3066 = vpack.c.b16 %v2989, %v2988
  %v3067 = vpack.c.b16 %v2991, %v2990
  %v3068 = vpack.c.b16 %v2993, %v2992
  %v3069 = vpack.c.b16 %v2995, %v2994
  %v3070 = vpack.c.b16 %v2997, %v2996
  %v3071 = vpack.c.b16 %v2999, %v2998
  %3144 = vmatprep.subr.bf16.mxu0 0
  %3145 = vmatpush1.bf16.msra.mxu0 %v3007
  %3146 = vmatprep.subr.bf16.mxu0 0
  %3147 = vmatpush1.bf16.msra.mxu0 %v3006
  %3148 = vmatprep.subr.bf16.mxu0 0
  %3149 = vmatpush1.bf16.msra.mxu0 %v3005
  %3150 = vmatprep.subr.bf16.mxu0 0
  %3151 = vmatpush1.bf16.msra.mxu0 %v3004
  %3152 = vmatprep.subr.bf16.mxu0 0
  %3153 = vmatpush1.bf16.msra.mxu0 %v3003
  %3154 = vmatprep.subr.bf16.mxu0 0
  %3155 = vmatpush1.bf16.msra.mxu0 %v3002
  %3156 = vmatprep.subr.bf16.mxu0 0
  %3157 = vmatpush1.bf16.msra.mxu0 %v3001
  %3158 = vmatprep.subr.bf16.mxu0 0
  %3159 = vmatpush1.bf16.msra.mxu0 %v3000
  %3160 = vmatprep.subr.bf16.mxu0 0
  %3161 = vmatpush2.bf16.msra.mxu0 %v3015
  %3162 = vmatprep.subr.bf16.mxu0 0
  %3163 = vmatpush2.bf16.msra.mxu0 %v3014
  %3164 = vmatprep.subr.bf16.mxu0 0
  %3165 = vmatpush2.bf16.msra.mxu0 %v3013
  %3166 = vmatprep.subr.bf16.mxu0 0
  %3167 = vmatpush2.bf16.msra.mxu0 %v3012
  %3168 = vmatprep.subr.bf16.mxu0 0
  %3169 = vmatpush2.bf16.msra.mxu0 %v3011
  %3170 = vmatprep.subr.bf16.mxu0 0
  %3171 = vmatpush2.bf16.msra.mxu0 %v3010
  %3172 = vmatprep.subr.bf16.mxu0 0
  %3173 = vmatpush2.bf16.msra.mxu0 %v3009
  %3174 = vmatprep.subr.bf16.mxu0 0
  %3175 = vmatpush2.bf16.msra.mxu0 %v3008
  %3176 = vmatprep.mubr.bf16.mxu0 %v2560
  %3177 = vmatmul.mubr.bf16.gmra.mxu0 %v2559
  %v3178 = vpop.f32.mrf.mxu0
  %v3179 = vadd.f32 %v26, %v3178
  %v3180 = vpop.f32.mrf.mxu0
  %v3181 = vpop.f32.mrf.mxu0
  %v3182 = vpop.f32.mrf.mxu0
  %3183 = vdwg.mxu0
  %3184 = vmatprep.subr.bf16.mxu0 0
  %3185 = vmatpush1.bf16.msra.mxu0 %v3023
  %3186 = vmatprep.subr.bf16.mxu0 0
  %3187 = vmatpush1.bf16.msra.mxu0 %v3022
  %3188 = vmatprep.subr.bf16.mxu0 0
  %3189 = vmatpush1.bf16.msra.mxu0 %v3021
  %3190 = vmatprep.subr.bf16.mxu0 0
  %3191 = vmatpush1.bf16.msra.mxu0 %v3020
  %3192 = vmatprep.subr.bf16.mxu0 0
  %3193 = vmatpush1.bf16.msra.mxu0 %v3019
  %3194 = vmatprep.subr.bf16.mxu0 0
  %3195 = vmatpush1.bf16.msra.mxu0 %v3018
  %3196 = vmatprep.subr.bf16.mxu0 0
  %3197 = vmatpush1.bf16.msra.mxu0 %v3017
  %3198 = vmatprep.subr.bf16.mxu0 0
  %3199 = vmatpush1.bf16.msra.mxu0 %v3016
  %3200 = vmatprep.subr.bf16.mxu0 0
  %3201 = vmatpush2.bf16.msra.mxu0 %v3031
  %3202 = vmatprep.subr.bf16.mxu0 0
  %3203 = vmatpush2.bf16.msra.mxu0 %v3030
  %3204 = vmatprep.subr.bf16.mxu0 0
  %3205 = vmatpush2.bf16.msra.mxu0 %v3029
  %3206 = vmatprep.subr.bf16.mxu0 0
  %3207 = vmatpush2.bf16.msra.mxu0 %v3028
  %3208 = vmatprep.subr.bf16.mxu0 0
  %3209 = vmatpush2.bf16.msra.mxu0 %v3027
  %3210 = vmatprep.subr.bf16.mxu0 0
  %3211 = vmatpush2.bf16.msra.mxu0 %v3026
  %3212 = vmatprep.subr.bf16.mxu0 0
  %3213 = vmatpush2.bf16.msra.mxu0 %v3025
  %3214 = vmatprep.subr.bf16.mxu0 0
  %3215 = vmatpush2.bf16.msra.mxu0 %v3024
  %3216 = vmatprep.mubr.bf16.mxu0 %v2562
  %3217 = vmatmul.mubr.bf16.gmra.mxu0 %v2561
  %v3218 = vpop.f32.mrf.mxu0
  %v3219 = vadd.f32 %v3179, %v3218
  %v3220 = vpop.f32.mrf.mxu0
  %v3221 = vpop.f32.mrf.mxu0
  %v3222 = vpop.f32.mrf.mxu0
  %3223 = vdwg.mxu0
  %3224 = vmatprep.subr.bf16.mxu0 0
  %3225 = vmatpush1.bf16.msra.mxu0 %v3039
  %3226 = vmatprep.subr.bf16.mxu0 0
  %3227 = vmatpush1.bf16.msra.mxu0 %v3038
  %3228 = vmatprep.subr.bf16.mxu0 0
  %3229 = vmatpush1.bf16.msra.mxu0 %v3037
  %3230 = vmatprep.subr.bf16.mxu0 0
  %3231 = vmatpush1.bf16.msra.mxu0 %v3036
  %3232 = vmatprep.subr.bf16.mxu0 0
  %3233 = vmatpush1.bf16.msra.mxu0 %v3035
  %3234 = vmatprep.subr.bf16.mxu0 0
  %3235 = vmatpush1.bf16.msra.mxu0 %v3034
  %3236 = vmatprep.subr.bf16.mxu0 0
  %3237 = vmatpush1.bf16.msra.mxu0 %v3033
  %3238 = vmatprep.subr.bf16.mxu0 0
  %3239 = vmatpush1.bf16.msra.mxu0 %v3032
  %3240 = vmatprep.subr.bf16.mxu0 0
  %3241 = vmatpush2.bf16.msra.mxu0 %v3047
  %3242 = vmatprep.subr.bf16.mxu0 0
  %3243 = vmatpush2.bf16.msra.mxu0 %v3046
  %3244 = vmatprep.subr.bf16.mxu0 0
  %3245 = vmatpush2.bf16.msra.mxu0 %v3045
  %3246 = vmatprep.subr.bf16.mxu0 0
  %3247 = vmatpush2.bf16.msra.mxu0 %v3044
  %3248 = vmatprep.subr.bf16.mxu0 0
  %3249 = vmatpush2.bf16.msra.mxu0 %v3043
  %3250 = vmatprep.subr.bf16.mxu0 0
  %3251 = vmatpush2.bf16.msra.mxu0 %v3042
  %3252 = vmatprep.subr.bf16.mxu0 0
  %3253 = vmatpush2.bf16.msra.mxu0 %v3041
  %3254 = vmatprep.subr.bf16.mxu0 0
  %3255 = vmatpush2.bf16.msra.mxu0 %v3040
  %3256 = vmatprep.mubr.bf16.mxu0 %v2564
  %3257 = vmatmul.mubr.bf16.gmra.mxu0 %v2563
  %v3258 = vpop.f32.mrf.mxu0
  %v3259 = vadd.f32 %v3219, %v3258
  %v3260 = vpop.f32.mrf.mxu0
  %v3261 = vpop.f32.mrf.mxu0
  %v3262 = vpop.f32.mrf.mxu0
  %3263 = vdwg.mxu0
  %3264 = vmatprep.subr.bf16.mxu0 0
  %3265 = vmatpush1.bf16.msra.mxu0 %v3055
  %3266 = vmatprep.subr.bf16.mxu0 0
  %3267 = vmatpush1.bf16.msra.mxu0 %v3054
  %3268 = vmatprep.subr.bf16.mxu0 0
  %3269 = vmatpush1.bf16.msra.mxu0 %v3053
  %3270 = vmatprep.subr.bf16.mxu0 0
  %3271 = vmatpush1.bf16.msra.mxu0 %v3052
  %3272 = vmatprep.subr.bf16.mxu0 0
  %3273 = vmatpush1.bf16.msra.mxu0 %v3051
  %3274 = vmatprep.subr.bf16.mxu0 0
  %3275 = vmatpush1.bf16.msra.mxu0 %v3050
  %3276 = vmatprep.subr.bf16.mxu0 0
  %3277 = vmatpush1.bf16.msra.mxu0 %v3049
  %3278 = vmatprep.subr.bf16.mxu0 0
  %3279 = vmatpush1.bf16.msra.mxu0 %v3048
  %3280 = vmatprep.subr.bf16.mxu0 0
  %3281 = vmatpush2.bf16.msra.mxu0 %v3063
  %3282 = vmatprep.subr.bf16.mxu0 0
  %3283 = vmatpush2.bf16.msra.mxu0 %v3062
  %3284 = vmatprep.subr.bf16.mxu0 0
  %3285 = vmatpush2.bf16.msra.mxu0 %v3061
  %3286 = vmatprep.subr.bf16.mxu0 0
  %3287 = vmatpush2.bf16.msra.mxu0 %v3060
  %3288 = vmatprep.subr.bf16.mxu0 0
  %3289 = vmatpush2.bf16.msra.mxu0 %v3059
  %3290 = vmatprep.subr.bf16.mxu0 0
  %3291 = vmatpush2.bf16.msra.mxu0 %v3058
  %3292 = vmatprep.subr.bf16.mxu0 0
  %3293 = vmatpush2.bf16.msra.mxu0 %v3057
  %3294 = vmatprep.subr.bf16.mxu0 0
  %3295 = vmatpush2.bf16.msra.mxu0 %v3056
  %3296 = vmatprep.mubr.bf16.mxu0 %v2566
  %3297 = vmatmul.mubr.bf16.gmra.mxu0 %v2565
  %v3298 = vpop.f32.mrf.mxu0
  %v3299 = vadd.f32 %v3259, %v3298
  %v3300 = vpop.f32.mrf.mxu0
  %v3301 = vpop.f32.mrf.mxu0
  %v3302 = vpop.f32.mrf.mxu0
  %3303 = vdwg.mxu0
  %3304 = vmatprep.subr.bf16.mxu0 0
  %3305 = vmatpush1.bf16.msra.mxu0 %v3071
  %3306 = vmatprep.subr.bf16.mxu0 0
  %3307 = vmatpush1.bf16.msra.mxu0 %v3070
  %3308 = vmatprep.subr.bf16.mxu0 0
  %3309 = vmatpush1.bf16.msra.mxu0 %v3069
  %3310 = vmatprep.subr.bf16.mxu0 0
  %3311 = vmatpush1.bf16.msra.mxu0 %v3068
  %3312 = vmatprep.subr.bf16.mxu0 0
  %3313 = vmatpush1.bf16.msra.mxu0 %v3067
  %3314 = vmatprep.subr.bf16.mxu0 0
  %3315 = vmatpush1.bf16.msra.mxu0 %v3066
  %3316 = vmatprep.subr.bf16.mxu0 0
  %3317 = vmatpush1.bf16.msra.mxu0 %v3065
  %3318 = vmatprep.subr.bf16.mxu0 0
  %3319 = vmatpush1.bf16.msra.mxu0 %v3064
  %3320 = vmatprep.subr.bf16.mxu0 0
  %3321 = vmatpush2.bf16.msra.mxu0 0
  %3322 = vmatprep.subr.bf16.mxu0 0
  %3323 = vmatpush2.bf16.msra.mxu0 0
  %3324 = vmatprep.subr.bf16.mxu0 0
  %3325 = vmatpush2.bf16.msra.mxu0 0
  %3326 = vmatprep.subr.bf16.mxu0 0
  %3327 = vmatpush2.bf16.msra.mxu0 0
  %3328 = vmatprep.subr.bf16.mxu0 0
  %3329 = vmatpush2.bf16.msra.mxu0 0
  %3330 = vmatprep.subr.bf16.mxu0 0
  %3331 = vmatpush2.bf16.msra.mxu0 0
  %3332 = vmatprep.subr.bf16.mxu0 0
  %3333 = vmatpush2.bf16.msra.mxu0 0
  %3334 = vmatprep.subr.bf16.mxu0 0
  %3335 = vmatpush2.bf16.msra.mxu0 0
  %3336 = vmatprep.mubr.bf16.mxu0 0
  %3337 = vmatmul.mubr.bf16.gmra.mxu0 %v2567
  %v3338 = vpop.f32.mrf.mxu0
  %v3339 = vadd.f32 %v3299, %v3338
  %v3340 = vpop.f32.mrf.mxu0
  %v3341 = vpop.f32.mrf.mxu0
  %v3342 = vpop.f32.mrf.mxu0
  %3343 = vdwg.mxu0
  %v3344 = vmax.f32 %v3339, 0.0
  %v3345 = vadd.f32 %v2523, %v3344
  %s3346 = scalar_lea.vmem %s5, 32
  %3347 = vst [vmem:[%s3346] sm:$0xff] %v3345
  %s3348 = scalar_lea.vmem %s0, 40
  %v3349 = vld [vmem:[%s3348] sm:$0xff]
  %v3351 = vrot.slane %v3345, 4
  %v3353 = vsel %vm42, 0.0, %v3351
  %v3354 = vsel %vm42, %v3351, 0.0
  %v3357 = vrot.slane %v3353, 1
  %v3358 = vrot.slane %v3354, 1
  %v3359 = vsel %vm47, %v3357, %v3358
  %v3361 = vrot.slane %v3353, 2
  %v3362 = vrot.slane %v3354, 2
  %v3363 = vsel %vm52, %v3361, %v3362
  %v3365 = vrot.slane %v3353, 3
  %v3366 = vrot.slane %v3354, 3
  %v3367 = vsel %vm57, %v3365, %v3366
  %v3369 = vrot.slane %v3353, 4
  %v3370 = vrot.slane %v3354, 4
  %v3371 = vsel %vm42, %v3369, %v3370
  %v3373 = vrot.slane %v3353, 5
  %v3374 = vrot.slane %v3354, 5
  %v3375 = vsel %vm66, %v3373, %v3374
  %v3377 = vrot.slane %v3353, 6
  %v3378 = vrot.slane %v3354, 6
  %v3379 = vsel %vm71, %v3377, %v3378
  %v3381 = vrot.slane %v3353, 7
  %v3382 = vrot.slane %v3354, 7
  %v3383 = vsel %vm76, %v3381, %v3382
  %v3385 = vpack.c.bf16 %v3353, %v3353
  %v3386 = vpack.c.bf16 %v3359, %v3359
  %v3387 = vpack.c.bf16 %v3363, %v3363
  %v3388 = vpack.c.bf16 %v3367, %v3367
  %v3389 = vpack.c.bf16 %v3371, %v3371
  %v3390 = vpack.c.bf16 %v3375, %v3375
  %v3391 = vpack.c.bf16 %v3379, %v3379
  %v3392 = vpack.c.bf16 %v3383, %v3383
  %v3393 = vpack.c.bf16 %v3354, %v3354
  %v3394 = vld [vmem:[%s1] sm:$0xf]
  %v3395 = vld [vmem:[%s1 + $0x4] sm:$0xf]
  %v3396 = vld [vmem:[%s1 + $0x8] sm:$0xf]
  %v3397 = vld [vmem:[%s1 + $0xc] sm:$0xf]
  %v3398 = vld [vmem:[%s1 + $0x10] sm:$0xf]
  %v3399 = vld [vmem:[%s1 + $0x14] sm:$0xf]
  %v3400 = vld [vmem:[%s1 + $0x18] sm:$0xf]
  %v3401 = vld [vmem:[%s1 + $0x1c] sm:$0xf]
  %v3402 = vld [vmem:[%s1 + $0x20] sm:$0xf]
  %v3403 = vld [vmem:[%s1 + $0x24] sm:$0xf]
  %v3404 = vld [vmem:[%s1 + $0x28] sm:$0xf]
  %v3405 = vld [vmem:[%s1 + $0x2c] sm:$0xf]
  %v3406 = vld [vmem:[%s1 + $0x30] sm:$0xf]
  %v3407 = vld [vmem:[%s1 + $0x34] sm:$0xf]
  %v3408 = vld [vmem:[%s1 + $0x38] sm:$0xf]
  %v3409 = vld [vmem:[%s1 + $0x3c] sm:$0xf]
  %v3410 = vld [vmem:[%s1 + $0x40] sm:$0xf]
  %v3411 = vld [vmem:[%s1 + $0x44] sm:$0xf]
  %v3412 = vld [vmem:[%s1 + $0x48] sm:$0xf]
  %v3413 = vld [vmem:[%s1 + $0x4c] sm:$0xf]
  %v3414 = vld [vmem:[%s1 + $0x50] sm:$0xf]
  %v3415 = vld [vmem:[%s1 + $0x54] sm:$0xf]
  %v3416 = vld [vmem:[%s1 + $0x58] sm:$0xf]
  %v3417 = vld [vmem:[%s1 + $0x5c] sm:$0xf]
  %v3418 = vld [vmem:[%s1 + $0x60] sm:$0xf]
  %v3419 = vld [vmem:[%s1 + $0x64] sm:$0xf]
  %v3420 = vld [vmem:[%s1 + $0x68] sm:$0xf]
  %v3421 = vld [vmem:[%s1 + $0x6c] sm:$0xf]
  %v3422 = vld [vmem:[%s1 + $0x70] sm:$0xf]
  %v3423 = vld [vmem:[%s1 + $0x74] sm:$0xf]
  %v3424 = vld [vmem:[%s1 + $0x78] sm:$0xf]
  %v3425 = vld [vmem:[%s1 + $0x7c] sm:$0xf]
  %v3426 = vld [vmem:[%s1 + $0x80] sm:$0xf]
  %v3427 = vld [vmem:[%s1 + $0x84] sm:$0xf]
  %v3428 = vld [vmem:[%s1 + $0x88] sm:$0xf]
  %v3429 = vld [vmem:[%s1 + $0x8c] sm:$0xf]
  %v3430 = vld [vmem:[%s1 + $0x90] sm:$0xf]
  %v3431 = vld [vmem:[%s1 + $0x94] sm:$0xf]
  %v3432 = vld [vmem:[%s1 + $0x98] sm:$0xf]
  %v3433 = vld [vmem:[%s1 + $0x9c] sm:$0xf]
  %v3434 = vld [vmem:[%s1 + $0xa0] sm:$0xf]
  %v3435 = vld [vmem:[%s1 + $0xa4] sm:$0xf]
  %v3436 = vld [vmem:[%s1 + $0xa8] sm:$0xf]
  %v3437 = vld [vmem:[%s1 + $0xac] sm:$0xf]
  %v3438 = vld [vmem:[%s1 + $0xb0] sm:$0xf]
  %v3439 = vld [vmem:[%s1 + $0xb4] sm:$0xf]
  %v3440 = vld [vmem:[%s1 + $0xb8] sm:$0xf]
  %v3441 = vld [vmem:[%s1 + $0xbc] sm:$0xf]
  %v3442 = vld [vmem:[%s1 + $0xc0] sm:$0xf]
  %v3443 = vld [vmem:[%s1 + $0xc4] sm:$0xf]
  %v3444 = vld [vmem:[%s1 + $0xc8] sm:$0xf]
  %v3445 = vld [vmem:[%s1 + $0xcc] sm:$0xf]
  %v3446 = vld [vmem:[%s1 + $0xd0] sm:$0xf]
  %v3447 = vld [vmem:[%s1 + $0xd4] sm:$0xf]
  %v3448 = vld [vmem:[%s1 + $0xd8] sm:$0xf]
  %v3449 = vld [vmem:[%s1 + $0xdc] sm:$0xf]
  %v3450 = vld [vmem:[%s1 + $0xe0] sm:$0xf]
  %v3451 = vld [vmem:[%s1 + $0xe4] sm:$0xf]
  %v3452 = vld [vmem:[%s1 + $0xe8] sm:$0xf]
  %v3453 = vld [vmem:[%s1 + $0xec] sm:$0xf]
  %v3454 = vld [vmem:[%s1 + $0xf0] sm:$0xf]
  %v3455 = vld [vmem:[%s1 + $0xf4] sm:$0xf]
  %v3456 = vld [vmem:[%s1 + $0xf8] sm:$0xf]
  %v3457 = vld [vmem:[%s1 + $0xfc] sm:$0xf]
  %v3458 = vld [vmem:[%s1 + $0x100] sm:$0xf]
  %v3459 = vld [vmem:[%s1 + $0x104] sm:$0xf]
  %v3460 = vld [vmem:[%s1 + $0x108] sm:$0xf]
  %v3461 = vld [vmem:[%s1 + $0x10c] sm:$0xf]
  %v3462 = vld [vmem:[%s1 + $0x110] sm:$0xf]
  %v3463 = vld [vmem:[%s1 + $0x114] sm:$0xf]
  %v3464 = vld [vmem:[%s1 + $0x118] sm:$0xf]
  %v3465 = vld [vmem:[%s1 + $0x11c] sm:$0xf]
  %v3466 = vld [vmem:[%s1 + $0x120] sm:$0xf]
  %v3467 = vld [vmem:[%s1 + $0x124] sm:$0xf]
  %v3468 = vld [vmem:[%s1 + $0x128] sm:$0xf]
  %v3469 = vld [vmem:[%s1 + $0x12c] sm:$0xf]
  %v3470 = vld [vmem:[%s1 + $0x130] sm:$0xf]
  %v3471 = vld [vmem:[%s1 + $0x134] sm:$0xf]
  %v3472 = vld [vmem:[%s1 + $0x138] sm:$0xf]
  %v3473 = vld [vmem:[%s1 + $0x13c] sm:$0xf]
  %v3474 = vld [vmem:[%s1 + $0x140] sm:$0xf]
  %v3475 = vld [vmem:[%s1 + $0x144] sm:$0xf]
  %v3476 = vld [vmem:[%s1 + $0x148] sm:$0xf]
  %v3477 = vld [vmem:[%s1 + $0x14c] sm:$0xf]
  %v3478 = vld [vmem:[%s1 + $0x150] sm:$0xf]
  %v3479 = vld [vmem:[%s1 + $0x154] sm:$0xf]
  %v3480 = vld [vmem:[%s1 + $0x158] sm:$0xf]
  %v3481 = vld [vmem:[%s1 + $0x15c] sm:$0xf]
  %v3482 = vld [vmem:[%s1 + $0x160] sm:$0xf]
  %v3483 = vld [vmem:[%s1 + $0x164] sm:$0xf]
  %v3484 = vld [vmem:[%s1 + $0x168] sm:$0xf]
  %v3485 = vld [vmem:[%s1 + $0x16c] sm:$0xf]
  %v3486 = vld [vmem:[%s1 + $0x170] sm:$0xf]
  %v3487 = vld [vmem:[%s1 + $0x174] sm:$0xf]
  %v3488 = vld [vmem:[%s1 + $0x178] sm:$0xf]
  %v3489 = vld [vmem:[%s1 + $0x17c] sm:$0xf]
  %v3490 = vld [vmem:[%s1 + $0x180] sm:$0xf]
  %v3491 = vld [vmem:[%s1 + $0x184] sm:$0xf]
  %v3492 = vld [vmem:[%s1 + $0x188] sm:$0xf]
  %v3493 = vld [vmem:[%s1 + $0x18c] sm:$0xf]
  %v3494 = vld [vmem:[%s1 + $0x190] sm:$0xf]
  %v3495 = vld [vmem:[%s1 + $0x194] sm:$0xf]
  %v3496 = vld [vmem:[%s1 + $0x198] sm:$0xf]
  %v3497 = vld [vmem:[%s1 + $0x19c] sm:$0xf]
  %v3498 = vld [vmem:[%s1 + $0x1a0] sm:$0xf]
  %v3499 = vld [vmem:[%s1 + $0x1a4] sm:$0xf]
  %v3500 = vld [vmem:[%s1 + $0x1a8] sm:$0xf]
  %v3501 = vld [vmem:[%s1 + $0x1ac] sm:$0xf]
  %v3502 = vld [vmem:[%s1 + $0x1b0] sm:$0xf]
  %v3503 = vld [vmem:[%s1 + $0x1b4] sm:$0xf]
  %v3504 = vld [vmem:[%s1 + $0x1b8] sm:$0xf]
  %v3505 = vld [vmem:[%s1 + $0x1bc] sm:$0xf]
  %v3506 = vld [vmem:[%s1 + $0x1c0] sm:$0xf]
  %v3507 = vld [vmem:[%s1 + $0x1c4] sm:$0xf]
  %v3508 = vld [vmem:[%s1 + $0x1c8] sm:$0xf]
  %v3509 = vld [vmem:[%s1 + $0x1cc] sm:$0xf]
  %v3510 = vld [vmem:[%s1 + $0x1d0] sm:$0xf]
  %v3511 = vld [vmem:[%s1 + $0x1d4] sm:$0xf]
  %v3512 = vld [vmem:[%s1 + $0x1d8] sm:$0xf]
  %v3513 = vld [vmem:[%s1 + $0x1dc] sm:$0xf]
  %v3514 = vld [vmem:[%s1 + $0x1e0] sm:$0xf]
  %v3515 = vld [vmem:[%s1 + $0x1e4] sm:$0xf]
  %v3516 = vld [vmem:[%s1 + $0x1e8] sm:$0xf]
  %v3517 = vld [vmem:[%s1 + $0x1ec] sm:$0xf]
  %v3518 = vld [vmem:[%s1 + $0x1f0] sm:$0xf]
  %v3519 = vld [vmem:[%s1 + $0x1f4] sm:$0xf]
  %v3520 = vld [vmem:[%s1 + $0x1f8] sm:$0xf]
  %v3521 = vld [vmem:[%s1 + $0x1fc] sm:$0xf]
  %v3522 = vld [vmem:[%s1 + $0x200] sm:$0xf]
  %v3523 = vld [vmem:[%s1 + $0x204] sm:$0xf]
  %v3524 = vld [vmem:[%s1 + $0x208] sm:$0xf]
  %v3525 = vld [vmem:[%s1 + $0x20c] sm:$0xf]
  %v3526 = vld [vmem:[%s1 + $0x210] sm:$0xf]
  %v3527 = vld [vmem:[%s1 + $0x214] sm:$0xf]
  %v3528 = vld [vmem:[%s1 + $0x218] sm:$0xf]
  %v3529 = vld [vmem:[%s1 + $0x21c] sm:$0xf]
  %v3530 = vld [vmem:[%s1 + $0x220] sm:$0xf]
  %v3531 = vld [vmem:[%s1 + $0x224] sm:$0xf]
  %v3532 = vld [vmem:[%s1 + $0x228] sm:$0xf]
  %v3533 = vld [vmem:[%s1 + $0x22c] sm:$0xf]
  %v3534 = vld [vmem:[%s1 + $0x230] sm:$0xf]
  %v3535 = vld [vmem:[%s1 + $0x234] sm:$0xf]
  %v3536 = vld [vmem:[%s1 + $0x238] sm:$0xf]
  %v3537 = vld [vmem:[%s1 + $0x23c] sm:$0xf]
  %v3682 = vunpack.c.l.b16 %v3394
  %v3683 = vunpack.c.l.b16 %v3395
  %v3684 = vunpack.c.l.b16 %v3396
  %v3685 = vunpack.c.l.b16 %v3397
  %v3686 = vunpack.c.l.b16 %v3398
  %v3687 = vunpack.c.l.b16 %v3399
  %v3688 = vunpack.c.l.b16 %v3400
  %v3689 = vunpack.c.l.b16 %v3401
  %v3690 = vunpack.c.l.b16 %v3402
  %v3691 = vunpack.c.l.b16 %v3403
  %v3692 = vunpack.c.l.b16 %v3404
  %v3693 = vunpack.c.l.b16 %v3405
  %v3694 = vunpack.c.l.b16 %v3406
  %v3695 = vunpack.c.l.b16 %v3407
  %v3696 = vunpack.c.l.b16 %v3408
  %v3697 = vunpack.c.l.b16 %v3409
  %v3698 = vunpack.c.l.b16 %v3410
  %v3699 = vunpack.c.l.b16 %v3411
  %v3700 = vunpack.c.l.b16 %v3412
  %v3701 = vunpack.c.l.b16 %v3413
  %v3702 = vunpack.c.l.b16 %v3414
  %v3703 = vunpack.c.l.b16 %v3415
  %v3704 = vunpack.c.l.b16 %v3416
  %v3705 = vunpack.c.l.b16 %v3417
  %v3706 = vunpack.c.l.b16 %v3418
  %v3707 = vunpack.c.l.b16 %v3419
  %v3708 = vunpack.c.l.b16 %v3420
  %v3709 = vunpack.c.l.b16 %v3421
  %v3710 = vunpack.c.l.b16 %v3422
  %v3711 = vunpack.c.l.b16 %v3423
  %v3712 = vunpack.c.l.b16 %v3424
  %v3713 = vunpack.c.l.b16 %v3425
  %v3714 = vunpack.c.l.b16 %v3426
  %v3715 = vunpack.c.l.b16 %v3427
  %v3716 = vunpack.c.l.b16 %v3428
  %v3717 = vunpack.c.l.b16 %v3429
  %v3718 = vunpack.c.l.b16 %v3430
  %v3719 = vunpack.c.l.b16 %v3431
  %v3720 = vunpack.c.l.b16 %v3432
  %v3721 = vunpack.c.l.b16 %v3433
  %v3722 = vunpack.c.l.b16 %v3434
  %v3723 = vunpack.c.l.b16 %v3435
  %v3724 = vunpack.c.l.b16 %v3436
  %v3725 = vunpack.c.l.b16 %v3437
  %v3726 = vunpack.c.l.b16 %v3438
  %v3727 = vunpack.c.l.b16 %v3439
  %v3728 = vunpack.c.l.b16 %v3440
  %v3729 = vunpack.c.l.b16 %v3441
  %v3730 = vunpack.c.l.b16 %v3442
  %v3731 = vunpack.c.l.b16 %v3443
  %v3732 = vunpack.c.l.b16 %v3444
  %v3733 = vunpack.c.l.b16 %v3445
  %v3734 = vunpack.c.l.b16 %v3446
  %v3735 = vunpack.c.l.b16 %v3447
  %v3736 = vunpack.c.l.b16 %v3448
  %v3737 = vunpack.c.l.b16 %v3449
  %v3738 = vunpack.c.l.b16 %v3450
  %v3739 = vunpack.c.l.b16 %v3451
  %v3740 = vunpack.c.l.b16 %v3452
  %v3741 = vunpack.c.l.b16 %v3453
  %v3742 = vunpack.c.l.b16 %v3454
  %v3743 = vunpack.c.l.b16 %v3455
  %v3744 = vunpack.c.l.b16 %v3456
  %v3745 = vunpack.c.l.b16 %v3457
  %v3746 = vunpack.c.l.b16 %v3458
  %v3747 = vunpack.c.l.b16 %v3459
  %v3748 = vunpack.c.l.b16 %v3460
  %v3749 = vunpack.c.l.b16 %v3461
  %v3750 = vunpack.c.l.b16 %v3462
  %v3751 = vunpack.c.l.b16 %v3463
  %v3752 = vunpack.c.l.b16 %v3464
  %v3753 = vunpack.c.l.b16 %v3465
  %v3754 = vunpack.c.l.b16 %v3466
  %v3755 = vunpack.c.l.b16 %v3467
  %v3756 = vunpack.c.l.b16 %v3468
  %v3757 = vunpack.c.l.b16 %v3469
  %v3758 = vunpack.c.l.b16 %v3470
  %v3759 = vunpack.c.l.b16 %v3471
  %v3760 = vunpack.c.l.b16 %v3472
  %v3761 = vunpack.c.l.b16 %v3473
  %v3762 = vunpack.c.l.b16 %v3474
  %v3763 = vunpack.c.l.b16 %v3475
  %v3764 = vunpack.c.l.b16 %v3476
  %v3765 = vunpack.c.l.b16 %v3477
  %v3766 = vunpack.c.l.b16 %v3478
  %v3767 = vunpack.c.l.b16 %v3479
  %v3768 = vunpack.c.l.b16 %v3480
  %v3769 = vunpack.c.l.b16 %v3481
  %v3770 = vunpack.c.l.b16 %v3482
  %v3771 = vunpack.c.l.b16 %v3483
  %v3772 = vunpack.c.l.b16 %v3484
  %v3773 = vunpack.c.l.b16 %v3485
  %v3774 = vunpack.c.l.b16 %v3486
  %v3775 = vunpack.c.l.b16 %v3487
  %v3776 = vunpack.c.l.b16 %v3488
  %v3777 = vunpack.c.l.b16 %v3489
  %v3778 = vunpack.c.l.b16 %v3490
  %v3779 = vunpack.c.l.b16 %v3491
  %v3780 = vunpack.c.l.b16 %v3492
  %v3781 = vunpack.c.l.b16 %v3493
  %v3782 = vunpack.c.l.b16 %v3494
  %v3783 = vunpack.c.l.b16 %v3495
  %v3784 = vunpack.c.l.b16 %v3496
  %v3785 = vunpack.c.l.b16 %v3497
  %v3786 = vunpack.c.l.b16 %v3498
  %v3787 = vunpack.c.l.b16 %v3499
  %v3788 = vunpack.c.l.b16 %v3500
  %v3789 = vunpack.c.l.b16 %v3501
  %v3790 = vunpack.c.l.b16 %v3502
  %v3791 = vunpack.c.l.b16 %v3503
  %v3792 = vunpack.c.l.b16 %v3504
  %v3793 = vunpack.c.l.b16 %v3505
  %v3794 = vunpack.c.l.b16 %v3506
  %v3795 = vunpack.c.l.b16 %v3507
  %v3796 = vunpack.c.l.b16 %v3508
  %v3797 = vunpack.c.l.b16 %v3509
  %v3798 = vunpack.c.l.b16 %v3510
  %v3799 = vunpack.c.l.b16 %v3511
  %v3800 = vunpack.c.l.b16 %v3512
  %v3801 = vunpack.c.l.b16 %v3513
  %v3802 = vunpack.c.l.b16 %v3514
  %v3803 = vunpack.c.l.b16 %v3515
  %v3804 = vunpack.c.l.b16 %v3516
  %v3805 = vunpack.c.l.b16 %v3517
  %v3806 = vunpack.c.l.b16 %v3518
  %v3807 = vunpack.c.l.b16 %v3519
  %v3808 = vunpack.c.l.b16 %v3520
  %v3809 = vunpack.c.l.b16 %v3521
  %v3810 = vunpack.c.l.b16 %v3522
  %v3811 = vunpack.c.l.b16 %v3523
  %v3812 = vunpack.c.l.b16 %v3524
  %v3813 = vunpack.c.l.b16 %v3525
  %v3814 = vunpack.c.l.b16 %v3526
  %v3815 = vunpack.c.l.b16 %v3527
  %v3816 = vunpack.c.l.b16 %v3528
  %v3817 = vunpack.c.l.b16 %v3529
  %v3818 = vunpack.c.l.b16 %v3530
  %v3819 = vunpack.c.l.b16 %v3531
  %v3820 = vunpack.c.l.b16 %v3532
  %v3821 = vunpack.c.l.b16 %v3533
  %v3822 = vunpack.c.l.b16 %v3534
  %v3823 = vunpack.c.l.b16 %v3535
  %v3824 = vunpack.c.l.b16 %v3536
  %v3825 = vunpack.c.l.b16 %v3537
  %v3826 = vpack.c.b16 %v3683, %v3682
  %v3827 = vpack.c.b16 %v3685, %v3684
  %v3828 = vpack.c.b16 %v3687, %v3686
  %v3829 = vpack.c.b16 %v3689, %v3688
  %v3830 = vpack.c.b16 %v3691, %v3690
  %v3831 = vpack.c.b16 %v3693, %v3692
  %v3832 = vpack.c.b16 %v3695, %v3694
  %v3833 = vpack.c.b16 %v3697, %v3696
  %v3834 = vpack.c.b16 %v3699, %v3698
  %v3835 = vpack.c.b16 %v3701, %v3700
  %v3836 = vpack.c.b16 %v3703, %v3702
  %v3837 = vpack.c.b16 %v3705, %v3704
  %v3838 = vpack.c.b16 %v3707, %v3706
  %v3839 = vpack.c.b16 %v3709, %v3708
  %v3840 = vpack.c.b16 %v3711, %v3710
  %v3841 = vpack.c.b16 %v3713, %v3712
  %v3842 = vpack.c.b16 %v3715, %v3714
  %v3843 = vpack.c.b16 %v3717, %v3716
  %v3844 = vpack.c.b16 %v3719, %v3718
  %v3845 = vpack.c.b16 %v3721, %v3720
  %v3846 = vpack.c.b16 %v3723, %v3722
  %v3847 = vpack.c.b16 %v3725, %v3724
  %v3848 = vpack.c.b16 %v3727, %v3726
  %v3849 = vpack.c.b16 %v3729, %v3728
  %v3850 = vpack.c.b16 %v3731, %v3730
  %v3851 = vpack.c.b16 %v3733, %v3732
  %v3852 = vpack.c.b16 %v3735, %v3734
  %v3853 = vpack.c.b16 %v3737, %v3736
  %v3854 = vpack.c.b16 %v3739, %v3738
  %v3855 = vpack.c.b16 %v3741, %v3740
  %v3856 = vpack.c.b16 %v3743, %v3742
  %v3857 = vpack.c.b16 %v3745, %v3744
  %v3858 = vpack.c.b16 %v3747, %v3746
  %v3859 = vpack.c.b16 %v3749, %v3748
  %v3860 = vpack.c.b16 %v3751, %v3750
  %v3861 = vpack.c.b16 %v3753, %v3752
  %v3862 = vpack.c.b16 %v3755, %v3754
  %v3863 = vpack.c.b16 %v3757, %v3756
  %v3864 = vpack.c.b16 %v3759, %v3758
  %v3865 = vpack.c.b16 %v3761, %v3760
  %v3866 = vpack.c.b16 %v3763, %v3762
  %v3867 = vpack.c.b16 %v3765, %v3764
  %v3868 = vpack.c.b16 %v3767, %v3766
  %v3869 = vpack.c.b16 %v3769, %v3768
  %v3870 = vpack.c.b16 %v3771, %v3770
  %v3871 = vpack.c.b16 %v3773, %v3772
  %v3872 = vpack.c.b16 %v3775, %v3774
  %v3873 = vpack.c.b16 %v3777, %v3776
  %v3874 = vpack.c.b16 %v3779, %v3778
  %v3875 = vpack.c.b16 %v3781, %v3780
  %v3876 = vpack.c.b16 %v3783, %v3782
  %v3877 = vpack.c.b16 %v3785, %v3784
  %v3878 = vpack.c.b16 %v3787, %v3786
  %v3879 = vpack.c.b16 %v3789, %v3788
  %v3880 = vpack.c.b16 %v3791, %v3790
  %v3881 = vpack.c.b16 %v3793, %v3792
  %v3882 = vpack.c.b16 %v3795, %v3794
  %v3883 = vpack.c.b16 %v3797, %v3796
  %v3884 = vpack.c.b16 %v3799, %v3798
  %v3885 = vpack.c.b16 %v3801, %v3800
  %v3886 = vpack.c.b16 %v3803, %v3802
  %v3887 = vpack.c.b16 %v3805, %v3804
  %v3888 = vpack.c.b16 %v3807, %v3806
  %v3889 = vpack.c.b16 %v3809, %v3808
  %v3890 = vpack.c.b16 %v3811, %v3810
  %v3891 = vpack.c.b16 %v3813, %v3812
  %v3892 = vpack.c.b16 %v3815, %v3814
  %v3893 = vpack.c.b16 %v3817, %v3816
  %v3894 = vpack.c.b16 %v3819, %v3818
  %v3895 = vpack.c.b16 %v3821, %v3820
  %v3896 = vpack.c.b16 %v3823, %v3822
  %v3897 = vpack.c.b16 %v3825, %v3824
  %3970 = vmatprep.subr.bf16.mxu0 0
  %3971 = vmatpush1.bf16.msra.mxu0 %v3833
  %3972 = vmatprep.subr.bf16.mxu0 0
  %3973 = vmatpush1.bf16.msra.mxu0 %v3832
  %3974 = vmatprep.subr.bf16.mxu0 0
  %3975 = vmatpush1.bf16.msra.mxu0 %v3831
  %3976 = vmatprep.subr.bf16.mxu0 0
  %3977 = vmatpush1.bf16.msra.mxu0 %v3830
  %3978 = vmatprep.subr.bf16.mxu0 0
  %3979 = vmatpush1.bf16.msra.mxu0 %v3829
  %3980 = vmatprep.subr.bf16.mxu0 0
  %3981 = vmatpush1.bf16.msra.mxu0 %v3828
  %3982 = vmatprep.subr.bf16.mxu0 0
  %3983 = vmatpush1.bf16.msra.mxu0 %v3827
  %3984 = vmatprep.subr.bf16.mxu0 0
  %3985 = vmatpush1.bf16.msra.mxu0 %v3826
  %3986 = vmatprep.subr.bf16.mxu0 0
  %3987 = vmatpush2.bf16.msra.mxu0 %v3841
  %3988 = vmatprep.subr.bf16.mxu0 0
  %3989 = vmatpush2.bf16.msra.mxu0 %v3840
  %3990 = vmatprep.subr.bf16.mxu0 0
  %3991 = vmatpush2.bf16.msra.mxu0 %v3839
  %3992 = vmatprep.subr.bf16.mxu0 0
  %3993 = vmatpush2.bf16.msra.mxu0 %v3838
  %3994 = vmatprep.subr.bf16.mxu0 0
  %3995 = vmatpush2.bf16.msra.mxu0 %v3837
  %3996 = vmatprep.subr.bf16.mxu0 0
  %3997 = vmatpush2.bf16.msra.mxu0 %v3836
  %3998 = vmatprep.subr.bf16.mxu0 0
  %3999 = vmatpush2.bf16.msra.mxu0 %v3835
  %4000 = vmatprep.subr.bf16.mxu0 0
  %4001 = vmatpush2.bf16.msra.mxu0 %v3834
  %4002 = vmatprep.mubr.bf16.mxu0 %v3386
  %4003 = vmatmul.mubr.bf16.gmra.mxu0 %v3385
  %v4004 = vpop.f32.mrf.mxu0
  %v4005 = vadd.f32 %v26, %v4004
  %v4006 = vpop.f32.mrf.mxu0
  %v4007 = vpop.f32.mrf.mxu0
  %v4008 = vpop.f32.mrf.mxu0
  %4009 = vdwg.mxu0
  %4010 = vmatprep.subr.bf16.mxu0 0
  %4011 = vmatpush1.bf16.msra.mxu0 %v3849
  %4012 = vmatprep.subr.bf16.mxu0 0
  %4013 = vmatpush1.bf16.msra.mxu0 %v3848
  %4014 = vmatprep.subr.bf16.mxu0 0
  %4015 = vmatpush1.bf16.msra.mxu0 %v3847
  %4016 = vmatprep.subr.bf16.mxu0 0
  %4017 = vmatpush1.bf16.msra.mxu0 %v3846
  %4018 = vmatprep.subr.bf16.mxu0 0
  %4019 = vmatpush1.bf16.msra.mxu0 %v3845
  %4020 = vmatprep.subr.bf16.mxu0 0
  %4021 = vmatpush1.bf16.msra.mxu0 %v3844
  %4022 = vmatprep.subr.bf16.mxu0 0
  %4023 = vmatpush1.bf16.msra.mxu0 %v3843
  %4024 = vmatprep.subr.bf16.mxu0 0
  %4025 = vmatpush1.bf16.msra.mxu0 %v3842
  %4026 = vmatprep.subr.bf16.mxu0 0
  %4027 = vmatpush2.bf16.msra.mxu0 %v3857
  %4028 = vmatprep.subr.bf16.mxu0 0
  %4029 = vmatpush2.bf16.msra.mxu0 %v3856
  %4030 = vmatprep.subr.bf16.mxu0 0
  %4031 = vmatpush2.bf16.msra.mxu0 %v3855
  %4032 = vmatprep.subr.bf16.mxu0 0
  %4033 = vmatpush2.bf16.msra.mxu0 %v3854
  %4034 = vmatprep.subr.bf16.mxu0 0
  %4035 = vmatpush2.bf16.msra.mxu0 %v3853
  %4036 = vmatprep.subr.bf16.mxu0 0
  %4037 = vmatpush2.bf16.msra.mxu0 %v3852
  %4038 = vmatprep.subr.bf16.mxu0 0
  %4039 = vmatpush2.bf16.msra.mxu0 %v3851
  %4040 = vmatprep.subr.bf16.mxu0 0
  %4041 = vmatpush2.bf16.msra.mxu0 %v3850
  %4042 = vmatprep.mubr.bf16.mxu0 %v3388
  %4043 = vmatmul.mubr.bf16.gmra.mxu0 %v3387
  %v4044 = vpop.f32.mrf.mxu0
  %v4045 = vadd.f32 %v4005, %v4044
  %v4046 = vpop.f32.mrf.mxu0
  %v4047 = vpop.f32.mrf.mxu0
  %v4048 = vpop.f32.mrf.mxu0
  %4049 = vdwg.mxu0
  %4050 = vmatprep.subr.bf16.mxu0 0
  %4051 = vmatpush1.bf16.msra.mxu0 %v3865
  %4052 = vmatprep.subr.bf16.mxu0 0
  %4053 = vmatpush1.bf16.msra.mxu0 %v3864
  %4054 = vmatprep.subr.bf16.mxu0 0
  %4055 = vmatpush1.bf16.msra.mxu0 %v3863
  %4056 = vmatprep.subr.bf16.mxu0 0
  %4057 = vmatpush1.bf16.msra.mxu0 %v3862
  %4058 = vmatprep.subr.bf16.mxu0 0
  %4059 = vmatpush1.bf16.msra.mxu0 %v3861
  %4060 = vmatprep.subr.bf16.mxu0 0
  %4061 = vmatpush1.bf16.msra.mxu0 %v3860
  %4062 = vmatprep.subr.bf16.mxu0 0
  %4063 = vmatpush1.bf16.msra.mxu0 %v3859
  %4064 = vmatprep.subr.bf16.mxu0 0
  %4065 = vmatpush1.bf16.msra.mxu0 %v3858
  %4066 = vmatprep.subr.bf16.mxu0 0
  %4067 = vmatpush2.bf16.msra.mxu0 %v3873
  %4068 = vmatprep.subr.bf16.mxu0 0
  %4069 = vmatpush2.bf16.msra.mxu0 %v3872
  %4070 = vmatprep.subr.bf16.mxu0 0
  %4071 = vmatpush2.bf16.msra.mxu0 %v3871
  %4072 = vmatprep.subr.bf16.mxu0 0
  %4073 = vmatpush2.bf16.msra.mxu0 %v3870
  %4074 = vmatprep.subr.bf16.mxu0 0
  %4075 = vmatpush2.bf16.msra.mxu0 %v3869
  %4076 = vmatprep.subr.bf16.mxu0 0
  %4077 = vmatpush2.bf16.msra.mxu0 %v3868
  %4078 = vmatprep.subr.bf16.mxu0 0
  %4079 = vmatpush2.bf16.msra.mxu0 %v3867
  %4080 = vmatprep.subr.bf16.mxu0 0
  %4081 = vmatpush2.bf16.msra.mxu0 %v3866
  %4082 = vmatprep.mubr.bf16.mxu0 %v3390
  %4083 = vmatmul.mubr.bf16.gmra.mxu0 %v3389
  %v4084 = vpop.f32.mrf.mxu0
  %v4085 = vadd.f32 %v4045, %v4084
  %v4086 = vpop.f32.mrf.mxu0
  %v4087 = vpop.f32.mrf.mxu0
  %v4088 = vpop.f32.mrf.mxu0
  %4089 = vdwg.mxu0
  %4090 = vmatprep.subr.bf16.mxu0 0
  %4091 = vmatpush1.bf16.msra.mxu0 %v3881
  %4092 = vmatprep.subr.bf16.mxu0 0
  %4093 = vmatpush1.bf16.msra.mxu0 %v3880
  %4094 = vmatprep.subr.bf16.mxu0 0
  %4095 = vmatpush1.bf16.msra.mxu0 %v3879
  %4096 = vmatprep.subr.bf16.mxu0 0
  %4097 = vmatpush1.bf16.msra.mxu0 %v3878
  %4098 = vmatprep.subr.bf16.mxu0 0
  %4099 = vmatpush1.bf16.msra.mxu0 %v3877
  %4100 = vmatprep.subr.bf16.mxu0 0
  %4101 = vmatpush1.bf16.msra.mxu0 %v3876
  %4102 = vmatprep.subr.bf16.mxu0 0
  %4103 = vmatpush1.bf16.msra.mxu0 %v3875
  %4104 = vmatprep.subr.bf16.mxu0 0
  %4105 = vmatpush1.bf16.msra.mxu0 %v3874
  %4106 = vmatprep.subr.bf16.mxu0 0
  %4107 = vmatpush2.bf16.msra.mxu0 %v3889
  %4108 = vmatprep.subr.bf16.mxu0 0
  %4109 = vmatpush2.bf16.msra.mxu0 %v3888
  %4110 = vmatprep.subr.bf16.mxu0 0
  %4111 = vmatpush2.bf16.msra.mxu0 %v3887
  %4112 = vmatprep.subr.bf16.mxu0 0
  %4113 = vmatpush2.bf16.msra.mxu0 %v3886
  %4114 = vmatprep.subr.bf16.mxu0 0
  %4115 = vmatpush2.bf16.msra.mxu0 %v3885
  %4116 = vmatprep.subr.bf16.mxu0 0
  %4117 = vmatpush2.bf16.msra.mxu0 %v3884
  %4118 = vmatprep.subr.bf16.mxu0 0
  %4119 = vmatpush2.bf16.msra.mxu0 %v3883
  %4120 = vmatprep.subr.bf16.mxu0 0
  %4121 = vmatpush2.bf16.msra.mxu0 %v3882
  %4122 = vmatprep.mubr.bf16.mxu0 %v3392
  %4123 = vmatmul.mubr.bf16.gmra.mxu0 %v3391
  %v4124 = vpop.f32.mrf.mxu0
  %v4125 = vadd.f32 %v4085, %v4124
  %v4126 = vpop.f32.mrf.mxu0
  %v4127 = vpop.f32.mrf.mxu0
  %v4128 = vpop.f32.mrf.mxu0
  %4129 = vdwg.mxu0
  %4130 = vmatprep.subr.bf16.mxu0 0
  %4131 = vmatpush1.bf16.msra.mxu0 %v3897
  %4132 = vmatprep.subr.bf16.mxu0 0
  %4133 = vmatpush1.bf16.msra.mxu0 %v3896
  %4134 = vmatprep.subr.bf16.mxu0 0
  %4135 = vmatpush1.bf16.msra.mxu0 %v3895
  %4136 = vmatprep.subr.bf16.mxu0 0
  %4137 = vmatpush1.bf16.msra.mxu0 %v3894
  %4138 = vmatprep.subr.bf16.mxu0 0
  %4139 = vmatpush1.bf16.msra.mxu0 %v3893
  %4140 = vmatprep.subr.bf16.mxu0 0
  %4141 = vmatpush1.bf16.msra.mxu0 %v3892
  %4142 = vmatprep.subr.bf16.mxu0 0
  %4143 = vmatpush1.bf16.msra.mxu0 %v3891
  %4144 = vmatprep.subr.bf16.mxu0 0
  %4145 = vmatpush1.bf16.msra.mxu0 %v3890
  %4146 = vmatprep.subr.bf16.mxu0 0
  %4147 = vmatpush2.bf16.msra.mxu0 0
  %4148 = vmatprep.subr.bf16.mxu0 0
  %4149 = vmatpush2.bf16.msra.mxu0 0
  %4150 = vmatprep.subr.bf16.mxu0 0
  %4151 = vmatpush2.bf16.msra.mxu0 0
  %4152 = vmatprep.subr.bf16.mxu0 0
  %4153 = vmatpush2.bf16.msra.mxu0 0
  %4154 = vmatprep.subr.bf16.mxu0 0
  %4155 = vmatpush2.bf16.msra.mxu0 0
  %4156 = vmatprep.subr.bf16.mxu0 0
  %4157 = vmatpush2.bf16.msra.mxu0 0
  %4158 = vmatprep.subr.bf16.mxu0 0
  %4159 = vmatpush2.bf16.msra.mxu0 0
  %4160 = vmatprep.subr.bf16.mxu0 0
  %4161 = vmatpush2.bf16.msra.mxu0 0
  %4162 = vmatprep.mubr.bf16.mxu0 0
  %4163 = vmatmul.mubr.bf16.gmra.mxu0 %v3393
  %v4164 = vpop.f32.mrf.mxu0
  %v4165 = vadd.f32 %v4125, %v4164
  %v4166 = vpop.f32.mrf.mxu0
  %v4167 = vpop.f32.mrf.mxu0
  %v4168 = vpop.f32.mrf.mxu0
  %4169 = vdwg.mxu0
  %v4170 = vmax.f32 %v4165, 0.0
  %v4171 = vadd.f32 %v3349, %v4170
  %s4172 = scalar_lea.vmem %s5, 40
  %4173 = vst [vmem:[%s4172] sm:$0xff] %v4171
  %s4174 = scalar_lea.vmem %s0, 48
  %v4175 = vld [vmem:[%s4174] sm:$0xff]
  %v4177 = vrot.slane %v4171, 4
  %v4179 = vsel %vm42, 0.0, %v4177
  %v4180 = vsel %vm42, %v4177, 0.0
  %v4183 = vrot.slane %v4179, 1
  %v4184 = vrot.slane %v4180, 1
  %v4185 = vsel %vm47, %v4183, %v4184
  %v4187 = vrot.slane %v4179, 2
  %v4188 = vrot.slane %v4180, 2
  %v4189 = vsel %vm52, %v4187, %v4188
  %v4191 = vrot.slane %v4179, 3
  %v4192 = vrot.slane %v4180, 3
  %v4193 = vsel %vm57, %v4191, %v4192
  %v4195 = vrot.slane %v4179, 4
  %v4196 = vrot.slane %v4180, 4
  %v4197 = vsel %vm42, %v4195, %v4196
  %v4199 = vrot.slane %v4179, 5
  %v4200 = vrot.slane %v4180, 5
  %v4201 = vsel %vm66, %v4199, %v4200
  %v4203 = vrot.slane %v4179, 6
  %v4204 = vrot.slane %v4180, 6
  %v4205 = vsel %vm71, %v4203, %v4204
  %v4207 = vrot.slane %v4179, 7
  %v4208 = vrot.slane %v4180, 7
  %v4209 = vsel %vm76, %v4207, %v4208
  %v4211 = vpack.c.bf16 %v4179, %v4179
  %v4212 = vpack.c.bf16 %v4185, %v4185
  %v4213 = vpack.c.bf16 %v4189, %v4189
  %v4214 = vpack.c.bf16 %v4193, %v4193
  %v4215 = vpack.c.bf16 %v4197, %v4197
  %v4216 = vpack.c.bf16 %v4201, %v4201
  %v4217 = vpack.c.bf16 %v4205, %v4205
  %v4218 = vpack.c.bf16 %v4209, %v4209
  %v4219 = vpack.c.bf16 %v4180, %v4180
  %v4220 = vld [vmem:[%s1] sm:$0xf]
  %v4221 = vld [vmem:[%s1 + $0x4] sm:$0xf]
  %v4222 = vld [vmem:[%s1 + $0x8] sm:$0xf]
  %v4223 = vld [vmem:[%s1 + $0xc] sm:$0xf]
  %v4224 = vld [vmem:[%s1 + $0x10] sm:$0xf]
  %v4225 = vld [vmem:[%s1 + $0x14] sm:$0xf]
  %v4226 = vld [vmem:[%s1 + $0x18] sm:$0xf]
  %v4227 = vld [vmem:[%s1 + $0x1c] sm:$0xf]
  %v4228 = vld [vmem:[%s1 + $0x20] sm:$0xf]
  %v4229 = vld [vmem:[%s1 + $0x24] sm:$0xf]
  %v4230 = vld [vmem:[%s1 + $0x28] sm:$0xf]
  %v4231 = vld [vmem:[%s1 + $0x2c] sm:$0xf]
  %v4232 = vld [vmem:[%s1 + $0x30] sm:$0xf]
  %v4233 = vld [vmem:[%s1 + $0x34] sm:$0xf]
  %v4234 = vld [vmem:[%s1 + $0x38] sm:$0xf]
  %v4235 = vld [vmem:[%s1 + $0x3c] sm:$0xf]
  %v4236 = vld [vmem:[%s1 + $0x40] sm:$0xf]
  %v4237 = vld [vmem:[%s1 + $0x44] sm:$0xf]
  %v4238 = vld [vmem:[%s1 + $0x48] sm:$0xf]
  %v4239 = vld [vmem:[%s1 + $0x4c] sm:$0xf]
  %v4240 = vld [vmem:[%s1 + $0x50] sm:$0xf]
  %v4241 = vld [vmem:[%s1 + $0x54] sm:$0xf]
  %v4242 = vld [vmem:[%s1 + $0x58] sm:$0xf]
  %v4243 = vld [vmem:[%s1 + $0x5c] sm:$0xf]
  %v4244 = vld [vmem:[%s1 + $0x60] sm:$0xf]
  %v4245 = vld [vmem:[%s1 + $0x64] sm:$0xf]
  %v4246 = vld [vmem:[%s1 + $0x68] sm:$0xf]
  %v4247 = vld [vmem:[%s1 + $0x6c] sm:$0xf]
  %v4248 = vld [vmem:[%s1 + $0x70] sm:$0xf]
  %v4249 = vld [vmem:[%s1 + $0x74] sm:$0xf]
  %v4250 = vld [vmem:[%s1 + $0x78] sm:$0xf]
  %v4251 = vld [vmem:[%s1 + $0x7c] sm:$0xf]
  %v4252 = vld [vmem:[%s1 + $0x80] sm:$0xf]
  %v4253 = vld [vmem:[%s1 + $0x84] sm:$0xf]
  %v4254 = vld [vmem:[%s1 + $0x88] sm:$0xf]
  %v4255 = vld [vmem:[%s1 + $0x8c] sm:$0xf]
  %v4256 = vld [vmem:[%s1 + $0x90] sm:$0xf]
  %v4257 = vld [vmem:[%s1 + $0x94] sm:$0xf]
  %v4258 = vld [vmem:[%s1 + $0x98] sm:$0xf]
  %v4259 = vld [vmem:[%s1 + $0x9c] sm:$0xf]
  %v4260 = vld [vmem:[%s1 + $0xa0] sm:$0xf]
  %v4261 = vld [vmem:[%s1 + $0xa4] sm:$0xf]
  %v4262 = vld [vmem:[%s1 + $0xa8] sm:$0xf]
  %v4263 = vld [vmem:[%s1 + $0xac] sm:$0xf]
  %v4264 = vld [vmem:[%s1 + $0xb0] sm:$0xf]
  %v4265 = vld [vmem:[%s1 + $0xb4] sm:$0xf]
  %v4266 = vld [vmem:[%s1 + $0xb8] sm:$0xf]
  %v4267 = vld [vmem:[%s1 + $0xbc] sm:$0xf]
  %v4268 = vld [vmem:[%s1 + $0xc0] sm:$0xf]
  %v4269 = vld [vmem:[%s1 + $0xc4] sm:$0xf]
  %v4270 = vld [vmem:[%s1 + $0xc8] sm:$0xf]
  %v4271 = vld [vmem:[%s1 + $0xcc] sm:$0xf]
  %v4272 = vld [vmem:[%s1 + $0xd0] sm:$0xf]
  %v4273 = vld [vmem:[%s1 + $0xd4] sm:$0xf]
  %v4274 = vld [vmem:[%s1 + $0xd8] sm:$0xf]
  %v4275 = vld [vmem:[%s1 + $0xdc] sm:$0xf]
  %v4276 = vld [vmem:[%s1 + $0xe0] sm:$0xf]
  %v4277 = vld [vmem:[%s1 + $0xe4] sm:$0xf]
  %v4278 = vld [vmem:[%s1 + $0xe8] sm:$0xf]
  %v4279 = vld [vmem:[%s1 + $0xec] sm:$0xf]
  %v4280 = vld [vmem:[%s1 + $0xf0] sm:$0xf]
  %v4281 = vld [vmem:[%s1 + $0xf4] sm:$0xf]
  %v4282 = vld [vmem:[%s1 + $0xf8] sm:$0xf]
  %v4283 = vld [vmem:[%s1 + $0xfc] sm:$0xf]
  %v4284 = vld [vmem:[%s1 + $0x100] sm:$0xf]
  %v4285 = vld [vmem:[%s1 + $0x104] sm:$0xf]
  %v4286 = vld [vmem:[%s1 + $0x108] sm:$0xf]
  %v4287 = vld [vmem:[%s1 + $0x10c] sm:$0xf]
  %v4288 = vld [vmem:[%s1 + $0x110] sm:$0xf]
  %v4289 = vld [vmem:[%s1 + $0x114] sm:$0xf]
  %v4290 = vld [vmem:[%s1 + $0x118] sm:$0xf]
  %v4291 = vld [vmem:[%s1 + $0x11c] sm:$0xf]
  %v4292 = vld [vmem:[%s1 + $0x120] sm:$0xf]
  %v4293 = vld [vmem:[%s1 + $0x124] sm:$0xf]
  %v4294 = vld [vmem:[%s1 + $0x128] sm:$0xf]
  %v4295 = vld [vmem:[%s1 + $0x12c] sm:$0xf]
  %v4296 = vld [vmem:[%s1 + $0x130] sm:$0xf]
  %v4297 = vld [vmem:[%s1 + $0x134] sm:$0xf]
  %v4298 = vld [vmem:[%s1 + $0x138] sm:$0xf]
  %v4299 = vld [vmem:[%s1 + $0x13c] sm:$0xf]
  %v4300 = vld [vmem:[%s1 + $0x140] sm:$0xf]
  %v4301 = vld [vmem:[%s1 + $0x144] sm:$0xf]
  %v4302 = vld [vmem:[%s1 + $0x148] sm:$0xf]
  %v4303 = vld [vmem:[%s1 + $0x14c] sm:$0xf]
  %v4304 = vld [vmem:[%s1 + $0x150] sm:$0xf]
  %v4305 = vld [vmem:[%s1 + $0x154] sm:$0xf]
  %v4306 = vld [vmem:[%s1 + $0x158] sm:$0xf]
  %v4307 = vld [vmem:[%s1 + $0x15c] sm:$0xf]
  %v4308 = vld [vmem:[%s1 + $0x160] sm:$0xf]
  %v4309 = vld [vmem:[%s1 + $0x164] sm:$0xf]
  %v4310 = vld [vmem:[%s1 + $0x168] sm:$0xf]
  %v4311 = vld [vmem:[%s1 + $0x16c] sm:$0xf]
  %v4312 = vld [vmem:[%s1 + $0x170] sm:$0xf]
  %v4313 = vld [vmem:[%s1 + $0x174] sm:$0xf]
  %v4314 = vld [vmem:[%s1 + $0x178] sm:$0xf]
  %v4315 = vld [vmem:[%s1 + $0x17c] sm:$0xf]
  %v4316 = vld [vmem:[%s1 + $0x180] sm:$0xf]
  %v4317 = vld [vmem:[%s1 + $0x184] sm:$0xf]
  %v4318 = vld [vmem:[%s1 + $0x188] sm:$0xf]
  %v4319 = vld [vmem:[%s1 + $0x18c] sm:$0xf]
  %v4320 = vld [vmem:[%s1 + $0x190] sm:$0xf]
  %v4321 = vld [vmem:[%s1 + $0x194] sm:$0xf]
  %v4322 = vld [vmem:[%s1 + $0x198] sm:$0xf]
  %v4323 = vld [vmem:[%s1 + $0x19c] sm:$0xf]
  %v4324 = vld [vmem:[%s1 + $0x1a0] sm:$0xf]
  %v4325 = vld [vmem:[%s1 + $0x1a4] sm:$0xf]
  %v4326 = vld [vmem:[%s1 + $0x1a8] sm:$0xf]
  %v4327 = vld [vmem:[%s1 + $0x1ac] sm:$0xf]
  %v4328 = vld [vmem:[%s1 + $0x1b0] sm:$0xf]
  %v4329 = vld [vmem:[%s1 + $0x1b4] sm:$0xf]
  %v4330 = vld [vmem:[%s1 + $0x1b8] sm:$0xf]
  %v4331 = vld [vmem:[%s1 + $0x1bc] sm:$0xf]
  %v4332 = vld [vmem:[%s1 + $0x1c0] sm:$0xf]
  %v4333 = vld [vmem:[%s1 + $0x1c4] sm:$0xf]
  %v4334 = vld [vmem:[%s1 + $0x1c8] sm:$0xf]
  %v4335 = vld [vmem:[%s1 + $0x1cc] sm:$0xf]
  %v4336 = vld [vmem:[%s1 + $0x1d0] sm:$0xf]
  %v4337 = vld [vmem:[%s1 + $0x1d4] sm:$0xf]
  %v4338 = vld [vmem:[%s1 + $0x1d8] sm:$0xf]
  %v4339 = vld [vmem:[%s1 + $0x1dc] sm:$0xf]
  %v4340 = vld [vmem:[%s1 + $0x1e0] sm:$0xf]
  %v4341 = vld [vmem:[%s1 + $0x1e4] sm:$0xf]
  %v4342 = vld [vmem:[%s1 + $0x1e8] sm:$0xf]
  %v4343 = vld [vmem:[%s1 + $0x1ec] sm:$0xf]
  %v4344 = vld [vmem:[%s1 + $0x1f0] sm:$0xf]
  %v4345 = vld [vmem:[%s1 + $0x1f4] sm:$0xf]
  %v4346 = vld [vmem:[%s1 + $0x1f8] sm:$0xf]
  %v4347 = vld [vmem:[%s1 + $0x1fc] sm:$0xf]
  %v4348 = vld [vmem:[%s1 + $0x200] sm:$0xf]
  %v4349 = vld [vmem:[%s1 + $0x204] sm:$0xf]
  %v4350 = vld [vmem:[%s1 + $0x208] sm:$0xf]
  %v4351 = vld [vmem:[%s1 + $0x20c] sm:$0xf]
  %v4352 = vld [vmem:[%s1 + $0x210] sm:$0xf]
  %v4353 = vld [vmem:[%s1 + $0x214] sm:$0xf]
  %v4354 = vld [vmem:[%s1 + $0x218] sm:$0xf]
  %v4355 = vld [vmem:[%s1 + $0x21c] sm:$0xf]
  %v4356 = vld [vmem:[%s1 + $0x220] sm:$0xf]
  %v4357 = vld [vmem:[%s1 + $0x224] sm:$0xf]
  %v4358 = vld [vmem:[%s1 + $0x228] sm:$0xf]
  %v4359 = vld [vmem:[%s1 + $0x22c] sm:$0xf]
  %v4360 = vld [vmem:[%s1 + $0x230] sm:$0xf]
  %v4361 = vld [vmem:[%s1 + $0x234] sm:$0xf]
  %v4362 = vld [vmem:[%s1 + $0x238] sm:$0xf]
  %v4363 = vld [vmem:[%s1 + $0x23c] sm:$0xf]
  %v4508 = vunpack.c.l.b16 %v4220
  %v4509 = vunpack.c.l.b16 %v4221
  %v4510 = vunpack.c.l.b16 %v4222
  %v4511 = vunpack.c.l.b16 %v4223
  %v4512 = vunpack.c.l.b16 %v4224
  %v4513 = vunpack.c.l.b16 %v4225
  %v4514 = vunpack.c.l.b16 %v4226
  %v4515 = vunpack.c.l.b16 %v4227
  %v4516 = vunpack.c.l.b16 %v4228
  %v4517 = vunpack.c.l.b16 %v4229
  %v4518 = vunpack.c.l.b16 %v4230
  %v4519 = vunpack.c.l.b16 %v4231
  %v4520 = vunpack.c.l.b16 %v4232
  %v4521 = vunpack.c.l.b16 %v4233
  %v4522 = vunpack.c.l.b16 %v4234
  %v4523 = vunpack.c.l.b16 %v4235
  %v4524 = vunpack.c.l.b16 %v4236
  %v4525 = vunpack.c.l.b16 %v4237
  %v4526 = vunpack.c.l.b16 %v4238
  %v4527 = vunpack.c.l.b16 %v4239
  %v4528 = vunpack.c.l.b16 %v4240
  %v4529 = vunpack.c.l.b16 %v4241
  %v4530 = vunpack.c.l.b16 %v4242
  %v4531 = vunpack.c.l.b16 %v4243
  %v4532 = vunpack.c.l.b16 %v4244
  %v4533 = vunpack.c.l.b16 %v4245
  %v4534 = vunpack.c.l.b16 %v4246
  %v4535 = vunpack.c.l.b16 %v4247
  %v4536 = vunpack.c.l.b16 %v4248
  %v4537 = vunpack.c.l.b16 %v4249
  %v4538 = vunpack.c.l.b16 %v4250
  %v4539 = vunpack.c.l.b16 %v4251
  %v4540 = vunpack.c.l.b16 %v4252
  %v4541 = vunpack.c.l.b16 %v4253
  %v4542 = vunpack.c.l.b16 %v4254
  %v4543 = vunpack.c.l.b16 %v4255
  %v4544 = vunpack.c.l.b16 %v4256
  %v4545 = vunpack.c.l.b16 %v4257
  %v4546 = vunpack.c.l.b16 %v4258
  %v4547 = vunpack.c.l.b16 %v4259
  %v4548 = vunpack.c.l.b16 %v4260
  %v4549 = vunpack.c.l.b16 %v4261
  %v4550 = vunpack.c.l.b16 %v4262
  %v4551 = vunpack.c.l.b16 %v4263
  %v4552 = vunpack.c.l.b16 %v4264
  %v4553 = vunpack.c.l.b16 %v4265
  %v4554 = vunpack.c.l.b16 %v4266
  %v4555 = vunpack.c.l.b16 %v4267
  %v4556 = vunpack.c.l.b16 %v4268
  %v4557 = vunpack.c.l.b16 %v4269
  %v4558 = vunpack.c.l.b16 %v4270
  %v4559 = vunpack.c.l.b16 %v4271
  %v4560 = vunpack.c.l.b16 %v4272
  %v4561 = vunpack.c.l.b16 %v4273
  %v4562 = vunpack.c.l.b16 %v4274
  %v4563 = vunpack.c.l.b16 %v4275
  %v4564 = vunpack.c.l.b16 %v4276
  %v4565 = vunpack.c.l.b16 %v4277
  %v4566 = vunpack.c.l.b16 %v4278
  %v4567 = vunpack.c.l.b16 %v4279
  %v4568 = vunpack.c.l.b16 %v4280
  %v4569 = vunpack.c.l.b16 %v4281
  %v4570 = vunpack.c.l.b16 %v4282
  %v4571 = vunpack.c.l.b16 %v4283
  %v4572 = vunpack.c.l.b16 %v4284
  %v4573 = vunpack.c.l.b16 %v4285
  %v4574 = vunpack.c.l.b16 %v4286
  %v4575 = vunpack.c.l.b16 %v4287
  %v4576 = vunpack.c.l.b16 %v4288
  %v4577 = vunpack.c.l.b16 %v4289
  %v4578 = vunpack.c.l.b16 %v4290
  %v4579 = vunpack.c.l.b16 %v4291
  %v4580 = vunpack.c.l.b16 %v4292
  %v4581 = vunpack.c.l.b16 %v4293
  %v4582 = vunpack.c.l.b16 %v4294
  %v4583 = vunpack.c.l.b16 %v4295
  %v4584 = vunpack.c.l.b16 %v4296
  %v4585 = vunpack.c.l.b16 %v4297
  %v4586 = vunpack.c.l.b16 %v4298
  %v4587 = vunpack.c.l.b16 %v4299
  %v4588 = vunpack.c.l.b16 %v4300
  %v4589 = vunpack.c.l.b16 %v4301
  %v4590 = vunpack.c.l.b16 %v4302
  %v4591 = vunpack.c.l.b16 %v4303
  %v4592 = vunpack.c.l.b16 %v4304
  %v4593 = vunpack.c.l.b16 %v4305
  %v4594 = vunpack.c.l.b16 %v4306
  %v4595 = vunpack.c.l.b16 %v4307
  %v4596 = vunpack.c.l.b16 %v4308
  %v4597 = vunpack.c.l.b16 %v4309
  %v4598 = vunpack.c.l.b16 %v4310
  %v4599 = vunpack.c.l.b16 %v4311
  %v4600 = vunpack.c.l.b16 %v4312
  %v4601 = vunpack.c.l.b16 %v4313
  %v4602 = vunpack.c.l.b16 %v4314
  %v4603 = vunpack.c.l.b16 %v4315
  %v4604 = vunpack.c.l.b16 %v4316
  %v4605 = vunpack.c.l.b16 %v4317
  %v4606 = vunpack.c.l.b16 %v4318
  %v4607 = vunpack.c.l.b16 %v4319
  %v4608 = vunpack.c.l.b16 %v4320
  %v4609 = vunpack.c.l.b16 %v4321
  %v4610 = vunpack.c.l.b16 %v4322
  %v4611 = vunpack.c.l.b16 %v4323
  %v4612 = vunpack.c.l.b16 %v4324
  %v4613 = vunpack.c.l.b16 %v4325
  %v4614 = vunpack.c.l.b16 %v4326
  %v4615 = vunpack.c.l.b16 %v4327
  %v4616 = vunpack.c.l.b16 %v4328
  %v4617 = vunpack.c.l.b16 %v4329
  %v4618 = vunpack.c.l.b16 %v4330
  %v4619 = vunpack.c.l.b16 %v4331
  %v4620 = vunpack.c.l.b16 %v4332
  %v4621 = vunpack.c.l.b16 %v4333
  %v4622 = vunpack.c.l.b16 %v4334
  %v4623 = vunpack.c.l.b16 %v4335
  %v4624 = vunpack.c.l.b16 %v4336
  %v4625 = vunpack.c.l.b16 %v4337
  %v4626 = vunpack.c.l.b16 %v4338
  %v4627 = vunpack.c.l.b16 %v4339
  %v4628 = vunpack.c.l.b16 %v4340
  %v4629 = vunpack.c.l.b16 %v4341
  %v4630 = vunpack.c.l.b16 %v4342
  %v4631 = vunpack.c.l.b16 %v4343
  %v4632 = vunpack.c.l.b16 %v4344
  %v4633 = vunpack.c.l.b16 %v4345
  %v4634 = vunpack.c.l.b16 %v4346
  %v4635 = vunpack.c.l.b16 %v4347
  %v4636 = vunpack.c.l.b16 %v4348
  %v4637 = vunpack.c.l.b16 %v4349
  %v4638 = vunpack.c.l.b16 %v4350
  %v4639 = vunpack.c.l.b16 %v4351
  %v4640 = vunpack.c.l.b16 %v4352
  %v4641 = vunpack.c.l.b16 %v4353
  %v4642 = vunpack.c.l.b16 %v4354
  %v4643 = vunpack.c.l.b16 %v4355
  %v4644 = vunpack.c.l.b16 %v4356
  %v4645 = vunpack.c.l.b16 %v4357
  %v4646 = vunpack.c.l.b16 %v4358
  %v4647 = vunpack.c.l.b16 %v4359
  %v4648 = vunpack.c.l.b16 %v4360
  %v4649 = vunpack.c.l.b16 %v4361
  %v4650 = vunpack.c.l.b16 %v4362
  %v4651 = vunpack.c.l.b16 %v4363
  %v4652 = vpack.c.b16 %v4509, %v4508
  %v4653 = vpack.c.b16 %v4511, %v4510
  %v4654 = vpack.c.b16 %v4513, %v4512
  %v4655 = vpack.c.b16 %v4515, %v4514
  %v4656 = vpack.c.b16 %v4517, %v4516
  %v4657 = vpack.c.b16 %v4519, %v4518
  %v4658 = vpack.c.b16 %v4521, %v4520
  %v4659 = vpack.c.b16 %v4523, %v4522
  %v4660 = vpack.c.b16 %v4525, %v4524
  %v4661 = vpack.c.b16 %v4527, %v4526
  %v4662 = vpack.c.b16 %v4529, %v4528
  %v4663 = vpack.c.b16 %v4531, %v4530
  %v4664 = vpack.c.b16 %v4533, %v4532
  %v4665 = vpack.c.b16 %v4535, %v4534
  %v4666 = vpack.c.b16 %v4537, %v4536
  %v4667 = vpack.c.b16 %v4539, %v4538
  %v4668 = vpack.c.b16 %v4541, %v4540
  %v4669 = vpack.c.b16 %v4543, %v4542
  %v4670 = vpack.c.b16 %v4545, %v4544
  %v4671 = vpack.c.b16 %v4547, %v4546
  %v4672 = vpack.c.b16 %v4549, %v4548
  %v4673 = vpack.c.b16 %v4551, %v4550
  %v4674 = vpack.c.b16 %v4553, %v4552
  %v4675 = vpack.c.b16 %v4555, %v4554
  %v4676 = vpack.c.b16 %v4557, %v4556
  %v4677 = vpack.c.b16 %v4559, %v4558
  %v4678 = vpack.c.b16 %v4561, %v4560
  %v4679 = vpack.c.b16 %v4563, %v4562
  %v4680 = vpack.c.b16 %v4565, %v4564
  %v4681 = vpack.c.b16 %v4567, %v4566
  %v4682 = vpack.c.b16 %v4569, %v4568
  %v4683 = vpack.c.b16 %v4571, %v4570
  %v4684 = vpack.c.b16 %v4573, %v4572
  %v4685 = vpack.c.b16 %v4575, %v4574
  %v4686 = vpack.c.b16 %v4577, %v4576
  %v4687 = vpack.c.b16 %v4579, %v4578
  %v4688 = vpack.c.b16 %v4581, %v4580
  %v4689 = vpack.c.b16 %v4583, %v4582
  %v4690 = vpack.c.b16 %v4585, %v4584
  %v4691 = vpack.c.b16 %v4587, %v4586
  %v4692 = vpack.c.b16 %v4589, %v4588
  %v4693 = vpack.c.b16 %v4591, %v4590
  %v4694 = vpack.c.b16 %v4593, %v4592
  %v4695 = vpack.c.b16 %v4595, %v4594
  %v4696 = vpack.c.b16 %v4597, %v4596
  %v4697 = vpack.c.b16 %v4599, %v4598
  %v4698 = vpack.c.b16 %v4601, %v4600
  %v4699 = vpack.c.b16 %v4603, %v4602
  %v4700 = vpack.c.b16 %v4605, %v4604
  %v4701 = vpack.c.b16 %v4607, %v4606
  %v4702 = vpack.c.b16 %v4609, %v4608
  %v4703 = vpack.c.b16 %v4611, %v4610
  %v4704 = vpack.c.b16 %v4613, %v4612
  %v4705 = vpack.c.b16 %v4615, %v4614
  %v4706 = vpack.c.b16 %v4617, %v4616
  %v4707 = vpack.c.b16 %v4619, %v4618
  %v4708 = vpack.c.b16 %v4621, %v4620
  %v4709 = vpack.c.b16 %v4623, %v4622
  %v4710 = vpack.c.b16 %v4625, %v4624
  %v4711 = vpack.c.b16 %v4627, %v4626
  %v4712 = vpack.c.b16 %v4629, %v4628
  %v4713 = vpack.c.b16 %v4631, %v4630
  %v4714 = vpack.c.b16 %v4633, %v4632
  %v4715 = vpack.c.b16 %v4635, %v4634
  %v4716 = vpack.c.b16 %v4637, %v4636
  %v4717 = vpack.c.b16 %v4639, %v4638
  %v4718 = vpack.c.b16 %v4641, %v4640
  %v4719 = vpack.c.b16 %v4643, %v4642
  %v4720 = vpack.c.b16 %v4645, %v4644
  %v4721 = vpack.c.b16 %v4647, %v4646
  %v4722 = vpack.c.b16 %v4649, %v4648
  %v4723 = vpack.c.b16 %v4651, %v4650
  %4796 = vmatprep.subr.bf16.mxu0 0
  %4797 = vmatpush1.bf16.msra.mxu0 %v4659
  %4798 = vmatprep.subr.bf16.mxu0 0
  %4799 = vmatpush1.bf16.msra.mxu0 %v4658
  %4800 = vmatprep.subr.bf16.mxu0 0
  %4801 = vmatpush1.bf16.msra.mxu0 %v4657
  %4802 = vmatprep.subr.bf16.mxu0 0
  %4803 = vmatpush1.bf16.msra.mxu0 %v4656
  %4804 = vmatprep.subr.bf16.mxu0 0
  %4805 = vmatpush1.bf16.msra.mxu0 %v4655
  %4806 = vmatprep.subr.bf16.mxu0 0
  %4807 = vmatpush1.bf16.msra.mxu0 %v4654
  %4808 = vmatprep.subr.bf16.mxu0 0
  %4809 = vmatpush1.bf16.msra.mxu0 %v4653
  %4810 = vmatprep.subr.bf16.mxu0 0
  %4811 = vmatpush1.bf16.msra.mxu0 %v4652
  %4812 = vmatprep.subr.bf16.mxu0 0
  %4813 = vmatpush2.bf16.msra.mxu0 %v4667
  %4814 = vmatprep.subr.bf16.mxu0 0
  %4815 = vmatpush2.bf16.msra.mxu0 %v4666
  %4816 = vmatprep.subr.bf16.mxu0 0
  %4817 = vmatpush2.bf16.msra.mxu0 %v4665
  %4818 = vmatprep.subr.bf16.mxu0 0
  %4819 = vmatpush2.bf16.msra.mxu0 %v4664
  %4820 = vmatprep.subr.bf16.mxu0 0
  %4821 = vmatpush2.bf16.msra.mxu0 %v4663
  %4822 = vmatprep.subr.bf16.mxu0 0
  %4823 = vmatpush2.bf16.msra.mxu0 %v4662
  %4824 = vmatprep.subr.bf16.mxu0 0
  %4825 = vmatpush2.bf16.msra.mxu0 %v4661
  %4826 = vmatprep.subr.bf16.mxu0 0
  %4827 = vmatpush2.bf16.msra.mxu0 %v4660
  %4828 = vmatprep.mubr.bf16.mxu0 %v4212
  %4829 = vmatmul.mubr.bf16.gmra.mxu0 %v4211
  %v4830 = vpop.f32.mrf.mxu0
  %v4831 = vadd.f32 %v26, %v4830
  %v4832 = vpop.f32.mrf.mxu0
  %v4833 = vpop.f32.mrf.mxu0
  %v4834 = vpop.f32.mrf.mxu0
  %4835 = vdwg.mxu0
  %4836 = vmatprep.subr.bf16.mxu0 0
  %4837 = vmatpush1.bf16.msra.mxu0 %v4675
  %4838 = vmatprep.subr.bf16.mxu0 0
  %4839 = vmatpush1.bf16.msra.mxu0 %v4674
  %4840 = vmatprep.subr.bf16.mxu0 0
  %4841 = vmatpush1.bf16.msra.mxu0 %v4673
  %4842 = vmatprep.subr.bf16.mxu0 0
  %4843 = vmatpush1.bf16.msra.mxu0 %v4672
  %4844 = vmatprep.subr.bf16.mxu0 0
  %4845 = vmatpush1.bf16.msra.mxu0 %v4671
  %4846 = vmatprep.subr.bf16.mxu0 0
  %4847 = vmatpush1.bf16.msra.mxu0 %v4670
  %4848 = vmatprep.subr.bf16.mxu0 0
  %4849 = vmatpush1.bf16.msra.mxu0 %v4669
  %4850 = vmatprep.subr.bf16.mxu0 0
  %4851 = vmatpush1.bf16.msra.mxu0 %v4668
  %4852 = vmatprep.subr.bf16.mxu0 0
  %4853 = vmatpush2.bf16.msra.mxu0 %v4683
  %4854 = vmatprep.subr.bf16.mxu0 0
  %4855 = vmatpush2.bf16.msra.mxu0 %v4682
  %4856 = vmatprep.subr.bf16.mxu0 0
  %4857 = vmatpush2.bf16.msra.mxu0 %v4681
  %4858 = vmatprep.subr.bf16.mxu0 0
  %4859 = vmatpush2.bf16.msra.mxu0 %v4680
  %4860 = vmatprep.subr.bf16.mxu0 0
  %4861 = vmatpush2.bf16.msra.mxu0 %v4679
  %4862 = vmatprep.subr.bf16.mxu0 0
  %4863 = vmatpush2.bf16.msra.mxu0 %v4678
  %4864 = vmatprep.subr.bf16.mxu0 0
  %4865 = vmatpush2.bf16.msra.mxu0 %v4677
  %4866 = vmatprep.subr.bf16.mxu0 0
  %4867 = vmatpush2.bf16.msra.mxu0 %v4676
  %4868 = vmatprep.mubr.bf16.mxu0 %v4214
  %4869 = vmatmul.mubr.bf16.gmra.mxu0 %v4213
  %v4870 = vpop.f32.mrf.mxu0
  %v4871 = vadd.f32 %v4831, %v4870
  %v4872 = vpop.f32.mrf.mxu0
  %v4873 = vpop.f32.mrf.mxu0
  %v4874 = vpop.f32.mrf.mxu0
  %4875 = vdwg.mxu0
  %4876 = vmatprep.subr.bf16.mxu0 0
  %4877 = vmatpush1.bf16.msra.mxu0 %v4691
  %4878 = vmatprep.subr.bf16.mxu0 0
  %4879 = vmatpush1.bf16.msra.mxu0 %v4690
  %4880 = vmatprep.subr.bf16.mxu0 0
  %4881 = vmatpush1.bf16.msra.mxu0 %v4689
  %4882 = vmatprep.subr.bf16.mxu0 0
  %4883 = vmatpush1.bf16.msra.mxu0 %v4688
  %4884 = vmatprep.subr.bf16.mxu0 0
  %4885 = vmatpush1.bf16.msra.mxu0 %v4687
  %4886 = vmatprep.subr.bf16.mxu0 0
  %4887 = vmatpush1.bf16.msra.mxu0 %v4686
  %4888 = vmatprep.subr.bf16.mxu0 0
  %4889 = vmatpush1.bf16.msra.mxu0 %v4685
  %4890 = vmatprep.subr.bf16.mxu0 0
  %4891 = vmatpush1.bf16.msra.mxu0 %v4684
  %4892 = vmatprep.subr.bf16.mxu0 0
  %4893 = vmatpush2.bf16.msra.mxu0 %v4699
  %4894 = vmatprep.subr.bf16.mxu0 0
  %4895 = vmatpush2.bf16.msra.mxu0 %v4698
  %4896 = vmatprep.subr.bf16.mxu0 0
  %4897 = vmatpush2.bf16.msra.mxu0 %v4697
  %4898 = vmatprep.subr.bf16.mxu0 0
  %4899 = vmatpush2.bf16.msra.mxu0 %v4696
  %4900 = vmatprep.subr.bf16.mxu0 0
  %4901 = vmatpush2.bf16.msra.mxu0 %v4695
  %4902 = vmatprep.subr.bf16.mxu0 0
  %4903 = vmatpush2.bf16.msra.mxu0 %v4694
  %4904 = vmatprep.subr.bf16.mxu0 0
  %4905 = vmatpush2.bf16.msra.mxu0 %v4693
  %4906 = vmatprep.subr.bf16.mxu0 0
  %4907 = vmatpush2.bf16.msra.mxu0 %v4692
  %4908 = vmatprep.mubr.bf16.mxu0 %v4216
  %4909 = vmatmul.mubr.bf16.gmra.mxu0 %v4215
  %v4910 = vpop.f32.mrf.mxu0
  %v4911 = vadd.f32 %v4871, %v4910
  %v4912 = vpop.f32.mrf.mxu0
  %v4913 = vpop.f32.mrf.mxu0
  %v4914 = vpop.f32.mrf.mxu0
  %4915 = vdwg.mxu0
  %4916 = vmatprep.subr.bf16.mxu0 0
  %4917 = vmatpush1.bf16.msra.mxu0 %v4707
  %4918 = vmatprep.subr.bf16.mxu0 0
  %4919 = vmatpush1.bf16.msra.mxu0 %v4706
  %4920 = vmatprep.subr.bf16.mxu0 0
  %4921 = vmatpush1.bf16.msra.mxu0 %v4705
  %4922 = vmatprep.subr.bf16.mxu0 0
  %4923 = vmatpush1.bf16.msra.mxu0 %v4704
  %4924 = vmatprep.subr.bf16.mxu0 0
  %4925 = vmatpush1.bf16.msra.mxu0 %v4703
  %4926 = vmatprep.subr.bf16.mxu0 0
  %4927 = vmatpush1.bf16.msra.mxu0 %v4702
  %4928 = vmatprep.subr.bf16.mxu0 0
  %4929 = vmatpush1.bf16.msra.mxu0 %v4701
  %4930 = vmatprep.subr.bf16.mxu0 0
  %4931 = vmatpush1.bf16.msra.mxu0 %v4700
  %4932 = vmatprep.subr.bf16.mxu0 0
  %4933 = vmatpush2.bf16.msra.mxu0 %v4715
  %4934 = vmatprep.subr.bf16.mxu0 0
  %4935 = vmatpush2.bf16.msra.mxu0 %v4714
  %4936 = vmatprep.subr.bf16.mxu0 0
  %4937 = vmatpush2.bf16.msra.mxu0 %v4713
  %4938 = vmatprep.subr.bf16.mxu0 0
  %4939 = vmatpush2.bf16.msra.mxu0 %v4712
  %4940 = vmatprep.subr.bf16.mxu0 0
  %4941 = vmatpush2.bf16.msra.mxu0 %v4711
  %4942 = vmatprep.subr.bf16.mxu0 0
  %4943 = vmatpush2.bf16.msra.mxu0 %v4710
  %4944 = vmatprep.subr.bf16.mxu0 0
  %4945 = vmatpush2.bf16.msra.mxu0 %v4709
  %4946 = vmatprep.subr.bf16.mxu0 0
  %4947 = vmatpush2.bf16.msra.mxu0 %v4708
  %4948 = vmatprep.mubr.bf16.mxu0 %v4218
  %4949 = vmatmul.mubr.bf16.gmra.mxu0 %v4217
  %v4950 = vpop.f32.mrf.mxu0
  %v4951 = vadd.f32 %v4911, %v4950
  %v4952 = vpop.f32.mrf.mxu0
  %v4953 = vpop.f32.mrf.mxu0
  %v4954 = vpop.f32.mrf.mxu0
  %4955 = vdwg.mxu0
  %4956 = vmatprep.subr.bf16.mxu0 0
  %4957 = vmatpush1.bf16.msra.mxu0 %v4723
  %4958 = vmatprep.subr.bf16.mxu0 0
  %4959 = vmatpush1.bf16.msra.mxu0 %v4722
  %4960 = vmatprep.subr.bf16.mxu0 0
  %4961 = vmatpush1.bf16.msra.mxu0 %v4721
  %4962 = vmatprep.subr.bf16.mxu0 0
  %4963 = vmatpush1.bf16.msra.mxu0 %v4720
  %4964 = vmatprep.subr.bf16.mxu0 0
  %4965 = vmatpush1.bf16.msra.mxu0 %v4719
  %4966 = vmatprep.subr.bf16.mxu0 0
  %4967 = vmatpush1.bf16.msra.mxu0 %v4718
  %4968 = vmatprep.subr.bf16.mxu0 0
  %4969 = vmatpush1.bf16.msra.mxu0 %v4717
  %4970 = vmatprep.subr.bf16.mxu0 0
  %4971 = vmatpush1.bf16.msra.mxu0 %v4716
  %4972 = vmatprep.subr.bf16.mxu0 0
  %4973 = vmatpush2.bf16.msra.mxu0 0
  %4974 = vmatprep.subr.bf16.mxu0 0
  %4975 = vmatpush2.bf16.msra.mxu0 0
  %4976 = vmatprep.subr.bf16.mxu0 0
  %4977 = vmatpush2.bf16.msra.mxu0 0
  %4978 = vmatprep.subr.bf16.mxu0 0
  %4979 = vmatpush2.bf16.msra.mxu0 0
  %4980 = vmatprep.subr.bf16.mxu0 0
  %4981 = vmatpush2.bf16.msra.mxu0 0
  %4982 = vmatprep.subr.bf16.mxu0 0
  %4983 = vmatpush2.bf16.msra.mxu0 0
  %4984 = vmatprep.subr.bf16.mxu0 0
  %4985 = vmatpush2.bf16.msra.mxu0 0
  %4986 = vmatprep.subr.bf16.mxu0 0
  %4987 = vmatpush2.bf16.msra.mxu0 0
  %4988 = vmatprep.mubr.bf16.mxu0 0
  %4989 = vmatmul.mubr.bf16.gmra.mxu0 %v4219
  %v4990 = vpop.f32.mrf.mxu0
  %v4991 = vadd.f32 %v4951, %v4990
  %v4992 = vpop.f32.mrf.mxu0
  %v4993 = vpop.f32.mrf.mxu0
  %v4994 = vpop.f32.mrf.mxu0
  %4995 = vdwg.mxu0
  %v4996 = vmax.f32 %v4991, 0.0
  %v4997 = vadd.f32 %v4175, %v4996
  %s4998 = scalar_lea.vmem %s5, 48
  %4999 = vst [vmem:[%s4998] sm:$0xff] %v4997
  %s5000 = scalar_lea.vmem %s0, 56
  %v5001 = vld [vmem:[%s5000] sm:$0xff]
  %v5003 = vrot.slane %v4997, 4
  %v5005 = vsel %vm42, 0.0, %v5003
  %v5006 = vsel %vm42, %v5003, 0.0
  %v5009 = vrot.slane %v5005, 1
  %v5010 = vrot.slane %v5006, 1
  %v5011 = vsel %vm47, %v5009, %v5010
  %v5013 = vrot.slane %v5005, 2
  %v5014 = vrot.slane %v5006, 2
  %v5015 = vsel %vm52, %v5013, %v5014
  %v5017 = vrot.slane %v5005, 3
  %v5018 = vrot.slane %v5006, 3
  %v5019 = vsel %vm57, %v5017, %v5018
  %v5021 = vrot.slane %v5005, 4
  %v5022 = vrot.slane %v5006, 4
  %v5023 = vsel %vm42, %v5021, %v5022
  %v5025 = vrot.slane %v5005, 5
  %v5026 = vrot.slane %v5006, 5
  %v5027 = vsel %vm66, %v5025, %v5026
  %v5029 = vrot.slane %v5005, 6
  %v5030 = vrot.slane %v5006, 6
  %v5031 = vsel %vm71, %v5029, %v5030
  %v5033 = vrot.slane %v5005, 7
  %v5034 = vrot.slane %v5006, 7
  %v5035 = vsel %vm76, %v5033, %v5034
  %v5037 = vpack.c.bf16 %v5005, %v5005
  %v5038 = vpack.c.bf16 %v5011, %v5011
  %v5039 = vpack.c.bf16 %v5015, %v5015
  %v5040 = vpack.c.bf16 %v5019, %v5019
  %v5041 = vpack.c.bf16 %v5023, %v5023
  %v5042 = vpack.c.bf16 %v5027, %v5027
  %v5043 = vpack.c.bf16 %v5031, %v5031
  %v5044 = vpack.c.bf16 %v5035, %v5035
  %v5045 = vpack.c.bf16 %v5006, %v5006
  %v5046 = vld [vmem:[%s1] sm:$0xf]
  %v5047 = vld [vmem:[%s1 + $0x4] sm:$0xf]
  %v5048 = vld [vmem:[%s1 + $0x8] sm:$0xf]
  %v5049 = vld [vmem:[%s1 + $0xc] sm:$0xf]
  %v5050 = vld [vmem:[%s1 + $0x10] sm:$0xf]
  %v5051 = vld [vmem:[%s1 + $0x14] sm:$0xf]
  %v5052 = vld [vmem:[%s1 + $0x18] sm:$0xf]
  %v5053 = vld [vmem:[%s1 + $0x1c] sm:$0xf]
  %v5054 = vld [vmem:[%s1 + $0x20] sm:$0xf]
  %v5055 = vld [vmem:[%s1 + $0x24] sm:$0xf]
  %v5056 = vld [vmem:[%s1 + $0x28] sm:$0xf]
  %v5057 = vld [vmem:[%s1 + $0x2c] sm:$0xf]
  %v5058 = vld [vmem:[%s1 + $0x30] sm:$0xf]
  %v5059 = vld [vmem:[%s1 + $0x34] sm:$0xf]
  %v5060 = vld [vmem:[%s1 + $0x38] sm:$0xf]
  %v5061 = vld [vmem:[%s1 + $0x3c] sm:$0xf]
  %v5062 = vld [vmem:[%s1 + $0x40] sm:$0xf]
  %v5063 = vld [vmem:[%s1 + $0x44] sm:$0xf]
  %v5064 = vld [vmem:[%s1 + $0x48] sm:$0xf]
  %v5065 = vld [vmem:[%s1 + $0x4c] sm:$0xf]
  %v5066 = vld [vmem:[%s1 + $0x50] sm:$0xf]
  %v5067 = vld [vmem:[%s1 + $0x54] sm:$0xf]
  %v5068 = vld [vmem:[%s1 + $0x58] sm:$0xf]
  %v5069 = vld [vmem:[%s1 + $0x5c] sm:$0xf]
  %v5070 = vld [vmem:[%s1 + $0x60] sm:$0xf]
  %v5071 = vld [vmem:[%s1 + $0x64] sm:$0xf]
  %v5072 = vld [vmem:[%s1 + $0x68] sm:$0xf]
  %v5073 = vld [vmem:[%s1 + $0x6c] sm:$0xf]
  %v5074 = vld [vmem:[%s1 + $0x70] sm:$0xf]
  %v5075 = vld [vmem:[%s1 + $0x74] sm:$0xf]
  %v5076 = vld [vmem:[%s1 + $0x78] sm:$0xf]
  %v5077 = vld [vmem:[%s1 + $0x7c] sm:$0xf]
  %v5078 = vld [vmem:[%s1 + $0x80] sm:$0xf]
  %v5079 = vld [vmem:[%s1 + $0x84] sm:$0xf]
  %v5080 = vld [vmem:[%s1 + $0x88] sm:$0xf]
  %v5081 = vld [vmem:[%s1 + $0x8c] sm:$0xf]
  %v5082 = vld [vmem:[%s1 + $0x90] sm:$0xf]
  %v5083 = vld [vmem:[%s1 + $0x94] sm:$0xf]
  %v5084 = vld [vmem:[%s1 + $0x98] sm:$0xf]
  %v5085 = vld [vmem:[%s1 + $0x9c] sm:$0xf]
  %v5086 = vld [vmem:[%s1 + $0xa0] sm:$0xf]
  %v5087 = vld [vmem:[%s1 + $0xa4] sm:$0xf]
  %v5088 = vld [vmem:[%s1 + $0xa8] sm:$0xf]
  %v5089 = vld [vmem:[%s1 + $0xac] sm:$0xf]
  %v5090 = vld [vmem:[%s1 + $0xb0] sm:$0xf]
  %v5091 = vld [vmem:[%s1 + $0xb4] sm:$0xf]
  %v5092 = vld [vmem:[%s1 + $0xb8] sm:$0xf]
  %v5093 = vld [vmem:[%s1 + $0xbc] sm:$0xf]
  %v5094 = vld [vmem:[%s1 + $0xc0] sm:$0xf]
  %v5095 = vld [vmem:[%s1 + $0xc4] sm:$0xf]
  %v5096 = vld [vmem:[%s1 + $0xc8] sm:$0xf]
  %v5097 = vld [vmem:[%s1 + $0xcc] sm:$0xf]
  %v5098 = vld [vmem:[%s1 + $0xd0] sm:$0xf]
  %v5099 = vld [vmem:[%s1 + $0xd4] sm:$0xf]
  %v5100 = vld [vmem:[%s1 + $0xd8] sm:$0xf]
  %v5101 = vld [vmem:[%s1 + $0xdc] sm:$0xf]
  %v5102 = vld [vmem:[%s1 + $0xe0] sm:$0xf]
  %v5103 = vld [vmem:[%s1 + $0xe4] sm:$0xf]
  %v5104 = vld [vmem:[%s1 + $0xe8] sm:$0xf]
  %v5105 = vld [vmem:[%s1 + $0xec] sm:$0xf]
  %v5106 = vld [vmem:[%s1 + $0xf0] sm:$0xf]
  %v5107 = vld [vmem:[%s1 + $0xf4] sm:$0xf]
  %v5108 = vld [vmem:[%s1 + $0xf8] sm:$0xf]
  %v5109 = vld [vmem:[%s1 + $0xfc] sm:$0xf]
  %v5110 = vld [vmem:[%s1 + $0x100] sm:$0xf]
  %v5111 = vld [vmem:[%s1 + $0x104] sm:$0xf]
  %v5112 = vld [vmem:[%s1 + $0x108] sm:$0xf]
  %v5113 = vld [vmem:[%s1 + $0x10c] sm:$0xf]
  %v5114 = vld [vmem:[%s1 + $0x110] sm:$0xf]
  %v5115 = vld [vmem:[%s1 + $0x114] sm:$0xf]
  %v5116 = vld [vmem:[%s1 + $0x118] sm:$0xf]
  %v5117 = vld [vmem:[%s1 + $0x11c] sm:$0xf]
  %v5118 = vld [vmem:[%s1 + $0x120] sm:$0xf]
  %v5119 = vld [vmem:[%s1 + $0x124] sm:$0xf]
  %v5120 = vld [vmem:[%s1 + $0x128] sm:$0xf]
  %v5121 = vld [vmem:[%s1 + $0x12c] sm:$0xf]
  %v5122 = vld [vmem:[%s1 + $0x130] sm:$0xf]
  %v5123 = vld [vmem:[%s1 + $0x134] sm:$0xf]
  %v5124 = vld [vmem:[%s1 + $0x138] sm:$0xf]
  %v5125 = vld [vmem:[%s1 + $0x13c] sm:$0xf]
  %v5126 = vld [vmem:[%s1 + $0x140] sm:$0xf]
  %v5127 = vld [vmem:[%s1 + $0x144] sm:$0xf]
  %v5128 = vld [vmem:[%s1 + $0x148] sm:$0xf]
  %v5129 = vld [vmem:[%s1 + $0x14c] sm:$0xf]
  %v5130 = vld [vmem:[%s1 + $0x150] sm:$0xf]
  %v5131 = vld [vmem:[%s1 + $0x154] sm:$0xf]
  %v5132 = vld [vmem:[%s1 + $0x158] sm:$0xf]
  %v5133 = vld [vmem:[%s1 + $0x15c] sm:$0xf]
  %v5134 = vld [vmem:[%s1 + $0x160] sm:$0xf]
  %v5135 = vld [vmem:[%s1 + $0x164] sm:$0xf]
  %v5136 = vld [vmem:[%s1 + $0x168] sm:$0xf]
  %v5137 = vld [vmem:[%s1 + $0x16c] sm:$0xf]
  %v5138 = vld [vmem:[%s1 + $0x170] sm:$0xf]
  %v5139 = vld [vmem:[%s1 + $0x174] sm:$0xf]
  %v5140 = vld [vmem:[%s1 + $0x178] sm:$0xf]
  %v5141 = vld [vmem:[%s1 + $0x17c] sm:$0xf]
  %v5142 = vld [vmem:[%s1 + $0x180] sm:$0xf]
  %v5143 = vld [vmem:[%s1 + $0x184] sm:$0xf]
  %v5144 = vld [vmem:[%s1 + $0x188] sm:$0xf]
  %v5145 = vld [vmem:[%s1 + $0x18c] sm:$0xf]
  %v5146 = vld [vmem:[%s1 + $0x190] sm:$0xf]
  %v5147 = vld [vmem:[%s1 + $0x194] sm:$0xf]
  %v5148 = vld [vmem:[%s1 + $0x198] sm:$0xf]
  %v5149 = vld [vmem:[%s1 + $0x19c] sm:$0xf]
  %v5150 = vld [vmem:[%s1 + $0x1a0] sm:$0xf]
  %v5151 = vld [vmem:[%s1 + $0x1a4] sm:$0xf]
  %v5152 = vld [vmem:[%s1 + $0x1a8] sm:$0xf]
  %v5153 = vld [vmem:[%s1 + $0x1ac] sm:$0xf]
  %v5154 = vld [vmem:[%s1 + $0x1b0] sm:$0xf]
  %v5155 = vld [vmem:[%s1 + $0x1b4] sm:$0xf]
  %v5156 = vld [vmem:[%s1 + $0x1b8] sm:$0xf]
  %v5157 = vld [vmem:[%s1 + $0x1bc] sm:$0xf]
  %v5158 = vld [vmem:[%s1 + $0x1c0] sm:$0xf]
  %v5159 = vld [vmem:[%s1 + $0x1c4] sm:$0xf]
  %v5160 = vld [vmem:[%s1 + $0x1c8] sm:$0xf]
  %v5161 = vld [vmem:[%s1 + $0x1cc] sm:$0xf]
  %v5162 = vld [vmem:[%s1 + $0x1d0] sm:$0xf]
  %v5163 = vld [vmem:[%s1 + $0x1d4] sm:$0xf]
  %v5164 = vld [vmem:[%s1 + $0x1d8] sm:$0xf]
  %v5165 = vld [vmem:[%s1 + $0x1dc] sm:$0xf]
  %v5166 = vld [vmem:[%s1 + $0x1e0] sm:$0xf]
  %v5167 = vld [vmem:[%s1 + $0x1e4] sm:$0xf]
  %v5168 = vld [vmem:[%s1 + $0x1e8] sm:$0xf]
  %v5169 = vld [vmem:[%s1 + $0x1ec] sm:$0xf]
  %v5170 = vld [vmem:[%s1 + $0x1f0] sm:$0xf]
  %v5171 = vld [vmem:[%s1 + $0x1f4] sm:$0xf]
  %v5172 = vld [vmem:[%s1 + $0x1f8] sm:$0xf]
  %v5173 = vld [vmem:[%s1 + $0x1fc] sm:$0xf]
  %v5174 = vld [vmem:[%s1 + $0x200] sm:$0xf]
  %v5175 = vld [vmem:[%s1 + $0x204] sm:$0xf]
  %v5176 = vld [vmem:[%s1 + $0x208] sm:$0xf]
  %v5177 = vld [vmem:[%s1 + $0x20c] sm:$0xf]
  %v5178 = vld [vmem:[%s1 + $0x210] sm:$0xf]
  %v5179 = vld [vmem:[%s1 + $0x214] sm:$0xf]
  %v5180 = vld [vmem:[%s1 + $0x218] sm:$0xf]
  %v5181 = vld [vmem:[%s1 + $0x21c] sm:$0xf]
  %v5182 = vld [vmem:[%s1 + $0x220] sm:$0xf]
  %v5183 = vld [vmem:[%s1 + $0x224] sm:$0xf]
  %v5184 = vld [vmem:[%s1 + $0x228] sm:$0xf]
  %v5185 = vld [vmem:[%s1 + $0x22c] sm:$0xf]
  %v5186 = vld [vmem:[%s1 + $0x230] sm:$0xf]
  %v5187 = vld [vmem:[%s1 + $0x234] sm:$0xf]
  %v5188 = vld [vmem:[%s1 + $0x238] sm:$0xf]
  %v5189 = vld [vmem:[%s1 + $0x23c] sm:$0xf]
  %v5334 = vunpack.c.l.b16 %v5046
  %v5335 = vunpack.c.l.b16 %v5047
  %v5336 = vunpack.c.l.b16 %v5048
  %v5337 = vunpack.c.l.b16 %v5049
  %v5338 = vunpack.c.l.b16 %v5050
  %v5339 = vunpack.c.l.b16 %v5051
  %v5340 = vunpack.c.l.b16 %v5052
  %v5341 = vunpack.c.l.b16 %v5053
  %v5342 = vunpack.c.l.b16 %v5054
  %v5343 = vunpack.c.l.b16 %v5055
  %v5344 = vunpack.c.l.b16 %v5056
  %v5345 = vunpack.c.l.b16 %v5057
  %v5346 = vunpack.c.l.b16 %v5058
  %v5347 = vunpack.c.l.b16 %v5059
  %v5348 = vunpack.c.l.b16 %v5060
  %v5349 = vunpack.c.l.b16 %v5061
  %v5350 = vunpack.c.l.b16 %v5062
  %v5351 = vunpack.c.l.b16 %v5063
  %v5352 = vunpack.c.l.b16 %v5064
  %v5353 = vunpack.c.l.b16 %v5065
  %v5354 = vunpack.c.l.b16 %v5066
  %v5355 = vunpack.c.l.b16 %v5067
  %v5356 = vunpack.c.l.b16 %v5068
  %v5357 = vunpack.c.l.b16 %v5069
  %v5358 = vunpack.c.l.b16 %v5070
  %v5359 = vunpack.c.l.b16 %v5071
  %v5360 = vunpack.c.l.b16 %v5072
  %v5361 = vunpack.c.l.b16 %v5073
  %v5362 = vunpack.c.l.b16 %v5074
  %v5363 = vunpack.c.l.b16 %v5075
  %v5364 = vunpack.c.l.b16 %v5076
  %v5365 = vunpack.c.l.b16 %v5077
  %v5366 = vunpack.c.l.b16 %v5078
  %v5367 = vunpack.c.l.b16 %v5079
  %v5368 = vunpack.c.l.b16 %v5080
  %v5369 = vunpack.c.l.b16 %v5081
  %v5370 = vunpack.c.l.b16 %v5082
  %v5371 = vunpack.c.l.b16 %v5083
  %v5372 = vunpack.c.l.b16 %v5084
  %v5373 = vunpack.c.l.b16 %v5085
  %v5374 = vunpack.c.l.b16 %v5086
  %v5375 = vunpack.c.l.b16 %v5087
  %v5376 = vunpack.c.l.b16 %v5088
  %v5377 = vunpack.c.l.b16 %v5089
  %v5378 = vunpack.c.l.b16 %v5090
  %v5379 = vunpack.c.l.b16 %v5091
  %v5380 = vunpack.c.l.b16 %v5092
  %v5381 = vunpack.c.l.b16 %v5093
  %v5382 = vunpack.c.l.b16 %v5094
  %v5383 = vunpack.c.l.b16 %v5095
  %v5384 = vunpack.c.l.b16 %v5096
  %v5385 = vunpack.c.l.b16 %v5097
  %v5386 = vunpack.c.l.b16 %v5098
  %v5387 = vunpack.c.l.b16 %v5099
  %v5388 = vunpack.c.l.b16 %v5100
  %v5389 = vunpack.c.l.b16 %v5101
  %v5390 = vunpack.c.l.b16 %v5102
  %v5391 = vunpack.c.l.b16 %v5103
  %v5392 = vunpack.c.l.b16 %v5104
  %v5393 = vunpack.c.l.b16 %v5105
  %v5394 = vunpack.c.l.b16 %v5106
  %v5395 = vunpack.c.l.b16 %v5107
  %v5396 = vunpack.c.l.b16 %v5108
  %v5397 = vunpack.c.l.b16 %v5109
  %v5398 = vunpack.c.l.b16 %v5110
  %v5399 = vunpack.c.l.b16 %v5111
  %v5400 = vunpack.c.l.b16 %v5112
  %v5401 = vunpack.c.l.b16 %v5113
  %v5402 = vunpack.c.l.b16 %v5114
  %v5403 = vunpack.c.l.b16 %v5115
  %v5404 = vunpack.c.l.b16 %v5116
  %v5405 = vunpack.c.l.b16 %v5117
  %v5406 = vunpack.c.l.b16 %v5118
  %v5407 = vunpack.c.l.b16 %v5119
  %v5408 = vunpack.c.l.b16 %v5120
  %v5409 = vunpack.c.l.b16 %v5121
  %v5410 = vunpack.c.l.b16 %v5122
  %v5411 = vunpack.c.l.b16 %v5123
  %v5412 = vunpack.c.l.b16 %v5124
  %v5413 = vunpack.c.l.b16 %v5125
  %v5414 = vunpack.c.l.b16 %v5126
  %v5415 = vunpack.c.l.b16 %v5127
  %v5416 = vunpack.c.l.b16 %v5128
  %v5417 = vunpack.c.l.b16 %v5129
  %v5418 = vunpack.c.l.b16 %v5130
  %v5419 = vunpack.c.l.b16 %v5131
  %v5420 = vunpack.c.l.b16 %v5132
  %v5421 = vunpack.c.l.b16 %v5133
  %v5422 = vunpack.c.l.b16 %v5134
  %v5423 = vunpack.c.l.b16 %v5135
  %v5424 = vunpack.c.l.b16 %v5136
  %v5425 = vunpack.c.l.b16 %v5137
  %v5426 = vunpack.c.l.b16 %v5138
  %v5427 = vunpack.c.l.b16 %v5139
  %v5428 = vunpack.c.l.b16 %v5140
  %v5429 = vunpack.c.l.b16 %v5141
  %v5430 = vunpack.c.l.b16 %v5142
  %v5431 = vunpack.c.l.b16 %v5143
  %v5432 = vunpack.c.l.b16 %v5144
  %v5433 = vunpack.c.l.b16 %v5145
  %v5434 = vunpack.c.l.b16 %v5146
  %v5435 = vunpack.c.l.b16 %v5147
  %v5436 = vunpack.c.l.b16 %v5148
  %v5437 = vunpack.c.l.b16 %v5149
  %v5438 = vunpack.c.l.b16 %v5150
  %v5439 = vunpack.c.l.b16 %v5151
  %v5440 = vunpack.c.l.b16 %v5152
  %v5441 = vunpack.c.l.b16 %v5153
  %v5442 = vunpack.c.l.b16 %v5154
  %v5443 = vunpack.c.l.b16 %v5155
  %v5444 = vunpack.c.l.b16 %v5156
  %v5445 = vunpack.c.l.b16 %v5157
  %v5446 = vunpack.c.l.b16 %v5158
  %v5447 = vunpack.c.l.b16 %v5159
  %v5448 = vunpack.c.l.b16 %v5160
  %v5449 = vunpack.c.l.b16 %v5161
  %v5450 = vunpack.c.l.b16 %v5162
  %v5451 = vunpack.c.l.b16 %v5163
  %v5452 = vunpack.c.l.b16 %v5164
  %v5453 = vunpack.c.l.b16 %v5165
  %v5454 = vunpack.c.l.b16 %v5166
  %v5455 = vunpack.c.l.b16 %v5167
  %v5456 = vunpack.c.l.b16 %v5168
  %v5457 = vunpack.c.l.b16 %v5169
  %v5458 = vunpack.c.l.b16 %v5170
  %v5459 = vunpack.c.l.b16 %v5171
  %v5460 = vunpack.c.l.b16 %v5172
  %v5461 = vunpack.c.l.b16 %v5173
  %v5462 = vunpack.c.l.b16 %v5174
  %v5463 = vunpack.c.l.b16 %v5175
  %v5464 = vunpack.c.l.b16 %v5176
  %v5465 = vunpack.c.l.b16 %v5177
  %v5466 = vunpack.c.l.b16 %v5178
  %v5467 = vunpack.c.l.b16 %v5179
  %v5468 = vunpack.c.l.b16 %v5180
  %v5469 = vunpack.c.l.b16 %v5181
  %v5470 = vunpack.c.l.b16 %v5182
  %v5471 = vunpack.c.l.b16 %v5183
  %v5472 = vunpack.c.l.b16 %v5184
  %v5473 = vunpack.c.l.b16 %v5185
  %v5474 = vunpack.c.l.b16 %v5186
  %v5475 = vunpack.c.l.b16 %v5187
  %v5476 = vunpack.c.l.b16 %v5188
  %v5477 = vunpack.c.l.b16 %v5189
  %v5478 = vpack.c.b16 %v5335, %v5334
  %v5479 = vpack.c.b16 %v5337, %v5336
  %v5480 = vpack.c.b16 %v5339, %v5338
  %v5481 = vpack.c.b16 %v5341, %v5340
  %v5482 = vpack.c.b16 %v5343, %v5342
  %v5483 = vpack.c.b16 %v5345, %v5344
  %v5484 = vpack.c.b16 %v5347, %v5346
  %v5485 = vpack.c.b16 %v5349, %v5348
  %v5486 = vpack.c.b16 %v5351, %v5350
  %v5487 = vpack.c.b16 %v5353, %v5352
  %v5488 = vpack.c.b16 %v5355, %v5354
  %v5489 = vpack.c.b16 %v5357, %v5356
  %v5490 = vpack.c.b16 %v5359, %v5358
  %v5491 = vpack.c.b16 %v5361, %v5360
  %v5492 = vpack.c.b16 %v5363, %v5362
  %v5493 = vpack.c.b16 %v5365, %v5364
  %v5494 = vpack.c.b16 %v5367, %v5366
  %v5495 = vpack.c.b16 %v5369, %v5368
  %v5496 = vpack.c.b16 %v5371, %v5370
  %v5497 = vpack.c.b16 %v5373, %v5372
  %v5498 = vpack.c.b16 %v5375, %v5374
  %v5499 = vpack.c.b16 %v5377, %v5376
  %v5500 = vpack.c.b16 %v5379, %v5378
  %v5501 = vpack.c.b16 %v5381, %v5380
  %v5502 = vpack.c.b16 %v5383, %v5382
  %v5503 = vpack.c.b16 %v5385, %v5384
  %v5504 = vpack.c.b16 %v5387, %v5386
  %v5505 = vpack.c.b16 %v5389, %v5388
  %v5506 = vpack.c.b16 %v5391, %v5390
  %v5507 = vpack.c.b16 %v5393, %v5392
  %v5508 = vpack.c.b16 %v5395, %v5394
  %v5509 = vpack.c.b16 %v5397, %v5396
  %v5510 = vpack.c.b16 %v5399, %v5398
  %v5511 = vpack.c.b16 %v5401, %v5400
  %v5512 = vpack.c.b16 %v5403, %v5402
  %v5513 = vpack.c.b16 %v5405, %v5404
  %v5514 = vpack.c.b16 %v5407, %v5406
  %v5515 = vpack.c.b16 %v5409, %v5408
  %v5516 = vpack.c.b16 %v5411, %v5410
  %v5517 = vpack.c.b16 %v5413, %v5412
  %v5518 = vpack.c.b16 %v5415, %v5414
  %v5519 = vpack.c.b16 %v5417, %v5416
  %v5520 = vpack.c.b16 %v5419, %v5418
  %v5521 = vpack.c.b16 %v5421, %v5420
  %v5522 = vpack.c.b16 %v5423, %v5422
  %v5523 = vpack.c.b16 %v5425, %v5424
  %v5524 = vpack.c.b16 %v5427, %v5426
  %v5525 = vpack.c.b16 %v5429, %v5428
  %v5526 = vpack.c.b16 %v5431, %v5430
  %v5527 = vpack.c.b16 %v5433, %v5432
  %v5528 = vpack.c.b16 %v5435, %v5434
  %v5529 = vpack.c.b16 %v5437, %v5436
  %v5530 = vpack.c.b16 %v5439, %v5438
  %v5531 = vpack.c.b16 %v5441, %v5440
  %v5532 = vpack.c.b16 %v5443, %v5442
  %v5533 = vpack.c.b16 %v5445, %v5444
  %v5534 = vpack.c.b16 %v5447, %v5446
  %v5535 = vpack.c.b16 %v5449, %v5448
  %v5536 = vpack.c.b16 %v5451, %v5450
  %v5537 = vpack.c.b16 %v5453, %v5452
  %v5538 = vpack.c.b16 %v5455, %v5454
  %v5539 = vpack.c.b16 %v5457, %v5456
  %v5540 = vpack.c.b16 %v5459, %v5458
  %v5541 = vpack.c.b16 %v5461, %v5460
  %v5542 = vpack.c.b16 %v5463, %v5462
  %v5543 = vpack.c.b16 %v5465, %v5464
  %v5544 = vpack.c.b16 %v5467, %v5466
  %v5545 = vpack.c.b16 %v5469, %v5468
  %v5546 = vpack.c.b16 %v5471, %v5470
  %v5547 = vpack.c.b16 %v5473, %v5472
  %v5548 = vpack.c.b16 %v5475, %v5474
  %v5549 = vpack.c.b16 %v5477, %v5476
  %5622 = vmatprep.subr.bf16.mxu0 0
  %5623 = vmatpush1.bf16.msra.mxu0 %v5485
  %5624 = vmatprep.subr.bf16.mxu0 0
  %5625 = vmatpush1.bf16.msra.mxu0 %v5484
  %5626 = vmatprep.subr.bf16.mxu0 0
  %5627 = vmatpush1.bf16.msra.mxu0 %v5483
  %5628 = vmatprep.subr.bf16.mxu0 0
  %5629 = vmatpush1.bf16.msra.mxu0 %v5482
  %5630 = vmatprep.subr.bf16.mxu0 0
  %5631 = vmatpush1.bf16.msra.mxu0 %v5481
  %5632 = vmatprep.subr.bf16.mxu0 0
  %5633 = vmatpush1.bf16.msra.mxu0 %v5480
  %5634 = vmatprep.subr.bf16.mxu0 0
  %5635 = vmatpush1.bf16.msra.mxu0 %v5479
  %5636 = vmatprep.subr.bf16.mxu0 0
  %5637 = vmatpush1.bf16.msra.mxu0 %v5478
  %5638 = vmatprep.subr.bf16.mxu0 0
  %5639 = vmatpush2.bf16.msra.mxu0 %v5493
  %5640 = vmatprep.subr.bf16.mxu0 0
  %5641 = vmatpush2.bf16.msra.mxu0 %v5492
  %5642 = vmatprep.subr.bf16.mxu0 0
  %5643 = vmatpush2.bf16.msra.mxu0 %v5491
  %5644 = vmatprep.subr.bf16.mxu0 0
  %5645 = vmatpush2.bf16.msra.mxu0 %v5490
  %5646 = vmatprep.subr.bf16.mxu0 0
  %5647 = vmatpush2.bf16.msra.mxu0 %v5489
  %5648 = vmatprep.subr.bf16.mxu0 0
  %5649 = vmatpush2.bf16.msra.mxu0 %v5488
  %5650 = vmatprep.subr.bf16.mxu0 0
  %5651 = vmatpush2.bf16.msra.mxu0 %v5487
  %5652 = vmatprep.subr.bf16.mxu0 0
  %5653 = vmatpush2.bf16.msra.mxu0 %v5486
  %5654 = vmatprep.mubr.bf16.mxu0 %v5038
  %5655 = vmatmul.mubr.bf16.gmra.mxu0 %v5037
  %v5656 = vpop.f32.mrf.mxu0
  %v5657 = vadd.f32 %v26, %v5656
  %v5658 = vpop.f32.mrf.mxu0
  %v5659 = vpop.f32.mrf.mxu0
  %v5660 = vpop.f32.mrf.mxu0
  %5661 = vdwg.mxu0
  %5662 = vmatprep.subr.bf16.mxu0 0
  %5663 = vmatpush1.bf16.msra.mxu0 %v5501
  %5664 = vmatprep.subr.bf16.mxu0 0
  %5665 = vmatpush1.bf16.msra.mxu0 %v5500
  %5666 = vmatprep.subr.bf16.mxu0 0
  %5667 = vmatpush1.bf16.msra.mxu0 %v5499
  %5668 = vmatprep.subr.bf16.mxu0 0
  %5669 = vmatpush1.bf16.msra.mxu0 %v5498
  %5670 = vmatprep.subr.bf16.mxu0 0
  %5671 = vmatpush1.bf16.msra.mxu0 %v5497
  %5672 = vmatprep.subr.bf16.mxu0 0
  %5673 = vmatpush1.bf16.msra.mxu0 %v5496
  %5674 = vmatprep.subr.bf16.mxu0 0
  %5675 = vmatpush1.bf16.msra.mxu0 %v5495
  %5676 = vmatprep.subr.bf16.mxu0 0
  %5677 = vmatpush1.bf16.msra.mxu0 %v5494
  %5678 = vmatprep.subr.bf16.mxu0 0
  %5679 = vmatpush2.bf16.msra.mxu0 %v5509
  %5680 = vmatprep.subr.bf16.mxu0 0
  %5681 = vmatpush2.bf16.msra.mxu0 %v5508
  %5682 = vmatprep.subr.bf16.mxu0 0
  %5683 = vmatpush2.bf16.msra.mxu0 %v5507
  %5684 = vmatprep.subr.bf16.mxu0 0
  %5685 = vmatpush2.bf16.msra.mxu0 %v5506
  %5686 = vmatprep.subr.bf16.mxu0 0
  %5687 = vmatpush2.bf16.msra.mxu0 %v5505
  %5688 = vmatprep.subr.bf16.mxu0 0
  %5689 = vmatpush2.bf16.msra.mxu0 %v5504
  %5690 = vmatprep.subr.bf16.mxu0 0
  %5691 = vmatpush2.bf16.msra.mxu0 %v5503
  %5692 = vmatprep.subr.bf16.mxu0 0
  %5693 = vmatpush2.bf16.msra.mxu0 %v5502
  %5694 = vmatprep.mubr.bf16.mxu0 %v5040
  %5695 = vmatmul.mubr.bf16.gmra.mxu0 %v5039
  %v5696 = vpop.f32.mrf.mxu0
  %v5697 = vadd.f32 %v5657, %v5696
  %v5698 = vpop.f32.mrf.mxu0
  %v5699 = vpop.f32.mrf.mxu0
  %v5700 = vpop.f32.mrf.mxu0
  %5701 = vdwg.mxu0
  %5702 = vmatprep.subr.bf16.mxu0 0
  %5703 = vmatpush1.bf16.msra.mxu0 %v5517
  %5704 = vmatprep.subr.bf16.mxu0 0
  %5705 = vmatpush1.bf16.msra.mxu0 %v5516
  %5706 = vmatprep.subr.bf16.mxu0 0
  %5707 = vmatpush1.bf16.msra.mxu0 %v5515
  %5708 = vmatprep.subr.bf16.mxu0 0
  %5709 = vmatpush1.bf16.msra.mxu0 %v5514
  %5710 = vmatprep.subr.bf16.mxu0 0
  %5711 = vmatpush1.bf16.msra.mxu0 %v5513
  %5712 = vmatprep.subr.bf16.mxu0 0
  %5713 = vmatpush1.bf16.msra.mxu0 %v5512
  %5714 = vmatprep.subr.bf16.mxu0 0
  %5715 = vmatpush1.bf16.msra.mxu0 %v5511
  %5716 = vmatprep.subr.bf16.mxu0 0
  %5717 = vmatpush1.bf16.msra.mxu0 %v5510
  %5718 = vmatprep.subr.bf16.mxu0 0
  %5719 = vmatpush2.bf16.msra.mxu0 %v5525
  %5720 = vmatprep.subr.bf16.mxu0 0
  %5721 = vmatpush2.bf16.msra.mxu0 %v5524
  %5722 = vmatprep.subr.bf16.mxu0 0
  %5723 = vmatpush2.bf16.msra.mxu0 %v5523
  %5724 = vmatprep.subr.bf16.mxu0 0
  %5725 = vmatpush2.bf16.msra.mxu0 %v5522
  %5726 = vmatprep.subr.bf16.mxu0 0
  %5727 = vmatpush2.bf16.msra.mxu0 %v5521
  %5728 = vmatprep.subr.bf16.mxu0 0
  %5729 = vmatpush2.bf16.msra.mxu0 %v5520
  %5730 = vmatprep.subr.bf16.mxu0 0
  %5731 = vmatpush2.bf16.msra.mxu0 %v5519
  %5732 = vmatprep.subr.bf16.mxu0 0
  %5733 = vmatpush2.bf16.msra.mxu0 %v5518
  %5734 = vmatprep.mubr.bf16.mxu0 %v5042
  %5735 = vmatmul.mubr.bf16.gmra.mxu0 %v5041
  %v5736 = vpop.f32.mrf.mxu0
  %v5737 = vadd.f32 %v5697, %v5736
  %v5738 = vpop.f32.mrf.mxu0
  %v5739 = vpop.f32.mrf.mxu0
  %v5740 = vpop.f32.mrf.mxu0
  %5741 = vdwg.mxu0
  %5742 = vmatprep.subr.bf16.mxu0 0
  %5743 = vmatpush1.bf16.msra.mxu0 %v5533
  %5744 = vmatprep.subr.bf16.mxu0 0
  %5745 = vmatpush1.bf16.msra.mxu0 %v5532
  %5746 = vmatprep.subr.bf16.mxu0 0
  %5747 = vmatpush1.bf16.msra.mxu0 %v5531
  %5748 = vmatprep.subr.bf16.mxu0 0
  %5749 = vmatpush1.bf16.msra.mxu0 %v5530
  %5750 = vmatprep.subr.bf16.mxu0 0
  %5751 = vmatpush1.bf16.msra.mxu0 %v5529
  %5752 = vmatprep.subr.bf16.mxu0 0
  %5753 = vmatpush1.bf16.msra.mxu0 %v5528
  %5754 = vmatprep.subr.bf16.mxu0 0
  %5755 = vmatpush1.bf16.msra.mxu0 %v5527
  %5756 = vmatprep.subr.bf16.mxu0 0
  %5757 = vmatpush1.bf16.msra.mxu0 %v5526
  %5758 = vmatprep.subr.bf16.mxu0 0
  %5759 = vmatpush2.bf16.msra.mxu0 %v5541
  %5760 = vmatprep.subr.bf16.mxu0 0
  %5761 = vmatpush2.bf16.msra.mxu0 %v5540
  %5762 = vmatprep.subr.bf16.mxu0 0
  %5763 = vmatpush2.bf16.msra.mxu0 %v5539
  %5764 = vmatprep.subr.bf16.mxu0 0
  %5765 = vmatpush2.bf16.msra.mxu0 %v5538
  %5766 = vmatprep.subr.bf16.mxu0 0
  %5767 = vmatpush2.bf16.msra.mxu0 %v5537
  %5768 = vmatprep.subr.bf16.mxu0 0
  %5769 = vmatpush2.bf16.msra.mxu0 %v5536
  %5770 = vmatprep.subr.bf16.mxu0 0
  %5771 = vmatpush2.bf16.msra.mxu0 %v5535
  %5772 = vmatprep.subr.bf16.mxu0 0
  %5773 = vmatpush2.bf16.msra.mxu0 %v5534
  %5774 = vmatprep.mubr.bf16.mxu0 %v5044
  %5775 = vmatmul.mubr.bf16.gmra.mxu0 %v5043
  %v5776 = vpop.f32.mrf.mxu0
  %v5777 = vadd.f32 %v5737, %v5776
  %v5778 = vpop.f32.mrf.mxu0
  %v5779 = vpop.f32.mrf.mxu0
  %v5780 = vpop.f32.mrf.mxu0
  %5781 = vdwg.mxu0
  %5782 = vmatprep.subr.bf16.mxu0 0
  %5783 = vmatpush1.bf16.msra.mxu0 %v5549
  %5784 = vmatprep.subr.bf16.mxu0 0
  %5785 = vmatpush1.bf16.msra.mxu0 %v5548
  %5786 = vmatprep.subr.bf16.mxu0 0
  %5787 = vmatpush1.bf16.msra.mxu0 %v5547
  %5788 = vmatprep.subr.bf16.mxu0 0
  %5789 = vmatpush1.bf16.msra.mxu0 %v5546
  %5790 = vmatprep.subr.bf16.mxu0 0
  %5791 = vmatpush1.bf16.msra.mxu0 %v5545
  %5792 = vmatprep.subr.bf16.mxu0 0
  %5793 = vmatpush1.bf16.msra.mxu0 %v5544
  %5794 = vmatprep.subr.bf16.mxu0 0
  %5795 = vmatpush1.bf16.msra.mxu0 %v5543
  %5796 = vmatprep.subr.bf16.mxu0 0
  %5797 = vmatpush1.bf16.msra.mxu0 %v5542
  %5798 = vmatprep.subr.bf16.mxu0 0
  %5799 = vmatpush2.bf16.msra.mxu0 0
  %5800 = vmatprep.subr.bf16.mxu0 0
  %5801 = vmatpush2.bf16.msra.mxu0 0
  %5802 = vmatprep.subr.bf16.mxu0 0
  %5803 = vmatpush2.bf16.msra.mxu0 0
  %5804 = vmatprep.subr.bf16.mxu0 0
  %5805 = vmatpush2.bf16.msra.mxu0 0
  %5806 = vmatprep.subr.bf16.mxu0 0
  %5807 = vmatpush2.bf16.msra.mxu0 0
  %5808 = vmatprep.subr.bf16.mxu0 0
  %5809 = vmatpush2.bf16.msra.mxu0 0
  %5810 = vmatprep.subr.bf16.mxu0 0
  %5811 = vmatpush2.bf16.msra.mxu0 0
  %5812 = vmatprep.subr.bf16.mxu0 0
  %5813 = vmatpush2.bf16.msra.mxu0 0
  %5814 = vmatprep.mubr.bf16.mxu0 0
  %5815 = vmatmul.mubr.bf16.gmra.mxu0 %v5045
  %v5816 = vpop.f32.mrf.mxu0
  %v5817 = vadd.f32 %v5777, %v5816
  %v5818 = vpop.f32.mrf.mxu0
  %v5819 = vpop.f32.mrf.mxu0
  %v5820 = vpop.f32.mrf.mxu0
  %5821 = vdwg.mxu0
  %v5822 = vmax.f32 %v5817, 0.0
  %v5823 = vadd.f32 %v5001, %v5822
  %s5824 = scalar_lea.vmem %s5, 56
  %5825 = vst [vmem:[%s5824] sm:$0xff] %v5823
  %v5826 = vld [vmem:[%s4998] sm:$0xff]
  %v5828 = vrot.slane %v5823, 4
  %v5830 = vsel %vm42, 0.0, %v5828
  %v5831 = vsel %vm42, %v5828, 0.0
  %v5834 = vrot.slane %v5830, 1
  %v5835 = vrot.slane %v5831, 1
  %v5836 = vsel %vm47, %v5834, %v5835
  %v5838 = vrot.slane %v5830, 2
  %v5839 = vrot.slane %v5831, 2
  %v5840 = vsel %vm52, %v5838, %v5839
  %v5842 = vrot.slane %v5830, 3
  %v5843 = vrot.slane %v5831, 3
  %v5844 = vsel %vm57, %v5842, %v5843
  %v5846 = vrot.slane %v5830, 4
  %v5847 = vrot.slane %v5831, 4
  %v5848 = vsel %vm42, %v5846, %v5847
  %v5850 = vrot.slane %v5830, 5
  %v5851 = vrot.slane %v5831, 5
  %v5852 = vsel %vm66, %v5850, %v5851
  %v5854 = vrot.slane %v5830, 6
  %v5855 = vrot.slane %v5831, 6
  %v5856 = vsel %vm71, %v5854, %v5855
  %v5858 = vrot.slane %v5830, 7
  %v5859 = vrot.slane %v5831, 7
  %v5860 = vsel %vm76, %v5858, %v5859
  %v5862 = vpack.c.bf16 %v5830, %v5830
  %v5863 = vpack.c.bf16 %v5836, %v5836
  %v5864 = vpack.c.bf16 %v5840, %v5840
  %v5865 = vpack.c.bf16 %v5844, %v5844
  %v5866 = vpack.c.bf16 %v5848, %v5848
  %v5867 = vpack.c.bf16 %v5852, %v5852
  %v5868 = vpack.c.bf16 %v5856, %v5856
  %v5869 = vpack.c.bf16 %v5860, %v5860
  %v5870 = vpack.c.bf16 %v5831, %v5831
  %v5871 = vld [vmem:[%s3] sm:$0xf]
  %v5872 = vld [vmem:[%s3 + $0x4] sm:$0xf]
  %v5873 = vld [vmem:[%s3 + $0x8] sm:$0xf]
  %v5874 = vld [vmem:[%s3 + $0xc] sm:$0xf]
  %v5875 = vld [vmem:[%s3 + $0x10] sm:$0xf]
  %v5876 = vld [vmem:[%s3 + $0x14] sm:$0xf]
  %v5877 = vld [vmem:[%s3 + $0x18] sm:$0xf]
  %v5878 = vld [vmem:[%s3 + $0x1c] sm:$0xf]
  %v5879 = vld [vmem:[%s3 + $0x20] sm:$0xf]
  %v5880 = vld [vmem:[%s3 + $0x24] sm:$0xf]
  %v5881 = vld [vmem:[%s3 + $0x28] sm:$0xf]
  %v5882 = vld [vmem:[%s3 + $0x2c] sm:$0xf]
  %v5883 = vld [vmem:[%s3 + $0x30] sm:$0xf]
  %v5884 = vld [vmem:[%s3 + $0x34] sm:$0xf]
  %v5885 = vld [vmem:[%s3 + $0x38] sm:$0xf]
  %v5886 = vld [vmem:[%s3 + $0x3c] sm:$0xf]
  %v5887 = vld [vmem:[%s3 + $0x40] sm:$0xf]
  %v5888 = vld [vmem:[%s3 + $0x44] sm:$0xf]
  %v5889 = vld [vmem:[%s3 + $0x48] sm:$0xf]
  %v5890 = vld [vmem:[%s3 + $0x4c] sm:$0xf]
  %v5891 = vld [vmem:[%s3 + $0x50] sm:$0xf]
  %v5892 = vld [vmem:[%s3 + $0x54] sm:$0xf]
  %v5893 = vld [vmem:[%s3 + $0x58] sm:$0xf]
  %v5894 = vld [vmem:[%s3 + $0x5c] sm:$0xf]
  %v5895 = vld [vmem:[%s3 + $0x60] sm:$0xf]
  %v5896 = vld [vmem:[%s3 + $0x64] sm:$0xf]
  %v5897 = vld [vmem:[%s3 + $0x68] sm:$0xf]
  %v5898 = vld [vmem:[%s3 + $0x6c] sm:$0xf]
  %v5899 = vld [vmem:[%s3 + $0x70] sm:$0xf]
  %v5900 = vld [vmem:[%s3 + $0x74] sm:$0xf]
  %v5901 = vld [vmem:[%s3 + $0x78] sm:$0xf]
  %v5902 = vld [vmem:[%s3 + $0x7c] sm:$0xf]
  %v5903 = vld [vmem:[%s3 + $0x80] sm:$0xf]
  %v5904 = vld [vmem:[%s3 + $0x84] sm:$0xf]
  %v5905 = vld [vmem:[%s3 + $0x88] sm:$0xf]
  %v5906 = vld [vmem:[%s3 + $0x8c] sm:$0xf]
  %v5907 = vld [vmem:[%s3 + $0x90] sm:$0xf]
  %v5908 = vld [vmem:[%s3 + $0x94] sm:$0xf]
  %v5909 = vld [vmem:[%s3 + $0x98] sm:$0xf]
  %v5910 = vld [vmem:[%s3 + $0x9c] sm:$0xf]
  %v5911 = vld [vmem:[%s3 + $0xa0] sm:$0xf]
  %v5912 = vld [vmem:[%s3 + $0xa4] sm:$0xf]
  %v5913 = vld [vmem:[%s3 + $0xa8] sm:$0xf]
  %v5914 = vld [vmem:[%s3 + $0xac] sm:$0xf]
  %v5915 = vld [vmem:[%s3 + $0xb0] sm:$0xf]
  %v5916 = vld [vmem:[%s3 + $0xb4] sm:$0xf]
  %v5917 = vld [vmem:[%s3 + $0xb8] sm:$0xf]
  %v5918 = vld [vmem:[%s3 + $0xbc] sm:$0xf]
  %v5919 = vld [vmem:[%s3 + $0xc0] sm:$0xf]
  %v5920 = vld [vmem:[%s3 + $0xc4] sm:$0xf]
  %v5921 = vld [vmem:[%s3 + $0xc8] sm:$0xf]
  %v5922 = vld [vmem:[%s3 + $0xcc] sm:$0xf]
  %v5923 = vld [vmem:[%s3 + $0xd0] sm:$0xf]
  %v5924 = vld [vmem:[%s3 + $0xd4] sm:$0xf]
  %v5925 = vld [vmem:[%s3 + $0xd8] sm:$0xf]
  %v5926 = vld [vmem:[%s3 + $0xdc] sm:$0xf]
  %v5927 = vld [vmem:[%s3 + $0xe0] sm:$0xf]
  %v5928 = vld [vmem:[%s3 + $0xe4] sm:$0xf]
  %v5929 = vld [vmem:[%s3 + $0xe8] sm:$0xf]
  %v5930 = vld [vmem:[%s3 + $0xec] sm:$0xf]
  %v5931 = vld [vmem:[%s3 + $0xf0] sm:$0xf]
  %v5932 = vld [vmem:[%s3 + $0xf4] sm:$0xf]
  %v5933 = vld [vmem:[%s3 + $0xf8] sm:$0xf]
  %v5934 = vld [vmem:[%s3 + $0xfc] sm:$0xf]
  %v5935 = vld [vmem:[%s3 + $0x100] sm:$0xf]
  %v5936 = vld [vmem:[%s3 + $0x104] sm:$0xf]
  %v5937 = vld [vmem:[%s3 + $0x108] sm:$0xf]
  %v5938 = vld [vmem:[%s3 + $0x10c] sm:$0xf]
  %v5939 = vld [vmem:[%s3 + $0x110] sm:$0xf]
  %v5940 = vld [vmem:[%s3 + $0x114] sm:$0xf]
  %v5941 = vld [vmem:[%s3 + $0x118] sm:$0xf]
  %v5942 = vld [vmem:[%s3 + $0x11c] sm:$0xf]
  %v5943 = vld [vmem:[%s3 + $0x120] sm:$0xf]
  %v5944 = vld [vmem:[%s3 + $0x124] sm:$0xf]
  %v5945 = vld [vmem:[%s3 + $0x128] sm:$0xf]
  %v5946 = vld [vmem:[%s3 + $0x12c] sm:$0xf]
  %v5947 = vld [vmem:[%s3 + $0x130] sm:$0xf]
  %v5948 = vld [vmem:[%s3 + $0x134] sm:$0xf]
  %v5949 = vld [vmem:[%s3 + $0x138] sm:$0xf]
  %v5950 = vld [vmem:[%s3 + $0x13c] sm:$0xf]
  %v5951 = vld [vmem:[%s3 + $0x140] sm:$0xf]
  %v5952 = vld [vmem:[%s3 + $0x144] sm:$0xf]
  %v5953 = vld [vmem:[%s3 + $0x148] sm:$0xf]
  %v5954 = vld [vmem:[%s3 + $0x14c] sm:$0xf]
  %v5955 = vld [vmem:[%s3 + $0x150] sm:$0xf]
  %v5956 = vld [vmem:[%s3 + $0x154] sm:$0xf]
  %v5957 = vld [vmem:[%s3 + $0x158] sm:$0xf]
  %v5958 = vld [vmem:[%s3 + $0x15c] sm:$0xf]
  %v5959 = vld [vmem:[%s3 + $0x160] sm:$0xf]
  %v5960 = vld [vmem:[%s3 + $0x164] sm:$0xf]
  %v5961 = vld [vmem:[%s3 + $0x168] sm:$0xf]
  %v5962 = vld [vmem:[%s3 + $0x16c] sm:$0xf]
  %v5963 = vld [vmem:[%s3 + $0x170] sm:$0xf]
  %v5964 = vld [vmem:[%s3 + $0x174] sm:$0xf]
  %v5965 = vld [vmem:[%s3 + $0x178] sm:$0xf]
  %v5966 = vld [vmem:[%s3 + $0x17c] sm:$0xf]
  %v5967 = vld [vmem:[%s3 + $0x180] sm:$0xf]
  %v5968 = vld [vmem:[%s3 + $0x184] sm:$0xf]
  %v5969 = vld [vmem:[%s3 + $0x188] sm:$0xf]
  %v5970 = vld [vmem:[%s3 + $0x18c] sm:$0xf]
  %v5971 = vld [vmem:[%s3 + $0x190] sm:$0xf]
  %v5972 = vld [vmem:[%s3 + $0x194] sm:$0xf]
  %v5973 = vld [vmem:[%s3 + $0x198] sm:$0xf]
  %v5974 = vld [vmem:[%s3 + $0x19c] sm:$0xf]
  %v5975 = vld [vmem:[%s3 + $0x1a0] sm:$0xf]
  %v5976 = vld [vmem:[%s3 + $0x1a4] sm:$0xf]
  %v5977 = vld [vmem:[%s3 + $0x1a8] sm:$0xf]
  %v5978 = vld [vmem:[%s3 + $0x1ac] sm:$0xf]
  %v5979 = vld [vmem:[%s3 + $0x1b0] sm:$0xf]
  %v5980 = vld [vmem:[%s3 + $0x1b4] sm:$0xf]
  %v5981 = vld [vmem:[%s3 + $0x1b8] sm:$0xf]
  %v5982 = vld [vmem:[%s3 + $0x1bc] sm:$0xf]
  %v5983 = vld [vmem:[%s3 + $0x1c0] sm:$0xf]
  %v5984 = vld [vmem:[%s3 + $0x1c4] sm:$0xf]
  %v5985 = vld [vmem:[%s3 + $0x1c8] sm:$0xf]
  %v5986 = vld [vmem:[%s3 + $0x1cc] sm:$0xf]
  %v5987 = vld [vmem:[%s3 + $0x1d0] sm:$0xf]
  %v5988 = vld [vmem:[%s3 + $0x1d4] sm:$0xf]
  %v5989 = vld [vmem:[%s3 + $0x1d8] sm:$0xf]
  %v5990 = vld [vmem:[%s3 + $0x1dc] sm:$0xf]
  %v5991 = vld [vmem:[%s3 + $0x1e0] sm:$0xf]
  %v5992 = vld [vmem:[%s3 + $0x1e4] sm:$0xf]
  %v5993 = vld [vmem:[%s3 + $0x1e8] sm:$0xf]
  %v5994 = vld [vmem:[%s3 + $0x1ec] sm:$0xf]
  %v5995 = vld [vmem:[%s3 + $0x1f0] sm:$0xf]
  %v5996 = vld [vmem:[%s3 + $0x1f4] sm:$0xf]
  %v5997 = vld [vmem:[%s3 + $0x1f8] sm:$0xf]
  %v5998 = vld [vmem:[%s3 + $0x1fc] sm:$0xf]
  %v5999 = vld [vmem:[%s3 + $0x200] sm:$0xf]
  %v6000 = vld [vmem:[%s3 + $0x204] sm:$0xf]
  %v6001 = vld [vmem:[%s3 + $0x208] sm:$0xf]
  %v6002 = vld [vmem:[%s3 + $0x20c] sm:$0xf]
  %v6003 = vld [vmem:[%s3 + $0x210] sm:$0xf]
  %v6004 = vld [vmem:[%s3 + $0x214] sm:$0xf]
  %v6005 = vld [vmem:[%s3 + $0x218] sm:$0xf]
  %v6006 = vld [vmem:[%s3 + $0x21c] sm:$0xf]
  %v6007 = vld [vmem:[%s3 + $0x220] sm:$0xf]
  %v6008 = vld [vmem:[%s3 + $0x224] sm:$0xf]
  %v6009 = vld [vmem:[%s3 + $0x228] sm:$0xf]
  %v6010 = vld [vmem:[%s3 + $0x22c] sm:$0xf]
  %v6011 = vld [vmem:[%s3 + $0x230] sm:$0xf]
  %v6012 = vld [vmem:[%s3 + $0x234] sm:$0xf]
  %v6013 = vld [vmem:[%s3 + $0x238] sm:$0xf]
  %v6014 = vld [vmem:[%s3 + $0x23c] sm:$0xf]
  %v6159 = vunpack.c.l.b16 %v5871
  %v6160 = vunpack.c.l.b16 %v5872
  %v6161 = vunpack.c.l.b16 %v5873
  %v6162 = vunpack.c.l.b16 %v5874
  %v6163 = vunpack.c.l.b16 %v5875
  %v6164 = vunpack.c.l.b16 %v5876
  %v6165 = vunpack.c.l.b16 %v5877
  %v6166 = vunpack.c.l.b16 %v5878
  %v6167 = vunpack.c.l.b16 %v5879
  %v6168 = vunpack.c.l.b16 %v5880
  %v6169 = vunpack.c.l.b16 %v5881
  %v6170 = vunpack.c.l.b16 %v5882
  %v6171 = vunpack.c.l.b16 %v5883
  %v6172 = vunpack.c.l.b16 %v5884
  %v6173 = vunpack.c.l.b16 %v5885
  %v6174 = vunpack.c.l.b16 %v5886
  %v6175 = vunpack.c.l.b16 %v5887
  %v6176 = vunpack.c.l.b16 %v5888
  %v6177 = vunpack.c.l.b16 %v5889
  %v6178 = vunpack.c.l.b16 %v5890
  %v6179 = vunpack.c.l.b16 %v5891
  %v6180 = vunpack.c.l.b16 %v5892
  %v6181 = vunpack.c.l.b16 %v5893
  %v6182 = vunpack.c.l.b16 %v5894
  %v6183 = vunpack.c.l.b16 %v5895
  %v6184 = vunpack.c.l.b16 %v5896
  %v6185 = vunpack.c.l.b16 %v5897
  %v6186 = vunpack.c.l.b16 %v5898
  %v6187 = vunpack.c.l.b16 %v5899
  %v6188 = vunpack.c.l.b16 %v5900
  %v6189 = vunpack.c.l.b16 %v5901
  %v6190 = vunpack.c.l.b16 %v5902
  %v6191 = vunpack.c.l.b16 %v5903
  %v6192 = vunpack.c.l.b16 %v5904
  %v6193 = vunpack.c.l.b16 %v5905
  %v6194 = vunpack.c.l.b16 %v5906
  %v6195 = vunpack.c.l.b16 %v5907
  %v6196 = vunpack.c.l.b16 %v5908
  %v6197 = vunpack.c.l.b16 %v5909
  %v6198 = vunpack.c.l.b16 %v5910
  %v6199 = vunpack.c.l.b16 %v5911
  %v6200 = vunpack.c.l.b16 %v5912
  %v6201 = vunpack.c.l.b16 %v5913
  %v6202 = vunpack.c.l.b16 %v5914
  %v6203 = vunpack.c.l.b16 %v5915
  %v6204 = vunpack.c.l.b16 %v5916
  %v6205 = vunpack.c.l.b16 %v5917
  %v6206 = vunpack.c.l.b16 %v5918
  %v6207 = vunpack.c.l.b16 %v5919
  %v6208 = vunpack.c.l.b16 %v5920
  %v6209 = vunpack.c.l.b16 %v5921
  %v6210 = vunpack.c.l.b16 %v5922
  %v6211 = vunpack.c.l.b16 %v5923
  %v6212 = vunpack.c.l.b16 %v5924
  %v6213 = vunpack.c.l.b16 %v5925
  %v6214 = vunpack.c.l.b16 %v5926
  %v6215 = vunpack.c.l.b16 %v5927
  %v6216 = vunpack.c.l.b16 %v5928
  %v6217 = vunpack.c.l.b16 %v5929
  %v6218 = vunpack.c.l.b16 %v5930
  %v6219 = vunpack.c.l.b16 %v5931
  %v6220 = vunpack.c.l.b16 %v5932
  %v6221 = vunpack.c.l.b16 %v5933
  %v6222 = vunpack.c.l.b16 %v5934
  %v6223 = vunpack.c.l.b16 %v5935
  %v6224 = vunpack.c.l.b16 %v5936
  %v6225 = vunpack.c.l.b16 %v5937
  %v6226 = vunpack.c.l.b16 %v5938
  %v6227 = vunpack.c.l.b16 %v5939
  %v6228 = vunpack.c.l.b16 %v5940
  %v6229 = vunpack.c.l.b16 %v5941
  %v6230 = vunpack.c.l.b16 %v5942
  %v6231 = vunpack.c.l.b16 %v5943
  %v6232 = vunpack.c.l.b16 %v5944
  %v6233 = vunpack.c.l.b16 %v5945
  %v6234 = vunpack.c.l.b16 %v5946
  %v6235 = vunpack.c.l.b16 %v5947
  %v6236 = vunpack.c.l.b16 %v5948
  %v6237 = vunpack.c.l.b16 %v5949
  %v6238 = vunpack.c.l.b16 %v5950
  %v6239 = vunpack.c.l.b16 %v5951
  %v6240 = vunpack.c.l.b16 %v5952
  %v6241 = vunpack.c.l.b16 %v5953
  %v6242 = vunpack.c.l.b16 %v5954
  %v6243 = vunpack.c.l.b16 %v5955
  %v6244 = vunpack.c.l.b16 %v5956
  %v6245 = vunpack.c.l.b16 %v5957
  %v6246 = vunpack.c.l.b16 %v5958
  %v6247 = vunpack.c.l.b16 %v5959
  %v6248 = vunpack.c.l.b16 %v5960
  %v6249 = vunpack.c.l.b16 %v5961
  %v6250 = vunpack.c.l.b16 %v5962
  %v6251 = vunpack.c.l.b16 %v5963
  %v6252 = vunpack.c.l.b16 %v5964
  %v6253 = vunpack.c.l.b16 %v5965
  %v6254 = vunpack.c.l.b16 %v5966
  %v6255 = vunpack.c.l.b16 %v5967
  %v6256 = vunpack.c.l.b16 %v5968
  %v6257 = vunpack.c.l.b16 %v5969
  %v6258 = vunpack.c.l.b16 %v5970
  %v6259 = vunpack.c.l.b16 %v5971
  %v6260 = vunpack.c.l.b16 %v5972
  %v6261 = vunpack.c.l.b16 %v5973
  %v6262 = vunpack.c.l.b16 %v5974
  %v6263 = vunpack.c.l.b16 %v5975
  %v6264 = vunpack.c.l.b16 %v5976
  %v6265 = vunpack.c.l.b16 %v5977
  %v6266 = vunpack.c.l.b16 %v5978
  %v6267 = vunpack.c.l.b16 %v5979
  %v6268 = vunpack.c.l.b16 %v5980
  %v6269 = vunpack.c.l.b16 %v5981
  %v6270 = vunpack.c.l.b16 %v5982
  %v6271 = vunpack.c.l.b16 %v5983
  %v6272 = vunpack.c.l.b16 %v5984
  %v6273 = vunpack.c.l.b16 %v5985
  %v6274 = vunpack.c.l.b16 %v5986
  %v6275 = vunpack.c.l.b16 %v5987
  %v6276 = vunpack.c.l.b16 %v5988
  %v6277 = vunpack.c.l.b16 %v5989
  %v6278 = vunpack.c.l.b16 %v5990
  %v6279 = vunpack.c.l.b16 %v5991
  %v6280 = vunpack.c.l.b16 %v5992
  %v6281 = vunpack.c.l.b16 %v5993
  %v6282 = vunpack.c.l.b16 %v5994
  %v6283 = vunpack.c.l.b16 %v5995
  %v6284 = vunpack.c.l.b16 %v5996
  %v6285 = vunpack.c.l.b16 %v5997
  %v6286 = vunpack.c.l.b16 %v5998
  %v6287 = vunpack.c.l.b16 %v5999
  %v6288 = vunpack.c.l.b16 %v6000
  %v6289 = vunpack.c.l.b16 %v6001
  %v6290 = vunpack.c.l.b16 %v6002
  %v6291 = vunpack.c.l.b16 %v6003
  %v6292 = vunpack.c.l.b16 %v6004
  %v6293 = vunpack.c.l.b16 %v6005
  %v6294 = vunpack.c.l.b16 %v6006
  %v6295 = vunpack.c.l.b16 %v6007
  %v6296 = vunpack.c.l.b16 %v6008
  %v6297 = vunpack.c.l.b16 %v6009
  %v6298 = vunpack.c.l.b16 %v6010
  %v6299 = vunpack.c.l.b16 %v6011
  %v6300 = vunpack.c.l.b16 %v6012
  %v6301 = vunpack.c.l.b16 %v6013
  %v6302 = vunpack.c.l.b16 %v6014
  %v6303 = vpack.c.b16 %v6160, %v6159
  %v6304 = vpack.c.b16 %v6162, %v6161
  %v6305 = vpack.c.b16 %v6164, %v6163
  %v6306 = vpack.c.b16 %v6166, %v6165
  %v6307 = vpack.c.b16 %v6168, %v6167
  %v6308 = vpack.c.b16 %v6170, %v6169
  %v6309 = vpack.c.b16 %v6172, %v6171
  %v6310 = vpack.c.b16 %v6174, %v6173
  %v6311 = vpack.c.b16 %v6176, %v6175
  %v6312 = vpack.c.b16 %v6178, %v6177
  %v6313 = vpack.c.b16 %v6180, %v6179
  %v6314 = vpack.c.b16 %v6182, %v6181
  %v6315 = vpack.c.b16 %v6184, %v6183
  %v6316 = vpack.c.b16 %v6186, %v6185
  %v6317 = vpack.c.b16 %v6188, %v6187
  %v6318 = vpack.c.b16 %v6190, %v6189
  %v6319 = vpack.c.b16 %v6192, %v6191
  %v6320 = vpack.c.b16 %v6194, %v6193
  %v6321 = vpack.c.b16 %v6196, %v6195
  %v6322 = vpack.c.b16 %v6198, %v6197
  %v6323 = vpack.c.b16 %v6200, %v6199
  %v6324 = vpack.c.b16 %v6202, %v6201
  %v6325 = vpack.c.b16 %v6204, %v6203
  %v6326 = vpack.c.b16 %v6206, %v6205
  %v6327 = vpack.c.b16 %v6208, %v6207
  %v6328 = vpack.c.b16 %v6210, %v6209
  %v6329 = vpack.c.b16 %v6212, %v6211
  %v6330 = vpack.c.b16 %v6214, %v6213
  %v6331 = vpack.c.b16 %v6216, %v6215
  %v6332 = vpack.c.b16 %v6218, %v6217
  %v6333 = vpack.c.b16 %v6220, %v6219
  %v6334 = vpack.c.b16 %v6222, %v6221
  %v6335 = vpack.c.b16 %v6224, %v6223
  %v6336 = vpack.c.b16 %v6226, %v6225
  %v6337 = vpack.c.b16 %v6228, %v6227
  %v6338 = vpack.c.b16 %v6230, %v6229
  %v6339 = vpack.c.b16 %v6232, %v6231
  %v6340 = vpack.c.b16 %v6234, %v6233
  %v6341 = vpack.c.b16 %v6236, %v6235
  %v6342 = vpack.c.b16 %v6238, %v6237
  %v6343 = vpack.c.b16 %v6240, %v6239
  %v6344 = vpack.c.b16 %v6242, %v6241
  %v6345 = vpack.c.b16 %v6244, %v6243
  %v6346 = vpack.c.b16 %v6246, %v6245
  %v6347 = vpack.c.b16 %v6248, %v6247
  %v6348 = vpack.c.b16 %v6250, %v6249
  %v6349 = vpack.c.b16 %v6252, %v6251
  %v6350 = vpack.c.b16 %v6254, %v6253
  %v6351 = vpack.c.b16 %v6256, %v6255
  %v6352 = vpack.c.b16 %v6258, %v6257
  %v6353 = vpack.c.b16 %v6260, %v6259
  %v6354 = vpack.c.b16 %v6262, %v6261
  %v6355 = vpack.c.b16 %v6264, %v6263
  %v6356 = vpack.c.b16 %v6266, %v6265
  %v6357 = vpack.c.b16 %v6268, %v6267
  %v6358 = vpack.c.b16 %v6270, %v6269
  %v6359 = vpack.c.b16 %v6272, %v6271
  %v6360 = vpack.c.b16 %v6274, %v6273
  %v6361 = vpack.c.b16 %v6276, %v6275
  %v6362 = vpack.c.b16 %v6278, %v6277
  %v6363 = vpack.c.b16 %v6280, %v6279
  %v6364 = vpack.c.b16 %v6282, %v6281
  %v6365 = vpack.c.b16 %v6284, %v6283
  %v6366 = vpack.c.b16 %v6286, %v6285
  %v6367 = vpack.c.b16 %v6288, %v6287
  %v6368 = vpack.c.b16 %v6290, %v6289
  %v6369 = vpack.c.b16 %v6292, %v6291
  %v6370 = vpack.c.b16 %v6294, %v6293
  %v6371 = vpack.c.b16 %v6296, %v6295
  %v6372 = vpack.c.b16 %v6298, %v6297
  %v6373 = vpack.c.b16 %v6300, %v6299
  %v6374 = vpack.c.b16 %v6302, %v6301
  %6447 = vmatprep.subr.bf16.mxu0 0
  %6448 = vmatpush1.bf16.msra.mxu0 %v6310
  %6449 = vmatprep.subr.bf16.mxu0 0
  %6450 = vmatpush1.bf16.msra.mxu0 %v6309
  %6451 = vmatprep.subr.bf16.mxu0 0
  %6452 = vmatpush1.bf16.msra.mxu0 %v6308
  %6453 = vmatprep.subr.bf16.mxu0 0
  %6454 = vmatpush1.bf16.msra.mxu0 %v6307
  %6455 = vmatprep.subr.bf16.mxu0 0
  %6456 = vmatpush1.bf16.msra.mxu0 %v6306
  %6457 = vmatprep.subr.bf16.mxu0 0
  %6458 = vmatpush1.bf16.msra.mxu0 %v6305
  %6459 = vmatprep.subr.bf16.mxu0 0
  %6460 = vmatpush1.bf16.msra.mxu0 %v6304
  %6461 = vmatprep.subr.bf16.mxu0 0
  %6462 = vmatpush1.bf16.msra.mxu0 %v6303
  %6463 = vmatprep.subr.bf16.mxu0 0
  %6464 = vmatpush2.bf16.msra.mxu0 %v6318
  %6465 = vmatprep.subr.bf16.mxu0 0
  %6466 = vmatpush2.bf16.msra.mxu0 %v6317
  %6467 = vmatprep.subr.bf16.mxu0 0
  %6468 = vmatpush2.bf16.msra.mxu0 %v6316
  %6469 = vmatprep.subr.bf16.mxu0 0
  %6470 = vmatpush2.bf16.msra.mxu0 %v6315
  %6471 = vmatprep.subr.bf16.mxu0 0
  %6472 = vmatpush2.bf16.msra.mxu0 %v6314
  %6473 = vmatprep.subr.bf16.mxu0 0
  %6474 = vmatpush2.bf16.msra.mxu0 %v6313
  %6475 = vmatprep.subr.bf16.mxu0 0
  %6476 = vmatpush2.bf16.msra.mxu0 %v6312
  %6477 = vmatprep.subr.bf16.mxu0 0
  %6478 = vmatpush2.bf16.msra.mxu0 %v6311
  %6479 = vmatprep.mubr.bf16.mxu0 %v5863
  %6480 = vmatmul.mubr.bf16.gmra.mxu0 %v5862
  %v6481 = vpop.f32.mrf.mxu0
  %v6482 = vadd.f32 %v33, %v6481
  %v6483 = vpop.f32.mrf.mxu0
  %v6484 = vpop.f32.mrf.mxu0
  %v6485 = vpop.f32.mrf.mxu0
  %6486 = vdwg.mxu0
  %6487 = vmatprep.subr.bf16.mxu0 0
  %6488 = vmatpush1.bf16.msra.mxu0 %v6326
  %6489 = vmatprep.subr.bf16.mxu0 0
  %6490 = vmatpush1.bf16.msra.mxu0 %v6325
  %6491 = vmatprep.subr.bf16.mxu0 0
  %6492 = vmatpush1.bf16.msra.mxu0 %v6324
  %6493 = vmatprep.subr.bf16.mxu0 0
  %6494 = vmatpush1.bf16.msra.mxu0 %v6323
  %6495 = vmatprep.subr.bf16.mxu0 0
  %6496 = vmatpush1.bf16.msra.mxu0 %v6322
  %6497 = vmatprep.subr.bf16.mxu0 0
  %6498 = vmatpush1.bf16.msra.mxu0 %v6321
  %6499 = vmatprep.subr.bf16.mxu0 0
  %6500 = vmatpush1.bf16.msra.mxu0 %v6320
  %6501 = vmatprep.subr.bf16.mxu0 0
  %6502 = vmatpush1.bf16.msra.mxu0 %v6319
  %6503 = vmatprep.subr.bf16.mxu0 0
  %6504 = vmatpush2.bf16.msra.mxu0 %v6334
  %6505 = vmatprep.subr.bf16.mxu0 0
  %6506 = vmatpush2.bf16.msra.mxu0 %v6333
  %6507 = vmatprep.subr.bf16.mxu0 0
  %6508 = vmatpush2.bf16.msra.mxu0 %v6332
  %6509 = vmatprep.subr.bf16.mxu0 0
  %6510 = vmatpush2.bf16.msra.mxu0 %v6331
  %6511 = vmatprep.subr.bf16.mxu0 0
  %6512 = vmatpush2.bf16.msra.mxu0 %v6330
  %6513 = vmatprep.subr.bf16.mxu0 0
  %6514 = vmatpush2.bf16.msra.mxu0 %v6329
  %6515 = vmatprep.subr.bf16.mxu0 0
  %6516 = vmatpush2.bf16.msra.mxu0 %v6328
  %6517 = vmatprep.subr.bf16.mxu0 0
  %6518 = vmatpush2.bf16.msra.mxu0 %v6327
  %6519 = vmatprep.mubr.bf16.mxu0 %v5865
  %6520 = vmatmul.mubr.bf16.gmra.mxu0 %v5864
  %v6521 = vpop.f32.mrf.mxu0
  %v6522 = vadd.f32 %v6482, %v6521
  %v6523 = vpop.f32.mrf.mxu0
  %v6524 = vpop.f32.mrf.mxu0
  %v6525 = vpop.f32.mrf.mxu0
  %6526 = vdwg.mxu0
  %6527 = vmatprep.subr.bf16.mxu0 0
  %6528 = vmatpush1.bf16.msra.mxu0 %v6342
  %6529 = vmatprep.subr.bf16.mxu0 0
  %6530 = vmatpush1.bf16.msra.mxu0 %v6341
  %6531 = vmatprep.subr.bf16.mxu0 0
  %6532 = vmatpush1.bf16.msra.mxu0 %v6340
  %6533 = vmatprep.subr.bf16.mxu0 0
  %6534 = vmatpush1.bf16.msra.mxu0 %v6339
  %6535 = vmatprep.subr.bf16.mxu0 0
  %6536 = vmatpush1.bf16.msra.mxu0 %v6338
  %6537 = vmatprep.subr.bf16.mxu0 0
  %6538 = vmatpush1.bf16.msra.mxu0 %v6337
  %6539 = vmatprep.subr.bf16.mxu0 0
  %6540 = vmatpush1.bf16.msra.mxu0 %v6336
  %6541 = vmatprep.subr.bf16.mxu0 0
  %6542 = vmatpush1.bf16.msra.mxu0 %v6335
  %6543 = vmatprep.subr.bf16.mxu0 0
  %6544 = vmatpush2.bf16.msra.mxu0 %v6350
  %6545 = vmatprep.subr.bf16.mxu0 0
  %6546 = vmatpush2.bf16.msra.mxu0 %v6349
  %6547 = vmatprep.subr.bf16.mxu0 0
  %6548 = vmatpush2.bf16.msra.mxu0 %v6348
  %6549 = vmatprep.subr.bf16.mxu0 0
  %6550 = vmatpush2.bf16.msra.mxu0 %v6347
  %6551 = vmatprep.subr.bf16.mxu0 0
  %6552 = vmatpush2.bf16.msra.mxu0 %v6346
  %6553 = vmatprep.subr.bf16.mxu0 0
  %6554 = vmatpush2.bf16.msra.mxu0 %v6345
  %6555 = vmatprep.subr.bf16.mxu0 0
  %6556 = vmatpush2.bf16.msra.mxu0 %v6344
  %6557 = vmatprep.subr.bf16.mxu0 0
  %6558 = vmatpush2.bf16.msra.mxu0 %v6343
  %6559 = vmatprep.mubr.bf16.mxu0 %v5867
  %6560 = vmatmul.mubr.bf16.gmra.mxu0 %v5866
  %v6561 = vpop.f32.mrf.mxu0
  %v6562 = vadd.f32 %v6522, %v6561
  %v6563 = vpop.f32.mrf.mxu0
  %v6564 = vpop.f32.mrf.mxu0
  %v6565 = vpop.f32.mrf.mxu0
  %6566 = vdwg.mxu0
  %6567 = vmatprep.subr.bf16.mxu0 0
  %6568 = vmatpush1.bf16.msra.mxu0 %v6358
  %6569 = vmatprep.subr.bf16.mxu0 0
  %6570 = vmatpush1.bf16.msra.mxu0 %v6357
  %6571 = vmatprep.subr.bf16.mxu0 0
  %6572 = vmatpush1.bf16.msra.mxu0 %v6356
  %6573 = vmatprep.subr.bf16.mxu0 0
  %6574 = vmatpush1.bf16.msra.mxu0 %v6355
  %6575 = vmatprep.subr.bf16.mxu0 0
  %6576 = vmatpush1.bf16.msra.mxu0 %v6354
  %6577 = vmatprep.subr.bf16.mxu0 0
  %6578 = vmatpush1.bf16.msra.mxu0 %v6353
  %6579 = vmatprep.subr.bf16.mxu0 0
  %6580 = vmatpush1.bf16.msra.mxu0 %v6352
  %6581 = vmatprep.subr.bf16.mxu0 0
  %6582 = vmatpush1.bf16.msra.mxu0 %v6351
  %6583 = vmatprep.subr.bf16.mxu0 0
  %6584 = vmatpush2.bf16.msra.mxu0 %v6366
  %6585 = vmatprep.subr.bf16.mxu0 0
  %6586 = vmatpush2.bf16.msra.mxu0 %v6365
  %6587 = vmatprep.subr.bf16.mxu0 0
  %6588 = vmatpush2.bf16.msra.mxu0 %v6364
  %6589 = vmatprep.subr.bf16.mxu0 0
  %6590 = vmatpush2.bf16.msra.mxu0 %v6363
  %6591 = vmatprep.subr.bf16.mxu0 0
  %6592 = vmatpush2.bf16.msra.mxu0 %v6362
  %6593 = vmatprep.subr.bf16.mxu0 0
  %6594 = vmatpush2.bf16.msra.mxu0 %v6361
  %6595 = vmatprep.subr.bf16.mxu0 0
  %6596 = vmatpush2.bf16.msra.mxu0 %v6360
  %6597 = vmatprep.subr.bf16.mxu0 0
  %6598 = vmatpush2.bf16.msra.mxu0 %v6359
  %6599 = vmatprep.mubr.bf16.mxu0 %v5869
  %6600 = vmatmul.mubr.bf16.gmra.mxu0 %v5868
  %v6601 = vpop.f32.mrf.mxu0
  %v6602 = vadd.f32 %v6562, %v6601
  %v6603 = vpop.f32.mrf.mxu0
  %v6604 = vpop.f32.mrf.mxu0
  %v6605 = vpop.f32.mrf.mxu0
  %6606 = vdwg.mxu0
  %6607 = vmatprep.subr.bf16.mxu0 0
  %6608 = vmatpush1.bf16.msra.mxu0 %v6374
  %6609 = vmatprep.subr.bf16.mxu0 0
  %6610 = vmatpush1.bf16.msra.mxu0 %v6373
  %6611 = vmatprep.subr.bf16.mxu0 0
  %6612 = vmatpush1.bf16.msra.mxu0 %v6372
  %6613 = vmatprep.subr.bf16.mxu0 0
  %6614 = vmatpush1.bf16.msra.mxu0 %v6371
  %6615 = vmatprep.subr.bf16.mxu0 0
  %6616 = vmatpush1.bf16.msra.mxu0 %v6370
  %6617 = vmatprep.subr.bf16.mxu0 0
  %6618 = vmatpush1.bf16.msra.mxu0 %v6369
  %6619 = vmatprep.subr.bf16.mxu0 0
  %6620 = vmatpush1.bf16.msra.mxu0 %v6368
  %6621 = vmatprep.subr.bf16.mxu0 0
  %6622 = vmatpush1.bf16.msra.mxu0 %v6367
  %6623 = vmatprep.subr.bf16.mxu0 0
  %6624 = vmatpush2.bf16.msra.mxu0 0
  %6625 = vmatprep.subr.bf16.mxu0 0
  %6626 = vmatpush2.bf16.msra.mxu0 0
  %6627 = vmatprep.subr.bf16.mxu0 0
  %6628 = vmatpush2.bf16.msra.mxu0 0
  %6629 = vmatprep.subr.bf16.mxu0 0
  %6630 = vmatpush2.bf16.msra.mxu0 0
  %6631 = vmatprep.subr.bf16.mxu0 0
  %6632 = vmatpush2.bf16.msra.mxu0 0
  %6633 = vmatprep.subr.bf16.mxu0 0
  %6634 = vmatpush2.bf16.msra.mxu0 0
  %6635 = vmatprep.subr.bf16.mxu0 0
  %6636 = vmatpush2.bf16.msra.mxu0 0
  %6637 = vmatprep.subr.bf16.mxu0 0
  %6638 = vmatpush2.bf16.msra.mxu0 0
  %6639 = vmatprep.mubr.bf16.mxu0 0
  %6640 = vmatmul.mubr.bf16.gmra.mxu0 %v5870
  %v6641 = vpop.f32.mrf.mxu0
  %v6642 = vadd.f32 %v6602, %v6641
  %v6643 = vpop.f32.mrf.mxu0
  %v6644 = vpop.f32.mrf.mxu0
  %v6645 = vpop.f32.mrf.mxu0
  %6646 = vdwg.mxu0
  %v6647 = vmax.f32 %v6642, 0.0
  %v6648 = vadd.f32 %v5826, %v6647
  %6649 = vst [vmem:[%s4998] sm:$0xff] %v6648
  %v6650 = vld [vmem:[%s4172] sm:$0xff]
  %v6652 = vrot.slane %v6648, 4
  %v6654 = vsel %vm42, 0.0, %v6652
  %v6655 = vsel %vm42, %v6652, 0.0
  %v6658 = vrot.slane %v6654, 1
  %v6659 = vrot.slane %v6655, 1
  %v6660 = vsel %vm47, %v6658, %v6659
  %v6662 = vrot.slane %v6654, 2
  %v6663 = vrot.slane %v6655, 2
  %v6664 = vsel %vm52, %v6662, %v6663
  %v6666 = vrot.slane %v6654, 3
  %v6667 = vrot.slane %v6655, 3
  %v6668 = vsel %vm57, %v6666, %v6667
  %v6670 = vrot.slane %v6654, 4
  %v6671 = vrot.slane %v6655, 4
  %v6672 = vsel %vm42, %v6670, %v6671
  %v6674 = vrot.slane %v6654, 5
  %v6675 = vrot.slane %v6655, 5
  %v6676 = vsel %vm66, %v6674, %v6675
  %v6678 = vrot.slane %v6654, 6
  %v6679 = vrot.slane %v6655, 6
  %v6680 = vsel %vm71, %v6678, %v6679
  %v6682 = vrot.slane %v6654, 7
  %v6683 = vrot.slane %v6655, 7
  %v6684 = vsel %vm76, %v6682, %v6683
  %v6686 = vpack.c.bf16 %v6654, %v6654
  %v6687 = vpack.c.bf16 %v6660, %v6660
  %v6688 = vpack.c.bf16 %v6664, %v6664
  %v6689 = vpack.c.bf16 %v6668, %v6668
  %v6690 = vpack.c.bf16 %v6672, %v6672
  %v6691 = vpack.c.bf16 %v6676, %v6676
  %v6692 = vpack.c.bf16 %v6680, %v6680
  %v6693 = vpack.c.bf16 %v6684, %v6684
  %v6694 = vpack.c.bf16 %v6655, %v6655
  %v6695 = vld [vmem:[%s3] sm:$0xf]
  %v6696 = vld [vmem:[%s3 + $0x4] sm:$0xf]
  %v6697 = vld [vmem:[%s3 + $0x8] sm:$0xf]
  %v6698 = vld [vmem:[%s3 + $0xc] sm:$0xf]
  %v6699 = vld [vmem:[%s3 + $0x10] sm:$0xf]
  %v6700 = vld [vmem:[%s3 + $0x14] sm:$0xf]
  %v6701 = vld [vmem:[%s3 + $0x18] sm:$0xf]
  %v6702 = vld [vmem:[%s3 + $0x1c] sm:$0xf]
  %v6703 = vld [vmem:[%s3 + $0x20] sm:$0xf]
  %v6704 = vld [vmem:[%s3 + $0x24] sm:$0xf]
  %v6705 = vld [vmem:[%s3 + $0x28] sm:$0xf]
  %v6706 = vld [vmem:[%s3 + $0x2c] sm:$0xf]
  %v6707 = vld [vmem:[%s3 + $0x30] sm:$0xf]
  %v6708 = vld [vmem:[%s3 + $0x34] sm:$0xf]
  %v6709 = vld [vmem:[%s3 + $0x38] sm:$0xf]
  %v6710 = vld [vmem:[%s3 + $0x3c] sm:$0xf]
  %v6711 = vld [vmem:[%s3 + $0x40] sm:$0xf]
  %v6712 = vld [vmem:[%s3 + $0x44] sm:$0xf]
  %v6713 = vld [vmem:[%s3 + $0x48] sm:$0xf]
  %v6714 = vld [vmem:[%s3 + $0x4c] sm:$0xf]
  %v6715 = vld [vmem:[%s3 + $0x50] sm:$0xf]
  %v6716 = vld [vmem:[%s3 + $0x54] sm:$0xf]
  %v6717 = vld [vmem:[%s3 + $0x58] sm:$0xf]
  %v6718 = vld [vmem:[%s3 + $0x5c] sm:$0xf]
  %v6719 = vld [vmem:[%s3 + $0x60] sm:$0xf]
  %v6720 = vld [vmem:[%s3 + $0x64] sm:$0xf]
  %v6721 = vld [vmem:[%s3 + $0x68] sm:$0xf]
  %v6722 = vld [vmem:[%s3 + $0x6c] sm:$0xf]
  %v6723 = vld [vmem:[%s3 + $0x70] sm:$0xf]
  %v6724 = vld [vmem:[%s3 + $0x74] sm:$0xf]
  %v6725 = vld [vmem:[%s3 + $0x78] sm:$0xf]
  %v6726 = vld [vmem:[%s3 + $0x7c] sm:$0xf]
  %v6727 = vld [vmem:[%s3 + $0x80] sm:$0xf]
  %v6728 = vld [vmem:[%s3 + $0x84] sm:$0xf]
  %v6729 = vld [vmem:[%s3 + $0x88] sm:$0xf]
  %v6730 = vld [vmem:[%s3 + $0x8c] sm:$0xf]
  %v6731 = vld [vmem:[%s3 + $0x90] sm:$0xf]
  %v6732 = vld [vmem:[%s3 + $0x94] sm:$0xf]
  %v6733 = vld [vmem:[%s3 + $0x98] sm:$0xf]
  %v6734 = vld [vmem:[%s3 + $0x9c] sm:$0xf]
  %v6735 = vld [vmem:[%s3 + $0xa0] sm:$0xf]
  %v6736 = vld [vmem:[%s3 + $0xa4] sm:$0xf]
  %v6737 = vld [vmem:[%s3 + $0xa8] sm:$0xf]
  %v6738 = vld [vmem:[%s3 + $0xac] sm:$0xf]
  %v6739 = vld [vmem:[%s3 + $0xb0] sm:$0xf]
  %v6740 = vld [vmem:[%s3 + $0xb4] sm:$0xf]
  %v6741 = vld [vmem:[%s3 + $0xb8] sm:$0xf]
  %v6742 = vld [vmem:[%s3 + $0xbc] sm:$0xf]
  %v6743 = vld [vmem:[%s3 + $0xc0] sm:$0xf]
  %v6744 = vld [vmem:[%s3 + $0xc4] sm:$0xf]
  %v6745 = vld [vmem:[%s3 + $0xc8] sm:$0xf]
  %v6746 = vld [vmem:[%s3 + $0xcc] sm:$0xf]
  %v6747 = vld [vmem:[%s3 + $0xd0] sm:$0xf]
  %v6748 = vld [vmem:[%s3 + $0xd4] sm:$0xf]
  %v6749 = vld [vmem:[%s3 + $0xd8] sm:$0xf]
  %v6750 = vld [vmem:[%s3 + $0xdc] sm:$0xf]
  %v6751 = vld [vmem:[%s3 + $0xe0] sm:$0xf]
  %v6752 = vld [vmem:[%s3 + $0xe4] sm:$0xf]
  %v6753 = vld [vmem:[%s3 + $0xe8] sm:$0xf]
  %v6754 = vld [vmem:[%s3 + $0xec] sm:$0xf]
  %v6755 = vld [vmem:[%s3 + $0xf0] sm:$0xf]
  %v6756 = vld [vmem:[%s3 + $0xf4] sm:$0xf]
  %v6757 = vld [vmem:[%s3 + $0xf8] sm:$0xf]
  %v6758 = vld [vmem:[%s3 + $0xfc] sm:$0xf]
  %v6759 = vld [vmem:[%s3 + $0x100] sm:$0xf]
  %v6760 = vld [vmem:[%s3 + $0x104] sm:$0xf]
  %v6761 = vld [vmem:[%s3 + $0x108] sm:$0xf]
  %v6762 = vld [vmem:[%s3 + $0x10c] sm:$0xf]
  %v6763 = vld [vmem:[%s3 + $0x110] sm:$0xf]
  %v6764 = vld [vmem:[%s3 + $0x114] sm:$0xf]
  %v6765 = vld [vmem:[%s3 + $0x118] sm:$0xf]
  %v6766 = vld [vmem:[%s3 + $0x11c] sm:$0xf]
  %v6767 = vld [vmem:[%s3 + $0x120] sm:$0xf]
  %v6768 = vld [vmem:[%s3 + $0x124] sm:$0xf]
  %v6769 = vld [vmem:[%s3 + $0x128] sm:$0xf]
  %v6770 = vld [vmem:[%s3 + $0x12c] sm:$0xf]
  %v6771 = vld [vmem:[%s3 + $0x130] sm:$0xf]
  %v6772 = vld [vmem:[%s3 + $0x134] sm:$0xf]
  %v6773 = vld [vmem:[%s3 + $0x138] sm:$0xf]
  %v6774 = vld [vmem:[%s3 + $0x13c] sm:$0xf]
  %v6775 = vld [vmem:[%s3 + $0x140] sm:$0xf]
  %v6776 = vld [vmem:[%s3 + $0x144] sm:$0xf]
  %v6777 = vld [vmem:[%s3 + $0x148] sm:$0xf]
  %v6778 = vld [vmem:[%s3 + $0x14c] sm:$0xf]
  %v6779 = vld [vmem:[%s3 + $0x150] sm:$0xf]
  %v6780 = vld [vmem:[%s3 + $0x154] sm:$0xf]
  %v6781 = vld [vmem:[%s3 + $0x158] sm:$0xf]
  %v6782 = vld [vmem:[%s3 + $0x15c] sm:$0xf]
  %v6783 = vld [vmem:[%s3 + $0x160] sm:$0xf]
  %v6784 = vld [vmem:[%s3 + $0x164] sm:$0xf]
  %v6785 = vld [vmem:[%s3 + $0x168] sm:$0xf]
  %v6786 = vld [vmem:[%s3 + $0x16c] sm:$0xf]
  %v6787 = vld [vmem:[%s3 + $0x170] sm:$0xf]
  %v6788 = vld [vmem:[%s3 + $0x174] sm:$0xf]
  %v6789 = vld [vmem:[%s3 + $0x178] sm:$0xf]
  %v6790 = vld [vmem:[%s3 + $0x17c] sm:$0xf]
  %v6791 = vld [vmem:[%s3 + $0x180] sm:$0xf]
  %v6792 = vld [vmem:[%s3 + $0x184] sm:$0xf]
  %v6793 = vld [vmem:[%s3 + $0x188] sm:$0xf]
  %v6794 = vld [vmem:[%s3 + $0x18c] sm:$0xf]
  %v6795 = vld [vmem:[%s3 + $0x190] sm:$0xf]
  %v6796 = vld [vmem:[%s3 + $0x194] sm:$0xf]
  %v6797 = vld [vmem:[%s3 + $0x198] sm:$0xf]
  %v6798 = vld [vmem:[%s3 + $0x19c] sm:$0xf]
  %v6799 = vld [vmem:[%s3 + $0x1a0] sm:$0xf]
  %v6800 = vld [vmem:[%s3 + $0x1a4] sm:$0xf]
  %v6801 = vld [vmem:[%s3 + $0x1a8] sm:$0xf]
  %v6802 = vld [vmem:[%s3 + $0x1ac] sm:$0xf]
  %v6803 = vld [vmem:[%s3 + $0x1b0] sm:$0xf]
  %v6804 = vld [vmem:[%s3 + $0x1b4] sm:$0xf]
  %v6805 = vld [vmem:[%s3 + $0x1b8] sm:$0xf]
  %v6806 = vld [vmem:[%s3 + $0x1bc] sm:$0xf]
  %v6807 = vld [vmem:[%s3 + $0x1c0] sm:$0xf]
  %v6808 = vld [vmem:[%s3 + $0x1c4] sm:$0xf]
  %v6809 = vld [vmem:[%s3 + $0x1c8] sm:$0xf]
  %v6810 = vld [vmem:[%s3 + $0x1cc] sm:$0xf]
  %v6811 = vld [vmem:[%s3 + $0x1d0] sm:$0xf]
  %v6812 = vld [vmem:[%s3 + $0x1d4] sm:$0xf]
  %v6813 = vld [vmem:[%s3 + $0x1d8] sm:$0xf]
  %v6814 = vld [vmem:[%s3 + $0x1dc] sm:$0xf]
  %v6815 = vld [vmem:[%s3 + $0x1e0] sm:$0xf]
  %v6816 = vld [vmem:[%s3 + $0x1e4] sm:$0xf]
  %v6817 = vld [vmem:[%s3 + $0x1e8] sm:$0xf]
  %v6818 = vld [vmem:[%s3 + $0x1ec] sm:$0xf]
  %v6819 = vld [vmem:[%s3 + $0x1f0] sm:$0xf]
  %v6820 = vld [vmem:[%s3 + $0x1f4] sm:$0xf]
  %v6821 = vld [vmem:[%s3 + $0x1f8] sm:$0xf]
  %v6822 = vld [vmem:[%s3 + $0x1fc] sm:$0xf]
  %v6823 = vld [vmem:[%s3 + $0x200] sm:$0xf]
  %v6824 = vld [vmem:[%s3 + $0x204] sm:$0xf]
  %v6825 = vld [vmem:[%s3 + $0x208] sm:$0xf]
  %v6826 = vld [vmem:[%s3 + $0x20c] sm:$0xf]
  %v6827 = vld [vmem:[%s3 + $0x210] sm:$0xf]
  %v6828 = vld [vmem:[%s3 + $0x214] sm:$0xf]
  %v6829 = vld [vmem:[%s3 + $0x218] sm:$0xf]
  %v6830 = vld [vmem:[%s3 + $0x21c] sm:$0xf]
  %v6831 = vld [vmem:[%s3 + $0x220] sm:$0xf]
  %v6832 = vld [vmem:[%s3 + $0x224] sm:$0xf]
  %v6833 = vld [vmem:[%s3 + $0x228] sm:$0xf]
  %v6834 = vld [vmem:[%s3 + $0x22c] sm:$0xf]
  %v6835 = vld [vmem:[%s3 + $0x230] sm:$0xf]
  %v6836 = vld [vmem:[%s3 + $0x234] sm:$0xf]
  %v6837 = vld [vmem:[%s3 + $0x238] sm:$0xf]
  %v6838 = vld [vmem:[%s3 + $0x23c] sm:$0xf]
  %v6983 = vunpack.c.l.b16 %v6695
  %v6984 = vunpack.c.l.b16 %v6696
  %v6985 = vunpack.c.l.b16 %v6697
  %v6986 = vunpack.c.l.b16 %v6698
  %v6987 = vunpack.c.l.b16 %v6699
  %v6988 = vunpack.c.l.b16 %v6700
  %v6989 = vunpack.c.l.b16 %v6701
  %v6990 = vunpack.c.l.b16 %v6702
  %v6991 = vunpack.c.l.b16 %v6703
  %v6992 = vunpack.c.l.b16 %v6704
  %v6993 = vunpack.c.l.b16 %v6705
  %v6994 = vunpack.c.l.b16 %v6706
  %v6995 = vunpack.c.l.b16 %v6707
  %v6996 = vunpack.c.l.b16 %v6708
  %v6997 = vunpack.c.l.b16 %v6709
  %v6998 = vunpack.c.l.b16 %v6710
  %v6999 = vunpack.c.l.b16 %v6711
  %v7000 = vunpack.c.l.b16 %v6712
  %v7001 = vunpack.c.l.b16 %v6713
  %v7002 = vunpack.c.l.b16 %v6714
  %v7003 = vunpack.c.l.b16 %v6715
  %v7004 = vunpack.c.l.b16 %v6716
  %v7005 = vunpack.c.l.b16 %v6717
  %v7006 = vunpack.c.l.b16 %v6718
  %v7007 = vunpack.c.l.b16 %v6719
  %v7008 = vunpack.c.l.b16 %v6720
  %v7009 = vunpack.c.l.b16 %v6721
  %v7010 = vunpack.c.l.b16 %v6722
  %v7011 = vunpack.c.l.b16 %v6723
  %v7012 = vunpack.c.l.b16 %v6724
  %v7013 = vunpack.c.l.b16 %v6725
  %v7014 = vunpack.c.l.b16 %v6726
  %v7015 = vunpack.c.l.b16 %v6727
  %v7016 = vunpack.c.l.b16 %v6728
  %v7017 = vunpack.c.l.b16 %v6729
  %v7018 = vunpack.c.l.b16 %v6730
  %v7019 = vunpack.c.l.b16 %v6731
  %v7020 = vunpack.c.l.b16 %v6732
  %v7021 = vunpack.c.l.b16 %v6733
  %v7022 = vunpack.c.l.b16 %v6734
  %v7023 = vunpack.c.l.b16 %v6735
  %v7024 = vunpack.c.l.b16 %v6736
  %v7025 = vunpack.c.l.b16 %v6737
  %v7026 = vunpack.c.l.b16 %v6738
  %v7027 = vunpack.c.l.b16 %v6739
  %v7028 = vunpack.c.l.b16 %v6740
  %v7029 = vunpack.c.l.b16 %v6741
  %v7030 = vunpack.c.l.b16 %v6742
  %v7031 = vunpack.c.l.b16 %v6743
  %v7032 = vunpack.c.l.b16 %v6744
  %v7033 = vunpack.c.l.b16 %v6745
  %v7034 = vunpack.c.l.b16 %v6746
  %v7035 = vunpack.c.l.b16 %v6747
  %v7036 = vunpack.c.l.b16 %v6748
  %v7037 = vunpack.c.l.b16 %v6749
  %v7038 = vunpack.c.l.b16 %v6750
  %v7039 = vunpack.c.l.b16 %v6751
  %v7040 = vunpack.c.l.b16 %v6752
  %v7041 = vunpack.c.l.b16 %v6753
  %v7042 = vunpack.c.l.b16 %v6754
  %v7043 = vunpack.c.l.b16 %v6755
  %v7044 = vunpack.c.l.b16 %v6756
  %v7045 = vunpack.c.l.b16 %v6757
  %v7046 = vunpack.c.l.b16 %v6758
  %v7047 = vunpack.c.l.b16 %v6759
  %v7048 = vunpack.c.l.b16 %v6760
  %v7049 = vunpack.c.l.b16 %v6761
  %v7050 = vunpack.c.l.b16 %v6762
  %v7051 = vunpack.c.l.b16 %v6763
  %v7052 = vunpack.c.l.b16 %v6764
  %v7053 = vunpack.c.l.b16 %v6765
  %v7054 = vunpack.c.l.b16 %v6766
  %v7055 = vunpack.c.l.b16 %v6767
  %v7056 = vunpack.c.l.b16 %v6768
  %v7057 = vunpack.c.l.b16 %v6769
  %v7058 = vunpack.c.l.b16 %v6770
  %v7059 = vunpack.c.l.b16 %v6771
  %v7060 = vunpack.c.l.b16 %v6772
  %v7061 = vunpack.c.l.b16 %v6773
  %v7062 = vunpack.c.l.b16 %v6774
  %v7063 = vunpack.c.l.b16 %v6775
  %v7064 = vunpack.c.l.b16 %v6776
  %v7065 = vunpack.c.l.b16 %v6777
  %v7066 = vunpack.c.l.b16 %v6778
  %v7067 = vunpack.c.l.b16 %v6779
  %v7068 = vunpack.c.l.b16 %v6780
  %v7069 = vunpack.c.l.b16 %v6781
  %v7070 = vunpack.c.l.b16 %v6782
  %v7071 = vunpack.c.l.b16 %v6783
  %v7072 = vunpack.c.l.b16 %v6784
  %v7073 = vunpack.c.l.b16 %v6785
  %v7074 = vunpack.c.l.b16 %v6786
  %v7075 = vunpack.c.l.b16 %v6787
  %v7076 = vunpack.c.l.b16 %v6788
  %v7077 = vunpack.c.l.b16 %v6789
  %v7078 = vunpack.c.l.b16 %v6790
  %v7079 = vunpack.c.l.b16 %v6791
  %v7080 = vunpack.c.l.b16 %v6792
  %v7081 = vunpack.c.l.b16 %v6793
  %v7082 = vunpack.c.l.b16 %v6794
  %v7083 = vunpack.c.l.b16 %v6795
  %v7084 = vunpack.c.l.b16 %v6796
  %v7085 = vunpack.c.l.b16 %v6797
  %v7086 = vunpack.c.l.b16 %v6798
  %v7087 = vunpack.c.l.b16 %v6799
  %v7088 = vunpack.c.l.b16 %v6800
  %v7089 = vunpack.c.l.b16 %v6801
  %v7090 = vunpack.c.l.b16 %v6802
  %v7091 = vunpack.c.l.b16 %v6803
  %v7092 = vunpack.c.l.b16 %v6804
  %v7093 = vunpack.c.l.b16 %v6805
  %v7094 = vunpack.c.l.b16 %v6806
  %v7095 = vunpack.c.l.b16 %v6807
  %v7096 = vunpack.c.l.b16 %v6808
  %v7097 = vunpack.c.l.b16 %v6809
  %v7098 = vunpack.c.l.b16 %v6810
  %v7099 = vunpack.c.l.b16 %v6811
  %v7100 = vunpack.c.l.b16 %v6812
  %v7101 = vunpack.c.l.b16 %v6813
  %v7102 = vunpack.c.l.b16 %v6814
  %v7103 = vunpack.c.l.b16 %v6815
  %v7104 = vunpack.c.l.b16 %v6816
  %v7105 = vunpack.c.l.b16 %v6817
  %v7106 = vunpack.c.l.b16 %v6818
  %v7107 = vunpack.c.l.b16 %v6819
  %v7108 = vunpack.c.l.b16 %v6820
  %v7109 = vunpack.c.l.b16 %v6821
  %v7110 = vunpack.c.l.b16 %v6822
  %v7111 = vunpack.c.l.b16 %v6823
  %v7112 = vunpack.c.l.b16 %v6824
  %v7113 = vunpack.c.l.b16 %v6825
  %v7114 = vunpack.c.l.b16 %v6826
  %v7115 = vunpack.c.l.b16 %v6827
  %v7116 = vunpack.c.l.b16 %v6828
  %v7117 = vunpack.c.l.b16 %v6829
  %v7118 = vunpack.c.l.b16 %v6830
  %v7119 = vunpack.c.l.b16 %v6831
  %v7120 = vunpack.c.l.b16 %v6832
  %v7121 = vunpack.c.l.b16 %v6833
  %v7122 = vunpack.c.l.b16 %v6834
  %v7123 = vunpack.c.l.b16 %v6835
  %v7124 = vunpack.c.l.b16 %v6836
  %v7125 = vunpack.c.l.b16 %v6837
  %v7126 = vunpack.c.l.b16 %v6838
  %v7127 = vpack.c.b16 %v6984, %v6983
  %v7128 = vpack.c.b16 %v6986, %v6985
  %v7129 = vpack.c.b16 %v6988, %v6987
  %v7130 = vpack.c.b16 %v6990, %v6989
  %v7131 = vpack.c.b16 %v6992, %v6991
  %v7132 = vpack.c.b16 %v6994, %v6993
  %v7133 = vpack.c.b16 %v6996, %v6995
  %v7134 = vpack.c.b16 %v6998, %v6997
  %v7135 = vpack.c.b16 %v7000, %v6999
  %v7136 = vpack.c.b16 %v7002, %v7001
  %v7137 = vpack.c.b16 %v7004, %v7003
  %v7138 = vpack.c.b16 %v7006, %v7005
  %v7139 = vpack.c.b16 %v7008, %v7007
  %v7140 = vpack.c.b16 %v7010, %v7009
  %v7141 = vpack.c.b16 %v7012, %v7011
  %v7142 = vpack.c.b16 %v7014, %v7013
  %v7143 = vpack.c.b16 %v7016, %v7015
  %v7144 = vpack.c.b16 %v7018, %v7017
  %v7145 = vpack.c.b16 %v7020, %v7019
  %v7146 = vpack.c.b16 %v7022, %v7021
  %v7147 = vpack.c.b16 %v7024, %v7023
  %v7148 = vpack.c.b16 %v7026, %v7025
  %v7149 = vpack.c.b16 %v7028, %v7027
  %v7150 = vpack.c.b16 %v7030, %v7029
  %v7151 = vpack.c.b16 %v7032, %v7031
  %v7152 = vpack.c.b16 %v7034, %v7033
  %v7153 = vpack.c.b16 %v7036, %v7035
  %v7154 = vpack.c.b16 %v7038, %v7037
  %v7155 = vpack.c.b16 %v7040, %v7039
  %v7156 = vpack.c.b16 %v7042, %v7041
  %v7157 = vpack.c.b16 %v7044, %v7043
  %v7158 = vpack.c.b16 %v7046, %v7045
  %v7159 = vpack.c.b16 %v7048, %v7047
  %v7160 = vpack.c.b16 %v7050, %v7049
  %v7161 = vpack.c.b16 %v7052, %v7051
  %v7162 = vpack.c.b16 %v7054, %v7053
  %v7163 = vpack.c.b16 %v7056, %v7055
  %v7164 = vpack.c.b16 %v7058, %v7057
  %v7165 = vpack.c.b16 %v7060, %v7059
  %v7166 = vpack.c.b16 %v7062, %v7061
  %v7167 = vpack.c.b16 %v7064, %v7063
  %v7168 = vpack.c.b16 %v7066, %v7065
  %v7169 = vpack.c.b16 %v7068, %v7067
  %v7170 = vpack.c.b16 %v7070, %v7069
  %v7171 = vpack.c.b16 %v7072, %v7071
  %v7172 = vpack.c.b16 %v7074, %v7073
  %v7173 = vpack.c.b16 %v7076, %v7075
  %v7174 = vpack.c.b16 %v7078, %v7077
  %v7175 = vpack.c.b16 %v7080, %v7079
  %v7176 = vpack.c.b16 %v7082, %v7081
  %v7177 = vpack.c.b16 %v7084, %v7083
  %v7178 = vpack.c.b16 %v7086, %v7085
  %v7179 = vpack.c.b16 %v7088, %v7087
  %v7180 = vpack.c.b16 %v7090, %v7089
  %v7181 = vpack.c.b16 %v7092, %v7091
  %v7182 = vpack.c.b16 %v7094, %v7093
  %v7183 = vpack.c.b16 %v7096, %v7095
  %v7184 = vpack.c.b16 %v7098, %v7097
  %v7185 = vpack.c.b16 %v7100, %v7099
  %v7186 = vpack.c.b16 %v7102, %v7101
  %v7187 = vpack.c.b16 %v7104, %v7103
  %v7188 = vpack.c.b16 %v7106, %v7105
  %v7189 = vpack.c.b16 %v7108, %v7107
  %v7190 = vpack.c.b16 %v7110, %v7109
  %v7191 = vpack.c.b16 %v7112, %v7111
  %v7192 = vpack.c.b16 %v7114, %v7113
  %v7193 = vpack.c.b16 %v7116, %v7115
  %v7194 = vpack.c.b16 %v7118, %v7117
  %v7195 = vpack.c.b16 %v7120, %v7119
  %v7196 = vpack.c.b16 %v7122, %v7121
  %v7197 = vpack.c.b16 %v7124, %v7123
  %v7198 = vpack.c.b16 %v7126, %v7125
  %7271 = vmatprep.subr.bf16.mxu0 0
  %7272 = vmatpush1.bf16.msra.mxu0 %v7134
  %7273 = vmatprep.subr.bf16.mxu0 0
  %7274 = vmatpush1.bf16.msra.mxu0 %v7133
  %7275 = vmatprep.subr.bf16.mxu0 0
  %7276 = vmatpush1.bf16.msra.mxu0 %v7132
  %7277 = vmatprep.subr.bf16.mxu0 0
  %7278 = vmatpush1.bf16.msra.mxu0 %v7131
  %7279 = vmatprep.subr.bf16.mxu0 0
  %7280 = vmatpush1.bf16.msra.mxu0 %v7130
  %7281 = vmatprep.subr.bf16.mxu0 0
  %7282 = vmatpush1.bf16.msra.mxu0 %v7129
  %7283 = vmatprep.subr.bf16.mxu0 0
  %7284 = vmatpush1.bf16.msra.mxu0 %v7128
  %7285 = vmatprep.subr.bf16.mxu0 0
  %7286 = vmatpush1.bf16.msra.mxu0 %v7127
  %7287 = vmatprep.subr.bf16.mxu0 0
  %7288 = vmatpush2.bf16.msra.mxu0 %v7142
  %7289 = vmatprep.subr.bf16.mxu0 0
  %7290 = vmatpush2.bf16.msra.mxu0 %v7141
  %7291 = vmatprep.subr.bf16.mxu0 0
  %7292 = vmatpush2.bf16.msra.mxu0 %v7140
  %7293 = vmatprep.subr.bf16.mxu0 0
  %7294 = vmatpush2.bf16.msra.mxu0 %v7139
  %7295 = vmatprep.subr.bf16.mxu0 0
  %7296 = vmatpush2.bf16.msra.mxu0 %v7138
  %7297 = vmatprep.subr.bf16.mxu0 0
  %7298 = vmatpush2.bf16.msra.mxu0 %v7137
  %7299 = vmatprep.subr.bf16.mxu0 0
  %7300 = vmatpush2.bf16.msra.mxu0 %v7136
  %7301 = vmatprep.subr.bf16.mxu0 0
  %7302 = vmatpush2.bf16.msra.mxu0 %v7135
  %7303 = vmatprep.mubr.bf16.mxu0 %v6687
  %7304 = vmatmul.mubr.bf16.gmra.mxu0 %v6686
  %v7305 = vpop.f32.mrf.mxu0
  %v7306 = vadd.f32 %v33, %v7305
  %v7307 = vpop.f32.mrf.mxu0
  %v7308 = vpop.f32.mrf.mxu0
  %v7309 = vpop.f32.mrf.mxu0
  %7310 = vdwg.mxu0
  %7311 = vmatprep.subr.bf16.mxu0 0
  %7312 = vmatpush1.bf16.msra.mxu0 %v7150
  %7313 = vmatprep.subr.bf16.mxu0 0
  %7314 = vmatpush1.bf16.msra.mxu0 %v7149
  %7315 = vmatprep.subr.bf16.mxu0 0
  %7316 = vmatpush1.bf16.msra.mxu0 %v7148
  %7317 = vmatprep.subr.bf16.mxu0 0
  %7318 = vmatpush1.bf16.msra.mxu0 %v7147
  %7319 = vmatprep.subr.bf16.mxu0 0
  %7320 = vmatpush1.bf16.msra.mxu0 %v7146
  %7321 = vmatprep.subr.bf16.mxu0 0
  %7322 = vmatpush1.bf16.msra.mxu0 %v7145
  %7323 = vmatprep.subr.bf16.mxu0 0
  %7324 = vmatpush1.bf16.msra.mxu0 %v7144
  %7325 = vmatprep.subr.bf16.mxu0 0
  %7326 = vmatpush1.bf16.msra.mxu0 %v7143
  %7327 = vmatprep.subr.bf16.mxu0 0
  %7328 = vmatpush2.bf16.msra.mxu0 %v7158
  %7329 = vmatprep.subr.bf16.mxu0 0
  %7330 = vmatpush2.bf16.msra.mxu0 %v7157
  %7331 = vmatprep.subr.bf16.mxu0 0
  %7332 = vmatpush2.bf16.msra.mxu0 %v7156
  %7333 = vmatprep.subr.bf16.mxu0 0
  %7334 = vmatpush2.bf16.msra.mxu0 %v7155
  %7335 = vmatprep.subr.bf16.mxu0 0
  %7336 = vmatpush2.bf16.msra.mxu0 %v7154
  %7337 = vmatprep.subr.bf16.mxu0 0
  %7338 = vmatpush2.bf16.msra.mxu0 %v7153
  %7339 = vmatprep.subr.bf16.mxu0 0
  %7340 = vmatpush2.bf16.msra.mxu0 %v7152
  %7341 = vmatprep.subr.bf16.mxu0 0
  %7342 = vmatpush2.bf16.msra.mxu0 %v7151
  %7343 = vmatprep.mubr.bf16.mxu0 %v6689
  %7344 = vmatmul.mubr.bf16.gmra.mxu0 %v6688
  %v7345 = vpop.f32.mrf.mxu0
  %v7346 = vadd.f32 %v7306, %v7345
  %v7347 = vpop.f32.mrf.mxu0
  %v7348 = vpop.f32.mrf.mxu0
  %v7349 = vpop.f32.mrf.mxu0
  %7350 = vdwg.mxu0
  %7351 = vmatprep.subr.bf16.mxu0 0
  %7352 = vmatpush1.bf16.msra.mxu0 %v7166
  %7353 = vmatprep.subr.bf16.mxu0 0
  %7354 = vmatpush1.bf16.msra.mxu0 %v7165
  %7355 = vmatprep.subr.bf16.mxu0 0
  %7356 = vmatpush1.bf16.msra.mxu0 %v7164
  %7357 = vmatprep.subr.bf16.mxu0 0
  %7358 = vmatpush1.bf16.msra.mxu0 %v7163
  %7359 = vmatprep.subr.bf16.mxu0 0
  %7360 = vmatpush1.bf16.msra.mxu0 %v7162
  %7361 = vmatprep.subr.bf16.mxu0 0
  %7362 = vmatpush1.bf16.msra.mxu0 %v7161
  %7363 = vmatprep.subr.bf16.mxu0 0
  %7364 = vmatpush1.bf16.msra.mxu0 %v7160
  %7365 = vmatprep.subr.bf16.mxu0 0
  %7366 = vmatpush1.bf16.msra.mxu0 %v7159
  %7367 = vmatprep.subr.bf16.mxu0 0
  %7368 = vmatpush2.bf16.msra.mxu0 %v7174
  %7369 = vmatprep.subr.bf16.mxu0 0
  %7370 = vmatpush2.bf16.msra.mxu0 %v7173
  %7371 = vmatprep.subr.bf16.mxu0 0
  %7372 = vmatpush2.bf16.msra.mxu0 %v7172
  %7373 = vmatprep.subr.bf16.mxu0 0
  %7374 = vmatpush2.bf16.msra.mxu0 %v7171
  %7375 = vmatprep.subr.bf16.mxu0 0
  %7376 = vmatpush2.bf16.msra.mxu0 %v7170
  %7377 = vmatprep.subr.bf16.mxu0 0
  %7378 = vmatpush2.bf16.msra.mxu0 %v7169
  %7379 = vmatprep.subr.bf16.mxu0 0
  %7380 = vmatpush2.bf16.msra.mxu0 %v7168
  %7381 = vmatprep.subr.bf16.mxu0 0
  %7382 = vmatpush2.bf16.msra.mxu0 %v7167
  %7383 = vmatprep.mubr.bf16.mxu0 %v6691
  %7384 = vmatmul.mubr.bf16.gmra.mxu0 %v6690
  %v7385 = vpop.f32.mrf.mxu0
  %v7386 = vadd.f32 %v7346, %v7385
  %v7387 = vpop.f32.mrf.mxu0
  %v7388 = vpop.f32.mrf.mxu0
  %v7389 = vpop.f32.mrf.mxu0
  %7390 = vdwg.mxu0
  %7391 = vmatprep.subr.bf16.mxu0 0
  %7392 = vmatpush1.bf16.msra.mxu0 %v7182
  %7393 = vmatprep.subr.bf16.mxu0 0
  %7394 = vmatpush1.bf16.msra.mxu0 %v7181
  %7395 = vmatprep.subr.bf16.mxu0 0
  %7396 = vmatpush1.bf16.msra.mxu0 %v7180
  %7397 = vmatprep.subr.bf16.mxu0 0
  %7398 = vmatpush1.bf16.msra.mxu0 %v7179
  %7399 = vmatprep.subr.bf16.mxu0 0
  %7400 = vmatpush1.bf16.msra.mxu0 %v7178
  %7401 = vmatprep.subr.bf16.mxu0 0
  %7402 = vmatpush1.bf16.msra.mxu0 %v7177
  %7403 = vmatprep.subr.bf16.mxu0 0
  %7404 = vmatpush1.bf16.msra.mxu0 %v7176
  %7405 = vmatprep.subr.bf16.mxu0 0
  %7406 = vmatpush1.bf16.msra.mxu0 %v7175
  %7407 = vmatprep.subr.bf16.mxu0 0
  %7408 = vmatpush2.bf16.msra.mxu0 %v7190
  %7409 = vmatprep.subr.bf16.mxu0 0
  %7410 = vmatpush2.bf16.msra.mxu0 %v7189
  %7411 = vmatprep.subr.bf16.mxu0 0
  %7412 = vmatpush2.bf16.msra.mxu0 %v7188
  %7413 = vmatprep.subr.bf16.mxu0 0
  %7414 = vmatpush2.bf16.msra.mxu0 %v7187
  %7415 = vmatprep.subr.bf16.mxu0 0
  %7416 = vmatpush2.bf16.msra.mxu0 %v7186
  %7417 = vmatprep.subr.bf16.mxu0 0
  %7418 = vmatpush2.bf16.msra.mxu0 %v7185
  %7419 = vmatprep.subr.bf16.mxu0 0
  %7420 = vmatpush2.bf16.msra.mxu0 %v7184
  %7421 = vmatprep.subr.bf16.mxu0 0
  %7422 = vmatpush2.bf16.msra.mxu0 %v7183
  %7423 = vmatprep.mubr.bf16.mxu0 %v6693
  %7424 = vmatmul.mubr.bf16.gmra.mxu0 %v6692
  %v7425 = vpop.f32.mrf.mxu0
  %v7426 = vadd.f32 %v7386, %v7425
  %v7427 = vpop.f32.mrf.mxu0
  %v7428 = vpop.f32.mrf.mxu0
  %v7429 = vpop.f32.mrf.mxu0
  %7430 = vdwg.mxu0
  %7431 = vmatprep.subr.bf16.mxu0 0
  %7432 = vmatpush1.bf16.msra.mxu0 %v7198
  %7433 = vmatprep.subr.bf16.mxu0 0
  %7434 = vmatpush1.bf16.msra.mxu0 %v7197
  %7435 = vmatprep.subr.bf16.mxu0 0
  %7436 = vmatpush1.bf16.msra.mxu0 %v7196
  %7437 = vmatprep.subr.bf16.mxu0 0
  %7438 = vmatpush1.bf16.msra.mxu0 %v7195
  %7439 = vmatprep.subr.bf16.mxu0 0
  %7440 = vmatpush1.bf16.msra.mxu0 %v7194
  %7441 = vmatprep.subr.bf16.mxu0 0
  %7442 = vmatpush1.bf16.msra.mxu0 %v7193
  %7443 = vmatprep.subr.bf16.mxu0 0
  %7444 = vmatpush1.bf16.msra.mxu0 %v7192
  %7445 = vmatprep.subr.bf16.mxu0 0
  %7446 = vmatpush1.bf16.msra.mxu0 %v7191
  %7447 = vmatprep.subr.bf16.mxu0 0
  %7448 = vmatpush2.bf16.msra.mxu0 0
  %7449 = vmatprep.subr.bf16.mxu0 0
  %7450 = vmatpush2.bf16.msra.mxu0 0
  %7451 = vmatprep.subr.bf16.mxu0 0
  %7452 = vmatpush2.bf16.msra.mxu0 0
  %7453 = vmatprep.subr.bf16.mxu0 0
  %7454 = vmatpush2.bf16.msra.mxu0 0
  %7455 = vmatprep.subr.bf16.mxu0 0
  %7456 = vmatpush2.bf16.msra.mxu0 0
  %7457 = vmatprep.subr.bf16.mxu0 0
  %7458 = vmatpush2.bf16.msra.mxu0 0
  %7459 = vmatprep.subr.bf16.mxu0 0
  %7460 = vmatpush2.bf16.msra.mxu0 0
  %7461 = vmatprep.subr.bf16.mxu0 0
  %7462 = vmatpush2.bf16.msra.mxu0 0
  %7463 = vmatprep.mubr.bf16.mxu0 0
  %7464 = vmatmul.mubr.bf16.gmra.mxu0 %v6694
  %v7465 = vpop.f32.mrf.mxu0
  %v7466 = vadd.f32 %v7426, %v7465
  %v7467 = vpop.f32.mrf.mxu0
  %v7468 = vpop.f32.mrf.mxu0
  %v7469 = vpop.f32.mrf.mxu0
  %7470 = vdwg.mxu0
  %v7471 = vmax.f32 %v7466, 0.0
  %v7472 = vadd.f32 %v6650, %v7471
  %7473 = vst [vmem:[%s4172] sm:$0xff] %v7472
  %v7474 = vld [vmem:[%s3346] sm:$0xff]
  %v7476 = vrot.slane %v7472, 4
  %v7478 = vsel %vm42, 0.0, %v7476
  %v7479 = vsel %vm42, %v7476, 0.0
  %v7482 = vrot.slane %v7478, 1
  %v7483 = vrot.slane %v7479, 1
  %v7484 = vsel %vm47, %v7482, %v7483
  %v7486 = vrot.slane %v7478, 2
  %v7487 = vrot.slane %v7479, 2
  %v7488 = vsel %vm52, %v7486, %v7487
  %v7490 = vrot.slane %v7478, 3
  %v7491 = vrot.slane %v7479, 3
  %v7492 = vsel %vm57, %v7490, %v7491
  %v7494 = vrot.slane %v7478, 4
  %v7495 = vrot.slane %v7479, 4
  %v7496 = vsel %vm42, %v7494, %v7495
  %v7498 = vrot.slane %v7478, 5
  %v7499 = vrot.slane %v7479, 5
  %v7500 = vsel %vm66, %v7498, %v7499
  %v7502 = vrot.slane %v7478, 6
  %v7503 = vrot.slane %v7479, 6
  %v7504 = vsel %vm71, %v7502, %v7503
  %v7506 = vrot.slane %v7478, 7
  %v7507 = vrot.slane %v7479, 7
  %v7508 = vsel %vm76, %v7506, %v7507
  %v7510 = vpack.c.bf16 %v7478, %v7478
  %v7511 = vpack.c.bf16 %v7484, %v7484
  %v7512 = vpack.c.bf16 %v7488, %v7488
  %v7513 = vpack.c.bf16 %v7492, %v7492
  %v7514 = vpack.c.bf16 %v7496, %v7496
  %v7515 = vpack.c.bf16 %v7500, %v7500
  %v7516 = vpack.c.bf16 %v7504, %v7504
  %v7517 = vpack.c.bf16 %v7508, %v7508
  %v7518 = vpack.c.bf16 %v7479, %v7479
  %v7519 = vld [vmem:[%s3] sm:$0xf]
  %v7520 = vld [vmem:[%s3 + $0x4] sm:$0xf]
  %v7521 = vld [vmem:[%s3 + $0x8] sm:$0xf]
  %v7522 = vld [vmem:[%s3 + $0xc] sm:$0xf]
  %v7523 = vld [vmem:[%s3 + $0x10] sm:$0xf]
  %v7524 = vld [vmem:[%s3 + $0x14] sm:$0xf]
  %v7525 = vld [vmem:[%s3 + $0x18] sm:$0xf]
  %v7526 = vld [vmem:[%s3 + $0x1c] sm:$0xf]
  %v7527 = vld [vmem:[%s3 + $0x20] sm:$0xf]
  %v7528 = vld [vmem:[%s3 + $0x24] sm:$0xf]
  %v7529 = vld [vmem:[%s3 + $0x28] sm:$0xf]
  %v7530 = vld [vmem:[%s3 + $0x2c] sm:$0xf]
  %v7531 = vld [vmem:[%s3 + $0x30] sm:$0xf]
  %v7532 = vld [vmem:[%s3 + $0x34] sm:$0xf]
  %v7533 = vld [vmem:[%s3 + $0x38] sm:$0xf]
  %v7534 = vld [vmem:[%s3 + $0x3c] sm:$0xf]
  %v7535 = vld [vmem:[%s3 + $0x40] sm:$0xf]
  %v7536 = vld [vmem:[%s3 + $0x44] sm:$0xf]
  %v7537 = vld [vmem:[%s3 + $0x48] sm:$0xf]
  %v7538 = vld [vmem:[%s3 + $0x4c] sm:$0xf]
  %v7539 = vld [vmem:[%s3 + $0x50] sm:$0xf]
  %v7540 = vld [vmem:[%s3 + $0x54] sm:$0xf]
  %v7541 = vld [vmem:[%s3 + $0x58] sm:$0xf]
  %v7542 = vld [vmem:[%s3 + $0x5c] sm:$0xf]
  %v7543 = vld [vmem:[%s3 + $0x60] sm:$0xf]
  %v7544 = vld [vmem:[%s3 + $0x64] sm:$0xf]
  %v7545 = vld [vmem:[%s3 + $0x68] sm:$0xf]
  %v7546 = vld [vmem:[%s3 + $0x6c] sm:$0xf]
  %v7547 = vld [vmem:[%s3 + $0x70] sm:$0xf]
  %v7548 = vld [vmem:[%s3 + $0x74] sm:$0xf]
  %v7549 = vld [vmem:[%s3 + $0x78] sm:$0xf]
  %v7550 = vld [vmem:[%s3 + $0x7c] sm:$0xf]
  %v7551 = vld [vmem:[%s3 + $0x80] sm:$0xf]
  %v7552 = vld [vmem:[%s3 + $0x84] sm:$0xf]
  %v7553 = vld [vmem:[%s3 + $0x88] sm:$0xf]
  %v7554 = vld [vmem:[%s3 + $0x8c] sm:$0xf]
  %v7555 = vld [vmem:[%s3 + $0x90] sm:$0xf]
  %v7556 = vld [vmem:[%s3 + $0x94] sm:$0xf]
  %v7557 = vld [vmem:[%s3 + $0x98] sm:$0xf]
  %v7558 = vld [vmem:[%s3 + $0x9c] sm:$0xf]
  %v7559 = vld [vmem:[%s3 + $0xa0] sm:$0xf]
  %v7560 = vld [vmem:[%s3 + $0xa4] sm:$0xf]
  %v7561 = vld [vmem:[%s3 + $0xa8] sm:$0xf]
  %v7562 = vld [vmem:[%s3 + $0xac] sm:$0xf]
  %v7563 = vld [vmem:[%s3 + $0xb0] sm:$0xf]
  %v7564 = vld [vmem:[%s3 + $0xb4] sm:$0xf]
  %v7565 = vld [vmem:[%s3 + $0xb8] sm:$0xf]
  %v7566 = vld [vmem:[%s3 + $0xbc] sm:$0xf]
  %v7567 = vld [vmem:[%s3 + $0xc0] sm:$0xf]
  %v7568 = vld [vmem:[%s3 + $0xc4] sm:$0xf]
  %v7569 = vld [vmem:[%s3 + $0xc8] sm:$0xf]
  %v7570 = vld [vmem:[%s3 + $0xcc] sm:$0xf]
  %v7571 = vld [vmem:[%s3 + $0xd0] sm:$0xf]
  %v7572 = vld [vmem:[%s3 + $0xd4] sm:$0xf]
  %v7573 = vld [vmem:[%s3 + $0xd8] sm:$0xf]
  %v7574 = vld [vmem:[%s3 + $0xdc] sm:$0xf]
  %v7575 = vld [vmem:[%s3 + $0xe0] sm:$0xf]
  %v7576 = vld [vmem:[%s3 + $0xe4] sm:$0xf]
  %v7577 = vld [vmem:[%s3 + $0xe8] sm:$0xf]
  %v7578 = vld [vmem:[%s3 + $0xec] sm:$0xf]
  %v7579 = vld [vmem:[%s3 + $0xf0] sm:$0xf]
  %v7580 = vld [vmem:[%s3 + $0xf4] sm:$0xf]
  %v7581 = vld [vmem:[%s3 + $0xf8] sm:$0xf]
  %v7582 = vld [vmem:[%s3 + $0xfc] sm:$0xf]
  %v7583 = vld [vmem:[%s3 + $0x100] sm:$0xf]
  %v7584 = vld [vmem:[%s3 + $0x104] sm:$0xf]
  %v7585 = vld [vmem:[%s3 + $0x108] sm:$0xf]
  %v7586 = vld [vmem:[%s3 + $0x10c] sm:$0xf]
  %v7587 = vld [vmem:[%s3 + $0x110] sm:$0xf]
  %v7588 = vld [vmem:[%s3 + $0x114] sm:$0xf]
  %v7589 = vld [vmem:[%s3 + $0x118] sm:$0xf]
  %v7590 = vld [vmem:[%s3 + $0x11c] sm:$0xf]
  %v7591 = vld [vmem:[%s3 + $0x120] sm:$0xf]
  %v7592 = vld [vmem:[%s3 + $0x124] sm:$0xf]
  %v7593 = vld [vmem:[%s3 + $0x128] sm:$0xf]
  %v7594 = vld [vmem:[%s3 + $0x12c] sm:$0xf]
  %v7595 = vld [vmem:[%s3 + $0x130] sm:$0xf]
  %v7596 = vld [vmem:[%s3 + $0x134] sm:$0xf]
  %v7597 = vld [vmem:[%s3 + $0x138] sm:$0xf]
  %v7598 = vld [vmem:[%s3 + $0x13c] sm:$0xf]
  %v7599 = vld [vmem:[%s3 + $0x140] sm:$0xf]
  %v7600 = vld [vmem:[%s3 + $0x144] sm:$0xf]
  %v7601 = vld [vmem:[%s3 + $0x148] sm:$0xf]
  %v7602 = vld [vmem:[%s3 + $0x14c] sm:$0xf]
  %v7603 = vld [vmem:[%s3 + $0x150] sm:$0xf]
  %v7604 = vld [vmem:[%s3 + $0x154] sm:$0xf]
  %v7605 = vld [vmem:[%s3 + $0x158] sm:$0xf]
  %v7606 = vld [vmem:[%s3 + $0x15c] sm:$0xf]
  %v7607 = vld [vmem:[%s3 + $0x160] sm:$0xf]
  %v7608 = vld [vmem:[%s3 + $0x164] sm:$0xf]
  %v7609 = vld [vmem:[%s3 + $0x168] sm:$0xf]
  %v7610 = vld [vmem:[%s3 + $0x16c] sm:$0xf]
  %v7611 = vld [vmem:[%s3 + $0x170] sm:$0xf]
  %v7612 = vld [vmem:[%s3 + $0x174] sm:$0xf]
  %v7613 = vld [vmem:[%s3 + $0x178] sm:$0xf]
  %v7614 = vld [vmem:[%s3 + $0x17c] sm:$0xf]
  %v7615 = vld [vmem:[%s3 + $0x180] sm:$0xf]
  %v7616 = vld [vmem:[%s3 + $0x184] sm:$0xf]
  %v7617 = vld [vmem:[%s3 + $0x188] sm:$0xf]
  %v7618 = vld [vmem:[%s3 + $0x18c] sm:$0xf]
  %v7619 = vld [vmem:[%s3 + $0x190] sm:$0xf]
  %v7620 = vld [vmem:[%s3 + $0x194] sm:$0xf]
  %v7621 = vld [vmem:[%s3 + $0x198] sm:$0xf]
  %v7622 = vld [vmem:[%s3 + $0x19c] sm:$0xf]
  %v7623 = vld [vmem:[%s3 + $0x1a0] sm:$0xf]
  %v7624 = vld [vmem:[%s3 + $0x1a4] sm:$0xf]
  %v7625 = vld [vmem:[%s3 + $0x1a8] sm:$0xf]
  %v7626 = vld [vmem:[%s3 + $0x1ac] sm:$0xf]
  %v7627 = vld [vmem:[%s3 + $0x1b0] sm:$0xf]
  %v7628 = vld [vmem:[%s3 + $0x1b4] sm:$0xf]
  %v7629 = vld [vmem:[%s3 + $0x1b8] sm:$0xf]
  %v7630 = vld [vmem:[%s3 + $0x1bc] sm:$0xf]
  %v7631 = vld [vmem:[%s3 + $0x1c0] sm:$0xf]
  %v7632 = vld [vmem:[%s3 + $0x1c4] sm:$0xf]
  %v7633 = vld [vmem:[%s3 + $0x1c8] sm:$0xf]
  %v7634 = vld [vmem:[%s3 + $0x1cc] sm:$0xf]
  %v7635 = vld [vmem:[%s3 + $0x1d0] sm:$0xf]
  %v7636 = vld [vmem:[%s3 + $0x1d4] sm:$0xf]
  %v7637 = vld [vmem:[%s3 + $0x1d8] sm:$0xf]
  %v7638 = vld [vmem:[%s3 + $0x1dc] sm:$0xf]
  %v7639 = vld [vmem:[%s3 + $0x1e0] sm:$0xf]
  %v7640 = vld [vmem:[%s3 + $0x1e4] sm:$0xf]
  %v7641 = vld [vmem:[%s3 + $0x1e8] sm:$0xf]
  %v7642 = vld [vmem:[%s3 + $0x1ec] sm:$0xf]
  %v7643 = vld [vmem:[%s3 + $0x1f0] sm:$0xf]
  %v7644 = vld [vmem:[%s3 + $0x1f4] sm:$0xf]
  %v7645 = vld [vmem:[%s3 + $0x1f8] sm:$0xf]
  %v7646 = vld [vmem:[%s3 + $0x1fc] sm:$0xf]
  %v7647 = vld [vmem:[%s3 + $0x200] sm:$0xf]
  %v7648 = vld [vmem:[%s3 + $0x204] sm:$0xf]
  %v7649 = vld [vmem:[%s3 + $0x208] sm:$0xf]
  %v7650 = vld [vmem:[%s3 + $0x20c] sm:$0xf]
  %v7651 = vld [vmem:[%s3 + $0x210] sm:$0xf]
  %v7652 = vld [vmem:[%s3 + $0x214] sm:$0xf]
  %v7653 = vld [vmem:[%s3 + $0x218] sm:$0xf]
  %v7654 = vld [vmem:[%s3 + $0x21c] sm:$0xf]
  %v7655 = vld [vmem:[%s3 + $0x220] sm:$0xf]
  %v7656 = vld [vmem:[%s3 + $0x224] sm:$0xf]
  %v7657 = vld [vmem:[%s3 + $0x228] sm:$0xf]
  %v7658 = vld [vmem:[%s3 + $0x22c] sm:$0xf]
  %v7659 = vld [vmem:[%s3 + $0x230] sm:$0xf]
  %v7660 = vld [vmem:[%s3 + $0x234] sm:$0xf]
  %v7661 = vld [vmem:[%s3 + $0x238] sm:$0xf]
  %v7662 = vld [vmem:[%s3 + $0x23c] sm:$0xf]
  %v7807 = vunpack.c.l.b16 %v7519
  %v7808 = vunpack.c.l.b16 %v7520
  %v7809 = vunpack.c.l.b16 %v7521
  %v7810 = vunpack.c.l.b16 %v7522
  %v7811 = vunpack.c.l.b16 %v7523
  %v7812 = vunpack.c.l.b16 %v7524
  %v7813 = vunpack.c.l.b16 %v7525
  %v7814 = vunpack.c.l.b16 %v7526
  %v7815 = vunpack.c.l.b16 %v7527
  %v7816 = vunpack.c.l.b16 %v7528
  %v7817 = vunpack.c.l.b16 %v7529
  %v7818 = vunpack.c.l.b16 %v7530
  %v7819 = vunpack.c.l.b16 %v7531
  %v7820 = vunpack.c.l.b16 %v7532
  %v7821 = vunpack.c.l.b16 %v7533
  %v7822 = vunpack.c.l.b16 %v7534
  %v7823 = vunpack.c.l.b16 %v7535
  %v7824 = vunpack.c.l.b16 %v7536
  %v7825 = vunpack.c.l.b16 %v7537
  %v7826 = vunpack.c.l.b16 %v7538
  %v7827 = vunpack.c.l.b16 %v7539
  %v7828 = vunpack.c.l.b16 %v7540
  %v7829 = vunpack.c.l.b16 %v7541
  %v7830 = vunpack.c.l.b16 %v7542
  %v7831 = vunpack.c.l.b16 %v7543
  %v7832 = vunpack.c.l.b16 %v7544
  %v7833 = vunpack.c.l.b16 %v7545
  %v7834 = vunpack.c.l.b16 %v7546
  %v7835 = vunpack.c.l.b16 %v7547
  %v7836 = vunpack.c.l.b16 %v7548
  %v7837 = vunpack.c.l.b16 %v7549
  %v7838 = vunpack.c.l.b16 %v7550
  %v7839 = vunpack.c.l.b16 %v7551
  %v7840 = vunpack.c.l.b16 %v7552
  %v7841 = vunpack.c.l.b16 %v7553
  %v7842 = vunpack.c.l.b16 %v7554
  %v7843 = vunpack.c.l.b16 %v7555
  %v7844 = vunpack.c.l.b16 %v7556
  %v7845 = vunpack.c.l.b16 %v7557
  %v7846 = vunpack.c.l.b16 %v7558
  %v7847 = vunpack.c.l.b16 %v7559
  %v7848 = vunpack.c.l.b16 %v7560
  %v7849 = vunpack.c.l.b16 %v7561
  %v7850 = vunpack.c.l.b16 %v7562
  %v7851 = vunpack.c.l.b16 %v7563
  %v7852 = vunpack.c.l.b16 %v7564
  %v7853 = vunpack.c.l.b16 %v7565
  %v7854 = vunpack.c.l.b16 %v7566
  %v7855 = vunpack.c.l.b16 %v7567
  %v7856 = vunpack.c.l.b16 %v7568
  %v7857 = vunpack.c.l.b16 %v7569
  %v7858 = vunpack.c.l.b16 %v7570
  %v7859 = vunpack.c.l.b16 %v7571
  %v7860 = vunpack.c.l.b16 %v7572
  %v7861 = vunpack.c.l.b16 %v7573
  %v7862 = vunpack.c.l.b16 %v7574
  %v7863 = vunpack.c.l.b16 %v7575
  %v7864 = vunpack.c.l.b16 %v7576
  %v7865 = vunpack.c.l.b16 %v7577
  %v7866 = vunpack.c.l.b16 %v7578
  %v7867 = vunpack.c.l.b16 %v7579
  %v7868 = vunpack.c.l.b16 %v7580
  %v7869 = vunpack.c.l.b16 %v7581
  %v7870 = vunpack.c.l.b16 %v7582
  %v7871 = vunpack.c.l.b16 %v7583
  %v7872 = vunpack.c.l.b16 %v7584
  %v7873 = vunpack.c.l.b16 %v7585
  %v7874 = vunpack.c.l.b16 %v7586
  %v7875 = vunpack.c.l.b16 %v7587
  %v7876 = vunpack.c.l.b16 %v7588
  %v7877 = vunpack.c.l.b16 %v7589
  %v7878 = vunpack.c.l.b16 %v7590
  %v7879 = vunpack.c.l.b16 %v7591
  %v7880 = vunpack.c.l.b16 %v7592
  %v7881 = vunpack.c.l.b16 %v7593
  %v7882 = vunpack.c.l.b16 %v7594
  %v7883 = vunpack.c.l.b16 %v7595
  %v7884 = vunpack.c.l.b16 %v7596
  %v7885 = vunpack.c.l.b16 %v7597
  %v7886 = vunpack.c.l.b16 %v7598
  %v7887 = vunpack.c.l.b16 %v7599
  %v7888 = vunpack.c.l.b16 %v7600
  %v7889 = vunpack.c.l.b16 %v7601
  %v7890 = vunpack.c.l.b16 %v7602
  %v7891 = vunpack.c.l.b16 %v7603
  %v7892 = vunpack.c.l.b16 %v7604
  %v7893 = vunpack.c.l.b16 %v7605
  %v7894 = vunpack.c.l.b16 %v7606
  %v7895 = vunpack.c.l.b16 %v7607
  %v7896 = vunpack.c.l.b16 %v7608
  %v7897 = vunpack.c.l.b16 %v7609
  %v7898 = vunpack.c.l.b16 %v7610
  %v7899 = vunpack.c.l.b16 %v7611
  %v7900 = vunpack.c.l.b16 %v7612
  %v7901 = vunpack.c.l.b16 %v7613
  %v7902 = vunpack.c.l.b16 %v7614
  %v7903 = vunpack.c.l.b16 %v7615
  %v7904 = vunpack.c.l.b16 %v7616
  %v7905 = vunpack.c.l.b16 %v7617
  %v7906 = vunpack.c.l.b16 %v7618
  %v7907 = vunpack.c.l.b16 %v7619
  %v7908 = vunpack.c.l.b16 %v7620
  %v7909 = vunpack.c.l.b16 %v7621
  %v7910 = vunpack.c.l.b16 %v7622
  %v7911 = vunpack.c.l.b16 %v7623
  %v7912 = vunpack.c.l.b16 %v7624
  %v7913 = vunpack.c.l.b16 %v7625
  %v7914 = vunpack.c.l.b16 %v7626
  %v7915 = vunpack.c.l.b16 %v7627
  %v7916 = vunpack.c.l.b16 %v7628
  %v7917 = vunpack.c.l.b16 %v7629
  %v7918 = vunpack.c.l.b16 %v7630
  %v7919 = vunpack.c.l.b16 %v7631
  %v7920 = vunpack.c.l.b16 %v7632
  %v7921 = vunpack.c.l.b16 %v7633
  %v7922 = vunpack.c.l.b16 %v7634
  %v7923 = vunpack.c.l.b16 %v7635
  %v7924 = vunpack.c.l.b16 %v7636
  %v7925 = vunpack.c.l.b16 %v7637
  %v7926 = vunpack.c.l.b16 %v7638
  %v7927 = vunpack.c.l.b16 %v7639
  %v7928 = vunpack.c.l.b16 %v7640
  %v7929 = vunpack.c.l.b16 %v7641
  %v7930 = vunpack.c.l.b16 %v7642
  %v7931 = vunpack.c.l.b16 %v7643
  %v7932 = vunpack.c.l.b16 %v7644
  %v7933 = vunpack.c.l.b16 %v7645
  %v7934 = vunpack.c.l.b16 %v7646
  %v7935 = vunpack.c.l.b16 %v7647
  %v7936 = vunpack.c.l.b16 %v7648
  %v7937 = vunpack.c.l.b16 %v7649
  %v7938 = vunpack.c.l.b16 %v7650
  %v7939 = vunpack.c.l.b16 %v7651
  %v7940 = vunpack.c.l.b16 %v7652
  %v7941 = vunpack.c.l.b16 %v7653
  %v7942 = vunpack.c.l.b16 %v7654
  %v7943 = vunpack.c.l.b16 %v7655
  %v7944 = vunpack.c.l.b16 %v7656
  %v7945 = vunpack.c.l.b16 %v7657
  %v7946 = vunpack.c.l.b16 %v7658
  %v7947 = vunpack.c.l.b16 %v7659
  %v7948 = vunpack.c.l.b16 %v7660
  %v7949 = vunpack.c.l.b16 %v7661
  %v7950 = vunpack.c.l.b16 %v7662
  %v7951 = vpack.c.b16 %v7808, %v7807
  %v7952 = vpack.c.b16 %v7810, %v7809
  %v7953 = vpack.c.b16 %v7812, %v7811
  %v7954 = vpack.c.b16 %v7814, %v7813
  %v7955 = vpack.c.b16 %v7816, %v7815
  %v7956 = vpack.c.b16 %v7818, %v7817
  %v7957 = vpack.c.b16 %v7820, %v7819
  %v7958 = vpack.c.b16 %v7822, %v7821
  %v7959 = vpack.c.b16 %v7824, %v7823
  %v7960 = vpack.c.b16 %v7826, %v7825
  %v7961 = vpack.c.b16 %v7828, %v7827
  %v7962 = vpack.c.b16 %v7830, %v7829
  %v7963 = vpack.c.b16 %v7832, %v7831
  %v7964 = vpack.c.b16 %v7834, %v7833
  %v7965 = vpack.c.b16 %v7836, %v7835
  %v7966 = vpack.c.b16 %v7838, %v7837
  %v7967 = vpack.c.b16 %v7840, %v7839
  %v7968 = vpack.c.b16 %v7842, %v7841
  %v7969 = vpack.c.b16 %v7844, %v7843
  %v7970 = vpack.c.b16 %v7846, %v7845
  %v7971 = vpack.c.b16 %v7848, %v7847
  %v7972 = vpack.c.b16 %v7850, %v7849
  %v7973 = vpack.c.b16 %v7852, %v7851
  %v7974 = vpack.c.b16 %v7854, %v7853
  %v7975 = vpack.c.b16 %v7856, %v7855
  %v7976 = vpack.c.b16 %v7858, %v7857
  %v7977 = vpack.c.b16 %v7860, %v7859
  %v7978 = vpack.c.b16 %v7862, %v7861
  %v7979 = vpack.c.b16 %v7864, %v7863
  %v7980 = vpack.c.b16 %v7866, %v7865
  %v7981 = vpack.c.b16 %v7868, %v7867
  %v7982 = vpack.c.b16 %v7870, %v7869
  %v7983 = vpack.c.b16 %v7872, %v7871
  %v7984 = vpack.c.b16 %v7874, %v7873
  %v7985 = vpack.c.b16 %v7876, %v7875
  %v7986 = vpack.c.b16 %v7878, %v7877
  %v7987 = vpack.c.b16 %v7880, %v7879
  %v7988 = vpack.c.b16 %v7882, %v7881
  %v7989 = vpack.c.b16 %v7884, %v7883
  %v7990 = vpack.c.b16 %v7886, %v7885
  %v7991 = vpack.c.b16 %v7888, %v7887
  %v7992 = vpack.c.b16 %v7890, %v7889
  %v7993 = vpack.c.b16 %v7892, %v7891
  %v7994 = vpack.c.b16 %v7894, %v7893
  %v7995 = vpack.c.b16 %v7896, %v7895
  %v7996 = vpack.c.b16 %v7898, %v7897
  %v7997 = vpack.c.b16 %v7900, %v7899
  %v7998 = vpack.c.b16 %v7902, %v7901
  %v7999 = vpack.c.b16 %v7904, %v7903
  %v8000 = vpack.c.b16 %v7906, %v7905
  %v8001 = vpack.c.b16 %v7908, %v7907
  %v8002 = vpack.c.b16 %v7910, %v7909
  %v8003 = vpack.c.b16 %v7912, %v7911
  %v8004 = vpack.c.b16 %v7914, %v7913
  %v8005 = vpack.c.b16 %v7916, %v7915
  %v8006 = vpack.c.b16 %v7918, %v7917
  %v8007 = vpack.c.b16 %v7920, %v7919
  %v8008 = vpack.c.b16 %v7922, %v7921
  %v8009 = vpack.c.b16 %v7924, %v7923
  %v8010 = vpack.c.b16 %v7926, %v7925
  %v8011 = vpack.c.b16 %v7928, %v7927
  %v8012 = vpack.c.b16 %v7930, %v7929
  %v8013 = vpack.c.b16 %v7932, %v7931
  %v8014 = vpack.c.b16 %v7934, %v7933
  %v8015 = vpack.c.b16 %v7936, %v7935
  %v8016 = vpack.c.b16 %v7938, %v7937
  %v8017 = vpack.c.b16 %v7940, %v7939
  %v8018 = vpack.c.b16 %v7942, %v7941
  %v8019 = vpack.c.b16 %v7944, %v7943
  %v8020 = vpack.c.b16 %v7946, %v7945
  %v8021 = vpack.c.b16 %v7948, %v7947
  %v8022 = vpack.c.b16 %v7950, %v7949
  %8095 = vmatprep.subr.bf16.mxu0 0
  %8096 = vmatpush1.bf16.msra.mxu0 %v7958
  %8097 = vmatprep.subr.bf16.mxu0 0
  %8098 = vmatpush1.bf16.msra.mxu0 %v7957
  %8099 = vmatprep.subr.bf16.mxu0 0
  %8100 = vmatpush1.bf16.msra.mxu0 %v7956
  %8101 = vmatprep.subr.bf16.mxu0 0
  %8102 = vmatpush1.bf16.msra.mxu0 %v7955
  %8103 = vmatprep.subr.bf16.mxu0 0
  %8104 = vmatpush1.bf16.msra.mxu0 %v7954
  %8105 = vmatprep.subr.bf16.mxu0 0
  %8106 = vmatpush1.bf16.msra.mxu0 %v7953
  %8107 = vmatprep.subr.bf16.mxu0 0
  %8108 = vmatpush1.bf16.msra.mxu0 %v7952
  %8109 = vmatprep.subr.bf16.mxu0 0
  %8110 = vmatpush1.bf16.msra.mxu0 %v7951
  %8111 = vmatprep.subr.bf16.mxu0 0
  %8112 = vmatpush2.bf16.msra.mxu0 %v7966
  %8113 = vmatprep.subr.bf16.mxu0 0
  %8114 = vmatpush2.bf16.msra.mxu0 %v7965
  %8115 = vmatprep.subr.bf16.mxu0 0
  %8116 = vmatpush2.bf16.msra.mxu0 %v7964
  %8117 = vmatprep.subr.bf16.mxu0 0
  %8118 = vmatpush2.bf16.msra.mxu0 %v7963
  %8119 = vmatprep.subr.bf16.mxu0 0
  %8120 = vmatpush2.bf16.msra.mxu0 %v7962
  %8121 = vmatprep.subr.bf16.mxu0 0
  %8122 = vmatpush2.bf16.msra.mxu0 %v7961
  %8123 = vmatprep.subr.bf16.mxu0 0
  %8124 = vmatpush2.bf16.msra.mxu0 %v7960
  %8125 = vmatprep.subr.bf16.mxu0 0
  %8126 = vmatpush2.bf16.msra.mxu0 %v7959
  %8127 = vmatprep.mubr.bf16.mxu0 %v7511
  %8128 = vmatmul.mubr.bf16.gmra.mxu0 %v7510
  %v8129 = vpop.f32.mrf.mxu0
  %v8130 = vadd.f32 %v33, %v8129
  %v8131 = vpop.f32.mrf.mxu0
  %v8132 = vpop.f32.mrf.mxu0
  %v8133 = vpop.f32.mrf.mxu0
  %8134 = vdwg.mxu0
  %8135 = vmatprep.subr.bf16.mxu0 0
  %8136 = vmatpush1.bf16.msra.mxu0 %v7974
  %8137 = vmatprep.subr.bf16.mxu0 0
  %8138 = vmatpush1.bf16.msra.mxu0 %v7973
  %8139 = vmatprep.subr.bf16.mxu0 0
  %8140 = vmatpush1.bf16.msra.mxu0 %v7972
  %8141 = vmatprep.subr.bf16.mxu0 0
  %8142 = vmatpush1.bf16.msra.mxu0 %v7971
  %8143 = vmatprep.subr.bf16.mxu0 0
  %8144 = vmatpush1.bf16.msra.mxu0 %v7970
  %8145 = vmatprep.subr.bf16.mxu0 0
  %8146 = vmatpush1.bf16.msra.mxu0 %v7969
  %8147 = vmatprep.subr.bf16.mxu0 0
  %8148 = vmatpush1.bf16.msra.mxu0 %v7968
  %8149 = vmatprep.subr.bf16.mxu0 0
  %8150 = vmatpush1.bf16.msra.mxu0 %v7967
  %8151 = vmatprep.subr.bf16.mxu0 0
  %8152 = vmatpush2.bf16.msra.mxu0 %v7982
  %8153 = vmatprep.subr.bf16.mxu0 0
  %8154 = vmatpush2.bf16.msra.mxu0 %v7981
  %8155 = vmatprep.subr.bf16.mxu0 0
  %8156 = vmatpush2.bf16.msra.mxu0 %v7980
  %8157 = vmatprep.subr.bf16.mxu0 0
  %8158 = vmatpush2.bf16.msra.mxu0 %v7979
  %8159 = vmatprep.subr.bf16.mxu0 0
  %8160 = vmatpush2.bf16.msra.mxu0 %v7978
  %8161 = vmatprep.subr.bf16.mxu0 0
  %8162 = vmatpush2.bf16.msra.mxu0 %v7977
  %8163 = vmatprep.subr.bf16.mxu0 0
  %8164 = vmatpush2.bf16.msra.mxu0 %v7976
  %8165 = vmatprep.subr.bf16.mxu0 0
  %8166 = vmatpush2.bf16.msra.mxu0 %v7975
  %8167 = vmatprep.mubr.bf16.mxu0 %v7513
  %8168 = vmatmul.mubr.bf16.gmra.mxu0 %v7512
  %v8169 = vpop.f32.mrf.mxu0
  %v8170 = vadd.f32 %v8130, %v8169
  %v8171 = vpop.f32.mrf.mxu0
  %v8172 = vpop.f32.mrf.mxu0
  %v8173 = vpop.f32.mrf.mxu0
  %8174 = vdwg.mxu0
  %8175 = vmatprep.subr.bf16.mxu0 0
  %8176 = vmatpush1.bf16.msra.mxu0 %v7990
  %8177 = vmatprep.subr.bf16.mxu0 0
  %8178 = vmatpush1.bf16.msra.mxu0 %v7989
  %8179 = vmatprep.subr.bf16.mxu0 0
  %8180 = vmatpush1.bf16.msra.mxu0 %v7988
  %8181 = vmatprep.subr.bf16.mxu0 0
  %8182 = vmatpush1.bf16.msra.mxu0 %v7987
  %8183 = vmatprep.subr.bf16.mxu0 0
  %8184 = vmatpush1.bf16.msra.mxu0 %v7986
  %8185 = vmatprep.subr.bf16.mxu0 0
  %8186 = vmatpush1.bf16.msra.mxu0 %v7985
  %8187 = vmatprep.subr.bf16.mxu0 0
  %8188 = vmatpush1.bf16.msra.mxu0 %v7984
  %8189 = vmatprep.subr.bf16.mxu0 0
  %8190 = vmatpush1.bf16.msra.mxu0 %v7983
  %8191 = vmatprep.subr.bf16.mxu0 0
  %8192 = vmatpush2.bf16.msra.mxu0 %v7998
  %8193 = vmatprep.subr.bf16.mxu0 0
  %8194 = vmatpush2.bf16.msra.mxu0 %v7997
  %8195 = vmatprep.subr.bf16.mxu0 0
  %8196 = vmatpush2.bf16.msra.mxu0 %v7996
  %8197 = vmatprep.subr.bf16.mxu0 0
  %8198 = vmatpush2.bf16.msra.mxu0 %v7995
  %8199 = vmatprep.subr.bf16.mxu0 0
  %8200 = vmatpush2.bf16.msra.mxu0 %v7994
  %8201 = vmatprep.subr.bf16.mxu0 0
  %8202 = vmatpush2.bf16.msra.mxu0 %v7993
  %8203 = vmatprep.subr.bf16.mxu0 0
  %8204 = vmatpush2.bf16.msra.mxu0 %v7992
  %8205 = vmatprep.subr.bf16.mxu0 0
  %8206 = vmatpush2.bf16.msra.mxu0 %v7991
  %8207 = vmatprep.mubr.bf16.mxu0 %v7515
  %8208 = vmatmul.mubr.bf16.gmra.mxu0 %v7514
  %v8209 = vpop.f32.mrf.mxu0
  %v8210 = vadd.f32 %v8170, %v8209
  %v8211 = vpop.f32.mrf.mxu0
  %v8212 = vpop.f32.mrf.mxu0
  %v8213 = vpop.f32.mrf.mxu0
  %8214 = vdwg.mxu0
  %8215 = vmatprep.subr.bf16.mxu0 0
  %8216 = vmatpush1.bf16.msra.mxu0 %v8006
  %8217 = vmatprep.subr.bf16.mxu0 0
  %8218 = vmatpush1.bf16.msra.mxu0 %v8005
  %8219 = vmatprep.subr.bf16.mxu0 0
  %8220 = vmatpush1.bf16.msra.mxu0 %v8004
  %8221 = vmatprep.subr.bf16.mxu0 0
  %8222 = vmatpush1.bf16.msra.mxu0 %v8003
  %8223 = vmatprep.subr.bf16.mxu0 0
  %8224 = vmatpush1.bf16.msra.mxu0 %v8002
  %8225 = vmatprep.subr.bf16.mxu0 0
  %8226 = vmatpush1.bf16.msra.mxu0 %v8001
  %8227 = vmatprep.subr.bf16.mxu0 0
  %8228 = vmatpush1.bf16.msra.mxu0 %v8000
  %8229 = vmatprep.subr.bf16.mxu0 0
  %8230 = vmatpush1.bf16.msra.mxu0 %v7999
  %8231 = vmatprep.subr.bf16.mxu0 0
  %8232 = vmatpush2.bf16.msra.mxu0 %v8014
  %8233 = vmatprep.subr.bf16.mxu0 0
  %8234 = vmatpush2.bf16.msra.mxu0 %v8013
  %8235 = vmatprep.subr.bf16.mxu0 0
  %8236 = vmatpush2.bf16.msra.mxu0 %v8012
  %8237 = vmatprep.subr.bf16.mxu0 0
  %8238 = vmatpush2.bf16.msra.mxu0 %v8011
  %8239 = vmatprep.subr.bf16.mxu0 0
  %8240 = vmatpush2.bf16.msra.mxu0 %v8010
  %8241 = vmatprep.subr.bf16.mxu0 0
  %8242 = vmatpush2.bf16.msra.mxu0 %v8009
  %8243 = vmatprep.subr.bf16.mxu0 0
  %8244 = vmatpush2.bf16.msra.mxu0 %v8008
  %8245 = vmatprep.subr.bf16.mxu0 0
  %8246 = vmatpush2.bf16.msra.mxu0 %v8007
  %8247 = vmatprep.mubr.bf16.mxu0 %v7517
  %8248 = vmatmul.mubr.bf16.gmra.mxu0 %v7516
  %v8249 = vpop.f32.mrf.mxu0
  %v8250 = vadd.f32 %v8210, %v8249
  %v8251 = vpop.f32.mrf.mxu0
  %v8252 = vpop.f32.mrf.mxu0
  %v8253 = vpop.f32.mrf.mxu0
  %8254 = vdwg.mxu0
  %8255 = vmatprep.subr.bf16.mxu0 0
  %8256 = vmatpush1.bf16.msra.mxu0 %v8022
  %8257 = vmatprep.subr.bf16.mxu0 0
  %8258 = vmatpush1.bf16.msra.mxu0 %v8021
  %8259 = vmatprep.subr.bf16.mxu0 0
  %8260 = vmatpush1.bf16.msra.mxu0 %v8020
  %8261 = vmatprep.subr.bf16.mxu0 0
  %8262 = vmatpush1.bf16.msra.mxu0 %v8019
  %8263 = vmatprep.subr.bf16.mxu0 0
  %8264 = vmatpush1.bf16.msra.mxu0 %v8018
  %8265 = vmatprep.subr.bf16.mxu0 0
  %8266 = vmatpush1.bf16.msra.mxu0 %v8017
  %8267 = vmatprep.subr.bf16.mxu0 0
  %8268 = vmatpush1.bf16.msra.mxu0 %v8016
  %8269 = vmatprep.subr.bf16.mxu0 0
  %8270 = vmatpush1.bf16.msra.mxu0 %v8015
  %8271 = vmatprep.subr.bf16.mxu0 0
  %8272 = vmatpush2.bf16.msra.mxu0 0
  %8273 = vmatprep.subr.bf16.mxu0 0
  %8274 = vmatpush2.bf16.msra.mxu0 0
  %8275 = vmatprep.subr.bf16.mxu0 0
  %8276 = vmatpush2.bf16.msra.mxu0 0
  %8277 = vmatprep.subr.bf16.mxu0 0
  %8278 = vmatpush2.bf16.msra.mxu0 0
  %8279 = vmatprep.subr.bf16.mxu0 0
  %8280 = vmatpush2.bf16.msra.mxu0 0
  %8281 = vmatprep.subr.bf16.mxu0 0
  %8282 = vmatpush2.bf16.msra.mxu0 0
  %8283 = vmatprep.subr.bf16.mxu0 0
  %8284 = vmatpush2.bf16.msra.mxu0 0
  %8285 = vmatprep.subr.bf16.mxu0 0
  %8286 = vmatpush2.bf16.msra.mxu0 0
  %8287 = vmatprep.mubr.bf16.mxu0 0
  %8288 = vmatmul.mubr.bf16.gmra.mxu0 %v7518
  %v8289 = vpop.f32.mrf.mxu0
  %v8290 = vadd.f32 %v8250, %v8289
  %v8291 = vpop.f32.mrf.mxu0
  %v8292 = vpop.f32.mrf.mxu0
  %v8293 = vpop.f32.mrf.mxu0
  %8294 = vdwg.mxu0
  %v8295 = vmax.f32 %v8290, 0.0
  %v8296 = vadd.f32 %v7474, %v8295
  %8297 = vst [vmem:[%s3346] sm:$0xff] %v8296
  %v8298 = vld [vmem:[%s2520] sm:$0xff]
  %v8300 = vrot.slane %v8296, 4
  %v8302 = vsel %vm42, 0.0, %v8300
  %v8303 = vsel %vm42, %v8300, 0.0
  %v8306 = vrot.slane %v8302, 1
  %v8307 = vrot.slane %v8303, 1
  %v8308 = vsel %vm47, %v8306, %v8307
  %v8310 = vrot.slane %v8302, 2
  %v8311 = vrot.slane %v8303, 2
  %v8312 = vsel %vm52, %v8310, %v8311
  %v8314 = vrot.slane %v8302, 3
  %v8315 = vrot.slane %v8303, 3
  %v8316 = vsel %vm57, %v8314, %v8315
  %v8318 = vrot.slane %v8302, 4
  %v8319 = vrot.slane %v8303, 4
  %v8320 = vsel %vm42, %v8318, %v8319
  %v8322 = vrot.slane %v8302, 5
  %v8323 = vrot.slane %v8303, 5
  %v8324 = vsel %vm66, %v8322, %v8323
  %v8326 = vrot.slane %v8302, 6
  %v8327 = vrot.slane %v8303, 6
  %v8328 = vsel %vm71, %v8326, %v8327
  %v8330 = vrot.slane %v8302, 7
  %v8331 = vrot.slane %v8303, 7
  %v8332 = vsel %vm76, %v8330, %v8331
  %v8334 = vpack.c.bf16 %v8302, %v8302
  %v8335 = vpack.c.bf16 %v8308, %v8308
  %v8336 = vpack.c.bf16 %v8312, %v8312
  %v8337 = vpack.c.bf16 %v8316, %v8316
  %v8338 = vpack.c.bf16 %v8320, %v8320
  %v8339 = vpack.c.bf16 %v8324, %v8324
  %v8340 = vpack.c.bf16 %v8328, %v8328
  %v8341 = vpack.c.bf16 %v8332, %v8332
  %v8342 = vpack.c.bf16 %v8303, %v8303
  %v8343 = vld [vmem:[%s3] sm:$0xf]
  %v8344 = vld [vmem:[%s3 + $0x4] sm:$0xf]
  %v8345 = vld [vmem:[%s3 + $0x8] sm:$0xf]
  %v8346 = vld [vmem:[%s3 + $0xc] sm:$0xf]
  %v8347 = vld [vmem:[%s3 + $0x10] sm:$0xf]
  %v8348 = vld [vmem:[%s3 + $0x14] sm:$0xf]
  %v8349 = vld [vmem:[%s3 + $0x18] sm:$0xf]
  %v8350 = vld [vmem:[%s3 + $0x1c] sm:$0xf]
  %v8351 = vld [vmem:[%s3 + $0x20] sm:$0xf]
  %v8352 = vld [vmem:[%s3 + $0x24] sm:$0xf]
  %v8353 = vld [vmem:[%s3 + $0x28] sm:$0xf]
  %v8354 = vld [vmem:[%s3 + $0x2c] sm:$0xf]
  %v8355 = vld [vmem:[%s3 + $0x30] sm:$0xf]
  %v8356 = vld [vmem:[%s3 + $0x34] sm:$0xf]
  %v8357 = vld [vmem:[%s3 + $0x38] sm:$0xf]
  %v8358 = vld [vmem:[%s3 + $0x3c] sm:$0xf]
  %v8359 = vld [vmem:[%s3 + $0x40] sm:$0xf]
  %v8360 = vld [vmem:[%s3 + $0x44] sm:$0xf]
  %v8361 = vld [vmem:[%s3 + $0x48] sm:$0xf]
  %v8362 = vld [vmem:[%s3 + $0x4c] sm:$0xf]
  %v8363 = vld [vmem:[%s3 + $0x50] sm:$0xf]
  %v8364 = vld [vmem:[%s3 + $0x54] sm:$0xf]
  %v8365 = vld [vmem:[%s3 + $0x58] sm:$0xf]
  %v8366 = vld [vmem:[%s3 + $0x5c] sm:$0xf]
  %v8367 = vld [vmem:[%s3 + $0x60] sm:$0xf]
  %v8368 = vld [vmem:[%s3 + $0x64] sm:$0xf]
  %v8369 = vld [vmem:[%s3 + $0x68] sm:$0xf]
  %v8370 = vld [vmem:[%s3 + $0x6c] sm:$0xf]
  %v8371 = vld [vmem:[%s3 + $0x70] sm:$0xf]
  %v8372 = vld [vmem:[%s3 + $0x74] sm:$0xf]
  %v8373 = vld [vmem:[%s3 + $0x78] sm:$0xf]
  %v8374 = vld [vmem:[%s3 + $0x7c] sm:$0xf]
  %v8375 = vld [vmem:[%s3 + $0x80] sm:$0xf]
  %v8376 = vld [vmem:[%s3 + $0x84] sm:$0xf]
  %v8377 = vld [vmem:[%s3 + $0x88] sm:$0xf]
  %v8378 = vld [vmem:[%s3 + $0x8c] sm:$0xf]
  %v8379 = vld [vmem:[%s3 + $0x90] sm:$0xf]
  %v8380 = vld [vmem:[%s3 + $0x94] sm:$0xf]
  %v8381 = vld [vmem:[%s3 + $0x98] sm:$0xf]
  %v8382 = vld [vmem:[%s3 + $0x9c] sm:$0xf]
  %v8383 = vld [vmem:[%s3 + $0xa0] sm:$0xf]
  %v8384 = vld [vmem:[%s3 + $0xa4] sm:$0xf]
  %v8385 = vld [vmem:[%s3 + $0xa8] sm:$0xf]
  %v8386 = vld [vmem:[%s3 + $0xac] sm:$0xf]
  %v8387 = vld [vmem:[%s3 + $0xb0] sm:$0xf]
  %v8388 = vld [vmem:[%s3 + $0xb4] sm:$0xf]
  %v8389 = vld [vmem:[%s3 + $0xb8] sm:$0xf]
  %v8390 = vld [vmem:[%s3 + $0xbc] sm:$0xf]
  %v8391 = vld [vmem:[%s3 + $0xc0] sm:$0xf]
  %v8392 = vld [vmem:[%s3 + $0xc4] sm:$0xf]
  %v8393 = vld [vmem:[%s3 + $0xc8] sm:$0xf]
  %v8394 = vld [vmem:[%s3 + $0xcc] sm:$0xf]
  %v8395 = vld [vmem:[%s3 + $0xd0] sm:$0xf]
  %v8396 = vld [vmem:[%s3 + $0xd4] sm:$0xf]
  %v8397 = vld [vmem:[%s3 + $0xd8] sm:$0xf]
  %v8398 = vld [vmem:[%s3 + $0xdc] sm:$0xf]
  %v8399 = vld [vmem:[%s3 + $0xe0] sm:$0xf]
  %v8400 = vld [vmem:[%s3 + $0xe4] sm:$0xf]
  %v8401 = vld [vmem:[%s3 + $0xe8] sm:$0xf]
  %v8402 = vld [vmem:[%s3 + $0xec] sm:$0xf]
  %v8403 = vld [vmem:[%s3 + $0xf0] sm:$0xf]
  %v8404 = vld [vmem:[%s3 + $0xf4] sm:$0xf]
  %v8405 = vld [vmem:[%s3 + $0xf8] sm:$0xf]
  %v8406 = vld [vmem:[%s3 + $0xfc] sm:$0xf]
  %v8407 = vld [vmem:[%s3 + $0x100] sm:$0xf]
  %v8408 = vld [vmem:[%s3 + $0x104] sm:$0xf]
  %v8409 = vld [vmem:[%s3 + $0x108] sm:$0xf]
  %v8410 = vld [vmem:[%s3 + $0x10c] sm:$0xf]
  %v8411 = vld [vmem:[%s3 + $0x110] sm:$0xf]
  %v8412 = vld [vmem:[%s3 + $0x114] sm:$0xf]
  %v8413 = vld [vmem:[%s3 + $0x118] sm:$0xf]
  %v8414 = vld [vmem:[%s3 + $0x11c] sm:$0xf]
  %v8415 = vld [vmem:[%s3 + $0x120] sm:$0xf]
  %v8416 = vld [vmem:[%s3 + $0x124] sm:$0xf]
  %v8417 = vld [vmem:[%s3 + $0x128] sm:$0xf]
  %v8418 = vld [vmem:[%s3 + $0x12c] sm:$0xf]
  %v8419 = vld [vmem:[%s3 + $0x130] sm:$0xf]
  %v8420 = vld [vmem:[%s3 + $0x134] sm:$0xf]
  %v8421 = vld [vmem:[%s3 + $0x138] sm:$0xf]
  %v8422 = vld [vmem:[%s3 + $0x13c] sm:$0xf]
  %v8423 = vld [vmem:[%s3 + $0x140] sm:$0xf]
  %v8424 = vld [vmem:[%s3 + $0x144] sm:$0xf]
  %v8425 = vld [vmem:[%s3 + $0x148] sm:$0xf]
  %v8426 = vld [vmem:[%s3 + $0x14c] sm:$0xf]
  %v8427 = vld [vmem:[%s3 + $0x150] sm:$0xf]
  %v8428 = vld [vmem:[%s3 + $0x154] sm:$0xf]
  %v8429 = vld [vmem:[%s3 + $0x158] sm:$0xf]
  %v8430 = vld [vmem:[%s3 + $0x15c] sm:$0xf]
  %v8431 = vld [vmem:[%s3 + $0x160] sm:$0xf]
  %v8432 = vld [vmem:[%s3 + $0x164] sm:$0xf]
  %v8433 = vld [vmem:[%s3 + $0x168] sm:$0xf]
  %v8434 = vld [vmem:[%s3 + $0x16c] sm:$0xf]
  %v8435 = vld [vmem:[%s3 + $0x170] sm:$0xf]
  %v8436 = vld [vmem:[%s3 + $0x174] sm:$0xf]
  %v8437 = vld [vmem:[%s3 + $0x178] sm:$0xf]
  %v8438 = vld [vmem:[%s3 + $0x17c] sm:$0xf]
  %v8439 = vld [vmem:[%s3 + $0x180] sm:$0xf]
  %v8440 = vld [vmem:[%s3 + $0x184] sm:$0xf]
  %v8441 = vld [vmem:[%s3 + $0x188] sm:$0xf]
  %v8442 = vld [vmem:[%s3 + $0x18c] sm:$0xf]
  %v8443 = vld [vmem:[%s3 + $0x190] sm:$0xf]
  %v8444 = vld [vmem:[%s3 + $0x194] sm:$0xf]
  %v8445 = vld [vmem:[%s3 + $0x198] sm:$0xf]
  %v8446 = vld [vmem:[%s3 + $0x19c] sm:$0xf]
  %v8447 = vld [vmem:[%s3 + $0x1a0] sm:$0xf]
  %v8448 = vld [vmem:[%s3 + $0x1a4] sm:$0xf]
  %v8449 = vld [vmem:[%s3 + $0x1a8] sm:$0xf]
  %v8450 = vld [vmem:[%s3 + $0x1ac] sm:$0xf]
  %v8451 = vld [vmem:[%s3 + $0x1b0] sm:$0xf]
  %v8452 = vld [vmem:[%s3 + $0x1b4] sm:$0xf]
  %v8453 = vld [vmem:[%s3 + $0x1b8] sm:$0xf]
  %v8454 = vld [vmem:[%s3 + $0x1bc] sm:$0xf]
  %v8455 = vld [vmem:[%s3 + $0x1c0] sm:$0xf]
  %v8456 = vld [vmem:[%s3 + $0x1c4] sm:$0xf]
  %v8457 = vld [vmem:[%s3 + $0x1c8] sm:$0xf]
  %v8458 = vld [vmem:[%s3 + $0x1cc] sm:$0xf]
  %v8459 = vld [vmem:[%s3 + $0x1d0] sm:$0xf]
  %v8460 = vld [vmem:[%s3 + $0x1d4] sm:$0xf]
  %v8461 = vld [vmem:[%s3 + $0x1d8] sm:$0xf]
  %v8462 = vld [vmem:[%s3 + $0x1dc] sm:$0xf]
  %v8463 = vld [vmem:[%s3 + $0x1e0] sm:$0xf]
  %v8464 = vld [vmem:[%s3 + $0x1e4] sm:$0xf]
  %v8465 = vld [vmem:[%s3 + $0x1e8] sm:$0xf]
  %v8466 = vld [vmem:[%s3 + $0x1ec] sm:$0xf]
  %v8467 = vld [vmem:[%s3 + $0x1f0] sm:$0xf]
  %v8468 = vld [vmem:[%s3 + $0x1f4] sm:$0xf]
  %v8469 = vld [vmem:[%s3 + $0x1f8] sm:$0xf]
  %v8470 = vld [vmem:[%s3 + $0x1fc] sm:$0xf]
  %v8471 = vld [vmem:[%s3 + $0x200] sm:$0xf]
  %v8472 = vld [vmem:[%s3 + $0x204] sm:$0xf]
  %v8473 = vld [vmem:[%s3 + $0x208] sm:$0xf]
  %v8474 = vld [vmem:[%s3 + $0x20c] sm:$0xf]
  %v8475 = vld [vmem:[%s3 + $0x210] sm:$0xf]
  %v8476 = vld [vmem:[%s3 + $0x214] sm:$0xf]
  %v8477 = vld [vmem:[%s3 + $0x218] sm:$0xf]
  %v8478 = vld [vmem:[%s3 + $0x21c] sm:$0xf]
  %v8479 = vld [vmem:[%s3 + $0x220] sm:$0xf]
  %v8480 = vld [vmem:[%s3 + $0x224] sm:$0xf]
  %v8481 = vld [vmem:[%s3 + $0x228] sm:$0xf]
  %v8482 = vld [vmem:[%s3 + $0x22c] sm:$0xf]
  %v8483 = vld [vmem:[%s3 + $0x230] sm:$0xf]
  %v8484 = vld [vmem:[%s3 + $0x234] sm:$0xf]
  %v8485 = vld [vmem:[%s3 + $0x238] sm:$0xf]
  %v8486 = vld [vmem:[%s3 + $0x23c] sm:$0xf]
  %v8631 = vunpack.c.l.b16 %v8343
  %v8632 = vunpack.c.l.b16 %v8344
  %v8633 = vunpack.c.l.b16 %v8345
  %v8634 = vunpack.c.l.b16 %v8346
  %v8635 = vunpack.c.l.b16 %v8347
  %v8636 = vunpack.c.l.b16 %v8348
  %v8637 = vunpack.c.l.b16 %v8349
  %v8638 = vunpack.c.l.b16 %v8350
  %v8639 = vunpack.c.l.b16 %v8351
  %v8640 = vunpack.c.l.b16 %v8352
  %v8641 = vunpack.c.l.b16 %v8353
  %v8642 = vunpack.c.l.b16 %v8354
  %v8643 = vunpack.c.l.b16 %v8355
  %v8644 = vunpack.c.l.b16 %v8356
  %v8645 = vunpack.c.l.b16 %v8357
  %v8646 = vunpack.c.l.b16 %v8358
  %v8647 = vunpack.c.l.b16 %v8359
  %v8648 = vunpack.c.l.b16 %v8360
  %v8649 = vunpack.c.l.b16 %v8361
  %v8650 = vunpack.c.l.b16 %v8362
  %v8651 = vunpack.c.l.b16 %v8363
  %v8652 = vunpack.c.l.b16 %v8364
  %v8653 = vunpack.c.l.b16 %v8365
  %v8654 = vunpack.c.l.b16 %v8366
  %v8655 = vunpack.c.l.b16 %v8367
  %v8656 = vunpack.c.l.b16 %v8368
  %v8657 = vunpack.c.l.b16 %v8369
  %v8658 = vunpack.c.l.b16 %v8370
  %v8659 = vunpack.c.l.b16 %v8371
  %v8660 = vunpack.c.l.b16 %v8372
  %v8661 = vunpack.c.l.b16 %v8373
  %v8662 = vunpack.c.l.b16 %v8374
  %v8663 = vunpack.c.l.b16 %v8375
  %v8664 = vunpack.c.l.b16 %v8376
  %v8665 = vunpack.c.l.b16 %v8377
  %v8666 = vunpack.c.l.b16 %v8378
  %v8667 = vunpack.c.l.b16 %v8379
  %v8668 = vunpack.c.l.b16 %v8380
  %v8669 = vunpack.c.l.b16 %v8381
  %v8670 = vunpack.c.l.b16 %v8382
  %v8671 = vunpack.c.l.b16 %v8383
  %v8672 = vunpack.c.l.b16 %v8384
  %v8673 = vunpack.c.l.b16 %v8385
  %v8674 = vunpack.c.l.b16 %v8386
  %v8675 = vunpack.c.l.b16 %v8387
  %v8676 = vunpack.c.l.b16 %v8388
  %v8677 = vunpack.c.l.b16 %v8389
  %v8678 = vunpack.c.l.b16 %v8390
  %v8679 = vunpack.c.l.b16 %v8391
  %v8680 = vunpack.c.l.b16 %v8392
  %v8681 = vunpack.c.l.b16 %v8393
  %v8682 = vunpack.c.l.b16 %v8394
  %v8683 = vunpack.c.l.b16 %v8395
  %v8684 = vunpack.c.l.b16 %v8396
  %v8685 = vunpack.c.l.b16 %v8397
  %v8686 = vunpack.c.l.b16 %v8398
  %v8687 = vunpack.c.l.b16 %v8399
  %v8688 = vunpack.c.l.b16 %v8400
  %v8689 = vunpack.c.l.b16 %v8401
  %v8690 = vunpack.c.l.b16 %v8402
  %v8691 = vunpack.c.l.b16 %v8403
  %v8692 = vunpack.c.l.b16 %v8404
  %v8693 = vunpack.c.l.b16 %v8405
  %v8694 = vunpack.c.l.b16 %v8406
  %v8695 = vunpack.c.l.b16 %v8407
  %v8696 = vunpack.c.l.b16 %v8408
  %v8697 = vunpack.c.l.b16 %v8409
  %v8698 = vunpack.c.l.b16 %v8410
  %v8699 = vunpack.c.l.b16 %v8411
  %v8700 = vunpack.c.l.b16 %v8412
  %v8701 = vunpack.c.l.b16 %v8413
  %v8702 = vunpack.c.l.b16 %v8414
  %v8703 = vunpack.c.l.b16 %v8415
  %v8704 = vunpack.c.l.b16 %v8416
  %v8705 = vunpack.c.l.b16 %v8417
  %v8706 = vunpack.c.l.b16 %v8418
  %v8707 = vunpack.c.l.b16 %v8419
  %v8708 = vunpack.c.l.b16 %v8420
  %v8709 = vunpack.c.l.b16 %v8421
  %v8710 = vunpack.c.l.b16 %v8422
  %v8711 = vunpack.c.l.b16 %v8423
  %v8712 = vunpack.c.l.b16 %v8424
  %v8713 = vunpack.c.l.b16 %v8425
  %v8714 = vunpack.c.l.b16 %v8426
  %v8715 = vunpack.c.l.b16 %v8427
  %v8716 = vunpack.c.l.b16 %v8428
  %v8717 = vunpack.c.l.b16 %v8429
  %v8718 = vunpack.c.l.b16 %v8430
  %v8719 = vunpack.c.l.b16 %v8431
  %v8720 = vunpack.c.l.b16 %v8432
  %v8721 = vunpack.c.l.b16 %v8433
  %v8722 = vunpack.c.l.b16 %v8434
  %v8723 = vunpack.c.l.b16 %v8435
  %v8724 = vunpack.c.l.b16 %v8436
  %v8725 = vunpack.c.l.b16 %v8437
  %v8726 = vunpack.c.l.b16 %v8438
  %v8727 = vunpack.c.l.b16 %v8439
  %v8728 = vunpack.c.l.b16 %v8440
  %v8729 = vunpack.c.l.b16 %v8441
  %v8730 = vunpack.c.l.b16 %v8442
  %v8731 = vunpack.c.l.b16 %v8443
  %v8732 = vunpack.c.l.b16 %v8444
  %v8733 = vunpack.c.l.b16 %v8445
  %v8734 = vunpack.c.l.b16 %v8446
  %v8735 = vunpack.c.l.b16 %v8447
  %v8736 = vunpack.c.l.b16 %v8448
  %v8737 = vunpack.c.l.b16 %v8449
  %v8738 = vunpack.c.l.b16 %v8450
  %v8739 = vunpack.c.l.b16 %v8451
  %v8740 = vunpack.c.l.b16 %v8452
  %v8741 = vunpack.c.l.b16 %v8453
  %v8742 = vunpack.c.l.b16 %v8454
  %v8743 = vunpack.c.l.b16 %v8455
  %v8744 = vunpack.c.l.b16 %v8456
  %v8745 = vunpack.c.l.b16 %v8457
  %v8746 = vunpack.c.l.b16 %v8458
  %v8747 = vunpack.c.l.b16 %v8459
  %v8748 = vunpack.c.l.b16 %v8460
  %v8749 = vunpack.c.l.b16 %v8461
  %v8750 = vunpack.c.l.b16 %v8462
  %v8751 = vunpack.c.l.b16 %v8463
  %v8752 = vunpack.c.l.b16 %v8464
  %v8753 = vunpack.c.l.b16 %v8465
  %v8754 = vunpack.c.l.b16 %v8466
  %v8755 = vunpack.c.l.b16 %v8467
  %v8756 = vunpack.c.l.b16 %v8468
  %v8757 = vunpack.c.l.b16 %v8469
  %v8758 = vunpack.c.l.b16 %v8470
  %v8759 = vunpack.c.l.b16 %v8471
  %v8760 = vunpack.c.l.b16 %v8472
  %v8761 = vunpack.c.l.b16 %v8473
  %v8762 = vunpack.c.l.b16 %v8474
  %v8763 = vunpack.c.l.b16 %v8475
  %v8764 = vunpack.c.l.b16 %v8476
  %v8765 = vunpack.c.l.b16 %v8477
  %v8766 = vunpack.c.l.b16 %v8478
  %v8767 = vunpack.c.l.b16 %v8479
  %v8768 = vunpack.c.l.b16 %v8480
  %v8769 = vunpack.c.l.b16 %v8481
  %v8770 = vunpack.c.l.b16 %v8482
  %v8771 = vunpack.c.l.b16 %v8483
  %v8772 = vunpack.c.l.b16 %v8484
  %v8773 = vunpack.c.l.b16 %v8485
  %v8774 = vunpack.c.l.b16 %v8486
  %v8775 = vpack.c.b16 %v8632, %v8631
  %v8776 = vpack.c.b16 %v8634, %v8633
  %v8777 = vpack.c.b16 %v8636, %v8635
  %v8778 = vpack.c.b16 %v8638, %v8637
  %v8779 = vpack.c.b16 %v8640, %v8639
  %v8780 = vpack.c.b16 %v8642, %v8641
  %v8781 = vpack.c.b16 %v8644, %v8643
  %v8782 = vpack.c.b16 %v8646, %v8645
  %v8783 = vpack.c.b16 %v8648, %v8647
  %v8784 = vpack.c.b16 %v8650, %v8649
  %v8785 = vpack.c.b16 %v8652, %v8651
  %v8786 = vpack.c.b16 %v8654, %v8653
  %v8787 = vpack.c.b16 %v8656, %v8655
  %v8788 = vpack.c.b16 %v8658, %v8657
  %v8789 = vpack.c.b16 %v8660, %v8659
  %v8790 = vpack.c.b16 %v8662, %v8661
  %v8791 = vpack.c.b16 %v8664, %v8663
  %v8792 = vpack.c.b16 %v8666, %v8665
  %v8793 = vpack.c.b16 %v8668, %v8667
  %v8794 = vpack.c.b16 %v8670, %v8669
  %v8795 = vpack.c.b16 %v8672, %v8671
  %v8796 = vpack.c.b16 %v8674, %v8673
  %v8797 = vpack.c.b16 %v8676, %v8675
  %v8798 = vpack.c.b16 %v8678, %v8677
  %v8799 = vpack.c.b16 %v8680, %v8679
  %v8800 = vpack.c.b16 %v8682, %v8681
  %v8801 = vpack.c.b16 %v8684, %v8683
  %v8802 = vpack.c.b16 %v8686, %v8685
  %v8803 = vpack.c.b16 %v8688, %v8687
  %v8804 = vpack.c.b16 %v8690, %v8689
  %v8805 = vpack.c.b16 %v8692, %v8691
  %v8806 = vpack.c.b16 %v8694, %v8693
  %v8807 = vpack.c.b16 %v8696, %v8695
  %v8808 = vpack.c.b16 %v8698, %v8697
  %v8809 = vpack.c.b16 %v8700, %v8699
  %v8810 = vpack.c.b16 %v8702, %v8701
  %v8811 = vpack.c.b16 %v8704, %v8703
  %v8812 = vpack.c.b16 %v8706, %v8705
  %v8813 = vpack.c.b16 %v8708, %v8707
  %v8814 = vpack.c.b16 %v8710, %v8709
  %v8815 = vpack.c.b16 %v8712, %v8711
  %v8816 = vpack.c.b16 %v8714, %v8713
  %v8817 = vpack.c.b16 %v8716, %v8715
  %v8818 = vpack.c.b16 %v8718, %v8717
  %v8819 = vpack.c.b16 %v8720, %v8719
  %v8820 = vpack.c.b16 %v8722, %v8721
  %v8821 = vpack.c.b16 %v8724, %v8723
  %v8822 = vpack.c.b16 %v8726, %v8725
  %v8823 = vpack.c.b16 %v8728, %v8727
  %v8824 = vpack.c.b16 %v8730, %v8729
  %v8825 = vpack.c.b16 %v8732, %v8731
  %v8826 = vpack.c.b16 %v8734, %v8733
  %v8827 = vpack.c.b16 %v8736, %v8735
  %v8828 = vpack.c.b16 %v8738, %v8737
  %v8829 = vpack.c.b16 %v8740, %v8739
  %v8830 = vpack.c.b16 %v8742, %v8741
  %v8831 = vpack.c.b16 %v8744, %v8743
  %v8832 = vpack.c.b16 %v8746, %v8745
  %v8833 = vpack.c.b16 %v8748, %v8747
  %v8834 = vpack.c.b16 %v8750, %v8749
  %v8835 = vpack.c.b16 %v8752, %v8751
  %v8836 = vpack.c.b16 %v8754, %v8753
  %v8837 = vpack.c.b16 %v8756, %v8755
  %v8838 = vpack.c.b16 %v8758, %v8757
  %v8839 = vpack.c.b16 %v8760, %v8759
  %v8840 = vpack.c.b16 %v8762, %v8761
  %v8841 = vpack.c.b16 %v8764, %v8763
  %v8842 = vpack.c.b16 %v8766, %v8765
  %v8843 = vpack.c.b16 %v8768, %v8767
  %v8844 = vpack.c.b16 %v8770, %v8769
  %v8845 = vpack.c.b16 %v8772, %v8771
  %v8846 = vpack.c.b16 %v8774, %v8773
  %8919 = vmatprep.subr.bf16.mxu0 0
  %8920 = vmatpush1.bf16.msra.mxu0 %v8782
  %8921 = vmatprep.subr.bf16.mxu0 0
  %8922 = vmatpush1.bf16.msra.mxu0 %v8781
  %8923 = vmatprep.subr.bf16.mxu0 0
  %8924 = vmatpush1.bf16.msra.mxu0 %v8780
  %8925 = vmatprep.subr.bf16.mxu0 0
  %8926 = vmatpush1.bf16.msra.mxu0 %v8779
  %8927 = vmatprep.subr.bf16.mxu0 0
  %8928 = vmatpush1.bf16.msra.mxu0 %v8778
  %8929 = vmatprep.subr.bf16.mxu0 0
  %8930 = vmatpush1.bf16.msra.mxu0 %v8777
  %8931 = vmatprep.subr.bf16.mxu0 0
  %8932 = vmatpush1.bf16.msra.mxu0 %v8776
  %8933 = vmatprep.subr.bf16.mxu0 0
  %8934 = vmatpush1.bf16.msra.mxu0 %v8775
  %8935 = vmatprep.subr.bf16.mxu0 0
  %8936 = vmatpush2.bf16.msra.mxu0 %v8790
  %8937 = vmatprep.subr.bf16.mxu0 0
  %8938 = vmatpush2.bf16.msra.mxu0 %v8789
  %8939 = vmatprep.subr.bf16.mxu0 0
  %8940 = vmatpush2.bf16.msra.mxu0 %v8788
  %8941 = vmatprep.subr.bf16.mxu0 0
  %8942 = vmatpush2.bf16.msra.mxu0 %v8787
  %8943 = vmatprep.subr.bf16.mxu0 0
  %8944 = vmatpush2.bf16.msra.mxu0 %v8786
  %8945 = vmatprep.subr.bf16.mxu0 0
  %8946 = vmatpush2.bf16.msra.mxu0 %v8785
  %8947 = vmatprep.subr.bf16.mxu0 0
  %8948 = vmatpush2.bf16.msra.mxu0 %v8784
  %8949 = vmatprep.subr.bf16.mxu0 0
  %8950 = vmatpush2.bf16.msra.mxu0 %v8783
  %8951 = vmatprep.mubr.bf16.mxu0 %v8335
  %8952 = vmatmul.mubr.bf16.gmra.mxu0 %v8334
  %v8953 = vpop.f32.mrf.mxu0
  %v8954 = vadd.f32 %v33, %v8953
  %v8955 = vpop.f32.mrf.mxu0
  %v8956 = vpop.f32.mrf.mxu0
  %v8957 = vpop.f32.mrf.mxu0
  %8958 = vdwg.mxu0
  %8959 = vmatprep.subr.bf16.mxu0 0
  %8960 = vmatpush1.bf16.msra.mxu0 %v8798
  %8961 = vmatprep.subr.bf16.mxu0 0
  %8962 = vmatpush1.bf16.msra.mxu0 %v8797
  %8963 = vmatprep.subr.bf16.mxu0 0
  %8964 = vmatpush1.bf16.msra.mxu0 %v8796
  %8965 = vmatprep.subr.bf16.mxu0 0
  %8966 = vmatpush1.bf16.msra.mxu0 %v8795
  %8967 = vmatprep.subr.bf16.mxu0 0
  %8968 = vmatpush1.bf16.msra.mxu0 %v8794
  %8969 = vmatprep.subr.bf16.mxu0 0
  %8970 = vmatpush1.bf16.msra.mxu0 %v8793
  %8971 = vmatprep.subr.bf16.mxu0 0
  %8972 = vmatpush1.bf16.msra.mxu0 %v8792
  %8973 = vmatprep.subr.bf16.mxu0 0
  %8974 = vmatpush1.bf16.msra.mxu0 %v8791
  %8975 = vmatprep.subr.bf16.mxu0 0
  %8976 = vmatpush2.bf16.msra.mxu0 %v8806
  %8977 = vmatprep.subr.bf16.mxu0 0
  %8978 = vmatpush2.bf16.msra.mxu0 %v8805
  %8979 = vmatprep.subr.bf16.mxu0 0
  %8980 = vmatpush2.bf16.msra.mxu0 %v8804
  %8981 = vmatprep.subr.bf16.mxu0 0
  %8982 = vmatpush2.bf16.msra.mxu0 %v8803
  %8983 = vmatprep.subr.bf16.mxu0 0
  %8984 = vmatpush2.bf16.msra.mxu0 %v8802
  %8985 = vmatprep.subr.bf16.mxu0 0
  %8986 = vmatpush2.bf16.msra.mxu0 %v8801
  %8987 = vmatprep.subr.bf16.mxu0 0
  %8988 = vmatpush2.bf16.msra.mxu0 %v8800
  %8989 = vmatprep.subr.bf16.mxu0 0
  %8990 = vmatpush2.bf16.msra.mxu0 %v8799
  %8991 = vmatprep.mubr.bf16.mxu0 %v8337
  %8992 = vmatmul.mubr.bf16.gmra.mxu0 %v8336
  %v8993 = vpop.f32.mrf.mxu0
  %v8994 = vadd.f32 %v8954, %v8993
  %v8995 = vpop.f32.mrf.mxu0
  %v8996 = vpop.f32.mrf.mxu0
  %v8997 = vpop.f32.mrf.mxu0
  %8998 = vdwg.mxu0
  %8999 = vmatprep.subr.bf16.mxu0 0
  %9000 = vmatpush1.bf16.msra.mxu0 %v8814
  %9001 = vmatprep.subr.bf16.mxu0 0
  %9002 = vmatpush1.bf16.msra.mxu0 %v8813
  %9003 = vmatprep.subr.bf16.mxu0 0
  %9004 = vmatpush1.bf16.msra.mxu0 %v8812
  %9005 = vmatprep.subr.bf16.mxu0 0
  %9006 = vmatpush1.bf16.msra.mxu0 %v8811
  %9007 = vmatprep.subr.bf16.mxu0 0
  %9008 = vmatpush1.bf16.msra.mxu0 %v8810
  %9009 = vmatprep.subr.bf16.mxu0 0
  %9010 = vmatpush1.bf16.msra.mxu0 %v8809
  %9011 = vmatprep.subr.bf16.mxu0 0
  %9012 = vmatpush1.bf16.msra.mxu0 %v8808
  %9013 = vmatprep.subr.bf16.mxu0 0
  %9014 = vmatpush1.bf16.msra.mxu0 %v8807
  %9015 = vmatprep.subr.bf16.mxu0 0
  %9016 = vmatpush2.bf16.msra.mxu0 %v8822
  %9017 = vmatprep.subr.bf16.mxu0 0
  %9018 = vmatpush2.bf16.msra.mxu0 %v8821
  %9019 = vmatprep.subr.bf16.mxu0 0
  %9020 = vmatpush2.bf16.msra.mxu0 %v8820
  %9021 = vmatprep.subr.bf16.mxu0 0
  %9022 = vmatpush2.bf16.msra.mxu0 %v8819
  %9023 = vmatprep.subr.bf16.mxu0 0
  %9024 = vmatpush2.bf16.msra.mxu0 %v8818
  %9025 = vmatprep.subr.bf16.mxu0 0
  %9026 = vmatpush2.bf16.msra.mxu0 %v8817
  %9027 = vmatprep.subr.bf16.mxu0 0
  %9028 = vmatpush2.bf16.msra.mxu0 %v8816
  %9029 = vmatprep.subr.bf16.mxu0 0
  %9030 = vmatpush2.bf16.msra.mxu0 %v8815
  %9031 = vmatprep.mubr.bf16.mxu0 %v8339
  %9032 = vmatmul.mubr.bf16.gmra.mxu0 %v8338
  %v9033 = vpop.f32.mrf.mxu0
  %v9034 = vadd.f32 %v8994, %v9033
  %v9035 = vpop.f32.mrf.mxu0
  %v9036 = vpop.f32.mrf.mxu0
  %v9037 = vpop.f32.mrf.mxu0
  %9038 = vdwg.mxu0
  %9039 = vmatprep.subr.bf16.mxu0 0
  %9040 = vmatpush1.bf16.msra.mxu0 %v8830
  %9041 = vmatprep.subr.bf16.mxu0 0
  %9042 = vmatpush1.bf16.msra.mxu0 %v8829
  %9043 = vmatprep.subr.bf16.mxu0 0
  %9044 = vmatpush1.bf16.msra.mxu0 %v8828
  %9045 = vmatprep.subr.bf16.mxu0 0
  %9046 = vmatpush1.bf16.msra.mxu0 %v8827
  %9047 = vmatprep.subr.bf16.mxu0 0
  %9048 = vmatpush1.bf16.msra.mxu0 %v8826
  %9049 = vmatprep.subr.bf16.mxu0 0
  %9050 = vmatpush1.bf16.msra.mxu0 %v8825
  %9051 = vmatprep.subr.bf16.mxu0 0
  %9052 = vmatpush1.bf16.msra.mxu0 %v8824
  %9053 = vmatprep.subr.bf16.mxu0 0
  %9054 = vmatpush1.bf16.msra.mxu0 %v8823
  %9055 = vmatprep.subr.bf16.mxu0 0
  %9056 = vmatpush2.bf16.msra.mxu0 %v8838
  %9057 = vmatprep.subr.bf16.mxu0 0
  %9058 = vmatpush2.bf16.msra.mxu0 %v8837
  %9059 = vmatprep.subr.bf16.mxu0 0
  %9060 = vmatpush2.bf16.msra.mxu0 %v8836
  %9061 = vmatprep.subr.bf16.mxu0 0
  %9062 = vmatpush2.bf16.msra.mxu0 %v8835
  %9063 = vmatprep.subr.bf16.mxu0 0
  %9064 = vmatpush2.bf16.msra.mxu0 %v8834
  %9065 = vmatprep.subr.bf16.mxu0 0
  %9066 = vmatpush2.bf16.msra.mxu0 %v8833
  %9067 = vmatprep.subr.bf16.mxu0 0
  %9068 = vmatpush2.bf16.msra.mxu0 %v8832
  %9069 = vmatprep.subr.bf16.mxu0 0
  %9070 = vmatpush2.bf16.msra.mxu0 %v8831
  %9071 = vmatprep.mubr.bf16.mxu0 %v8341
  %9072 = vmatmul.mubr.bf16.gmra.mxu0 %v8340
  %v9073 = vpop.f32.mrf.mxu0
  %v9074 = vadd.f32 %v9034, %v9073
  %v9075 = vpop.f32.mrf.mxu0
  %v9076 = vpop.f32.mrf.mxu0
  %v9077 = vpop.f32.mrf.mxu0
  %9078 = vdwg.mxu0
  %9079 = vmatprep.subr.bf16.mxu0 0
  %9080 = vmatpush1.bf16.msra.mxu0 %v8846
  %9081 = vmatprep.subr.bf16.mxu0 0
  %9082 = vmatpush1.bf16.msra.mxu0 %v8845
  %9083 = vmatprep.subr.bf16.mxu0 0
  %9084 = vmatpush1.bf16.msra.mxu0 %v8844
  %9085 = vmatprep.subr.bf16.mxu0 0
  %9086 = vmatpush1.bf16.msra.mxu0 %v8843
  %9087 = vmatprep.subr.bf16.mxu0 0
  %9088 = vmatpush1.bf16.msra.mxu0 %v8842
  %9089 = vmatprep.subr.bf16.mxu0 0
  %9090 = vmatpush1.bf16.msra.mxu0 %v8841
  %9091 = vmatprep.subr.bf16.mxu0 0
  %9092 = vmatpush1.bf16.msra.mxu0 %v8840
  %9093 = vmatprep.subr.bf16.mxu0 0
  %9094 = vmatpush1.bf16.msra.mxu0 %v8839
  %9095 = vmatprep.subr.bf16.mxu0 0
  %9096 = vmatpush2.bf16.msra.mxu0 0
  %9097 = vmatprep.subr.bf16.mxu0 0
  %9098 = vmatpush2.bf16.msra.mxu0 0
  %9099 = vmatprep.subr.bf16.mxu0 0
  %9100 = vmatpush2.bf16.msra.mxu0 0
  %9101 = vmatprep.subr.bf16.mxu0 0
  %9102 = vmatpush2.bf16.msra.mxu0 0
  %9103 = vmatprep.subr.bf16.mxu0 0
  %9104 = vmatpush2.bf16.msra.mxu0 0
  %9105 = vmatprep.subr.bf16.mxu0 0
  %9106 = vmatpush2.bf16.msra.mxu0 0
  %9107 = vmatprep.subr.bf16.mxu0 0
  %9108 = vmatpush2.bf16.msra.mxu0 0
  %9109 = vmatprep.subr.bf16.mxu0 0
  %9110 = vmatpush2.bf16.msra.mxu0 0
  %9111 = vmatprep.mubr.bf16.mxu0 0
  %9112 = vmatmul.mubr.bf16.gmra.mxu0 %v8342
  %v9113 = vpop.f32.mrf.mxu0
  %v9114 = vadd.f32 %v9074, %v9113
  %v9115 = vpop.f32.mrf.mxu0
  %v9116 = vpop.f32.mrf.mxu0
  %v9117 = vpop.f32.mrf.mxu0
  %9118 = vdwg.mxu0
  %v9119 = vmax.f32 %v9114, 0.0
  %v9120 = vadd.f32 %v8298, %v9119
  %9121 = vst [vmem:[%s2520] sm:$0xff] %v9120
  %v9122 = vld [vmem:[%s1694] sm:$0xff]
  %v9124 = vrot.slane %v9120, 4
  %v9126 = vsel %vm42, 0.0, %v9124
  %v9127 = vsel %vm42, %v9124, 0.0
  %v9130 = vrot.slane %v9126, 1
  %v9131 = vrot.slane %v9127, 1
  %v9132 = vsel %vm47, %v9130, %v9131
  %v9134 = vrot.slane %v9126, 2
  %v9135 = vrot.slane %v9127, 2
  %v9136 = vsel %vm52, %v9134, %v9135
  %v9138 = vrot.slane %v9126, 3
  %v9139 = vrot.slane %v9127, 3
  %v9140 = vsel %vm57, %v9138, %v9139
  %v9142 = vrot.slane %v9126, 4
  %v9143 = vrot.slane %v9127, 4
  %v9144 = vsel %vm42, %v9142, %v9143
  %v9146 = vrot.slane %v9126, 5
  %v9147 = vrot.slane %v9127, 5
  %v9148 = vsel %vm66, %v9146, %v9147
  %v9150 = vrot.slane %v9126, 6
  %v9151 = vrot.slane %v9127, 6
  %v9152 = vsel %vm71, %v9150, %v9151
  %v9154 = vrot.slane %v9126, 7
  %v9155 = vrot.slane %v9127, 7
  %v9156 = vsel %vm76, %v9154, %v9155
  %v9158 = vpack.c.bf16 %v9126, %v9126
  %v9159 = vpack.c.bf16 %v9132, %v9132
  %v9160 = vpack.c.bf16 %v9136, %v9136
  %v9161 = vpack.c.bf16 %v9140, %v9140
  %v9162 = vpack.c.bf16 %v9144, %v9144
  %v9163 = vpack.c.bf16 %v9148, %v9148
  %v9164 = vpack.c.bf16 %v9152, %v9152
  %v9165 = vpack.c.bf16 %v9156, %v9156
  %v9166 = vpack.c.bf16 %v9127, %v9127
  %v9167 = vld [vmem:[%s3] sm:$0xf]
  %v9168 = vld [vmem:[%s3 + $0x4] sm:$0xf]
  %v9169 = vld [vmem:[%s3 + $0x8] sm:$0xf]
  %v9170 = vld [vmem:[%s3 + $0xc] sm:$0xf]
  %v9171 = vld [vmem:[%s3 + $0x10] sm:$0xf]
  %v9172 = vld [vmem:[%s3 + $0x14] sm:$0xf]
  %v9173 = vld [vmem:[%s3 + $0x18] sm:$0xf]
  %v9174 = vld [vmem:[%s3 + $0x1c] sm:$0xf]
  %v9175 = vld [vmem:[%s3 + $0x20] sm:$0xf]
  %v9176 = vld [vmem:[%s3 + $0x24] sm:$0xf]
  %v9177 = vld [vmem:[%s3 + $0x28] sm:$0xf]
  %v9178 = vld [vmem:[%s3 + $0x2c] sm:$0xf]
  %v9179 = vld [vmem:[%s3 + $0x30] sm:$0xf]
  %v9180 = vld [vmem:[%s3 + $0x34] sm:$0xf]
  %v9181 = vld [vmem:[%s3 + $0x38] sm:$0xf]
  %v9182 = vld [vmem:[%s3 + $0x3c] sm:$0xf]
  %v9183 = vld [vmem:[%s3 + $0x40] sm:$0xf]
  %v9184 = vld [vmem:[%s3 + $0x44] sm:$0xf]
  %v9185 = vld [vmem:[%s3 + $0x48] sm:$0xf]
  %v9186 = vld [vmem:[%s3 + $0x4c] sm:$0xf]
  %v9187 = vld [vmem:[%s3 + $0x50] sm:$0xf]
  %v9188 = vld [vmem:[%s3 + $0x54] sm:$0xf]
  %v9189 = vld [vmem:[%s3 + $0x58] sm:$0xf]
  %v9190 = vld [vmem:[%s3 + $0x5c] sm:$0xf]
  %v9191 = vld [vmem:[%s3 + $0x60] sm:$0xf]
  %v9192 = vld [vmem:[%s3 + $0x64] sm:$0xf]
  %v9193 = vld [vmem:[%s3 + $0x68] sm:$0xf]
  %v9194 = vld [vmem:[%s3 + $0x6c] sm:$0xf]
  %v9195 = vld [vmem:[%s3 + $0x70] sm:$0xf]
  %v9196 = vld [vmem:[%s3 + $0x74] sm:$0xf]
  %v9197 = vld [vmem:[%s3 + $0x78] sm:$0xf]
  %v9198 = vld [vmem:[%s3 + $0x7c] sm:$0xf]
  %v9199 = vld [vmem:[%s3 + $0x80] sm:$0xf]
  %v9200 = vld [vmem:[%s3 + $0x84] sm:$0xf]
  %v9201 = vld [vmem:[%s3 + $0x88] sm:$0xf]
  %v9202 = vld [vmem:[%s3 + $0x8c] sm:$0xf]
  %v9203 = vld [vmem:[%s3 + $0x90] sm:$0xf]
  %v9204 = vld [vmem:[%s3 + $0x94] sm:$0xf]
  %v9205 = vld [vmem:[%s3 + $0x98] sm:$0xf]
  %v9206 = vld [vmem:[%s3 + $0x9c] sm:$0xf]
  %v9207 = vld [vmem:[%s3 + $0xa0] sm:$0xf]
  %v9208 = vld [vmem:[%s3 + $0xa4] sm:$0xf]
  %v9209 = vld [vmem:[%s3 + $0xa8] sm:$0xf]
  %v9210 = vld [vmem:[%s3 + $0xac] sm:$0xf]
  %v9211 = vld [vmem:[%s3 + $0xb0] sm:$0xf]
  %v9212 = vld [vmem:[%s3 + $0xb4] sm:$0xf]
  %v9213 = vld [vmem:[%s3 + $0xb8] sm:$0xf]
  %v9214 = vld [vmem:[%s3 + $0xbc] sm:$0xf]
  %v9215 = vld [vmem:[%s3 + $0xc0] sm:$0xf]
  %v9216 = vld [vmem:[%s3 + $0xc4] sm:$0xf]
  %v9217 = vld [vmem:[%s3 + $0xc8] sm:$0xf]
  %v9218 = vld [vmem:[%s3 + $0xcc] sm:$0xf]
  %v9219 = vld [vmem:[%s3 + $0xd0] sm:$0xf]
  %v9220 = vld [vmem:[%s3 + $0xd4] sm:$0xf]
  %v9221 = vld [vmem:[%s3 + $0xd8] sm:$0xf]
  %v9222 = vld [vmem:[%s3 + $0xdc] sm:$0xf]
  %v9223 = vld [vmem:[%s3 + $0xe0] sm:$0xf]
  %v9224 = vld [vmem:[%s3 + $0xe4] sm:$0xf]
  %v9225 = vld [vmem:[%s3 + $0xe8] sm:$0xf]
  %v9226 = vld [vmem:[%s3 + $0xec] sm:$0xf]
  %v9227 = vld [vmem:[%s3 + $0xf0] sm:$0xf]
  %v9228 = vld [vmem:[%s3 + $0xf4] sm:$0xf]
  %v9229 = vld [vmem:[%s3 + $0xf8] sm:$0xf]
  %v9230 = vld [vmem:[%s3 + $0xfc] sm:$0xf]
  %v9231 = vld [vmem:[%s3 + $0x100] sm:$0xf]
  %v9232 = vld [vmem:[%s3 + $0x104] sm:$0xf]
  %v9233 = vld [vmem:[%s3 + $0x108] sm:$0xf]
  %v9234 = vld [vmem:[%s3 + $0x10c] sm:$0xf]
  %v9235 = vld [vmem:[%s3 + $0x110] sm:$0xf]
  %v9236 = vld [vmem:[%s3 + $0x114] sm:$0xf]
  %v9237 = vld [vmem:[%s3 + $0x118] sm:$0xf]
  %v9238 = vld [vmem:[%s3 + $0x11c] sm:$0xf]
  %v9239 = vld [vmem:[%s3 + $0x120] sm:$0xf]
  %v9240 = vld [vmem:[%s3 + $0x124] sm:$0xf]
  %v9241 = vld [vmem:[%s3 + $0x128] sm:$0xf]
  %v9242 = vld [vmem:[%s3 + $0x12c] sm:$0xf]
  %v9243 = vld [vmem:[%s3 + $0x130] sm:$0xf]
  %v9244 = vld [vmem:[%s3 + $0x134] sm:$0xf]
  %v9245 = vld [vmem:[%s3 + $0x138] sm:$0xf]
  %v9246 = vld [vmem:[%s3 + $0x13c] sm:$0xf]
  %v9247 = vld [vmem:[%s3 + $0x140] sm:$0xf]
  %v9248 = vld [vmem:[%s3 + $0x144] sm:$0xf]
  %v9249 = vld [vmem:[%s3 + $0x148] sm:$0xf]
  %v9250 = vld [vmem:[%s3 + $0x14c] sm:$0xf]
  %v9251 = vld [vmem:[%s3 + $0x150] sm:$0xf]
  %v9252 = vld [vmem:[%s3 + $0x154] sm:$0xf]
  %v9253 = vld [vmem:[%s3 + $0x158] sm:$0xf]
  %v9254 = vld [vmem:[%s3 + $0x15c] sm:$0xf]
  %v9255 = vld [vmem:[%s3 + $0x160] sm:$0xf]
  %v9256 = vld [vmem:[%s3 + $0x164] sm:$0xf]
  %v9257 = vld [vmem:[%s3 + $0x168] sm:$0xf]
  %v9258 = vld [vmem:[%s3 + $0x16c] sm:$0xf]
  %v9259 = vld [vmem:[%s3 + $0x170] sm:$0xf]
  %v9260 = vld [vmem:[%s3 + $0x174] sm:$0xf]
  %v9261 = vld [vmem:[%s3 + $0x178] sm:$0xf]
  %v9262 = vld [vmem:[%s3 + $0x17c] sm:$0xf]
  %v9263 = vld [vmem:[%s3 + $0x180] sm:$0xf]
  %v9264 = vld [vmem:[%s3 + $0x184] sm:$0xf]
  %v9265 = vld [vmem:[%s3 + $0x188] sm:$0xf]
  %v9266 = vld [vmem:[%s3 + $0x18c] sm:$0xf]
  %v9267 = vld [vmem:[%s3 + $0x190] sm:$0xf]
  %v9268 = vld [vmem:[%s3 + $0x194] sm:$0xf]
  %v9269 = vld [vmem:[%s3 + $0x198] sm:$0xf]
  %v9270 = vld [vmem:[%s3 + $0x19c] sm:$0xf]
  %v9271 = vld [vmem:[%s3 + $0x1a0] sm:$0xf]
  %v9272 = vld [vmem:[%s3 + $0x1a4] sm:$0xf]
  %v9273 = vld [vmem:[%s3 + $0x1a8] sm:$0xf]
  %v9274 = vld [vmem:[%s3 + $0x1ac] sm:$0xf]
  %v9275 = vld [vmem:[%s3 + $0x1b0] sm:$0xf]
  %v9276 = vld [vmem:[%s3 + $0x1b4] sm:$0xf]
  %v9277 = vld [vmem:[%s3 + $0x1b8] sm:$0xf]
  %v9278 = vld [vmem:[%s3 + $0x1bc] sm:$0xf]
  %v9279 = vld [vmem:[%s3 + $0x1c0] sm:$0xf]
  %v9280 = vld [vmem:[%s3 + $0x1c4] sm:$0xf]
  %v9281 = vld [vmem:[%s3 + $0x1c8] sm:$0xf]
  %v9282 = vld [vmem:[%s3 + $0x1cc] sm:$0xf]
  %v9283 = vld [vmem:[%s3 + $0x1d0] sm:$0xf]
  %v9284 = vld [vmem:[%s3 + $0x1d4] sm:$0xf]
  %v9285 = vld [vmem:[%s3 + $0x1d8] sm:$0xf]
  %v9286 = vld [vmem:[%s3 + $0x1dc] sm:$0xf]
  %v9287 = vld [vmem:[%s3 + $0x1e0] sm:$0xf]
  %v9288 = vld [vmem:[%s3 + $0x1e4] sm:$0xf]
  %v9289 = vld [vmem:[%s3 + $0x1e8] sm:$0xf]
  %v9290 = vld [vmem:[%s3 + $0x1ec] sm:$0xf]
  %v9291 = vld [vmem:[%s3 + $0x1f0] sm:$0xf]
  %v9292 = vld [vmem:[%s3 + $0x1f4] sm:$0xf]
  %v9293 = vld [vmem:[%s3 + $0x1f8] sm:$0xf]
  %v9294 = vld [vmem:[%s3 + $0x1fc] sm:$0xf]
  %v9295 = vld [vmem:[%s3 + $0x200] sm:$0xf]
  %v9296 = vld [vmem:[%s3 + $0x204] sm:$0xf]
  %v9297 = vld [vmem:[%s3 + $0x208] sm:$0xf]
  %v9298 = vld [vmem:[%s3 + $0x20c] sm:$0xf]
  %v9299 = vld [vmem:[%s3 + $0x210] sm:$0xf]
  %v9300 = vld [vmem:[%s3 + $0x214] sm:$0xf]
  %v9301 = vld [vmem:[%s3 + $0x218] sm:$0xf]
  %v9302 = vld [vmem:[%s3 + $0x21c] sm:$0xf]
  %v9303 = vld [vmem:[%s3 + $0x220] sm:$0xf]
  %v9304 = vld [vmem:[%s3 + $0x224] sm:$0xf]
  %v9305 = vld [vmem:[%s3 + $0x228] sm:$0xf]
  %v9306 = vld [vmem:[%s3 + $0x22c] sm:$0xf]
  %v9307 = vld [vmem:[%s3 + $0x230] sm:$0xf]
  %v9308 = vld [vmem:[%s3 + $0x234] sm:$0xf]
  %v9309 = vld [vmem:[%s3 + $0x238] sm:$0xf]
  %v9310 = vld [vmem:[%s3 + $0x23c] sm:$0xf]
  %v9455 = vunpack.c.l.b16 %v9167
  %v9456 = vunpack.c.l.b16 %v9168
  %v9457 = vunpack.c.l.b16 %v9169
  %v9458 = vunpack.c.l.b16 %v9170
  %v9459 = vunpack.c.l.b16 %v9171
  %v9460 = vunpack.c.l.b16 %v9172
  %v9461 = vunpack.c.l.b16 %v9173
  %v9462 = vunpack.c.l.b16 %v9174
  %v9463 = vunpack.c.l.b16 %v9175
  %v9464 = vunpack.c.l.b16 %v9176
  %v9465 = vunpack.c.l.b16 %v9177
  %v9466 = vunpack.c.l.b16 %v9178
  %v9467 = vunpack.c.l.b16 %v9179
  %v9468 = vunpack.c.l.b16 %v9180
  %v9469 = vunpack.c.l.b16 %v9181
  %v9470 = vunpack.c.l.b16 %v9182
  %v9471 = vunpack.c.l.b16 %v9183
  %v9472 = vunpack.c.l.b16 %v9184
  %v9473 = vunpack.c.l.b16 %v9185
  %v9474 = vunpack.c.l.b16 %v9186
  %v9475 = vunpack.c.l.b16 %v9187
  %v9476 = vunpack.c.l.b16 %v9188
  %v9477 = vunpack.c.l.b16 %v9189
  %v9478 = vunpack.c.l.b16 %v9190
  %v9479 = vunpack.c.l.b16 %v9191
  %v9480 = vunpack.c.l.b16 %v9192
  %v9481 = vunpack.c.l.b16 %v9193
  %v9482 = vunpack.c.l.b16 %v9194
  %v9483 = vunpack.c.l.b16 %v9195
  %v9484 = vunpack.c.l.b16 %v9196
  %v9485 = vunpack.c.l.b16 %v9197
  %v9486 = vunpack.c.l.b16 %v9198
  %v9487 = vunpack.c.l.b16 %v9199
  %v9488 = vunpack.c.l.b16 %v9200
  %v9489 = vunpack.c.l.b16 %v9201
  %v9490 = vunpack.c.l.b16 %v9202
  %v9491 = vunpack.c.l.b16 %v9203
  %v9492 = vunpack.c.l.b16 %v9204
  %v9493 = vunpack.c.l.b16 %v9205
  %v9494 = vunpack.c.l.b16 %v9206
  %v9495 = vunpack.c.l.b16 %v9207
  %v9496 = vunpack.c.l.b16 %v9208
  %v9497 = vunpack.c.l.b16 %v9209
  %v9498 = vunpack.c.l.b16 %v9210
  %v9499 = vunpack.c.l.b16 %v9211
  %v9500 = vunpack.c.l.b16 %v9212
  %v9501 = vunpack.c.l.b16 %v9213
  %v9502 = vunpack.c.l.b16 %v9214
  %v9503 = vunpack.c.l.b16 %v9215
  %v9504 = vunpack.c.l.b16 %v9216
  %v9505 = vunpack.c.l.b16 %v9217
  %v9506 = vunpack.c.l.b16 %v9218
  %v9507 = vunpack.c.l.b16 %v9219
  %v9508 = vunpack.c.l.b16 %v9220
  %v9509 = vunpack.c.l.b16 %v9221
  %v9510 = vunpack.c.l.b16 %v9222
  %v9511 = vunpack.c.l.b16 %v9223
  %v9512 = vunpack.c.l.b16 %v9224
  %v9513 = vunpack.c.l.b16 %v9225
  %v9514 = vunpack.c.l.b16 %v9226
  %v9515 = vunpack.c.l.b16 %v9227
  %v9516 = vunpack.c.l.b16 %v9228
  %v9517 = vunpack.c.l.b16 %v9229
  %v9518 = vunpack.c.l.b16 %v9230
  %v9519 = vunpack.c.l.b16 %v9231
  %v9520 = vunpack.c.l.b16 %v9232
  %v9521 = vunpack.c.l.b16 %v9233
  %v9522 = vunpack.c.l.b16 %v9234
  %v9523 = vunpack.c.l.b16 %v9235
  %v9524 = vunpack.c.l.b16 %v9236
  %v9525 = vunpack.c.l.b16 %v9237
  %v9526 = vunpack.c.l.b16 %v9238
  %v9527 = vunpack.c.l.b16 %v9239
  %v9528 = vunpack.c.l.b16 %v9240
  %v9529 = vunpack.c.l.b16 %v9241
  %v9530 = vunpack.c.l.b16 %v9242
  %v9531 = vunpack.c.l.b16 %v9243
  %v9532 = vunpack.c.l.b16 %v9244
  %v9533 = vunpack.c.l.b16 %v9245
  %v9534 = vunpack.c.l.b16 %v9246
  %v9535 = vunpack.c.l.b16 %v9247
  %v9536 = vunpack.c.l.b16 %v9248
  %v9537 = vunpack.c.l.b16 %v9249
  %v9538 = vunpack.c.l.b16 %v9250
  %v9539 = vunpack.c.l.b16 %v9251
  %v9540 = vunpack.c.l.b16 %v9252
  %v9541 = vunpack.c.l.b16 %v9253
  %v9542 = vunpack.c.l.b16 %v9254
  %v9543 = vunpack.c.l.b16 %v9255
  %v9544 = vunpack.c.l.b16 %v9256
  %v9545 = vunpack.c.l.b16 %v9257
  %v9546 = vunpack.c.l.b16 %v9258
  %v9547 = vunpack.c.l.b16 %v9259
  %v9548 = vunpack.c.l.b16 %v9260
  %v9549 = vunpack.c.l.b16 %v9261
  %v9550 = vunpack.c.l.b16 %v9262
  %v9551 = vunpack.c.l.b16 %v9263
  %v9552 = vunpack.c.l.b16 %v9264
  %v9553 = vunpack.c.l.b16 %v9265
  %v9554 = vunpack.c.l.b16 %v9266
  %v9555 = vunpack.c.l.b16 %v9267
  %v9556 = vunpack.c.l.b16 %v9268
  %v9557 = vunpack.c.l.b16 %v9269
  %v9558 = vunpack.c.l.b16 %v9270
  %v9559 = vunpack.c.l.b16 %v9271
  %v9560 = vunpack.c.l.b16 %v9272
  %v9561 = vunpack.c.l.b16 %v9273
  %v9562 = vunpack.c.l.b16 %v9274
  %v9563 = vunpack.c.l.b16 %v9275
  %v9564 = vunpack.c.l.b16 %v9276
  %v9565 = vunpack.c.l.b16 %v9277
  %v9566 = vunpack.c.l.b16 %v9278
  %v9567 = vunpack.c.l.b16 %v9279
  %v9568 = vunpack.c.l.b16 %v9280
  %v9569 = vunpack.c.l.b16 %v9281
  %v9570 = vunpack.c.l.b16 %v9282
  %v9571 = vunpack.c.l.b16 %v9283
  %v9572 = vunpack.c.l.b16 %v9284
  %v9573 = vunpack.c.l.b16 %v9285
  %v9574 = vunpack.c.l.b16 %v9286
  %v9575 = vunpack.c.l.b16 %v9287
  %v9576 = vunpack.c.l.b16 %v9288
  %v9577 = vunpack.c.l.b16 %v9289
  %v9578 = vunpack.c.l.b16 %v9290
  %v9579 = vunpack.c.l.b16 %v9291
  %v9580 = vunpack.c.l.b16 %v9292
  %v9581 = vunpack.c.l.b16 %v9293
  %v9582 = vunpack.c.l.b16 %v9294
  %v9583 = vunpack.c.l.b16 %v9295
  %v9584 = vunpack.c.l.b16 %v9296
  %v9585 = vunpack.c.l.b16 %v9297
  %v9586 = vunpack.c.l.b16 %v9298
  %v9587 = vunpack.c.l.b16 %v9299
  %v9588 = vunpack.c.l.b16 %v9300
  %v9589 = vunpack.c.l.b16 %v9301
  %v9590 = vunpack.c.l.b16 %v9302
  %v9591 = vunpack.c.l.b16 %v9303
  %v9592 = vunpack.c.l.b16 %v9304
  %v9593 = vunpack.c.l.b16 %v9305
  %v9594 = vunpack.c.l.b16 %v9306
  %v9595 = vunpack.c.l.b16 %v9307
  %v9596 = vunpack.c.l.b16 %v9308
  %v9597 = vunpack.c.l.b16 %v9309
  %v9598 = vunpack.c.l.b16 %v9310
  %v9599 = vpack.c.b16 %v9456, %v9455
  %v9600 = vpack.c.b16 %v9458, %v9457
  %v9601 = vpack.c.b16 %v9460, %v9459
  %v9602 = vpack.c.b16 %v9462, %v9461
  %v9603 = vpack.c.b16 %v9464, %v9463
  %v9604 = vpack.c.b16 %v9466, %v9465
  %v9605 = vpack.c.b16 %v9468, %v9467
  %v9606 = vpack.c.b16 %v9470, %v9469
  %v9607 = vpack.c.b16 %v9472, %v9471
  %v9608 = vpack.c.b16 %v9474, %v9473
  %v9609 = vpack.c.b16 %v9476, %v9475
  %v9610 = vpack.c.b16 %v9478, %v9477
  %v9611 = vpack.c.b16 %v9480, %v9479
  %v9612 = vpack.c.b16 %v9482, %v9481
  %v9613 = vpack.c.b16 %v9484, %v9483
  %v9614 = vpack.c.b16 %v9486, %v9485
  %v9615 = vpack.c.b16 %v9488, %v9487
  %v9616 = vpack.c.b16 %v9490, %v9489
  %v9617 = vpack.c.b16 %v9492, %v9491
  %v9618 = vpack.c.b16 %v9494, %v9493
  %v9619 = vpack.c.b16 %v9496, %v9495
  %v9620 = vpack.c.b16 %v9498, %v9497
  %v9621 = vpack.c.b16 %v9500, %v9499
  %v9622 = vpack.c.b16 %v9502, %v9501
  %v9623 = vpack.c.b16 %v9504, %v9503
  %v9624 = vpack.c.b16 %v9506, %v9505
  %v9625 = vpack.c.b16 %v9508, %v9507
  %v9626 = vpack.c.b16 %v9510, %v9509
  %v9627 = vpack.c.b16 %v9512, %v9511
  %v9628 = vpack.c.b16 %v9514, %v9513
  %v9629 = vpack.c.b16 %v9516, %v9515
  %v9630 = vpack.c.b16 %v9518, %v9517
  %v9631 = vpack.c.b16 %v9520, %v9519
  %v9632 = vpack.c.b16 %v9522, %v9521
  %v9633 = vpack.c.b16 %v9524, %v9523
  %v9634 = vpack.c.b16 %v9526, %v9525
  %v9635 = vpack.c.b16 %v9528, %v9527
  %v9636 = vpack.c.b16 %v9530, %v9529
  %v9637 = vpack.c.b16 %v9532, %v9531
  %v9638 = vpack.c.b16 %v9534, %v9533
  %v9639 = vpack.c.b16 %v9536, %v9535
  %v9640 = vpack.c.b16 %v9538, %v9537
  %v9641 = vpack.c.b16 %v9540, %v9539
  %v9642 = vpack.c.b16 %v9542, %v9541
  %v9643 = vpack.c.b16 %v9544, %v9543
  %v9644 = vpack.c.b16 %v9546, %v9545
  %v9645 = vpack.c.b16 %v9548, %v9547
  %v9646 = vpack.c.b16 %v9550, %v9549
  %v9647 = vpack.c.b16 %v9552, %v9551
  %v9648 = vpack.c.b16 %v9554, %v9553
  %v9649 = vpack.c.b16 %v9556, %v9555
  %v9650 = vpack.c.b16 %v9558, %v9557
  %v9651 = vpack.c.b16 %v9560, %v9559
  %v9652 = vpack.c.b16 %v9562, %v9561
  %v9653 = vpack.c.b16 %v9564, %v9563
  %v9654 = vpack.c.b16 %v9566, %v9565
  %v9655 = vpack.c.b16 %v9568, %v9567
  %v9656 = vpack.c.b16 %v9570, %v9569
  %v9657 = vpack.c.b16 %v9572, %v9571
  %v9658 = vpack.c.b16 %v9574, %v9573
  %v9659 = vpack.c.b16 %v9576, %v9575
  %v9660 = vpack.c.b16 %v9578, %v9577
  %v9661 = vpack.c.b16 %v9580, %v9579
  %v9662 = vpack.c.b16 %v9582, %v9581
  %v9663 = vpack.c.b16 %v9584, %v9583
  %v9664 = vpack.c.b16 %v9586, %v9585
  %v9665 = vpack.c.b16 %v9588, %v9587
  %v9666 = vpack.c.b16 %v9590, %v9589
  %v9667 = vpack.c.b16 %v9592, %v9591
  %v9668 = vpack.c.b16 %v9594, %v9593
  %v9669 = vpack.c.b16 %v9596, %v9595
  %v9670 = vpack.c.b16 %v9598, %v9597
  %9743 = vmatprep.subr.bf16.mxu0 0
  %9744 = vmatpush1.bf16.msra.mxu0 %v9606
  %9745 = vmatprep.subr.bf16.mxu0 0
  %9746 = vmatpush1.bf16.msra.mxu0 %v9605
  %9747 = vmatprep.subr.bf16.mxu0 0
  %9748 = vmatpush1.bf16.msra.mxu0 %v9604
  %9749 = vmatprep.subr.bf16.mxu0 0
  %9750 = vmatpush1.bf16.msra.mxu0 %v9603
  %9751 = vmatprep.subr.bf16.mxu0 0
  %9752 = vmatpush1.bf16.msra.mxu0 %v9602
  %9753 = vmatprep.subr.bf16.mxu0 0
  %9754 = vmatpush1.bf16.msra.mxu0 %v9601
  %9755 = vmatprep.subr.bf16.mxu0 0
  %9756 = vmatpush1.bf16.msra.mxu0 %v9600
  %9757 = vmatprep.subr.bf16.mxu0 0
  %9758 = vmatpush1.bf16.msra.mxu0 %v9599
  %9759 = vmatprep.subr.bf16.mxu0 0
  %9760 = vmatpush2.bf16.msra.mxu0 %v9614
  %9761 = vmatprep.subr.bf16.mxu0 0
  %9762 = vmatpush2.bf16.msra.mxu0 %v9613
  %9763 = vmatprep.subr.bf16.mxu0 0
  %9764 = vmatpush2.bf16.msra.mxu0 %v9612
  %9765 = vmatprep.subr.bf16.mxu0 0
  %9766 = vmatpush2.bf16.msra.mxu0 %v9611
  %9767 = vmatprep.subr.bf16.mxu0 0
  %9768 = vmatpush2.bf16.msra.mxu0 %v9610
  %9769 = vmatprep.subr.bf16.mxu0 0
  %9770 = vmatpush2.bf16.msra.mxu0 %v9609
  %9771 = vmatprep.subr.bf16.mxu0 0
  %9772 = vmatpush2.bf16.msra.mxu0 %v9608
  %9773 = vmatprep.subr.bf16.mxu0 0
  %9774 = vmatpush2.bf16.msra.mxu0 %v9607
  %9775 = vmatprep.mubr.bf16.mxu0 %v9159
  %9776 = vmatmul.mubr.bf16.gmra.mxu0 %v9158
  %v9777 = vpop.f32.mrf.mxu0
  %v9778 = vadd.f32 %v33, %v9777
  %v9779 = vpop.f32.mrf.mxu0
  %v9780 = vpop.f32.mrf.mxu0
  %v9781 = vpop.f32.mrf.mxu0
  %9782 = vdwg.mxu0
  %9783 = vmatprep.subr.bf16.mxu0 0
  %9784 = vmatpush1.bf16.msra.mxu0 %v9622
  %9785 = vmatprep.subr.bf16.mxu0 0
  %9786 = vmatpush1.bf16.msra.mxu0 %v9621
  %9787 = vmatprep.subr.bf16.mxu0 0
  %9788 = vmatpush1.bf16.msra.mxu0 %v9620
  %9789 = vmatprep.subr.bf16.mxu0 0
  %9790 = vmatpush1.bf16.msra.mxu0 %v9619
  %9791 = vmatprep.subr.bf16.mxu0 0
  %9792 = vmatpush1.bf16.msra.mxu0 %v9618
  %9793 = vmatprep.subr.bf16.mxu0 0
  %9794 = vmatpush1.bf16.msra.mxu0 %v9617
  %9795 = vmatprep.subr.bf16.mxu0 0
  %9796 = vmatpush1.bf16.msra.mxu0 %v9616
  %9797 = vmatprep.subr.bf16.mxu0 0
  %9798 = vmatpush1.bf16.msra.mxu0 %v9615
  %9799 = vmatprep.subr.bf16.mxu0 0
  %9800 = vmatpush2.bf16.msra.mxu0 %v9630
  %9801 = vmatprep.subr.bf16.mxu0 0
  %9802 = vmatpush2.bf16.msra.mxu0 %v9629
  %9803 = vmatprep.subr.bf16.mxu0 0
  %9804 = vmatpush2.bf16.msra.mxu0 %v9628
  %9805 = vmatprep.subr.bf16.mxu0 0
  %9806 = vmatpush2.bf16.msra.mxu0 %v9627
  %9807 = vmatprep.subr.bf16.mxu0 0
  %9808 = vmatpush2.bf16.msra.mxu0 %v9626
  %9809 = vmatprep.subr.bf16.mxu0 0
  %9810 = vmatpush2.bf16.msra.mxu0 %v9625
  %9811 = vmatprep.subr.bf16.mxu0 0
  %9812 = vmatpush2.bf16.msra.mxu0 %v9624
  %9813 = vmatprep.subr.bf16.mxu0 0
  %9814 = vmatpush2.bf16.msra.mxu0 %v9623
  %9815 = vmatprep.mubr.bf16.mxu0 %v9161
  %9816 = vmatmul.mubr.bf16.gmra.mxu0 %v9160
  %v9817 = vpop.f32.mrf.mxu0
  %v9818 = vadd.f32 %v9778, %v9817
  %v9819 = vpop.f32.mrf.mxu0
  %v9820 = vpop.f32.mrf.mxu0
  %v9821 = vpop.f32.mrf.mxu0
  %9822 = vdwg.mxu0
  %9823 = vmatprep.subr.bf16.mxu0 0
  %9824 = vmatpush1.bf16.msra.mxu0 %v9638
  %9825 = vmatprep.subr.bf16.mxu0 0
  %9826 = vmatpush1.bf16.msra.mxu0 %v9637
  %9827 = vmatprep.subr.bf16.mxu0 0
  %9828 = vmatpush1.bf16.msra.mxu0 %v9636
  %9829 = vmatprep.subr.bf16.mxu0 0
  %9830 = vmatpush1.bf16.msra.mxu0 %v9635
  %9831 = vmatprep.subr.bf16.mxu0 0
  %9832 = vmatpush1.bf16.msra.mxu0 %v9634
  %9833 = vmatprep.subr.bf16.mxu0 0
  %9834 = vmatpush1.bf16.msra.mxu0 %v9633
  %9835 = vmatprep.subr.bf16.mxu0 0
  %9836 = vmatpush1.bf16.msra.mxu0 %v9632
  %9837 = vmatprep.subr.bf16.mxu0 0
  %9838 = vmatpush1.bf16.msra.mxu0 %v9631
  %9839 = vmatprep.subr.bf16.mxu0 0
  %9840 = vmatpush2.bf16.msra.mxu0 %v9646
  %9841 = vmatprep.subr.bf16.mxu0 0
  %9842 = vmatpush2.bf16.msra.mxu0 %v9645
  %9843 = vmatprep.subr.bf16.mxu0 0
  %9844 = vmatpush2.bf16.msra.mxu0 %v9644
  %9845 = vmatprep.subr.bf16.mxu0 0
  %9846 = vmatpush2.bf16.msra.mxu0 %v9643
  %9847 = vmatprep.subr.bf16.mxu0 0
  %9848 = vmatpush2.bf16.msra.mxu0 %v9642
  %9849 = vmatprep.subr.bf16.mxu0 0
  %9850 = vmatpush2.bf16.msra.mxu0 %v9641
  %9851 = vmatprep.subr.bf16.mxu0 0
  %9852 = vmatpush2.bf16.msra.mxu0 %v9640
  %9853 = vmatprep.subr.bf16.mxu0 0
  %9854 = vmatpush2.bf16.msra.mxu0 %v9639
  %9855 = vmatprep.mubr.bf16.mxu0 %v9163
  %9856 = vmatmul.mubr.bf16.gmra.mxu0 %v9162
  %v9857 = vpop.f32.mrf.mxu0
  %v9858 = vadd.f32 %v9818, %v9857
  %v9859 = vpop.f32.mrf.mxu0
  %v9860 = vpop.f32.mrf.mxu0
  %v9861 = vpop.f32.mrf.mxu0
  %9862 = vdwg.mxu0
  %9863 = vmatprep.subr.bf16.mxu0 0
  %9864 = vmatpush1.bf16.msra.mxu0 %v9654
  %9865 = vmatprep.subr.bf16.mxu0 0
  %9866 = vmatpush1.bf16.msra.mxu0 %v9653
  %9867 = vmatprep.subr.bf16.mxu0 0
  %9868 = vmatpush1.bf16.msra.mxu0 %v9652
  %9869 = vmatprep.subr.bf16.mxu0 0
  %9870 = vmatpush1.bf16.msra.mxu0 %v9651
  %9871 = vmatprep.subr.bf16.mxu0 0
  %9872 = vmatpush1.bf16.msra.mxu0 %v9650
  %9873 = vmatprep.subr.bf16.mxu0 0
  %9874 = vmatpush1.bf16.msra.mxu0 %v9649
  %9875 = vmatprep.subr.bf16.mxu0 0
  %9876 = vmatpush1.bf16.msra.mxu0 %v9648
  %9877 = vmatprep.subr.bf16.mxu0 0
  %9878 = vmatpush1.bf16.msra.mxu0 %v9647
  %9879 = vmatprep.subr.bf16.mxu0 0
  %9880 = vmatpush2.bf16.msra.mxu0 %v9662
  %9881 = vmatprep.subr.bf16.mxu0 0
  %9882 = vmatpush2.bf16.msra.mxu0 %v9661
  %9883 = vmatprep.subr.bf16.mxu0 0
  %9884 = vmatpush2.bf16.msra.mxu0 %v9660
  %9885 = vmatprep.subr.bf16.mxu0 0
  %9886 = vmatpush2.bf16.msra.mxu0 %v9659
  %9887 = vmatprep.subr.bf16.mxu0 0
  %9888 = vmatpush2.bf16.msra.mxu0 %v9658
  %9889 = vmatprep.subr.bf16.mxu0 0
  %9890 = vmatpush2.bf16.msra.mxu0 %v9657
  %9891 = vmatprep.subr.bf16.mxu0 0
  %9892 = vmatpush2.bf16.msra.mxu0 %v9656
  %9893 = vmatprep.subr.bf16.mxu0 0
  %9894 = vmatpush2.bf16.msra.mxu0 %v9655
  %9895 = vmatprep.mubr.bf16.mxu0 %v9165
  %9896 = vmatmul.mubr.bf16.gmra.mxu0 %v9164
  %v9897 = vpop.f32.mrf.mxu0
  %v9898 = vadd.f32 %v9858, %v9897
  %v9899 = vpop.f32.mrf.mxu0
  %v9900 = vpop.f32.mrf.mxu0
  %v9901 = vpop.f32.mrf.mxu0
  %9902 = vdwg.mxu0
  %9903 = vmatprep.subr.bf16.mxu0 0
  %9904 = vmatpush1.bf16.msra.mxu0 %v9670
  %9905 = vmatprep.subr.bf16.mxu0 0
  %9906 = vmatpush1.bf16.msra.mxu0 %v9669
  %9907 = vmatprep.subr.bf16.mxu0 0
  %9908 = vmatpush1.bf16.msra.mxu0 %v9668
  %9909 = vmatprep.subr.bf16.mxu0 0
  %9910 = vmatpush1.bf16.msra.mxu0 %v9667
  %9911 = vmatprep.subr.bf16.mxu0 0
  %9912 = vmatpush1.bf16.msra.mxu0 %v9666
  %9913 = vmatprep.subr.bf16.mxu0 0
  %9914 = vmatpush1.bf16.msra.mxu0 %v9665
  %9915 = vmatprep.subr.bf16.mxu0 0
  %9916 = vmatpush1.bf16.msra.mxu0 %v9664
  %9917 = vmatprep.subr.bf16.mxu0 0
  %9918 = vmatpush1.bf16.msra.mxu0 %v9663
  %9919 = vmatprep.subr.bf16.mxu0 0
  %9920 = vmatpush2.bf16.msra.mxu0 0
  %9921 = vmatprep.subr.bf16.mxu0 0
  %9922 = vmatpush2.bf16.msra.mxu0 0
  %9923 = vmatprep.subr.bf16.mxu0 0
  %9924 = vmatpush2.bf16.msra.mxu0 0
  %9925 = vmatprep.subr.bf16.mxu0 0
  %9926 = vmatpush2.bf16.msra.mxu0 0
  %9927 = vmatprep.subr.bf16.mxu0 0
  %9928 = vmatpush2.bf16.msra.mxu0 0
  %9929 = vmatprep.subr.bf16.mxu0 0
  %9930 = vmatpush2.bf16.msra.mxu0 0
  %9931 = vmatprep.subr.bf16.mxu0 0
  %9932 = vmatpush2.bf16.msra.mxu0 0
  %9933 = vmatprep.subr.bf16.mxu0 0
  %9934 = vmatpush2.bf16.msra.mxu0 0
  %9935 = vmatprep.mubr.bf16.mxu0 0
  %9936 = vmatmul.mubr.bf16.gmra.mxu0 %v9166
  %v9937 = vpop.f32.mrf.mxu0
  %v9938 = vadd.f32 %v9898, %v9937
  %v9939 = vpop.f32.mrf.mxu0
  %v9940 = vpop.f32.mrf.mxu0
  %v9941 = vpop.f32.mrf.mxu0
  %9942 = vdwg.mxu0
  %v9943 = vmax.f32 %v9938, 0.0
  %v9944 = vadd.f32 %v9122, %v9943
  %9945 = vst [vmem:[%s1694] sm:$0xff] %v9944
  %v9946 = vld [vmem:[%s868] sm:$0xff]
  %v9948 = vrot.slane %v9944, 4
  %v9950 = vsel %vm42, 0.0, %v9948
  %v9951 = vsel %vm42, %v9948, 0.0
  %v9954 = vrot.slane %v9950, 1
  %v9955 = vrot.slane %v9951, 1
  %v9956 = vsel %vm47, %v9954, %v9955
  %v9958 = vrot.slane %v9950, 2
  %v9959 = vrot.slane %v9951, 2
  %v9960 = vsel %vm52, %v9958, %v9959
  %v9962 = vrot.slane %v9950, 3
  %v9963 = vrot.slane %v9951, 3
  %v9964 = vsel %vm57, %v9962, %v9963
  %v9966 = vrot.slane %v9950, 4
  %v9967 = vrot.slane %v9951, 4
  %v9968 = vsel %vm42, %v9966, %v9967
  %v9970 = vrot.slane %v9950, 5
  %v9971 = vrot.slane %v9951, 5
  %v9972 = vsel %vm66, %v9970, %v9971
  %v9974 = vrot.slane %v9950, 6
  %v9975 = vrot.slane %v9951, 6
  %v9976 = vsel %vm71, %v9974, %v9975
  %v9978 = vrot.slane %v9950, 7
  %v9979 = vrot.slane %v9951, 7
  %v9980 = vsel %vm76, %v9978, %v9979
  %v9982 = vpack.c.bf16 %v9950, %v9950
  %v9983 = vpack.c.bf16 %v9956, %v9956
  %v9984 = vpack.c.bf16 %v9960, %v9960
  %v9985 = vpack.c.bf16 %v9964, %v9964
  %v9986 = vpack.c.bf16 %v9968, %v9968
  %v9987 = vpack.c.bf16 %v9972, %v9972
  %v9988 = vpack.c.bf16 %v9976, %v9976
  %v9989 = vpack.c.bf16 %v9980, %v9980
  %v9990 = vpack.c.bf16 %v9951, %v9951
  %v9991 = vld [vmem:[%s3] sm:$0xf]
  %v9992 = vld [vmem:[%s3 + $0x4] sm:$0xf]
  %v9993 = vld [vmem:[%s3 + $0x8] sm:$0xf]
  %v9994 = vld [vmem:[%s3 + $0xc] sm:$0xf]
  %v9995 = vld [vmem:[%s3 + $0x10] sm:$0xf]
  %v9996 = vld [vmem:[%s3 + $0x14] sm:$0xf]
  %v9997 = vld [vmem:[%s3 + $0x18] sm:$0xf]
  %v9998 = vld [vmem:[%s3 + $0x1c] sm:$0xf]
  %v9999 = vld [vmem:[%s3 + $0x20] sm:$0xf]
  %v10000 = vld [vmem:[%s3 + $0x24] sm:$0xf]
  %v10001 = vld [vmem:[%s3 + $0x28] sm:$0xf]
  %v10002 = vld [vmem:[%s3 + $0x2c] sm:$0xf]
  %v10003 = vld [vmem:[%s3 + $0x30] sm:$0xf]
  %v10004 = vld [vmem:[%s3 + $0x34] sm:$0xf]
  %v10005 = vld [vmem:[%s3 + $0x38] sm:$0xf]
  %v10006 = vld [vmem:[%s3 + $0x3c] sm:$0xf]
  %v10007 = vld [vmem:[%s3 + $0x40] sm:$0xf]
  %v10008 = vld [vmem:[%s3 + $0x44] sm:$0xf]
  %v10009 = vld [vmem:[%s3 + $0x48] sm:$0xf]
  %v10010 = vld [vmem:[%s3 + $0x4c] sm:$0xf]
  %v10011 = vld [vmem:[%s3 + $0x50] sm:$0xf]
  %v10012 = vld [vmem:[%s3 + $0x54] sm:$0xf]
  %v10013 = vld [vmem:[%s3 + $0x58] sm:$0xf]
  %v10014 = vld [vmem:[%s3 + $0x5c] sm:$0xf]
  %v10015 = vld [vmem:[%s3 + $0x60] sm:$0xf]
  %v10016 = vld [vmem:[%s3 + $0x64] sm:$0xf]
  %v10017 = vld [vmem:[%s3 + $0x68] sm:$0xf]
  %v10018 = vld [vmem:[%s3 + $0x6c] sm:$0xf]
  %v10019 = vld [vmem:[%s3 + $0x70] sm:$0xf]
  %v10020 = vld [vmem:[%s3 + $0x74] sm:$0xf]
  %v10021 = vld [vmem:[%s3 + $0x78] sm:$0xf]
  %v10022 = vld [vmem:[%s3 + $0x7c] sm:$0xf]
  %v10023 = vld [vmem:[%s3 + $0x80] sm:$0xf]
  %v10024 = vld [vmem:[%s3 + $0x84] sm:$0xf]
  %v10025 = vld [vmem:[%s3 + $0x88] sm:$0xf]
  %v10026 = vld [vmem:[%s3 + $0x8c] sm:$0xf]
  %v10027 = vld [vmem:[%s3 + $0x90] sm:$0xf]
  %v10028 = vld [vmem:[%s3 + $0x94] sm:$0xf]
  %v10029 = vld [vmem:[%s3 + $0x98] sm:$0xf]
  %v10030 = vld [vmem:[%s3 + $0x9c] sm:$0xf]
  %v10031 = vld [vmem:[%s3 + $0xa0] sm:$0xf]
  %v10032 = vld [vmem:[%s3 + $0xa4] sm:$0xf]
  %v10033 = vld [vmem:[%s3 + $0xa8] sm:$0xf]
  %v10034 = vld [vmem:[%s3 + $0xac] sm:$0xf]
  %v10035 = vld [vmem:[%s3 + $0xb0] sm:$0xf]
  %v10036 = vld [vmem:[%s3 + $0xb4] sm:$0xf]
  %v10037 = vld [vmem:[%s3 + $0xb8] sm:$0xf]
  %v10038 = vld [vmem:[%s3 + $0xbc] sm:$0xf]
  %v10039 = vld [vmem:[%s3 + $0xc0] sm:$0xf]
  %v10040 = vld [vmem:[%s3 + $0xc4] sm:$0xf]
  %v10041 = vld [vmem:[%s3 + $0xc8] sm:$0xf]
  %v10042 = vld [vmem:[%s3 + $0xcc] sm:$0xf]
  %v10043 = vld [vmem:[%s3 + $0xd0] sm:$0xf]
  %v10044 = vld [vmem:[%s3 + $0xd4] sm:$0xf]
  %v10045 = vld [vmem:[%s3 + $0xd8] sm:$0xf]
  %v10046 = vld [vmem:[%s3 + $0xdc] sm:$0xf]
  %v10047 = vld [vmem:[%s3 + $0xe0] sm:$0xf]
  %v10048 = vld [vmem:[%s3 + $0xe4] sm:$0xf]
  %v10049 = vld [vmem:[%s3 + $0xe8] sm:$0xf]
  %v10050 = vld [vmem:[%s3 + $0xec] sm:$0xf]
  %v10051 = vld [vmem:[%s3 + $0xf0] sm:$0xf]
  %v10052 = vld [vmem:[%s3 + $0xf4] sm:$0xf]
  %v10053 = vld [vmem:[%s3 + $0xf8] sm:$0xf]
  %v10054 = vld [vmem:[%s3 + $0xfc] sm:$0xf]
  %v10055 = vld [vmem:[%s3 + $0x100] sm:$0xf]
  %v10056 = vld [vmem:[%s3 + $0x104] sm:$0xf]
  %v10057 = vld [vmem:[%s3 + $0x108] sm:$0xf]
  %v10058 = vld [vmem:[%s3 + $0x10c] sm:$0xf]
  %v10059 = vld [vmem:[%s3 + $0x110] sm:$0xf]
  %v10060 = vld [vmem:[%s3 + $0x114] sm:$0xf]
  %v10061 = vld [vmem:[%s3 + $0x118] sm:$0xf]
  %v10062 = vld [vmem:[%s3 + $0x11c] sm:$0xf]
  %v10063 = vld [vmem:[%s3 + $0x120] sm:$0xf]
  %v10064 = vld [vmem:[%s3 + $0x124] sm:$0xf]
  %v10065 = vld [vmem:[%s3 + $0x128] sm:$0xf]
  %v10066 = vld [vmem:[%s3 + $0x12c] sm:$0xf]
  %v10067 = vld [vmem:[%s3 + $0x130] sm:$0xf]
  %v10068 = vld [vmem:[%s3 + $0x134] sm:$0xf]
  %v10069 = vld [vmem:[%s3 + $0x138] sm:$0xf]
  %v10070 = vld [vmem:[%s3 + $0x13c] sm:$0xf]
  %v10071 = vld [vmem:[%s3 + $0x140] sm:$0xf]
  %v10072 = vld [vmem:[%s3 + $0x144] sm:$0xf]
  %v10073 = vld [vmem:[%s3 + $0x148] sm:$0xf]
  %v10074 = vld [vmem:[%s3 + $0x14c] sm:$0xf]
  %v10075 = vld [vmem:[%s3 + $0x150] sm:$0xf]
  %v10076 = vld [vmem:[%s3 + $0x154] sm:$0xf]
  %v10077 = vld [vmem:[%s3 + $0x158] sm:$0xf]
  %v10078 = vld [vmem:[%s3 + $0x15c] sm:$0xf]
  %v10079 = vld [vmem:[%s3 + $0x160] sm:$0xf]
  %v10080 = vld [vmem:[%s3 + $0x164] sm:$0xf]
  %v10081 = vld [vmem:[%s3 + $0x168] sm:$0xf]
  %v10082 = vld [vmem:[%s3 + $0x16c] sm:$0xf]
  %v10083 = vld [vmem:[%s3 + $0x170] sm:$0xf]
  %v10084 = vld [vmem:[%s3 + $0x174] sm:$0xf]
  %v10085 = vld [vmem:[%s3 + $0x178] sm:$0xf]
  %v10086 = vld [vmem:[%s3 + $0x17c] sm:$0xf]
  %v10087 = vld [vmem:[%s3 + $0x180] sm:$0xf]
  %v10088 = vld [vmem:[%s3 + $0x184] sm:$0xf]
  %v10089 = vld [vmem:[%s3 + $0x188] sm:$0xf]
  %v10090 = vld [vmem:[%s3 + $0x18c] sm:$0xf]
  %v10091 = vld [vmem:[%s3 + $0x190] sm:$0xf]
  %v10092 = vld [vmem:[%s3 + $0x194] sm:$0xf]
  %v10093 = vld [vmem:[%s3 + $0x198] sm:$0xf]
  %v10094 = vld [vmem:[%s3 + $0x19c] sm:$0xf]
  %v10095 = vld [vmem:[%s3 + $0x1a0] sm:$0xf]
  %v10096 = vld [vmem:[%s3 + $0x1a4] sm:$0xf]
  %v10097 = vld [vmem:[%s3 + $0x1a8] sm:$0xf]
  %v10098 = vld [vmem:[%s3 + $0x1ac] sm:$0xf]
  %v10099 = vld [vmem:[%s3 + $0x1b0] sm:$0xf]
  %v10100 = vld [vmem:[%s3 + $0x1b4] sm:$0xf]
  %v10101 = vld [vmem:[%s3 + $0x1b8] sm:$0xf]
  %v10102 = vld [vmem:[%s3 + $0x1bc] sm:$0xf]
  %v10103 = vld [vmem:[%s3 + $0x1c0] sm:$0xf]
  %v10104 = vld [vmem:[%s3 + $0x1c4] sm:$0xf]
  %v10105 = vld [vmem:[%s3 + $0x1c8] sm:$0xf]
  %v10106 = vld [vmem:[%s3 + $0x1cc] sm:$0xf]
  %v10107 = vld [vmem:[%s3 + $0x1d0] sm:$0xf]
  %v10108 = vld [vmem:[%s3 + $0x1d4] sm:$0xf]
  %v10109 = vld [vmem:[%s3 + $0x1d8] sm:$0xf]
  %v10110 = vld [vmem:[%s3 + $0x1dc] sm:$0xf]
  %v10111 = vld [vmem:[%s3 + $0x1e0] sm:$0xf]
  %v10112 = vld [vmem:[%s3 + $0x1e4] sm:$0xf]
  %v10113 = vld [vmem:[%s3 + $0x1e8] sm:$0xf]
  %v10114 = vld [vmem:[%s3 + $0x1ec] sm:$0xf]
  %v10115 = vld [vmem:[%s3 + $0x1f0] sm:$0xf]
  %v10116 = vld [vmem:[%s3 + $0x1f4] sm:$0xf]
  %v10117 = vld [vmem:[%s3 + $0x1f8] sm:$0xf]
  %v10118 = vld [vmem:[%s3 + $0x1fc] sm:$0xf]
  %v10119 = vld [vmem:[%s3 + $0x200] sm:$0xf]
  %v10120 = vld [vmem:[%s3 + $0x204] sm:$0xf]
  %v10121 = vld [vmem:[%s3 + $0x208] sm:$0xf]
  %v10122 = vld [vmem:[%s3 + $0x20c] sm:$0xf]
  %v10123 = vld [vmem:[%s3 + $0x210] sm:$0xf]
  %v10124 = vld [vmem:[%s3 + $0x214] sm:$0xf]
  %v10125 = vld [vmem:[%s3 + $0x218] sm:$0xf]
  %v10126 = vld [vmem:[%s3 + $0x21c] sm:$0xf]
  %v10127 = vld [vmem:[%s3 + $0x220] sm:$0xf]
  %v10128 = vld [vmem:[%s3 + $0x224] sm:$0xf]
  %v10129 = vld [vmem:[%s3 + $0x228] sm:$0xf]
  %v10130 = vld [vmem:[%s3 + $0x22c] sm:$0xf]
  %v10131 = vld [vmem:[%s3 + $0x230] sm:$0xf]
  %v10132 = vld [vmem:[%s3 + $0x234] sm:$0xf]
  %v10133 = vld [vmem:[%s3 + $0x238] sm:$0xf]
  %v10134 = vld [vmem:[%s3 + $0x23c] sm:$0xf]
  %v10279 = vunpack.c.l.b16 %v9991
  %v10280 = vunpack.c.l.b16 %v9992
  %v10281 = vunpack.c.l.b16 %v9993
  %v10282 = vunpack.c.l.b16 %v9994
  %v10283 = vunpack.c.l.b16 %v9995
  %v10284 = vunpack.c.l.b16 %v9996
  %v10285 = vunpack.c.l.b16 %v9997
  %v10286 = vunpack.c.l.b16 %v9998
  %v10287 = vunpack.c.l.b16 %v9999
  %v10288 = vunpack.c.l.b16 %v10000
  %v10289 = vunpack.c.l.b16 %v10001
  %v10290 = vunpack.c.l.b16 %v10002
  %v10291 = vunpack.c.l.b16 %v10003
  %v10292 = vunpack.c.l.b16 %v10004
  %v10293 = vunpack.c.l.b16 %v10005
  %v10294 = vunpack.c.l.b16 %v10006
  %v10295 = vunpack.c.l.b16 %v10007
  %v10296 = vunpack.c.l.b16 %v10008
  %v10297 = vunpack.c.l.b16 %v10009
  %v10298 = vunpack.c.l.b16 %v10010
  %v10299 = vunpack.c.l.b16 %v10011
  %v10300 = vunpack.c.l.b16 %v10012
  %v10301 = vunpack.c.l.b16 %v10013
  %v10302 = vunpack.c.l.b16 %v10014
  %v10303 = vunpack.c.l.b16 %v10015
  %v10304 = vunpack.c.l.b16 %v10016
  %v10305 = vunpack.c.l.b16 %v10017
  %v10306 = vunpack.c.l.b16 %v10018
  %v10307 = vunpack.c.l.b16 %v10019
  %v10308 = vunpack.c.l.b16 %v10020
  %v10309 = vunpack.c.l.b16 %v10021
  %v10310 = vunpack.c.l.b16 %v10022
  %v10311 = vunpack.c.l.b16 %v10023
  %v10312 = vunpack.c.l.b16 %v10024
  %v10313 = vunpack.c.l.b16 %v10025
  %v10314 = vunpack.c.l.b16 %v10026
  %v10315 = vunpack.c.l.b16 %v10027
  %v10316 = vunpack.c.l.b16 %v10028
  %v10317 = vunpack.c.l.b16 %v10029
  %v10318 = vunpack.c.l.b16 %v10030
  %v10319 = vunpack.c.l.b16 %v10031
  %v10320 = vunpack.c.l.b16 %v10032
  %v10321 = vunpack.c.l.b16 %v10033
  %v10322 = vunpack.c.l.b16 %v10034
  %v10323 = vunpack.c.l.b16 %v10035
  %v10324 = vunpack.c.l.b16 %v10036
  %v10325 = vunpack.c.l.b16 %v10037
  %v10326 = vunpack.c.l.b16 %v10038
  %v10327 = vunpack.c.l.b16 %v10039
  %v10328 = vunpack.c.l.b16 %v10040
  %v10329 = vunpack.c.l.b16 %v10041
  %v10330 = vunpack.c.l.b16 %v10042
  %v10331 = vunpack.c.l.b16 %v10043
  %v10332 = vunpack.c.l.b16 %v10044
  %v10333 = vunpack.c.l.b16 %v10045
  %v10334 = vunpack.c.l.b16 %v10046
  %v10335 = vunpack.c.l.b16 %v10047
  %v10336 = vunpack.c.l.b16 %v10048
  %v10337 = vunpack.c.l.b16 %v10049
  %v10338 = vunpack.c.l.b16 %v10050
  %v10339 = vunpack.c.l.b16 %v10051
  %v10340 = vunpack.c.l.b16 %v10052
  %v10341 = vunpack.c.l.b16 %v10053
  %v10342 = vunpack.c.l.b16 %v10054
  %v10343 = vunpack.c.l.b16 %v10055
  %v10344 = vunpack.c.l.b16 %v10056
  %v10345 = vunpack.c.l.b16 %v10057
  %v10346 = vunpack.c.l.b16 %v10058
  %v10347 = vunpack.c.l.b16 %v10059
  %v10348 = vunpack.c.l.b16 %v10060
  %v10349 = vunpack.c.l.b16 %v10061
  %v10350 = vunpack.c.l.b16 %v10062
  %v10351 = vunpack.c.l.b16 %v10063
  %v10352 = vunpack.c.l.b16 %v10064
  %v10353 = vunpack.c.l.b16 %v10065
  %v10354 = vunpack.c.l.b16 %v10066
  %v10355 = vunpack.c.l.b16 %v10067
  %v10356 = vunpack.c.l.b16 %v10068
  %v10357 = vunpack.c.l.b16 %v10069
  %v10358 = vunpack.c.l.b16 %v10070
  %v10359 = vunpack.c.l.b16 %v10071
  %v10360 = vunpack.c.l.b16 %v10072
  %v10361 = vunpack.c.l.b16 %v10073
  %v10362 = vunpack.c.l.b16 %v10074
  %v10363 = vunpack.c.l.b16 %v10075
  %v10364 = vunpack.c.l.b16 %v10076
  %v10365 = vunpack.c.l.b16 %v10077
  %v10366 = vunpack.c.l.b16 %v10078
  %v10367 = vunpack.c.l.b16 %v10079
  %v10368 = vunpack.c.l.b16 %v10080
  %v10369 = vunpack.c.l.b16 %v10081
  %v10370 = vunpack.c.l.b16 %v10082
  %v10371 = vunpack.c.l.b16 %v10083
  %v10372 = vunpack.c.l.b16 %v10084
  %v10373 = vunpack.c.l.b16 %v10085
  %v10374 = vunpack.c.l.b16 %v10086
  %v10375 = vunpack.c.l.b16 %v10087
  %v10376 = vunpack.c.l.b16 %v10088
  %v10377 = vunpack.c.l.b16 %v10089
  %v10378 = vunpack.c.l.b16 %v10090
  %v10379 = vunpack.c.l.b16 %v10091
  %v10380 = vunpack.c.l.b16 %v10092
  %v10381 = vunpack.c.l.b16 %v10093
  %v10382 = vunpack.c.l.b16 %v10094
  %v10383 = vunpack.c.l.b16 %v10095
  %v10384 = vunpack.c.l.b16 %v10096
  %v10385 = vunpack.c.l.b16 %v10097
  %v10386 = vunpack.c.l.b16 %v10098
  %v10387 = vunpack.c.l.b16 %v10099
  %v10388 = vunpack.c.l.b16 %v10100
  %v10389 = vunpack.c.l.b16 %v10101
  %v10390 = vunpack.c.l.b16 %v10102
  %v10391 = vunpack.c.l.b16 %v10103
  %v10392 = vunpack.c.l.b16 %v10104
  %v10393 = vunpack.c.l.b16 %v10105
  %v10394 = vunpack.c.l.b16 %v10106
  %v10395 = vunpack.c.l.b16 %v10107
  %v10396 = vunpack.c.l.b16 %v10108
  %v10397 = vunpack.c.l.b16 %v10109
  %v10398 = vunpack.c.l.b16 %v10110
  %v10399 = vunpack.c.l.b16 %v10111
  %v10400 = vunpack.c.l.b16 %v10112
  %v10401 = vunpack.c.l.b16 %v10113
  %v10402 = vunpack.c.l.b16 %v10114
  %v10403 = vunpack.c.l.b16 %v10115
  %v10404 = vunpack.c.l.b16 %v10116
  %v10405 = vunpack.c.l.b16 %v10117
  %v10406 = vunpack.c.l.b16 %v10118
  %v10407 = vunpack.c.l.b16 %v10119
  %v10408 = vunpack.c.l.b16 %v10120
  %v10409 = vunpack.c.l.b16 %v10121
  %v10410 = vunpack.c.l.b16 %v10122
  %v10411 = vunpack.c.l.b16 %v10123
  %v10412 = vunpack.c.l.b16 %v10124
  %v10413 = vunpack.c.l.b16 %v10125
  %v10414 = vunpack.c.l.b16 %v10126
  %v10415 = vunpack.c.l.b16 %v10127
  %v10416 = vunpack.c.l.b16 %v10128
  %v10417 = vunpack.c.l.b16 %v10129
  %v10418 = vunpack.c.l.b16 %v10130
  %v10419 = vunpack.c.l.b16 %v10131
  %v10420 = vunpack.c.l.b16 %v10132
  %v10421 = vunpack.c.l.b16 %v10133
  %v10422 = vunpack.c.l.b16 %v10134
  %v10423 = vpack.c.b16 %v10280, %v10279
  %v10424 = vpack.c.b16 %v10282, %v10281
  %v10425 = vpack.c.b16 %v10284, %v10283
  %v10426 = vpack.c.b16 %v10286, %v10285
  %v10427 = vpack.c.b16 %v10288, %v10287
  %v10428 = vpack.c.b16 %v10290, %v10289
  %v10429 = vpack.c.b16 %v10292, %v10291
  %v10430 = vpack.c.b16 %v10294, %v10293
  %v10431 = vpack.c.b16 %v10296, %v10295
  %v10432 = vpack.c.b16 %v10298, %v10297
  %v10433 = vpack.c.b16 %v10300, %v10299
  %v10434 = vpack.c.b16 %v10302, %v10301
  %v10435 = vpack.c.b16 %v10304, %v10303
  %v10436 = vpack.c.b16 %v10306, %v10305
  %v10437 = vpack.c.b16 %v10308, %v10307
  %v10438 = vpack.c.b16 %v10310, %v10309
  %v10439 = vpack.c.b16 %v10312, %v10311
  %v10440 = vpack.c.b16 %v10314, %v10313
  %v10441 = vpack.c.b16 %v10316, %v10315
  %v10442 = vpack.c.b16 %v10318, %v10317
  %v10443 = vpack.c.b16 %v10320, %v10319
  %v10444 = vpack.c.b16 %v10322, %v10321
  %v10445 = vpack.c.b16 %v10324, %v10323
  %v10446 = vpack.c.b16 %v10326, %v10325
  %v10447 = vpack.c.b16 %v10328, %v10327
  %v10448 = vpack.c.b16 %v10330, %v10329
  %v10449 = vpack.c.b16 %v10332, %v10331
  %v10450 = vpack.c.b16 %v10334, %v10333
  %v10451 = vpack.c.b16 %v10336, %v10335
  %v10452 = vpack.c.b16 %v10338, %v10337
  %v10453 = vpack.c.b16 %v10340, %v10339
  %v10454 = vpack.c.b16 %v10342, %v10341
  %v10455 = vpack.c.b16 %v10344, %v10343
  %v10456 = vpack.c.b16 %v10346, %v10345
  %v10457 = vpack.c.b16 %v10348, %v10347
  %v10458 = vpack.c.b16 %v10350, %v10349
  %v10459 = vpack.c.b16 %v10352, %v10351
  %v10460 = vpack.c.b16 %v10354, %v10353
  %v10461 = vpack.c.b16 %v10356, %v10355
  %v10462 = vpack.c.b16 %v10358, %v10357
  %v10463 = vpack.c.b16 %v10360, %v10359
  %v10464 = vpack.c.b16 %v10362, %v10361
  %v10465 = vpack.c.b16 %v10364, %v10363
  %v10466 = vpack.c.b16 %v10366, %v10365
  %v10467 = vpack.c.b16 %v10368, %v10367
  %v10468 = vpack.c.b16 %v10370, %v10369
  %v10469 = vpack.c.b16 %v10372, %v10371
  %v10470 = vpack.c.b16 %v10374, %v10373
  %v10471 = vpack.c.b16 %v10376, %v10375
  %v10472 = vpack.c.b16 %v10378, %v10377
  %v10473 = vpack.c.b16 %v10380, %v10379
  %v10474 = vpack.c.b16 %v10382, %v10381
  %v10475 = vpack.c.b16 %v10384, %v10383
  %v10476 = vpack.c.b16 %v10386, %v10385
  %v10477 = vpack.c.b16 %v10388, %v10387
  %v10478 = vpack.c.b16 %v10390, %v10389
  %v10479 = vpack.c.b16 %v10392, %v10391
  %v10480 = vpack.c.b16 %v10394, %v10393
  %v10481 = vpack.c.b16 %v10396, %v10395
  %v10482 = vpack.c.b16 %v10398, %v10397
  %v10483 = vpack.c.b16 %v10400, %v10399
  %v10484 = vpack.c.b16 %v10402, %v10401
  %v10485 = vpack.c.b16 %v10404, %v10403
  %v10486 = vpack.c.b16 %v10406, %v10405
  %v10487 = vpack.c.b16 %v10408, %v10407
  %v10488 = vpack.c.b16 %v10410, %v10409
  %v10489 = vpack.c.b16 %v10412, %v10411
  %v10490 = vpack.c.b16 %v10414, %v10413
  %v10491 = vpack.c.b16 %v10416, %v10415
  %v10492 = vpack.c.b16 %v10418, %v10417
  %v10493 = vpack.c.b16 %v10420, %v10419
  %v10494 = vpack.c.b16 %v10422, %v10421
  %10567 = vmatprep.subr.bf16.mxu0 0
  %10568 = vmatpush1.bf16.msra.mxu0 %v10430
  %10569 = vmatprep.subr.bf16.mxu0 0
  %10570 = vmatpush1.bf16.msra.mxu0 %v10429
  %10571 = vmatprep.subr.bf16.mxu0 0
  %10572 = vmatpush1.bf16.msra.mxu0 %v10428
  %10573 = vmatprep.subr.bf16.mxu0 0
  %10574 = vmatpush1.bf16.msra.mxu0 %v10427
  %10575 = vmatprep.subr.bf16.mxu0 0
  %10576 = vmatpush1.bf16.msra.mxu0 %v10426
  %10577 = vmatprep.subr.bf16.mxu0 0
  %10578 = vmatpush1.bf16.msra.mxu0 %v10425
  %10579 = vmatprep.subr.bf16.mxu0 0
  %10580 = vmatpush1.bf16.msra.mxu0 %v10424
  %10581 = vmatprep.subr.bf16.mxu0 0
  %10582 = vmatpush1.bf16.msra.mxu0 %v10423
  %10583 = vmatprep.subr.bf16.mxu0 0
  %10584 = vmatpush2.bf16.msra.mxu0 %v10438
  %10585 = vmatprep.subr.bf16.mxu0 0
  %10586 = vmatpush2.bf16.msra.mxu0 %v10437
  %10587 = vmatprep.subr.bf16.mxu0 0
  %10588 = vmatpush2.bf16.msra.mxu0 %v10436
  %10589 = vmatprep.subr.bf16.mxu0 0
  %10590 = vmatpush2.bf16.msra.mxu0 %v10435
  %10591 = vmatprep.subr.bf16.mxu0 0
  %10592 = vmatpush2.bf16.msra.mxu0 %v10434
  %10593 = vmatprep.subr.bf16.mxu0 0
  %10594 = vmatpush2.bf16.msra.mxu0 %v10433
  %10595 = vmatprep.subr.bf16.mxu0 0
  %10596 = vmatpush2.bf16.msra.mxu0 %v10432
  %10597 = vmatprep.subr.bf16.mxu0 0
  %10598 = vmatpush2.bf16.msra.mxu0 %v10431
  %10599 = vmatprep.mubr.bf16.mxu0 %v9983
  %10600 = vmatmul.mubr.bf16.gmra.mxu0 %v9982
  %v10601 = vpop.f32.mrf.mxu0
  %v10602 = vadd.f32 %v33, %v10601
  %v10603 = vpop.f32.mrf.mxu0
  %v10604 = vpop.f32.mrf.mxu0
  %v10605 = vpop.f32.mrf.mxu0
  %10606 = vdwg.mxu0
  %10607 = vmatprep.subr.bf16.mxu0 0
  %10608 = vmatpush1.bf16.msra.mxu0 %v10446
  %10609 = vmatprep.subr.bf16.mxu0 0
  %10610 = vmatpush1.bf16.msra.mxu0 %v10445
  %10611 = vmatprep.subr.bf16.mxu0 0
  %10612 = vmatpush1.bf16.msra.mxu0 %v10444
  %10613 = vmatprep.subr.bf16.mxu0 0
  %10614 = vmatpush1.bf16.msra.mxu0 %v10443
  %10615 = vmatprep.subr.bf16.mxu0 0
  %10616 = vmatpush1.bf16.msra.mxu0 %v10442
  %10617 = vmatprep.subr.bf16.mxu0 0
  %10618 = vmatpush1.bf16.msra.mxu0 %v10441
  %10619 = vmatprep.subr.bf16.mxu0 0
  %10620 = vmatpush1.bf16.msra.mxu0 %v10440
  %10621 = vmatprep.subr.bf16.mxu0 0
  %10622 = vmatpush1.bf16.msra.mxu0 %v10439
  %10623 = vmatprep.subr.bf16.mxu0 0
  %10624 = vmatpush2.bf16.msra.mxu0 %v10454
  %10625 = vmatprep.subr.bf16.mxu0 0
  %10626 = vmatpush2.bf16.msra.mxu0 %v10453
  %10627 = vmatprep.subr.bf16.mxu0 0
  %10628 = vmatpush2.bf16.msra.mxu0 %v10452
  %10629 = vmatprep.subr.bf16.mxu0 0
  %10630 = vmatpush2.bf16.msra.mxu0 %v10451
  %10631 = vmatprep.subr.bf16.mxu0 0
  %10632 = vmatpush2.bf16.msra.mxu0 %v10450
  %10633 = vmatprep.subr.bf16.mxu0 0
  %10634 = vmatpush2.bf16.msra.mxu0 %v10449
  %10635 = vmatprep.subr.bf16.mxu0 0
  %10636 = vmatpush2.bf16.msra.mxu0 %v10448
  %10637 = vmatprep.subr.bf16.mxu0 0
  %10638 = vmatpush2.bf16.msra.mxu0 %v10447
  %10639 = vmatprep.mubr.bf16.mxu0 %v9985
  %10640 = vmatmul.mubr.bf16.gmra.mxu0 %v9984
  %v10641 = vpop.f32.mrf.mxu0
  %v10642 = vadd.f32 %v10602, %v10641
  %v10643 = vpop.f32.mrf.mxu0
  %v10644 = vpop.f32.mrf.mxu0
  %v10645 = vpop.f32.mrf.mxu0
  %10646 = vdwg.mxu0
  %10647 = vmatprep.subr.bf16.mxu0 0
  %10648 = vmatpush1.bf16.msra.mxu0 %v10462
  %10649 = vmatprep.subr.bf16.mxu0 0
  %10650 = vmatpush1.bf16.msra.mxu0 %v10461
  %10651 = vmatprep.subr.bf16.mxu0 0
  %10652 = vmatpush1.bf16.msra.mxu0 %v10460
  %10653 = vmatprep.subr.bf16.mxu0 0
  %10654 = vmatpush1.bf16.msra.mxu0 %v10459
  %10655 = vmatprep.subr.bf16.mxu0 0
  %10656 = vmatpush1.bf16.msra.mxu0 %v10458
  %10657 = vmatprep.subr.bf16.mxu0 0
  %10658 = vmatpush1.bf16.msra.mxu0 %v10457
  %10659 = vmatprep.subr.bf16.mxu0 0
  %10660 = vmatpush1.bf16.msra.mxu0 %v10456
  %10661 = vmatprep.subr.bf16.mxu0 0
  %10662 = vmatpush1.bf16.msra.mxu0 %v10455
  %10663 = vmatprep.subr.bf16.mxu0 0
  %10664 = vmatpush2.bf16.msra.mxu0 %v10470
  %10665 = vmatprep.subr.bf16.mxu0 0
  %10666 = vmatpush2.bf16.msra.mxu0 %v10469
  %10667 = vmatprep.subr.bf16.mxu0 0
  %10668 = vmatpush2.bf16.msra.mxu0 %v10468
  %10669 = vmatprep.subr.bf16.mxu0 0
  %10670 = vmatpush2.bf16.msra.mxu0 %v10467
  %10671 = vmatprep.subr.bf16.mxu0 0
  %10672 = vmatpush2.bf16.msra.mxu0 %v10466
  %10673 = vmatprep.subr.bf16.mxu0 0
  %10674 = vmatpush2.bf16.msra.mxu0 %v10465
  %10675 = vmatprep.subr.bf16.mxu0 0
  %10676 = vmatpush2.bf16.msra.mxu0 %v10464
  %10677 = vmatprep.subr.bf16.mxu0 0
  %10678 = vmatpush2.bf16.msra.mxu0 %v10463
  %10679 = vmatprep.mubr.bf16.mxu0 %v9987
  %10680 = vmatmul.mubr.bf16.gmra.mxu0 %v9986
  %v10681 = vpop.f32.mrf.mxu0
  %v10682 = vadd.f32 %v10642, %v10681
  %v10683 = vpop.f32.mrf.mxu0
  %v10684 = vpop.f32.mrf.mxu0
  %v10685 = vpop.f32.mrf.mxu0
  %10686 = vdwg.mxu0
  %10687 = vmatprep.subr.bf16.mxu0 0
  %10688 = vmatpush1.bf16.msra.mxu0 %v10478
  %10689 = vmatprep.subr.bf16.mxu0 0
  %10690 = vmatpush1.bf16.msra.mxu0 %v10477
  %10691 = vmatprep.subr.bf16.mxu0 0
  %10692 = vmatpush1.bf16.msra.mxu0 %v10476
  %10693 = vmatprep.subr.bf16.mxu0 0
  %10694 = vmatpush1.bf16.msra.mxu0 %v10475
  %10695 = vmatprep.subr.bf16.mxu0 0
  %10696 = vmatpush1.bf16.msra.mxu0 %v10474
  %10697 = vmatprep.subr.bf16.mxu0 0
  %10698 = vmatpush1.bf16.msra.mxu0 %v10473
  %10699 = vmatprep.subr.bf16.mxu0 0
  %10700 = vmatpush1.bf16.msra.mxu0 %v10472
  %10701 = vmatprep.subr.bf16.mxu0 0
  %10702 = vmatpush1.bf16.msra.mxu0 %v10471
  %10703 = vmatprep.subr.bf16.mxu0 0
  %10704 = vmatpush2.bf16.msra.mxu0 %v10486
  %10705 = vmatprep.subr.bf16.mxu0 0
  %10706 = vmatpush2.bf16.msra.mxu0 %v10485
  %10707 = vmatprep.subr.bf16.mxu0 0
  %10708 = vmatpush2.bf16.msra.mxu0 %v10484
  %10709 = vmatprep.subr.bf16.mxu0 0
  %10710 = vmatpush2.bf16.msra.mxu0 %v10483
  %10711 = vmatprep.subr.bf16.mxu0 0
  %10712 = vmatpush2.bf16.msra.mxu0 %v10482
  %10713 = vmatprep.subr.bf16.mxu0 0
  %10714 = vmatpush2.bf16.msra.mxu0 %v10481
  %10715 = vmatprep.subr.bf16.mxu0 0
  %10716 = vmatpush2.bf16.msra.mxu0 %v10480
  %10717 = vmatprep.subr.bf16.mxu0 0
  %10718 = vmatpush2.bf16.msra.mxu0 %v10479
  %10719 = vmatprep.mubr.bf16.mxu0 %v9989
  %10720 = vmatmul.mubr.bf16.gmra.mxu0 %v9988
  %v10721 = vpop.f32.mrf.mxu0
  %v10722 = vadd.f32 %v10682, %v10721
  %v10723 = vpop.f32.mrf.mxu0
  %v10724 = vpop.f32.mrf.mxu0
  %v10725 = vpop.f32.mrf.mxu0
  %10726 = vdwg.mxu0
  %10727 = vmatprep.subr.bf16.mxu0 0
  %10728 = vmatpush1.bf16.msra.mxu0 %v10494
  %10729 = vmatprep.subr.bf16.mxu0 0
  %10730 = vmatpush1.bf16.msra.mxu0 %v10493
  %10731 = vmatprep.subr.bf16.mxu0 0
  %10732 = vmatpush1.bf16.msra.mxu0 %v10492
  %10733 = vmatprep.subr.bf16.mxu0 0
  %10734 = vmatpush1.bf16.msra.mxu0 %v10491
  %10735 = vmatprep.subr.bf16.mxu0 0
  %10736 = vmatpush1.bf16.msra.mxu0 %v10490
  %10737 = vmatprep.subr.bf16.mxu0 0
  %10738 = vmatpush1.bf16.msra.mxu0 %v10489
  %10739 = vmatprep.subr.bf16.mxu0 0
  %10740 = vmatpush1.bf16.msra.mxu0 %v10488
  %10741 = vmatprep.subr.bf16.mxu0 0
  %10742 = vmatpush1.bf16.msra.mxu0 %v10487
  %10743 = vmatprep.subr.bf16.mxu0 0
  %10744 = vmatpush2.bf16.msra.mxu0 0
  %10745 = vmatprep.subr.bf16.mxu0 0
  %10746 = vmatpush2.bf16.msra.mxu0 0
  %10747 = vmatprep.subr.bf16.mxu0 0
  %10748 = vmatpush2.bf16.msra.mxu0 0
  %10749 = vmatprep.subr.bf16.mxu0 0
  %10750 = vmatpush2.bf16.msra.mxu0 0
  %10751 = vmatprep.subr.bf16.mxu0 0
  %10752 = vmatpush2.bf16.msra.mxu0 0
  %10753 = vmatprep.subr.bf16.mxu0 0
  %10754 = vmatpush2.bf16.msra.mxu0 0
  %10755 = vmatprep.subr.bf16.mxu0 0
  %10756 = vmatpush2.bf16.msra.mxu0 0
  %10757 = vmatprep.subr.bf16.mxu0 0
  %10758 = vmatpush2.bf16.msra.mxu0 0
  %10759 = vmatprep.mubr.bf16.mxu0 0
  %10760 = vmatmul.mubr.bf16.gmra.mxu0 %v9990
  %v10761 = vpop.f32.mrf.mxu0
  %v10762 = vadd.f32 %v10722, %v10761
  %v10763 = vpop.f32.mrf.mxu0
  %v10764 = vpop.f32.mrf.mxu0
  %v10765 = vpop.f32.mrf.mxu0
  %10766 = vdwg.mxu0
  %v10767 = vmax.f32 %v10762, 0.0
  %v10768 = vadd.f32 %v9946, %v10767
  %10769 = vst [vmem:[%s868] sm:$0xff] %v10768
  %v10770 = vld [vmem:[%s5] sm:$0xff]
  %v10772 = vrot.slane %v10768, 4
  %v10774 = vsel %vm42, 0.0, %v10772
  %v10775 = vsel %vm42, %v10772, 0.0
  %v10778 = vrot.slane %v10774, 1
  %v10779 = vrot.slane %v10775, 1
  %v10780 = vsel %vm47, %v10778, %v10779
  %v10782 = vrot.slane %v10774, 2
  %v10783 = vrot.slane %v10775, 2
  %v10784 = vsel %vm52, %v10782, %v10783
  %v10786 = vrot.slane %v10774, 3
  %v10787 = vrot.slane %v10775, 3
  %v10788 = vsel %vm57, %v10786, %v10787
  %v10790 = vrot.slane %v10774, 4
  %v10791 = vrot.slane %v10775, 4
  %v10792 = vsel %vm42, %v10790, %v10791
  %v10794 = vrot.slane %v10774, 5
  %v10795 = vrot.slane %v10775, 5
  %v10796 = vsel %vm66, %v10794, %v10795
  %v10798 = vrot.slane %v10774, 6
  %v10799 = vrot.slane %v10775, 6
  %v10800 = vsel %vm71, %v10798, %v10799
  %v10802 = vrot.slane %v10774, 7
  %v10803 = vrot.slane %v10775, 7
  %v10804 = vsel %vm76, %v10802, %v10803
  %v10806 = vpack.c.bf16 %v10774, %v10774
  %v10807 = vpack.c.bf16 %v10780, %v10780
  %v10808 = vpack.c.bf16 %v10784, %v10784
  %v10809 = vpack.c.bf16 %v10788, %v10788
  %v10810 = vpack.c.bf16 %v10792, %v10792
  %v10811 = vpack.c.bf16 %v10796, %v10796
  %v10812 = vpack.c.bf16 %v10800, %v10800
  %v10813 = vpack.c.bf16 %v10804, %v10804
  %v10814 = vpack.c.bf16 %v10775, %v10775
  %v10815 = vld [vmem:[%s3] sm:$0xf]
  %v10816 = vld [vmem:[%s3 + $0x4] sm:$0xf]
  %v10817 = vld [vmem:[%s3 + $0x8] sm:$0xf]
  %v10818 = vld [vmem:[%s3 + $0xc] sm:$0xf]
  %v10819 = vld [vmem:[%s3 + $0x10] sm:$0xf]
  %v10820 = vld [vmem:[%s3 + $0x14] sm:$0xf]
  %v10821 = vld [vmem:[%s3 + $0x18] sm:$0xf]
  %v10822 = vld [vmem:[%s3 + $0x1c] sm:$0xf]
  %v10823 = vld [vmem:[%s3 + $0x20] sm:$0xf]
  %v10824 = vld [vmem:[%s3 + $0x24] sm:$0xf]
  %v10825 = vld [vmem:[%s3 + $0x28] sm:$0xf]
  %v10826 = vld [vmem:[%s3 + $0x2c] sm:$0xf]
  %v10827 = vld [vmem:[%s3 + $0x30] sm:$0xf]
  %v10828 = vld [vmem:[%s3 + $0x34] sm:$0xf]
  %v10829 = vld [vmem:[%s3 + $0x38] sm:$0xf]
  %v10830 = vld [vmem:[%s3 + $0x3c] sm:$0xf]
  %v10831 = vld [vmem:[%s3 + $0x40] sm:$0xf]
  %v10832 = vld [vmem:[%s3 + $0x44] sm:$0xf]
  %v10833 = vld [vmem:[%s3 + $0x48] sm:$0xf]
  %v10834 = vld [vmem:[%s3 + $0x4c] sm:$0xf]
  %v10835 = vld [vmem:[%s3 + $0x50] sm:$0xf]
  %v10836 = vld [vmem:[%s3 + $0x54] sm:$0xf]
  %v10837 = vld [vmem:[%s3 + $0x58] sm:$0xf]
  %v10838 = vld [vmem:[%s3 + $0x5c] sm:$0xf]
  %v10839 = vld [vmem:[%s3 + $0x60] sm:$0xf]
  %v10840 = vld [vmem:[%s3 + $0x64] sm:$0xf]
  %v10841 = vld [vmem:[%s3 + $0x68] sm:$0xf]
  %v10842 = vld [vmem:[%s3 + $0x6c] sm:$0xf]
  %v10843 = vld [vmem:[%s3 + $0x70] sm:$0xf]
  %v10844 = vld [vmem:[%s3 + $0x74] sm:$0xf]
  %v10845 = vld [vmem:[%s3 + $0x78] sm:$0xf]
  %v10846 = vld [vmem:[%s3 + $0x7c] sm:$0xf]
  %v10847 = vld [vmem:[%s3 + $0x80] sm:$0xf]
  %v10848 = vld [vmem:[%s3 + $0x84] sm:$0xf]
  %v10849 = vld [vmem:[%s3 + $0x88] sm:$0xf]
  %v10850 = vld [vmem:[%s3 + $0x8c] sm:$0xf]
  %v10851 = vld [vmem:[%s3 + $0x90] sm:$0xf]
  %v10852 = vld [vmem:[%s3 + $0x94] sm:$0xf]
  %v10853 = vld [vmem:[%s3 + $0x98] sm:$0xf]
  %v10854 = vld [vmem:[%s3 + $0x9c] sm:$0xf]
  %v10855 = vld [vmem:[%s3 + $0xa0] sm:$0xf]
  %v10856 = vld [vmem:[%s3 + $0xa4] sm:$0xf]
  %v10857 = vld [vmem:[%s3 + $0xa8] sm:$0xf]
  %v10858 = vld [vmem:[%s3 + $0xac] sm:$0xf]
  %v10859 = vld [vmem:[%s3 + $0xb0] sm:$0xf]
  %v10860 = vld [vmem:[%s3 + $0xb4] sm:$0xf]
  %v10861 = vld [vmem:[%s3 + $0xb8] sm:$0xf]
  %v10862 = vld [vmem:[%s3 + $0xbc] sm:$0xf]
  %v10863 = vld [vmem:[%s3 + $0xc0] sm:$0xf]
  %v10864 = vld [vmem:[%s3 + $0xc4] sm:$0xf]
  %v10865 = vld [vmem:[%s3 + $0xc8] sm:$0xf]
  %v10866 = vld [vmem:[%s3 + $0xcc] sm:$0xf]
  %v10867 = vld [vmem:[%s3 + $0xd0] sm:$0xf]
  %v10868 = vld [vmem:[%s3 + $0xd4] sm:$0xf]
  %v10869 = vld [vmem:[%s3 + $0xd8] sm:$0xf]
  %v10870 = vld [vmem:[%s3 + $0xdc] sm:$0xf]
  %v10871 = vld [vmem:[%s3 + $0xe0] sm:$0xf]
  %v10872 = vld [vmem:[%s3 + $0xe4] sm:$0xf]
  %v10873 = vld [vmem:[%s3 + $0xe8] sm:$0xf]
  %v10874 = vld [vmem:[%s3 + $0xec] sm:$0xf]
  %v10875 = vld [vmem:[%s3 + $0xf0] sm:$0xf]
  %v10876 = vld [vmem:[%s3 + $0xf4] sm:$0xf]
  %v10877 = vld [vmem:[%s3 + $0xf8] sm:$0xf]
  %v10878 = vld [vmem:[%s3 + $0xfc] sm:$0xf]
  %v10879 = vld [vmem:[%s3 + $0x100] sm:$0xf]
  %v10880 = vld [vmem:[%s3 + $0x104] sm:$0xf]
  %v10881 = vld [vmem:[%s3 + $0x108] sm:$0xf]
  %v10882 = vld [vmem:[%s3 + $0x10c] sm:$0xf]
  %v10883 = vld [vmem:[%s3 + $0x110] sm:$0xf]
  %v10884 = vld [vmem:[%s3 + $0x114] sm:$0xf]
  %v10885 = vld [vmem:[%s3 + $0x118] sm:$0xf]
  %v10886 = vld [vmem:[%s3 + $0x11c] sm:$0xf]
  %v10887 = vld [vmem:[%s3 + $0x120] sm:$0xf]
  %v10888 = vld [vmem:[%s3 + $0x124] sm:$0xf]
  %v10889 = vld [vmem:[%s3 + $0x128] sm:$0xf]
  %v10890 = vld [vmem:[%s3 + $0x12c] sm:$0xf]
  %v10891 = vld [vmem:[%s3 + $0x130] sm:$0xf]
  %v10892 = vld [vmem:[%s3 + $0x134] sm:$0xf]
  %v10893 = vld [vmem:[%s3 + $0x138] sm:$0xf]
  %v10894 = vld [vmem:[%s3 + $0x13c] sm:$0xf]
  %v10895 = vld [vmem:[%s3 + $0x140] sm:$0xf]
  %v10896 = vld [vmem:[%s3 + $0x144] sm:$0xf]
  %v10897 = vld [vmem:[%s3 + $0x148] sm:$0xf]
  %v10898 = vld [vmem:[%s3 + $0x14c] sm:$0xf]
  %v10899 = vld [vmem:[%s3 + $0x150] sm:$0xf]
  %v10900 = vld [vmem:[%s3 + $0x154] sm:$0xf]
  %v10901 = vld [vmem:[%s3 + $0x158] sm:$0xf]
  %v10902 = vld [vmem:[%s3 + $0x15c] sm:$0xf]
  %v10903 = vld [vmem:[%s3 + $0x160] sm:$0xf]
  %v10904 = vld [vmem:[%s3 + $0x164] sm:$0xf]
  %v10905 = vld [vmem:[%s3 + $0x168] sm:$0xf]
  %v10906 = vld [vmem:[%s3 + $0x16c] sm:$0xf]
  %v10907 = vld [vmem:[%s3 + $0x170] sm:$0xf]
  %v10908 = vld [vmem:[%s3 + $0x174] sm:$0xf]
  %v10909 = vld [vmem:[%s3 + $0x178] sm:$0xf]
  %v10910 = vld [vmem:[%s3 + $0x17c] sm:$0xf]
  %v10911 = vld [vmem:[%s3 + $0x180] sm:$0xf]
  %v10912 = vld [vmem:[%s3 + $0x184] sm:$0xf]
  %v10913 = vld [vmem:[%s3 + $0x188] sm:$0xf]
  %v10914 = vld [vmem:[%s3 + $0x18c] sm:$0xf]
  %v10915 = vld [vmem:[%s3 + $0x190] sm:$0xf]
  %v10916 = vld [vmem:[%s3 + $0x194] sm:$0xf]
  %v10917 = vld [vmem:[%s3 + $0x198] sm:$0xf]
  %v10918 = vld [vmem:[%s3 + $0x19c] sm:$0xf]
  %v10919 = vld [vmem:[%s3 + $0x1a0] sm:$0xf]
  %v10920 = vld [vmem:[%s3 + $0x1a4] sm:$0xf]
  %v10921 = vld [vmem:[%s3 + $0x1a8] sm:$0xf]
  %v10922 = vld [vmem:[%s3 + $0x1ac] sm:$0xf]
  %v10923 = vld [vmem:[%s3 + $0x1b0] sm:$0xf]
  %v10924 = vld [vmem:[%s3 + $0x1b4] sm:$0xf]
  %v10925 = vld [vmem:[%s3 + $0x1b8] sm:$0xf]
  %v10926 = vld [vmem:[%s3 + $0x1bc] sm:$0xf]
  %v10927 = vld [vmem:[%s3 + $0x1c0] sm:$0xf]
  %v10928 = vld [vmem:[%s3 + $0x1c4] sm:$0xf]
  %v10929 = vld [vmem:[%s3 + $0x1c8] sm:$0xf]
  %v10930 = vld [vmem:[%s3 + $0x1cc] sm:$0xf]
  %v10931 = vld [vmem:[%s3 + $0x1d0] sm:$0xf]
  %v10932 = vld [vmem:[%s3 + $0x1d4] sm:$0xf]
  %v10933 = vld [vmem:[%s3 + $0x1d8] sm:$0xf]
  %v10934 = vld [vmem:[%s3 + $0x1dc] sm:$0xf]
  %v10935 = vld [vmem:[%s3 + $0x1e0] sm:$0xf]
  %v10936 = vld [vmem:[%s3 + $0x1e4] sm:$0xf]
  %v10937 = vld [vmem:[%s3 + $0x1e8] sm:$0xf]
  %v10938 = vld [vmem:[%s3 + $0x1ec] sm:$0xf]
  %v10939 = vld [vmem:[%s3 + $0x1f0] sm:$0xf]
  %v10940 = vld [vmem:[%s3 + $0x1f4] sm:$0xf]
  %v10941 = vld [vmem:[%s3 + $0x1f8] sm:$0xf]
  %v10942 = vld [vmem:[%s3 + $0x1fc] sm:$0xf]
  %v10943 = vld [vmem:[%s3 + $0x200] sm:$0xf]
  %v10944 = vld [vmem:[%s3 + $0x204] sm:$0xf]
  %v10945 = vld [vmem:[%s3 + $0x208] sm:$0xf]
  %v10946 = vld [vmem:[%s3 + $0x20c] sm:$0xf]
  %v10947 = vld [vmem:[%s3 + $0x210] sm:$0xf]
  %v10948 = vld [vmem:[%s3 + $0x214] sm:$0xf]
  %v10949 = vld [vmem:[%s3 + $0x218] sm:$0xf]
  %v10950 = vld [vmem:[%s3 + $0x21c] sm:$0xf]
  %v10951 = vld [vmem:[%s3 + $0x220] sm:$0xf]
  %v10952 = vld [vmem:[%s3 + $0x224] sm:$0xf]
  %v10953 = vld [vmem:[%s3 + $0x228] sm:$0xf]
  %v10954 = vld [vmem:[%s3 + $0x22c] sm:$0xf]
  %v10955 = vld [vmem:[%s3 + $0x230] sm:$0xf]
  %v10956 = vld [vmem:[%s3 + $0x234] sm:$0xf]
  %v10957 = vld [vmem:[%s3 + $0x238] sm:$0xf]
  %v10958 = vld [vmem:[%s3 + $0x23c] sm:$0xf]
  %v11103 = vunpack.c.l.b16 %v10815
  %v11104 = vunpack.c.l.b16 %v10816
  %v11105 = vunpack.c.l.b16 %v10817
  %v11106 = vunpack.c.l.b16 %v10818
  %v11107 = vunpack.c.l.b16 %v10819
  %v11108 = vunpack.c.l.b16 %v10820
  %v11109 = vunpack.c.l.b16 %v10821
  %v11110 = vunpack.c.l.b16 %v10822
  %v11111 = vunpack.c.l.b16 %v10823
  %v11112 = vunpack.c.l.b16 %v10824
  %v11113 = vunpack.c.l.b16 %v10825
  %v11114 = vunpack.c.l.b16 %v10826
  %v11115 = vunpack.c.l.b16 %v10827
  %v11116 = vunpack.c.l.b16 %v10828
  %v11117 = vunpack.c.l.b16 %v10829
  %v11118 = vunpack.c.l.b16 %v10830
  %v11119 = vunpack.c.l.b16 %v10831
  %v11120 = vunpack.c.l.b16 %v10832
  %v11121 = vunpack.c.l.b16 %v10833
  %v11122 = vunpack.c.l.b16 %v10834
  %v11123 = vunpack.c.l.b16 %v10835
  %v11124 = vunpack.c.l.b16 %v10836
  %v11125 = vunpack.c.l.b16 %v10837
  %v11126 = vunpack.c.l.b16 %v10838
  %v11127 = vunpack.c.l.b16 %v10839
  %v11128 = vunpack.c.l.b16 %v10840
  %v11129 = vunpack.c.l.b16 %v10841
  %v11130 = vunpack.c.l.b16 %v10842
  %v11131 = vunpack.c.l.b16 %v10843
  %v11132 = vunpack.c.l.b16 %v10844
  %v11133 = vunpack.c.l.b16 %v10845
  %v11134 = vunpack.c.l.b16 %v10846
  %v11135 = vunpack.c.l.b16 %v10847
  %v11136 = vunpack.c.l.b16 %v10848
  %v11137 = vunpack.c.l.b16 %v10849
  %v11138 = vunpack.c.l.b16 %v10850
  %v11139 = vunpack.c.l.b16 %v10851
  %v11140 = vunpack.c.l.b16 %v10852
  %v11141 = vunpack.c.l.b16 %v10853
  %v11142 = vunpack.c.l.b16 %v10854
  %v11143 = vunpack.c.l.b16 %v10855
  %v11144 = vunpack.c.l.b16 %v10856
  %v11145 = vunpack.c.l.b16 %v10857
  %v11146 = vunpack.c.l.b16 %v10858
  %v11147 = vunpack.c.l.b16 %v10859
  %v11148 = vunpack.c.l.b16 %v10860
  %v11149 = vunpack.c.l.b16 %v10861
  %v11150 = vunpack.c.l.b16 %v10862
  %v11151 = vunpack.c.l.b16 %v10863
  %v11152 = vunpack.c.l.b16 %v10864
  %v11153 = vunpack.c.l.b16 %v10865
  %v11154 = vunpack.c.l.b16 %v10866
  %v11155 = vunpack.c.l.b16 %v10867
  %v11156 = vunpack.c.l.b16 %v10868
  %v11157 = vunpack.c.l.b16 %v10869
  %v11158 = vunpack.c.l.b16 %v10870
  %v11159 = vunpack.c.l.b16 %v10871
  %v11160 = vunpack.c.l.b16 %v10872
  %v11161 = vunpack.c.l.b16 %v10873
  %v11162 = vunpack.c.l.b16 %v10874
  %v11163 = vunpack.c.l.b16 %v10875
  %v11164 = vunpack.c.l.b16 %v10876
  %v11165 = vunpack.c.l.b16 %v10877
  %v11166 = vunpack.c.l.b16 %v10878
  %v11167 = vunpack.c.l.b16 %v10879
  %v11168 = vunpack.c.l.b16 %v10880
  %v11169 = vunpack.c.l.b16 %v10881
  %v11170 = vunpack.c.l.b16 %v10882
  %v11171 = vunpack.c.l.b16 %v10883
  %v11172 = vunpack.c.l.b16 %v10884
  %v11173 = vunpack.c.l.b16 %v10885
  %v11174 = vunpack.c.l.b16 %v10886
  %v11175 = vunpack.c.l.b16 %v10887
  %v11176 = vunpack.c.l.b16 %v10888
  %v11177 = vunpack.c.l.b16 %v10889
  %v11178 = vunpack.c.l.b16 %v10890
  %v11179 = vunpack.c.l.b16 %v10891
  %v11180 = vunpack.c.l.b16 %v10892
  %v11181 = vunpack.c.l.b16 %v10893
  %v11182 = vunpack.c.l.b16 %v10894
  %v11183 = vunpack.c.l.b16 %v10895
  %v11184 = vunpack.c.l.b16 %v10896
  %v11185 = vunpack.c.l.b16 %v10897
  %v11186 = vunpack.c.l.b16 %v10898
  %v11187 = vunpack.c.l.b16 %v10899
  %v11188 = vunpack.c.l.b16 %v10900
  %v11189 = vunpack.c.l.b16 %v10901
  %v11190 = vunpack.c.l.b16 %v10902
  %v11191 = vunpack.c.l.b16 %v10903
  %v11192 = vunpack.c.l.b16 %v10904
  %v11193 = vunpack.c.l.b16 %v10905
  %v11194 = vunpack.c.l.b16 %v10906
  %v11195 = vunpack.c.l.b16 %v10907
  %v11196 = vunpack.c.l.b16 %v10908
  %v11197 = vunpack.c.l.b16 %v10909
  %v11198 = vunpack.c.l.b16 %v10910
  %v11199 = vunpack.c.l.b16 %v10911
  %v11200 = vunpack.c.l.b16 %v10912
  %v11201 = vunpack.c.l.b16 %v10913
  %v11202 = vunpack.c.l.b16 %v10914
  %v11203 = vunpack.c.l.b16 %v10915
  %v11204 = vunpack.c.l.b16 %v10916
  %v11205 = vunpack.c.l.b16 %v10917
  %v11206 = vunpack.c.l.b16 %v10918
  %v11207 = vunpack.c.l.b16 %v10919
  %v11208 = vunpack.c.l.b16 %v10920
  %v11209 = vunpack.c.l.b16 %v10921
  %v11210 = vunpack.c.l.b16 %v10922
  %v11211 = vunpack.c.l.b16 %v10923
  %v11212 = vunpack.c.l.b16 %v10924
  %v11213 = vunpack.c.l.b16 %v10925
  %v11214 = vunpack.c.l.b16 %v10926
  %v11215 = vunpack.c.l.b16 %v10927
  %v11216 = vunpack.c.l.b16 %v10928
  %v11217 = vunpack.c.l.b16 %v10929
  %v11218 = vunpack.c.l.b16 %v10930
  %v11219 = vunpack.c.l.b16 %v10931
  %v11220 = vunpack.c.l.b16 %v10932
  %v11221 = vunpack.c.l.b16 %v10933
  %v11222 = vunpack.c.l.b16 %v10934
  %v11223 = vunpack.c.l.b16 %v10935
  %v11224 = vunpack.c.l.b16 %v10936
  %v11225 = vunpack.c.l.b16 %v10937
  %v11226 = vunpack.c.l.b16 %v10938
  %v11227 = vunpack.c.l.b16 %v10939
  %v11228 = vunpack.c.l.b16 %v10940
  %v11229 = vunpack.c.l.b16 %v10941
  %v11230 = vunpack.c.l.b16 %v10942
  %v11231 = vunpack.c.l.b16 %v10943
  %v11232 = vunpack.c.l.b16 %v10944
  %v11233 = vunpack.c.l.b16 %v10945
  %v11234 = vunpack.c.l.b16 %v10946
  %v11235 = vunpack.c.l.b16 %v10947
  %v11236 = vunpack.c.l.b16 %v10948
  %v11237 = vunpack.c.l.b16 %v10949
  %v11238 = vunpack.c.l.b16 %v10950
  %v11239 = vunpack.c.l.b16 %v10951
  %v11240 = vunpack.c.l.b16 %v10952
  %v11241 = vunpack.c.l.b16 %v10953
  %v11242 = vunpack.c.l.b16 %v10954
  %v11243 = vunpack.c.l.b16 %v10955
  %v11244 = vunpack.c.l.b16 %v10956
  %v11245 = vunpack.c.l.b16 %v10957
  %v11246 = vunpack.c.l.b16 %v10958
  %v11247 = vpack.c.b16 %v11104, %v11103
  %v11248 = vpack.c.b16 %v11106, %v11105
  %v11249 = vpack.c.b16 %v11108, %v11107
  %v11250 = vpack.c.b16 %v11110, %v11109
  %v11251 = vpack.c.b16 %v11112, %v11111
  %v11252 = vpack.c.b16 %v11114, %v11113
  %v11253 = vpack.c.b16 %v11116, %v11115
  %v11254 = vpack.c.b16 %v11118, %v11117
  %v11255 = vpack.c.b16 %v11120, %v11119
  %v11256 = vpack.c.b16 %v11122, %v11121
  %v11257 = vpack.c.b16 %v11124, %v11123
  %v11258 = vpack.c.b16 %v11126, %v11125
  %v11259 = vpack.c.b16 %v11128, %v11127
  %v11260 = vpack.c.b16 %v11130, %v11129
  %v11261 = vpack.c.b16 %v11132, %v11131
  %v11262 = vpack.c.b16 %v11134, %v11133
  %v11263 = vpack.c.b16 %v11136, %v11135
  %v11264 = vpack.c.b16 %v11138, %v11137
  %v11265 = vpack.c.b16 %v11140, %v11139
  %v11266 = vpack.c.b16 %v11142, %v11141
  %v11267 = vpack.c.b16 %v11144, %v11143
  %v11268 = vpack.c.b16 %v11146, %v11145
  %v11269 = vpack.c.b16 %v11148, %v11147
  %v11270 = vpack.c.b16 %v11150, %v11149
  %v11271 = vpack.c.b16 %v11152, %v11151
  %v11272 = vpack.c.b16 %v11154, %v11153
  %v11273 = vpack.c.b16 %v11156, %v11155
  %v11274 = vpack.c.b16 %v11158, %v11157
  %v11275 = vpack.c.b16 %v11160, %v11159
  %v11276 = vpack.c.b16 %v11162, %v11161
  %v11277 = vpack.c.b16 %v11164, %v11163
  %v11278 = vpack.c.b16 %v11166, %v11165
  %v11279 = vpack.c.b16 %v11168, %v11167
  %v11280 = vpack.c.b16 %v11170, %v11169
  %v11281 = vpack.c.b16 %v11172, %v11171
  %v11282 = vpack.c.b16 %v11174, %v11173
  %v11283 = vpack.c.b16 %v11176, %v11175
  %v11284 = vpack.c.b16 %v11178, %v11177
  %v11285 = vpack.c.b16 %v11180, %v11179
  %v11286 = vpack.c.b16 %v11182, %v11181
  %v11287 = vpack.c.b16 %v11184, %v11183
  %v11288 = vpack.c.b16 %v11186, %v11185
  %v11289 = vpack.c.b16 %v11188, %v11187
  %v11290 = vpack.c.b16 %v11190, %v11189
  %v11291 = vpack.c.b16 %v11192, %v11191
  %v11292 = vpack.c.b16 %v11194, %v11193
  %v11293 = vpack.c.b16 %v11196, %v11195
  %v11294 = vpack.c.b16 %v11198, %v11197
  %v11295 = vpack.c.b16 %v11200, %v11199
  %v11296 = vpack.c.b16 %v11202, %v11201
  %v11297 = vpack.c.b16 %v11204, %v11203
  %v11298 = vpack.c.b16 %v11206, %v11205
  %v11299 = vpack.c.b16 %v11208, %v11207
  %v11300 = vpack.c.b16 %v11210, %v11209
  %v11301 = vpack.c.b16 %v11212, %v11211
  %v11302 = vpack.c.b16 %v11214, %v11213
  %v11303 = vpack.c.b16 %v11216, %v11215
  %v11304 = vpack.c.b16 %v11218, %v11217
  %v11305 = vpack.c.b16 %v11220, %v11219
  %v11306 = vpack.c.b16 %v11222, %v11221
  %v11307 = vpack.c.b16 %v11224, %v11223
  %v11308 = vpack.c.b16 %v11226, %v11225
  %v11309 = vpack.c.b16 %v11228, %v11227
  %v11310 = vpack.c.b16 %v11230, %v11229
  %v11311 = vpack.c.b16 %v11232, %v11231
  %v11312 = vpack.c.b16 %v11234, %v11233
  %v11313 = vpack.c.b16 %v11236, %v11235
  %v11314 = vpack.c.b16 %v11238, %v11237
  %v11315 = vpack.c.b16 %v11240, %v11239
  %v11316 = vpack.c.b16 %v11242, %v11241
  %v11317 = vpack.c.b16 %v11244, %v11243
  %v11318 = vpack.c.b16 %v11246, %v11245
  %11391 = vmatprep.subr.bf16.mxu0 0
  %11392 = vmatpush1.bf16.msra.mxu0 %v11254
  %11393 = vmatprep.subr.bf16.mxu0 0
  %11394 = vmatpush1.bf16.msra.mxu0 %v11253
  %11395 = vmatprep.subr.bf16.mxu0 0
  %11396 = vmatpush1.bf16.msra.mxu0 %v11252
  %11397 = vmatprep.subr.bf16.mxu0 0
  %11398 = vmatpush1.bf16.msra.mxu0 %v11251
  %11399 = vmatprep.subr.bf16.mxu0 0
  %11400 = vmatpush1.bf16.msra.mxu0 %v11250
  %11401 = vmatprep.subr.bf16.mxu0 0
  %11402 = vmatpush1.bf16.msra.mxu0 %v11249
  %11403 = vmatprep.subr.bf16.mxu0 0
  %11404 = vmatpush1.bf16.msra.mxu0 %v11248
  %11405 = vmatprep.subr.bf16.mxu0 0
  %11406 = vmatpush1.bf16.msra.mxu0 %v11247
  %11407 = vmatprep.subr.bf16.mxu0 0
  %11408 = vmatpush2.bf16.msra.mxu0 %v11262
  %11409 = vmatprep.subr.bf16.mxu0 0
  %11410 = vmatpush2.bf16.msra.mxu0 %v11261
  %11411 = vmatprep.subr.bf16.mxu0 0
  %11412 = vmatpush2.bf16.msra.mxu0 %v11260
  %11413 = vmatprep.subr.bf16.mxu0 0
  %11414 = vmatpush2.bf16.msra.mxu0 %v11259
  %11415 = vmatprep.subr.bf16.mxu0 0
  %11416 = vmatpush2.bf16.msra.mxu0 %v11258
  %11417 = vmatprep.subr.bf16.mxu0 0
  %11418 = vmatpush2.bf16.msra.mxu0 %v11257
  %11419 = vmatprep.subr.bf16.mxu0 0
  %11420 = vmatpush2.bf16.msra.mxu0 %v11256
  %11421 = vmatprep.subr.bf16.mxu0 0
  %11422 = vmatpush2.bf16.msra.mxu0 %v11255
  %11423 = vmatprep.mubr.bf16.mxu0 %v10807
  %11424 = vmatmul.mubr.bf16.gmra.mxu0 %v10806
  %v11425 = vpop.f32.mrf.mxu0
  %v11426 = vadd.f32 %v33, %v11425
  %v11427 = vpop.f32.mrf.mxu0
  %v11428 = vpop.f32.mrf.mxu0
  %v11429 = vpop.f32.mrf.mxu0
  %11430 = vdwg.mxu0
  %11431 = vmatprep.subr.bf16.mxu0 0
  %11432 = vmatpush1.bf16.msra.mxu0 %v11270
  %11433 = vmatprep.subr.bf16.mxu0 0
  %11434 = vmatpush1.bf16.msra.mxu0 %v11269
  %11435 = vmatprep.subr.bf16.mxu0 0
  %11436 = vmatpush1.bf16.msra.mxu0 %v11268
  %11437 = vmatprep.subr.bf16.mxu0 0
  %11438 = vmatpush1.bf16.msra.mxu0 %v11267
  %11439 = vmatprep.subr.bf16.mxu0 0
  %11440 = vmatpush1.bf16.msra.mxu0 %v11266
  %11441 = vmatprep.subr.bf16.mxu0 0
  %11442 = vmatpush1.bf16.msra.mxu0 %v11265
  %11443 = vmatprep.subr.bf16.mxu0 0
  %11444 = vmatpush1.bf16.msra.mxu0 %v11264
  %11445 = vmatprep.subr.bf16.mxu0 0
  %11446 = vmatpush1.bf16.msra.mxu0 %v11263
  %11447 = vmatprep.subr.bf16.mxu0 0
  %11448 = vmatpush2.bf16.msra.mxu0 %v11278
  %11449 = vmatprep.subr.bf16.mxu0 0
  %11450 = vmatpush2.bf16.msra.mxu0 %v11277
  %11451 = vmatprep.subr.bf16.mxu0 0
  %11452 = vmatpush2.bf16.msra.mxu0 %v11276
  %11453 = vmatprep.subr.bf16.mxu0 0
  %11454 = vmatpush2.bf16.msra.mxu0 %v11275
  %11455 = vmatprep.subr.bf16.mxu0 0
  %11456 = vmatpush2.bf16.msra.mxu0 %v11274
  %11457 = vmatprep.subr.bf16.mxu0 0
  %11458 = vmatpush2.bf16.msra.mxu0 %v11273
  %11459 = vmatprep.subr.bf16.mxu0 0
  %11460 = vmatpush2.bf16.msra.mxu0 %v11272
  %11461 = vmatprep.subr.bf16.mxu0 0
  %11462 = vmatpush2.bf16.msra.mxu0 %v11271
  %11463 = vmatprep.mubr.bf16.mxu0 %v10809
  %11464 = vmatmul.mubr.bf16.gmra.mxu0 %v10808
  %v11465 = vpop.f32.mrf.mxu0
  %v11466 = vadd.f32 %v11426, %v11465
  %v11467 = vpop.f32.mrf.mxu0
  %v11468 = vpop.f32.mrf.mxu0
  %v11469 = vpop.f32.mrf.mxu0
  %11470 = vdwg.mxu0
  %11471 = vmatprep.subr.bf16.mxu0 0
  %11472 = vmatpush1.bf16.msra.mxu0 %v11286
  %11473 = vmatprep.subr.bf16.mxu0 0
  %11474 = vmatpush1.bf16.msra.mxu0 %v11285
  %11475 = vmatprep.subr.bf16.mxu0 0
  %11476 = vmatpush1.bf16.msra.mxu0 %v11284
  %11477 = vmatprep.subr.bf16.mxu0 0
  %11478 = vmatpush1.bf16.msra.mxu0 %v11283
  %11479 = vmatprep.subr.bf16.mxu0 0
  %11480 = vmatpush1.bf16.msra.mxu0 %v11282
  %11481 = vmatprep.subr.bf16.mxu0 0
  %11482 = vmatpush1.bf16.msra.mxu0 %v11281
  %11483 = vmatprep.subr.bf16.mxu0 0
  %11484 = vmatpush1.bf16.msra.mxu0 %v11280
  %11485 = vmatprep.subr.bf16.mxu0 0
  %11486 = vmatpush1.bf16.msra.mxu0 %v11279
  %11487 = vmatprep.subr.bf16.mxu0 0
  %11488 = vmatpush2.bf16.msra.mxu0 %v11294
  %11489 = vmatprep.subr.bf16.mxu0 0
  %11490 = vmatpush2.bf16.msra.mxu0 %v11293
  %11491 = vmatprep.subr.bf16.mxu0 0
  %11492 = vmatpush2.bf16.msra.mxu0 %v11292
  %11493 = vmatprep.subr.bf16.mxu0 0
  %11494 = vmatpush2.bf16.msra.mxu0 %v11291
  %11495 = vmatprep.subr.bf16.mxu0 0
  %11496 = vmatpush2.bf16.msra.mxu0 %v11290
  %11497 = vmatprep.subr.bf16.mxu0 0
  %11498 = vmatpush2.bf16.msra.mxu0 %v11289
  %11499 = vmatprep.subr.bf16.mxu0 0
  %11500 = vmatpush2.bf16.msra.mxu0 %v11288
  %11501 = vmatprep.subr.bf16.mxu0 0
  %11502 = vmatpush2.bf16.msra.mxu0 %v11287
  %11503 = vmatprep.mubr.bf16.mxu0 %v10811
  %11504 = vmatmul.mubr.bf16.gmra.mxu0 %v10810
  %v11505 = vpop.f32.mrf.mxu0
  %v11506 = vadd.f32 %v11466, %v11505
  %v11507 = vpop.f32.mrf.mxu0
  %v11508 = vpop.f32.mrf.mxu0
  %v11509 = vpop.f32.mrf.mxu0
  %11510 = vdwg.mxu0
  %11511 = vmatprep.subr.bf16.mxu0 0
  %11512 = vmatpush1.bf16.msra.mxu0 %v11302
  %11513 = vmatprep.subr.bf16.mxu0 0
  %11514 = vmatpush1.bf16.msra.mxu0 %v11301
  %11515 = vmatprep.subr.bf16.mxu0 0
  %11516 = vmatpush1.bf16.msra.mxu0 %v11300
  %11517 = vmatprep.subr.bf16.mxu0 0
  %11518 = vmatpush1.bf16.msra.mxu0 %v11299
  %11519 = vmatprep.subr.bf16.mxu0 0
  %11520 = vmatpush1.bf16.msra.mxu0 %v11298
  %11521 = vmatprep.subr.bf16.mxu0 0
  %11522 = vmatpush1.bf16.msra.mxu0 %v11297
  %11523 = vmatprep.subr.bf16.mxu0 0
  %11524 = vmatpush1.bf16.msra.mxu0 %v11296
  %11525 = vmatprep.subr.bf16.mxu0 0
  %11526 = vmatpush1.bf16.msra.mxu0 %v11295
  %11527 = vmatprep.subr.bf16.mxu0 0
  %11528 = vmatpush2.bf16.msra.mxu0 %v11310
  %11529 = vmatprep.subr.bf16.mxu0 0
  %11530 = vmatpush2.bf16.msra.mxu0 %v11309
  %11531 = vmatprep.subr.bf16.mxu0 0
  %11532 = vmatpush2.bf16.msra.mxu0 %v11308
  %11533 = vmatprep.subr.bf16.mxu0 0
  %11534 = vmatpush2.bf16.msra.mxu0 %v11307
  %11535 = vmatprep.subr.bf16.mxu0 0
  %11536 = vmatpush2.bf16.msra.mxu0 %v11306
  %11537 = vmatprep.subr.bf16.mxu0 0
  %11538 = vmatpush2.bf16.msra.mxu0 %v11305
  %11539 = vmatprep.subr.bf16.mxu0 0
  %11540 = vmatpush2.bf16.msra.mxu0 %v11304
  %11541 = vmatprep.subr.bf16.mxu0 0
  %11542 = vmatpush2.bf16.msra.mxu0 %v11303
  %11543 = vmatprep.mubr.bf16.mxu0 %v10813
  %11544 = vmatmul.mubr.bf16.gmra.mxu0 %v10812
  %v11545 = vpop.f32.mrf.mxu0
  %v11546 = vadd.f32 %v11506, %v11545
  %v11547 = vpop.f32.mrf.mxu0
  %v11548 = vpop.f32.mrf.mxu0
  %v11549 = vpop.f32.mrf.mxu0
  %11550 = vdwg.mxu0
  %11551 = vmatprep.subr.bf16.mxu0 0
  %11552 = vmatpush1.bf16.msra.mxu0 %v11318
  %11553 = vmatprep.subr.bf16.mxu0 0
  %11554 = vmatpush1.bf16.msra.mxu0 %v11317
  %11555 = vmatprep.subr.bf16.mxu0 0
  %11556 = vmatpush1.bf16.msra.mxu0 %v11316
  %11557 = vmatprep.subr.bf16.mxu0 0
  %11558 = vmatpush1.bf16.msra.mxu0 %v11315
  %11559 = vmatprep.subr.bf16.mxu0 0
  %11560 = vmatpush1.bf16.msra.mxu0 %v11314
  %11561 = vmatprep.subr.bf16.mxu0 0
  %11562 = vmatpush1.bf16.msra.mxu0 %v11313
  %11563 = vmatprep.subr.bf16.mxu0 0
  %11564 = vmatpush1.bf16.msra.mxu0 %v11312
  %11565 = vmatprep.subr.bf16.mxu0 0
  %11566 = vmatpush1.bf16.msra.mxu0 %v11311
  %11567 = vmatprep.subr.bf16.mxu0 0
  %11568 = vmatpush2.bf16.msra.mxu0 0
  %11569 = vmatprep.subr.bf16.mxu0 0
  %11570 = vmatpush2.bf16.msra.mxu0 0
  %11571 = vmatprep.subr.bf16.mxu0 0
  %11572 = vmatpush2.bf16.msra.mxu0 0
  %11573 = vmatprep.subr.bf16.mxu0 0
  %11574 = vmatpush2.bf16.msra.mxu0 0
  %11575 = vmatprep.subr.bf16.mxu0 0
  %11576 = vmatpush2.bf16.msra.mxu0 0
  %11577 = vmatprep.subr.bf16.mxu0 0
  %11578 = vmatpush2.bf16.msra.mxu0 0
  %11579 = vmatprep.subr.bf16.mxu0 0
  %11580 = vmatpush2.bf16.msra.mxu0 0
  %11581 = vmatprep.subr.bf16.mxu0 0
  %11582 = vmatpush2.bf16.msra.mxu0 0
  %11583 = vmatprep.mubr.bf16.mxu0 0
  %11584 = vmatmul.mubr.bf16.gmra.mxu0 %v10814
  %v11585 = vpop.f32.mrf.mxu0
  %v11586 = vadd.f32 %v11546, %v11585
  %v11587 = vpop.f32.mrf.mxu0
  %v11588 = vpop.f32.mrf.mxu0
  %v11589 = vpop.f32.mrf.mxu0
  %11590 = vdwg.mxu0
  %v11591 = vmax.f32 %v11586, 0.0
  %v11592 = vadd.f32 %v10770, %v11591
  %11593 = vst [vmem:[%s5] sm:$0xff] %v11592
  // Predicated region
  $region22: #{scnn_forward.2} parent=0 // pred_check
    _
  $region23: #{scnn_forward.2} parent=0 // pred_check_branch
    %11595 = sbr.rel (0) target = $region25
  $region24: #{scnn_forward.2} parent=0 // pred_region
    _
  $region25: #{scnn_forward.2} parent=0 // pred_fallthru
    _
  // Predicated region
  $region26: #{scnn_forward.2} parent=0 // pred_check
    _
  $region27: #{scnn_forward.2} parent=0 // pred_check_branch
    %11597 = sbr.rel (0) target = $region29
  $region28: #{scnn_forward.2} parent=0 // pred_region
    _
  $region29: #{scnn_forward.2} parent=0 // pred_fallthru
    _

</llo_original>
